<compile_context>
chip_gen: v7x
topology: tpu7x:2x2x1
jax: 0.10.0
libtpu: 0.0.40
codegen_flags: <defaults>
</compile_context>

<pallas_src>
import functools
from math import sqrt

import numpy as np
import jax
import jax.numpy as jnp
from jax.experimental import pallas as pl
from jax.experimental.pallas import tpu as pltpu

EPS = 1e-5  # LayerNorm / GroupNorm eps (PyTorch default)


# ----------------------------------------------------------------------------
# Pallas kernel: full MHSA block for a block of batch elements (channels-first)
# ----------------------------------------------------------------------------
def mhsa_kernel(x_ref, pos_ref, wqkv_ref, bqkv_ref, wo_ref, c1w_ref, c2w_ref,
                c1b_ref, aff_ref, prelu_ref, o_ref, *, n_head, compute_dtype):
    f32 = jnp.float32
    cdt = compute_dtype
    Bb, C, L = x_ref.shape
    Dh = C // n_head

    # Packed (C, 10) per-channel params -> (C, 1) columns (single small DMA).
    aff = aff_ref[...]
    ln1_w, ln1_b = aff[:, 0:1], aff[:, 1:2]
    ln2_w, ln2_b = aff[:, 2:3], aff[:, 3:4]
    gn1_w, gn1_b = aff[:, 4:5], aff[:, 5:6]
    gn2_w, gn2_b = aff[:, 6:7], aff[:, 7:8]
    out_b, c2_b = aff[:, 8:9], aff[:, 9:10]

    posT = pos_ref[...]                      # (C, L) f32
    wqkv = wqkv_ref[...]                     # (3C, C) compute dtype, q rows pre-scaled
    bqkv = bqkv_ref[...]                     # (3C, 1) f32, q part pre-scaled
    wo = wo_ref[...]                         # (C, C)  compute dtype
    c1w = c1w_ref[...]                       # (2C, C) compute dtype
    c2w = c2w_ref[...]                       # (C, 2C) compute dtype
    c1b = c1b_ref[...]                       # (2C, 1) f32
    alpha = prelu_ref[0]                     # PReLU scalar (SMEM)

    # channel index, used to select a head's channel rows by zero-masking.
    chan = jax.lax.broadcasted_iota(jnp.int32, (C, 1), 0)

    # Unrolled loop over the batch block: every per-sample op is an independent
    # dense 2-D (rows, L) tile -> no cross-batch concatenates / copies at all.
    for b in range(Bb):
        xb = x_ref[b].astype(f32)                                # (C, L)

        # ---- preprocess: LayerNorm (over channels) + positional encoding ----
        mu = jnp.mean(xb, axis=0, keepdims=True)
        var = jnp.mean((xb - mu) ** 2, axis=0, keepdims=True)
        h = (xb - mu) * jax.lax.rsqrt(var + EPS) * ln1_w + ln1_b
        h = h + posT

        # ---- fused Q/K/V projection: ONE matmul, K = C, lane-dense N = L ----
        qkv = jnp.dot(wqkv, h.astype(cdt), preferred_element_type=f32) + bqkv
        q_cf = qkv[0:C]                                          # (C, L), pre-scaled
        k_cf = qkv[C:2 * C].astype(cdt)                          # (C, L)
        v_cf = qkv[2 * C:3 * C].astype(cdt)                      # (C, L)

        # single dense (C, L) -> (L, C) transpose: MXU LHS of the score matmuls
        q_sm = q_cf.T.astype(cdt)

        # ---- attention core --------------------------------------------------
        # Head selection by zero-masking K / V channel rows keeps every matmul
        # operand and result 128-lane dense (no (L, Dh) lane-padded tiles, no
        # per-head staging copies); the MXU pass count equals the Dh contraction.
        ctx = jnp.zeros((C, L), f32)
        for hh in range(n_head):
            msk = (chan >= hh * Dh) & (chan < (hh + 1) * Dh)      # (C, 1)
            k_h = jnp.where(msk, k_cf, 0)
            s = jnp.dot(q_sm, k_h, preferred_element_type=f32)    # (L, L)
            s = s - jnp.max(s, axis=-1, keepdims=True)
            e = jnp.exp(s)
            # approx reciprocal -> EUP slot; rows sum to 1 only to ~1e-3 rel.
            p = e * pl.reciprocal(jnp.sum(e, axis=-1, keepdims=True), approx=True)
            v_h = jnp.where(msk, v_cf, 0)
            # context directly in transposed (C, L) form: contraction K = L,
            # lane-dense output, accumulated across heads.
            ctx = ctx + jnp.einsum('cm,lm->cl', v_h, p.astype(cdt),
                                   preferred_element_type=f32)

        # ---- output projection: single matmul, K = C -------------------------
        out = jnp.dot(wo, ctx.astype(cdt), preferred_element_type=f32) + out_b

        # ---- postprocess: Dropout(id) -> LayerNorm -> Dropout(id) ------------
        mu2 = jnp.mean(out, axis=0, keepdims=True)
        var2 = jnp.mean((out - mu2) ** 2, axis=0, keepdims=True)
        out = (out - mu2) * jax.lax.rsqrt(var2 + EPS) * ln2_w + ln2_b
        y1 = out + xb                                             # MHSA residual

        # ---- FeedForward: GroupNorm -> conv1x1 -> PReLU -> conv1x1 -> GroupNorm
        gm = jnp.mean(y1, axis=(0, 1), keepdims=True)             # per-sample stats
        gv = jnp.mean((y1 - gm) ** 2, axis=(0, 1), keepdims=True)
        g = (y1 - gm) * jax.lax.rsqrt(gv + EPS) * gn1_w + gn1_b

        h1 = jnp.dot(c1w, g.astype(cdt), preferred_element_type=f32) + c1b   # (2C, L)
        h1 = jnp.where(h1 >= 0, h1, alpha * h1)                              # PReLU
        h2 = jnp.dot(c2w, h1.astype(cdt), preferred_element_type=f32) + c2_b # (C, L)

        gm2 = jnp.mean(h2, axis=(0, 1), keepdims=True)
        gv2 = jnp.mean((h2 - gm2) ** 2, axis=(0, 1), keepdims=True)
        g2 = (h2 - gm2) * jax.lax.rsqrt(gv2 + EPS) * gn2_w + gn2_b

        y2 = g2 + y1                                              # FF residual
        o_ref[b] = (y2 + xb).astype(o_ref.dtype)                  # outer residual


# ----------------------------------------------------------------------------
# Wrapper: parameter prep (pre-scale / pre-cast / repack) + pallas_call
# ----------------------------------------------------------------------------
def _prepare_params(p, C, n_head, compute_dtype):
    f32 = jnp.float32
    Dh = C // n_head
    scale = 1.0 / sqrt(Dh)
    # q rows of the fused in-projection absorb the 1/sqrt(Dh) attention scale.
    scale_vec = jnp.concatenate([jnp.full((C,), scale, f32),
                                 jnp.ones((2 * C,), f32)])
    wqkv = (p["in_w"].astype(f32) * scale_vec[:, None]).astype(compute_dtype)   # (3C, C)
    bqkv = (p["in_b"].astype(f32) * scale_vec).reshape(3 * C, 1)                # (3C, 1)
    wo = p["out_w"].astype(compute_dtype)                                       # (C, C)
    c1w = p["c1_w"].astype(compute_dtype)                                       # (2C, C)
    c2w = p["c2_w"].astype(compute_dtype)                                       # (C, 2C)
    c1b = p["c1_b"].reshape(-1, 1).astype(f32)                                  # (2C, 1)
    posT = p["pos"].T.astype(f32)                                               # (C, L)
    # all (C,)-sized params packed into one (C, 10) array -> a single DMA
    aff = jnp.stack([p["ln1_w"], p["ln1_b"], p["ln2_w"], p["ln2_b"],
                     p["gn1_w"], p["gn1_b"], p["gn2_w"], p["gn2_b"],
                     p["out_b"], p["c2_b"]], axis=1).astype(f32)                # (C, 10)
    prelu = p["prelu"].reshape(1).astype(f32)
    return posT, wqkv, bqkv, wo, c1w, c2w, c1b, aff, prelu


def mhsa_forward(x, params, n_head, *, block_b=None, compute_dtype=jnp.float32):
    B, C, L = x.shape
    if C % n_head != 0:
        raise ValueError("C must be divisible by n_head")
    if block_b is None:
        # v7x has 2 TensorCores per chip: keep the grid length >= 2 so the
        # "parallel" batch axis can be sharded across both.  On single-TC
        # v5e / v6e, pass block_b=B to amortize per-step overhead instead.
        block_b = B // 2 if (B >= 2 and B % 2 == 0) else 1
    if B % block_b != 0:
        raise ValueError("B must be divisible by block_b")

    prep = _prepare_params(params, C, n_head, compute_dtype)
    posT, wqkv, bqkv, wo, c1w, c2w, c1b, aff, prelu = prep

    def full_spec(a):
        zeros = (0,) * a.ndim
        return pl.BlockSpec(a.shape, lambda i: zeros)

    in_specs = [pl.BlockSpec((block_b, C, L), lambda i: (i, 0, 0))]          # x
    in_specs += [full_spec(a) for a in
                 (posT, wqkv, bqkv, wo, c1w, c2w, c1b, aff)]
    in_specs += [pl.BlockSpec(memory_space=pltpu.MemorySpace.SMEM)]          # PReLU

    # advisory cost estimate so XLA schedules neighbouring ops around the call
    flops = int(B * L * C * (16 * C + 4 * n_head * L))
    transcendentals = int(B * (n_head * L * L + 8 * L))
    param_bytes = sum(int(a.size) * a.dtype.itemsize for a in prep)
    bytes_accessed = int(2 * B * C * L * x.dtype.itemsize + param_bytes)

    return pl.pallas_call(
        functools.partial(mhsa_kernel, n_head=n_head, compute_dtype=compute_dtype),
        out_shape=jax.ShapeDtypeStruct((B, C, L), x.dtype),
        grid=(B // block_b,),
        in_specs=in_specs,
        out_specs=pl.BlockSpec((block_b, C, L), lambda i: (i, 0, 0)),
        compiler_params=pltpu.CompilerParams(
            dimension_semantics=("parallel",),
            vmem_limit_bytes=32 * 1024 * 1024,
        ),
        cost_estimate=pl.CostEstimate(flops=flops,
                                      transcendentals=transcendentals,
                                      bytes_accessed=bytes_accessed),
    )(x, posT, wqkv, bqkv, wo, c1w, c2w, c1b, aff, prelu)


# ----------------------------------------------------------------------------
# Pure-JAX reference (eval-mode semantics of the PyTorch module)
# ----------------------------------------------------------------------------
def mhsa_reference(x, p, n_head):
    B, C, L = x.shape
    Dh = C // n_head

    xt = jnp.transpose(x, (0, 2, 1))                        # (B, L, C)
    mu = xt.mean(-1, keepdims=True)
    var = ((xt - mu) ** 2).mean(-1, keepdims=True)
    h = (xt - mu) / jnp.sqrt(var + EPS) * p["ln1_w"] + p["ln1_b"]
    h = h + p["pos"][None]

    qkv = h @ p["in_w"].T + p["in_b"]
    q, k, v = jnp.split(qkv, 3, axis=-1)
    q = q.reshape(B, L, n_head, Dh).transpose(0, 2, 1, 3)
    k = k.reshape(B, L, n_head, Dh).transpose(0, 2, 1, 3)
    v = v.reshape(B, L, n_head, Dh).transpose(0, 2, 1, 3)
    s = (q / sqrt(Dh)) @ k.transpose(0, 1, 3, 2)
    attn = jax.nn.softmax(s, axis=-1) @ v                   # (B, H, L, Dh)
    attn = attn.transpose(0, 2, 1, 3).reshape(B, L, C)
    out = attn @ p["out_w"].T + p["out_b"]

    mu2 = out.mean(-1, keepdims=True)
    var2 = ((out - mu2) ** 2).mean(-1, keepdims=True)
    out = (out - mu2) / jnp.sqrt(var2 + EPS) * p["ln2_w"] + p["ln2_b"]
    y1 = jnp.transpose(out, (0, 2, 1)) + x                  # (B, C, L)

    gmu = y1.mean(axis=(1, 2), keepdims=True)
    gvar = ((y1 - gmu) ** 2).mean(axis=(1, 2), keepdims=True)
    g = (y1 - gmu) / jnp.sqrt(gvar + EPS)
    g = g * p["gn1_w"].reshape(1, C, 1) + p["gn1_b"].reshape(1, C, 1)

    h1 = jnp.einsum("oc,bcl->bol", p["c1_w"], g) + p["c1_b"].reshape(1, -1, 1)
    h1 = jnp.where(h1 >= 0, h1, p["prelu"][0] * h1)
    h2 = jnp.einsum("oc,bcl->bol", p["c2_w"], h1) + p["c2_b"].reshape(1, -1, 1)

    gmu2 = h2.mean(axis=(1, 2), keepdims=True)
    gvar2 = ((h2 - gmu2) ** 2).mean(axis=(1, 2), keepdims=True)
    g2 = (h2 - gmu2) / jnp.sqrt(gvar2 + EPS)
    g2 = g2 * p["gn2_w"].reshape(1, C, 1) + p["gn2_b"].reshape(1, C, 1)

    y2 = g2 + y1
    return y2 + x


# ----------------------------------------------------------------------------
# Deterministic parameter init + run
# ----------------------------------------------------------------------------
def make_params(key, C, L, n_head):
    ks = jax.random.split(key, 16)
    nrm = lambda k, shp, s=0.1: (s * jax.random.normal(k, shp)).astype(jnp.float32)

    # sinusoidal positional encoding (deterministic, as in the module)
    inv = 1.0 / (10000.0 ** (jnp.arange(0, C, 2, dtype=jnp.float32) / C))
    pos_idx = jnp.arange(L, dtype=jnp.float32)[:, None]
    ang = pos_idx * inv[None, :]
    pos = jnp.zeros((L, C), jnp.float32)
    pos = pos.at[:, 0::2].set(jnp.sin(ang))
    pos = pos.at[:, 1::2].set(jnp.cos(ang))

    Hdim = 2 * C  # FeedForward expansion_factor = 2
    return {
        "ln1_w": 1.0 + nrm(ks[0], (C,)),  "ln1_b": nrm(ks[1], (C,)),
        "pos": pos,
        "in_w": nrm(ks[2], (3 * C, C)),   "in_b": nrm(ks[3], (3 * C,)),
        "out_w": nrm(ks[4], (C, C)),      "out_b": nrm(ks[5], (C,)),
        "ln2_w": 1.0 + nrm(ks[6], (C,)),  "ln2_b": nrm(ks[7], (C,)),
        "gn1_w": 1.0 + nrm(ks[8], (C,)),  "gn1_b": nrm(ks[9], (C,)),
        "c1_w": nrm(ks[10], (Hdim, C)),   "c1_b": nrm(ks[11], (Hdim,)),
        "prelu": jnp.array([0.25], jnp.float32),
        "c2_w": nrm(ks[12], (C, Hdim)),   "c2_b": nrm(ks[13], (C,)),
        "gn2_w": 1.0 + nrm(ks[14], (C,)), "gn2_b": nrm(ks[15], (C,)),
    }


if __name__ == "__main__":
    B, C, L = 4, 32, 128          # (batch, channels=input_size, sequence length)
    n_head = 8

    key = jax.random.PRNGKey(0)
    kx, kp = jax.random.split(key)
    x = jax.random.normal(kx, (B, C, L), dtype=jnp.float32)
    params = make_params(kp, C, L, n_head)

    ref = jax.block_until_ready(mhsa_reference(x, params, n_head))

    # f32 matmul path (default; recommended on v5e)
    out_f32 = jax.block_until_ready(mhsa_forward(x, params, n_head))
    np.testing.assert_allclose(np.asarray(out_f32), np.asarray(ref),
                               rtol=3e-2, atol=3e-2)

    # bf16 matmul path (MXU peak dtype, weights pre-cast in the wrapper);
    # LayerNorm / GroupNorm / softmax statistics remain f32.
    out_bf16 = jax.block_until_ready(
        mhsa_forward(x, params, n_head, compute_dtype=jnp.bfloat16))
    np.testing.assert_allclose(np.asarray(out_bf16), np.asarray(ref),
                               rtol=1.5e-1, atol=1.5e-1)

    print("KERNEL_OK")
</pallas_src>

<mosaic_0001>
module attributes {stable_mosaic.version = 11 : i64} {
  func.func @mhsa_kernel(%arg0: i32, %arg1: memref<2x32x128xf32, #tpu.memory_space<vmem>>, %arg2: memref<32x128xf32, #tpu.memory_space<vmem>>, %arg3: memref<96x32xf32, #tpu.memory_space<vmem>>, %arg4: memref<96x1xf32, #tpu.memory_space<vmem>>, %arg5: memref<32x32xf32, #tpu.memory_space<vmem>>, %arg6: memref<64x32xf32, #tpu.memory_space<vmem>>, %arg7: memref<32x64xf32, #tpu.memory_space<vmem>>, %arg8: memref<64x1xf32, #tpu.memory_space<vmem>>, %arg9: memref<32x10xf32, #tpu.memory_space<vmem>>, %arg10: memref<1xf32, #tpu.memory_space<smem>>, %arg11: memref<2x32x128xf32, #tpu.memory_space<vmem>>) attributes {dimension_semantics = [#tpu.dimension_semantics<parallel>], iteration_bounds = array<i64: 2>, scalar_prefetch = 0 : i64, scratch_operands = 0 : i64, tpu.core_type = #tpu.core_type<tc>, window_params = [{transform_indices = @transform_0, window_bounds = array<i64: 2, 32, 128>}, {pipeline_mode = #tpu.pipeline_mode<synchronous>, transform_indices = @transform_1, window_bounds = array<i64: 32, 128>}, {pipeline_mode = #tpu.pipeline_mode<synchronous>, transform_indices = @transform_2, window_bounds = array<i64: 96, 32>}, {pipeline_mode = #tpu.pipeline_mode<synchronous>, transform_indices = @transform_3, window_bounds = array<i64: 96, 1>}, {pipeline_mode = #tpu.pipeline_mode<synchronous>, transform_indices = @transform_4, window_bounds = array<i64: 32, 32>}, {pipeline_mode = #tpu.pipeline_mode<synchronous>, transform_indices = @transform_5, window_bounds = array<i64: 64, 32>}, {pipeline_mode = #tpu.pipeline_mode<synchronous>, transform_indices = @transform_6, window_bounds = array<i64: 32, 64>}, {pipeline_mode = #tpu.pipeline_mode<synchronous>, transform_indices = @transform_7, window_bounds = array<i64: 64, 1>}, {pipeline_mode = #tpu.pipeline_mode<synchronous>, transform_indices = @transform_8, window_bounds = array<i64: 32, 10>}, {transform_indices = @transform_9, window_bounds = array<i64: 1>}, {transform_indices = @transform_10, window_bounds = array<i64: 2, 32, 128>}]} {
    %c0 = arith.constant 0 : index
    %c0_0 = arith.constant 0 : index
    %0 = vector.load %arg9[%c0, %c0_0] : memref<32x10xf32, #tpu.memory_space<vmem>>, vector<32x10xf32>
    %1 = vector.extract_strided_slice %0 {offsets = [0, 0], sizes = [32, 1], strides = [1, 1]} : vector<32x10xf32> to vector<32x1xf32>
    %2 = vector.extract_strided_slice %0 {offsets = [0, 1], sizes = [32, 1], strides = [1, 1]} : vector<32x10xf32> to vector<32x1xf32>
    %3 = vector.extract_strided_slice %0 {offsets = [0, 2], sizes = [32, 1], strides = [1, 1]} : vector<32x10xf32> to vector<32x1xf32>
    %4 = vector.extract_strided_slice %0 {offsets = [0, 3], sizes = [32, 1], strides = [1, 1]} : vector<32x10xf32> to vector<32x1xf32>
    %5 = vector.extract_strided_slice %0 {offsets = [0, 4], sizes = [32, 1], strides = [1, 1]} : vector<32x10xf32> to vector<32x1xf32>
    %6 = vector.extract_strided_slice %0 {offsets = [0, 5], sizes = [32, 1], strides = [1, 1]} : vector<32x10xf32> to vector<32x1xf32>
    %7 = vector.extract_strided_slice %0 {offsets = [0, 6], sizes = [32, 1], strides = [1, 1]} : vector<32x10xf32> to vector<32x1xf32>
    %8 = vector.extract_strided_slice %0 {offsets = [0, 7], sizes = [32, 1], strides = [1, 1]} : vector<32x10xf32> to vector<32x1xf32>
    %9 = vector.extract_strided_slice %0 {offsets = [0, 8], sizes = [32, 1], strides = [1, 1]} : vector<32x10xf32> to vector<32x1xf32>
    %10 = vector.extract_strided_slice %0 {offsets = [0, 9], sizes = [32, 1], strides = [1, 1]} : vector<32x10xf32> to vector<32x1xf32>
    %c0_1 = arith.constant 0 : index
    %c0_2 = arith.constant 0 : index
    %11 = vector.load %arg2[%c0_1, %c0_2] : memref<32x128xf32, #tpu.memory_space<vmem>>, vector<32x128xf32>
    %c0_3 = arith.constant 0 : index
    %c0_4 = arith.constant 0 : index
    %12 = vector.load %arg3[%c0_3, %c0_4] : memref<96x32xf32, #tpu.memory_space<vmem>>, vector<96x32xf32>
    %c0_5 = arith.constant 0 : index
    %c0_6 = arith.constant 0 : index
    %13 = vector.load %arg4[%c0_5, %c0_6] : memref<96x1xf32, #tpu.memory_space<vmem>>, vector<96x1xf32>
    %c0_7 = arith.constant 0 : index
    %c0_8 = arith.constant 0 : index
    %14 = vector.load %arg5[%c0_7, %c0_8] : memref<32x32xf32, #tpu.memory_space<vmem>>, vector<32x32xf32>
    %c0_9 = arith.constant 0 : index
    %c0_10 = arith.constant 0 : index
    %15 = vector.load %arg6[%c0_9, %c0_10] : memref<64x32xf32, #tpu.memory_space<vmem>>, vector<64x32xf32>
    %c0_11 = arith.constant 0 : index
    %c0_12 = arith.constant 0 : index
    %16 = vector.load %arg7[%c0_11, %c0_12] : memref<32x64xf32, #tpu.memory_space<vmem>>, vector<32x64xf32>
    %c0_13 = arith.constant 0 : index
    %c0_14 = arith.constant 0 : index
    %17 = vector.load %arg8[%c0_13, %c0_14] : memref<64x1xf32, #tpu.memory_space<vmem>>, vector<64x1xf32>
    %c0_15 = arith.constant 0 : index
    %18 = memref.load %arg10[%c0_15] : memref<1xf32, #tpu.memory_space<smem>>
    %19 = tpu.iota {dimensions = array<i32: 0>} : vector<32x1xi32>
    %c0_16 = arith.constant 0 : index
    %c0_17 = arith.constant 0 : index
    %c0_18 = arith.constant 0 : index
    %20 = vector.load %arg1[%c0_16, %c0_17, %c0_18] : memref<2x32x128xf32, #tpu.memory_space<vmem>>, vector<1x32x128xf32>
    %21 = vector.shape_cast %20 : vector<1x32x128xf32> to vector<32x128xf32>
    %cst = arith.constant dense<0.000000e+00> : vector<128xf32>
    %22 = vector.multi_reduction <add>, %21, %cst [0] : vector<32x128xf32> to vector<128xf32>
    %23 = vector.shape_cast %22 : vector<128xf32> to vector<1x128xf32>
    %cst_19 = arith.constant 3.200000e+01 : f32
    %24 = vector.broadcast %cst_19 : f32 to vector<1x128xf32>
    %25 = arith.divf %23, %24 : vector<1x128xf32>
    %26 = vector.broadcast %25 : vector<1x128xf32> to vector<32x128xf32>
    %27 = arith.subf %21, %26 : vector<32x128xf32>
    %28 = arith.mulf %27, %27 : vector<32x128xf32>
    %cst_20 = arith.constant dense<0.000000e+00> : vector<128xf32>
    %29 = vector.multi_reduction <add>, %28, %cst_20 [0] : vector<32x128xf32> to vector<128xf32>
    %30 = vector.shape_cast %29 : vector<128xf32> to vector<1x128xf32>
    %cst_21 = arith.constant 3.200000e+01 : f32
    %31 = vector.broadcast %cst_21 : f32 to vector<1x128xf32>
    %32 = arith.divf %30, %31 : vector<1x128xf32>
    %33 = vector.broadcast %25 : vector<1x128xf32> to vector<32x128xf32>
    %34 = arith.subf %21, %33 : vector<32x128xf32>
    %cst_22 = arith.constant 9.99999974E-6 : f32
    %35 = vector.broadcast %cst_22 : f32 to vector<1x128xf32>
    %36 = arith.addf %32, %35 : vector<1x128xf32>
    %37 = math.rsqrt %36 : vector<1x128xf32>
    %38 = vector.broadcast %37 : vector<1x128xf32> to vector<32x128xf32>
    %39 = arith.mulf %34, %38 : vector<32x128xf32>
    %40 = vector.broadcast %1 : vector<32x1xf32> to vector<32x128xf32>
    %41 = arith.mulf %39, %40 : vector<32x128xf32>
    %42 = vector.broadcast %2 : vector<32x1xf32> to vector<32x128xf32>
    %43 = arith.addf %41, %42 : vector<32x128xf32>
    %44 = arith.addf %43, %11 : vector<32x128xf32>
    %cst_23 = arith.constant dense<0.000000e+00> : vector<96x128xf32>
    %45 = tpu.matmul %12, %44, %cst_23 {dimension_numbers = #tpu.dot_dimension_numbers<[1], [0], [0], [1], [0, 0, 1, 1], [], []>} : vector<96x32xf32>, vector<32x128xf32>, vector<96x128xf32> -> vector<96x128xf32>
    %46 = vector.broadcast %13 : vector<96x1xf32> to vector<96x128xf32>
    %47 = arith.addf %45, %46 : vector<96x128xf32>
    %48 = vector.extract_strided_slice %47 {offsets = [0, 0], sizes = [32, 128], strides = [1, 1]} : vector<96x128xf32> to vector<32x128xf32>
    %49 = vector.extract_strided_slice %47 {offsets = [32, 0], sizes = [32, 128], strides = [1, 1]} : vector<96x128xf32> to vector<32x128xf32>
    %50 = vector.extract_strided_slice %47 {offsets = [64, 0], sizes = [32, 128], strides = [1, 1]} : vector<96x128xf32> to vector<32x128xf32>
    %51 = tpu.transpose %48, [1, 0] : vector<32x128xf32> -> vector<128x32xf32>
    %cst_24 = arith.constant 0.000000e+00 : f32
    %52 = vector.broadcast %cst_24 : f32 to vector<32x128xf32>
    %c0_i32 = arith.constant 0 : i32
    %53 = vector.broadcast %c0_i32 : i32 to vector<32x1xi32>
    %54 = arith.cmpi sge, %19, %53 : vector<32x1xi32>
    %c4_i32 = arith.constant 4 : i32
    %55 = vector.broadcast %c4_i32 : i32 to vector<32x1xi32>
    %56 = arith.cmpi slt, %19, %55 : vector<32x1xi32>
    %57 = arith.andi %54, %56 : vector<32x1xi1>
    %c0_i32_25 = arith.constant 0 : i32
    %58 = arith.sitofp %c0_i32_25 : i32 to f32
    %59 = vector.shape_cast %57 : vector<32x1xi1> to vector<32x1xi1>
    %60 = vector.broadcast %59 : vector<32x1xi1> to vector<32x128xi1>
    %61 = vector.broadcast %58 : f32 to vector<32x128xf32>
    %62 = arith.select %60, %49, %61 : vector<32x128xi1>, vector<32x128xf32>
    %cst_26 = arith.constant dense<0.000000e+00> : vector<128x128xf32>
    %63 = tpu.matmul %51, %62, %cst_26 {dimension_numbers = #tpu.dot_dimension_numbers<[1], [0], [0], [1], [0, 0, 1, 1], [], []>} : vector<128x32xf32>, vector<32x128xf32>, vector<128x128xf32> -> vector<128x128xf32>
    %cst_27 = arith.constant dense<0xFF800000> : vector<128xf32>
    %64 = vector.multi_reduction <maximumf>, %63, %cst_27 [1] : vector<128x128xf32> to vector<128xf32>
    %65 = vector.shape_cast %64 : vector<128xf32> to vector<128x1xf32>
    %66 = vector.broadcast %65 : vector<128x1xf32> to vector<128x128xf32>
    %67 = arith.subf %63, %66 : vector<128x128xf32>
    %68 = math.exp %67 : vector<128x128xf32>
    %cst_28 = arith.constant dense<0.000000e+00> : vector<128xf32>
    %69 = vector.multi_reduction <add>, %68, %cst_28 [1] : vector<128x128xf32> to vector<128xf32>
    %70 = vector.shape_cast %69 : vector<128xf32> to vector<128x1xf32>
    %71 = tpu.reciprocal %70 {approx = true} : vector<128x1xf32> -> vector<128x1xf32>
    %72 = vector.broadcast %71 : vector<128x1xf32> to vector<128x128xf32>
    %73 = arith.mulf %68, %72 : vector<128x128xf32>
    %c0_i32_29 = arith.constant 0 : i32
    %74 = arith.sitofp %c0_i32_29 : i32 to f32
    %75 = vector.shape_cast %57 : vector<32x1xi1> to vector<32x1xi1>
    %76 = vector.broadcast %75 : vector<32x1xi1> to vector<32x128xi1>
    %77 = vector.broadcast %74 : f32 to vector<32x128xf32>
    %78 = arith.select %76, %50, %77 : vector<32x128xi1>, vector<32x128xf32>
    "tpu.trace_start"() <{level = 10 : i32, message = "cm,lm->cl"}> : () -> ()
    %cst_30 = arith.constant dense<0.000000e+00> : vector<32x128xf32>
    %79 = tpu.matmul %78, %73, %cst_30 {dimension_numbers = #tpu.dot_dimension_numbers<[1], [1], [0], [0], [0, 0, 1, 0], [], []>} : vector<32x128xf32>, vector<128x128xf32>, vector<32x128xf32> -> vector<32x128xf32>
    "tpu.trace_stop"() : () -> ()
    %80 = arith.addf %52, %79 : vector<32x128xf32>
    %c4_i32_31 = arith.constant 4 : i32
    %81 = vector.broadcast %c4_i32_31 : i32 to vector<32x1xi32>
    %82 = arith.cmpi sge, %19, %81 : vector<32x1xi32>
    %c8_i32 = arith.constant 8 : i32
    %83 = vector.broadcast %c8_i32 : i32 to vector<32x1xi32>
    %84 = arith.cmpi slt, %19, %83 : vector<32x1xi32>
    %85 = arith.andi %82, %84 : vector<32x1xi1>
    %c0_i32_32 = arith.constant 0 : i32
    %86 = arith.sitofp %c0_i32_32 : i32 to f32
    %87 = vector.shape_cast %85 : vector<32x1xi1> to vector<32x1xi1>
    %88 = vector.broadcast %87 : vector<32x1xi1> to vector<32x128xi1>
    %89 = vector.broadcast %86 : f32 to vector<32x128xf32>
    %90 = arith.select %88, %49, %89 : vector<32x128xi1>, vector<32x128xf32>
    %cst_33 = arith.constant dense<0.000000e+00> : vector<128x128xf32>
    %91 = tpu.matmul %51, %90, %cst_33 {dimension_numbers = #tpu.dot_dimension_numbers<[1], [0], [0], [1], [0, 0, 1, 1], [], []>} : vector<128x32xf32>, vector<32x128xf32>, vector<128x128xf32> -> vector<128x128xf32>
    %cst_34 = arith.constant dense<0xFF800000> : vector<128xf32>
    %92 = vector.multi_reduction <maximumf>, %91, %cst_34 [1] : vector<128x128xf32> to vector<128xf32>
    %93 = vector.shape_cast %92 : vector<128xf32> to vector<128x1xf32>
    %94 = vector.broadcast %93 : vector<128x1xf32> to vector<128x128xf32>
    %95 = arith.subf %91, %94 : vector<128x128xf32>
    %96 = math.exp %95 : vector<128x128xf32>
    %cst_35 = arith.constant dense<0.000000e+00> : vector<128xf32>
    %97 = vector.multi_reduction <add>, %96, %cst_35 [1] : vector<128x128xf32> to vector<128xf32>
    %98 = vector.shape_cast %97 : vector<128xf32> to vector<128x1xf32>
    %99 = tpu.reciprocal %98 {approx = true} : vector<128x1xf32> -> vector<128x1xf32>
    %100 = vector.broadcast %99 : vector<128x1xf32> to vector<128x128xf32>
    %101 = arith.mulf %96, %100 : vector<128x128xf32>
    %c0_i32_36 = arith.constant 0 : i32
    %102 = arith.sitofp %c0_i32_36 : i32 to f32
    %103 = vector.shape_cast %85 : vector<32x1xi1> to vector<32x1xi1>
    %104 = vector.broadcast %103 : vector<32x1xi1> to vector<32x128xi1>
    %105 = vector.broadcast %102 : f32 to vector<32x128xf32>
    %106 = arith.select %104, %50, %105 : vector<32x128xi1>, vector<32x128xf32>
    "tpu.trace_start"() <{level = 10 : i32, message = "cm,lm->cl"}> : () -> ()
    %cst_37 = arith.constant dense<0.000000e+00> : vector<32x128xf32>
    %107 = tpu.matmul %106, %101, %cst_37 {dimension_numbers = #tpu.dot_dimension_numbers<[1], [1], [0], [0], [0, 0, 1, 0], [], []>} : vector<32x128xf32>, vector<128x128xf32>, vector<32x128xf32> -> vector<32x128xf32>
    "tpu.trace_stop"() : () -> ()
    %108 = arith.addf %80, %107 : vector<32x128xf32>
    %c8_i32_38 = arith.constant 8 : i32
    %109 = vector.broadcast %c8_i32_38 : i32 to vector<32x1xi32>
    %110 = arith.cmpi sge, %19, %109 : vector<32x1xi32>
    %c12_i32 = arith.constant 12 : i32
    %111 = vector.broadcast %c12_i32 : i32 to vector<32x1xi32>
    %112 = arith.cmpi slt, %19, %111 : vector<32x1xi32>
    %113 = arith.andi %110, %112 : vector<32x1xi1>
    %c0_i32_39 = arith.constant 0 : i32
    %114 = arith.sitofp %c0_i32_39 : i32 to f32
    %115 = vector.shape_cast %113 : vector<32x1xi1> to vector<32x1xi1>
    %116 = vector.broadcast %115 : vector<32x1xi1> to vector<32x128xi1>
    %117 = vector.broadcast %114 : f32 to vector<32x128xf32>
    %118 = arith.select %116, %49, %117 : vector<32x128xi1>, vector<32x128xf32>
    %cst_40 = arith.constant dense<0.000000e+00> : vector<128x128xf32>
    %119 = tpu.matmul %51, %118, %cst_40 {dimension_numbers = #tpu.dot_dimension_numbers<[1], [0], [0], [1], [0, 0, 1, 1], [], []>} : vector<128x32xf32>, vector<32x128xf32>, vector<128x128xf32> -> vector<128x128xf32>
    %cst_41 = arith.constant dense<0xFF800000> : vector<128xf32>
    %120 = vector.multi_reduction <maximumf>, %119, %cst_41 [1] : vector<128x128xf32> to vector<128xf32>
    %121 = vector.shape_cast %120 : vector<128xf32> to vector<128x1xf32>
    %122 = vector.broadcast %121 : vector<128x1xf32> to vector<128x128xf32>
    %123 = arith.subf %119, %122 : vector<128x128xf32>
    %124 = math.exp %123 : vector<128x128xf32>
    %cst_42 = arith.constant dense<0.000000e+00> : vector<128xf32>
    %125 = vector.multi_reduction <add>, %124, %cst_42 [1] : vector<128x128xf32> to vector<128xf32>
    %126 = vector.shape_cast %125 : vector<128xf32> to vector<128x1xf32>
    %127 = tpu.reciprocal %126 {approx = true} : vector<128x1xf32> -> vector<128x1xf32>
    %128 = vector.broadcast %127 : vector<128x1xf32> to vector<128x128xf32>
    %129 = arith.mulf %124, %128 : vector<128x128xf32>
    %c0_i32_43 = arith.constant 0 : i32
    %130 = arith.sitofp %c0_i32_43 : i32 to f32
    %131 = vector.shape_cast %113 : vector<32x1xi1> to vector<32x1xi1>
    %132 = vector.broadcast %131 : vector<32x1xi1> to vector<32x128xi1>
    %133 = vector.broadcast %130 : f32 to vector<32x128xf32>
    %134 = arith.select %132, %50, %133 : vector<32x128xi1>, vector<32x128xf32>
    "tpu.trace_start"() <{level = 10 : i32, message = "cm,lm->cl"}> : () -> ()
    %cst_44 = arith.constant dense<0.000000e+00> : vector<32x128xf32>
    %135 = tpu.matmul %134, %129, %cst_44 {dimension_numbers = #tpu.dot_dimension_numbers<[1], [1], [0], [0], [0, 0, 1, 0], [], []>} : vector<32x128xf32>, vector<128x128xf32>, vector<32x128xf32> -> vector<32x128xf32>
    "tpu.trace_stop"() : () -> ()
    %136 = arith.addf %108, %135 : vector<32x128xf32>
    %c12_i32_45 = arith.constant 12 : i32
    %137 = vector.broadcast %c12_i32_45 : i32 to vector<32x1xi32>
    %138 = arith.cmpi sge, %19, %137 : vector<32x1xi32>
    %c16_i32 = arith.constant 16 : i32
    %139 = vector.broadcast %c16_i32 : i32 to vector<32x1xi32>
    %140 = arith.cmpi slt, %19, %139 : vector<32x1xi32>
    %141 = arith.andi %138, %140 : vector<32x1xi1>
    %c0_i32_46 = arith.constant 0 : i32
    %142 = arith.sitofp %c0_i32_46 : i32 to f32
    %143 = vector.shape_cast %141 : vector<32x1xi1> to vector<32x1xi1>
    %144 = vector.broadcast %143 : vector<32x1xi1> to vector<32x128xi1>
    %145 = vector.broadcast %142 : f32 to vector<32x128xf32>
    %146 = arith.select %144, %49, %145 : vector<32x128xi1>, vector<32x128xf32>
    %cst_47 = arith.constant dense<0.000000e+00> : vector<128x128xf32>
    %147 = tpu.matmul %51, %146, %cst_47 {dimension_numbers = #tpu.dot_dimension_numbers<[1], [0], [0], [1], [0, 0, 1, 1], [], []>} : vector<128x32xf32>, vector<32x128xf32>, vector<128x128xf32> -> vector<128x128xf32>
    %cst_48 = arith.constant dense<0xFF800000> : vector<128xf32>
    %148 = vector.multi_reduction <maximumf>, %147, %cst_48 [1] : vector<128x128xf32> to vector<128xf32>
    %149 = vector.shape_cast %148 : vector<128xf32> to vector<128x1xf32>
    %150 = vector.broadcast %149 : vector<128x1xf32> to vector<128x128xf32>
    %151 = arith.subf %147, %150 : vector<128x128xf32>
    %152 = math.exp %151 : vector<128x128xf32>
    %cst_49 = arith.constant dense<0.000000e+00> : vector<128xf32>
    %153 = vector.multi_reduction <add>, %152, %cst_49 [1] : vector<128x128xf32> to vector<128xf32>
    %154 = vector.shape_cast %153 : vector<128xf32> to vector<128x1xf32>
    %155 = tpu.reciprocal %154 {approx = true} : vector<128x1xf32> -> vector<128x1xf32>
    %156 = vector.broadcast %155 : vector<128x1xf32> to vector<128x128xf32>
    %157 = arith.mulf %152, %156 : vector<128x128xf32>
    %c0_i32_50 = arith.constant 0 : i32
    %158 = arith.sitofp %c0_i32_50 : i32 to f32
    %159 = vector.shape_cast %141 : vector<32x1xi1> to vector<32x1xi1>
    %160 = vector.broadcast %159 : vector<32x1xi1> to vector<32x128xi1>
    %161 = vector.broadcast %158 : f32 to vector<32x128xf32>
    %162 = arith.select %160, %50, %161 : vector<32x128xi1>, vector<32x128xf32>
    "tpu.trace_start"() <{level = 10 : i32, message = "cm,lm->cl"}> : () -> ()
    %cst_51 = arith.constant dense<0.000000e+00> : vector<32x128xf32>
    %163 = tpu.matmul %162, %157, %cst_51 {dimension_numbers = #tpu.dot_dimension_numbers<[1], [1], [0], [0], [0, 0, 1, 0], [], []>} : vector<32x128xf32>, vector<128x128xf32>, vector<32x128xf32> -> vector<32x128xf32>
    "tpu.trace_stop"() : () -> ()
    %164 = arith.addf %136, %163 : vector<32x128xf32>
    %c16_i32_52 = arith.constant 16 : i32
    %165 = vector.broadcast %c16_i32_52 : i32 to vector<32x1xi32>
    %166 = arith.cmpi sge, %19, %165 : vector<32x1xi32>
    %c20_i32 = arith.constant 20 : i32
    %167 = vector.broadcast %c20_i32 : i32 to vector<32x1xi32>
    %168 = arith.cmpi slt, %19, %167 : vector<32x1xi32>
    %169 = arith.andi %166, %168 : vector<32x1xi1>
    %c0_i32_53 = arith.constant 0 : i32
    %170 = arith.sitofp %c0_i32_53 : i32 to f32
    %171 = vector.shape_cast %169 : vector<32x1xi1> to vector<32x1xi1>
    %172 = vector.broadcast %171 : vector<32x1xi1> to vector<32x128xi1>
    %173 = vector.broadcast %170 : f32 to vector<32x128xf32>
    %174 = arith.select %172, %49, %173 : vector<32x128xi1>, vector<32x128xf32>
    %cst_54 = arith.constant dense<0.000000e+00> : vector<128x128xf32>
    %175 = tpu.matmul %51, %174, %cst_54 {dimension_numbers = #tpu.dot_dimension_numbers<[1], [0], [0], [1], [0, 0, 1, 1], [], []>} : vector<128x32xf32>, vector<32x128xf32>, vector<128x128xf32> -> vector<128x128xf32>
    %cst_55 = arith.constant dense<0xFF800000> : vector<128xf32>
    %176 = vector.multi_reduction <maximumf>, %175, %cst_55 [1] : vector<128x128xf32> to vector<128xf32>
    %177 = vector.shape_cast %176 : vector<128xf32> to vector<128x1xf32>
    %178 = vector.broadcast %177 : vector<128x1xf32> to vector<128x128xf32>
    %179 = arith.subf %175, %178 : vector<128x128xf32>
    %180 = math.exp %179 : vector<128x128xf32>
    %cst_56 = arith.constant dense<0.000000e+00> : vector<128xf32>
    %181 = vector.multi_reduction <add>, %180, %cst_56 [1] : vector<128x128xf32> to vector<128xf32>
    %182 = vector.shape_cast %181 : vector<128xf32> to vector<128x1xf32>
    %183 = tpu.reciprocal %182 {approx = true} : vector<128x1xf32> -> vector<128x1xf32>
    %184 = vector.broadcast %183 : vector<128x1xf32> to vector<128x128xf32>
    %185 = arith.mulf %180, %184 : vector<128x128xf32>
    %c0_i32_57 = arith.constant 0 : i32
    %186 = arith.sitofp %c0_i32_57 : i32 to f32
    %187 = vector.shape_cast %169 : vector<32x1xi1> to vector<32x1xi1>
    %188 = vector.broadcast %187 : vector<32x1xi1> to vector<32x128xi1>
    %189 = vector.broadcast %186 : f32 to vector<32x128xf32>
    %190 = arith.select %188, %50, %189 : vector<32x128xi1>, vector<32x128xf32>
    "tpu.trace_start"() <{level = 10 : i32, message = "cm,lm->cl"}> : () -> ()
    %cst_58 = arith.constant dense<0.000000e+00> : vector<32x128xf32>
    %191 = tpu.matmul %190, %185, %cst_58 {dimension_numbers = #tpu.dot_dimension_numbers<[1], [1], [0], [0], [0, 0, 1, 0], [], []>} : vector<32x128xf32>, vector<128x128xf32>, vector<32x128xf32> -> vector<32x128xf32>
    "tpu.trace_stop"() : () -> ()
    %192 = arith.addf %164, %191 : vector<32x128xf32>
    %c20_i32_59 = arith.constant 20 : i32
    %193 = vector.broadcast %c20_i32_59 : i32 to vector<32x1xi32>
    %194 = arith.cmpi sge, %19, %193 : vector<32x1xi32>
    %c24_i32 = arith.constant 24 : i32
    %195 = vector.broadcast %c24_i32 : i32 to vector<32x1xi32>
    %196 = arith.cmpi slt, %19, %195 : vector<32x1xi32>
    %197 = arith.andi %194, %196 : vector<32x1xi1>
    %c0_i32_60 = arith.constant 0 : i32
    %198 = arith.sitofp %c0_i32_60 : i32 to f32
    %199 = vector.shape_cast %197 : vector<32x1xi1> to vector<32x1xi1>
    %200 = vector.broadcast %199 : vector<32x1xi1> to vector<32x128xi1>
    %201 = vector.broadcast %198 : f32 to vector<32x128xf32>
    %202 = arith.select %200, %49, %201 : vector<32x128xi1>, vector<32x128xf32>
    %cst_61 = arith.constant dense<0.000000e+00> : vector<128x128xf32>
    %203 = tpu.matmul %51, %202, %cst_61 {dimension_numbers = #tpu.dot_dimension_numbers<[1], [0], [0], [1], [0, 0, 1, 1], [], []>} : vector<128x32xf32>, vector<32x128xf32>, vector<128x128xf32> -> vector<128x128xf32>
    %cst_62 = arith.constant dense<0xFF800000> : vector<128xf32>
    %204 = vector.multi_reduction <maximumf>, %203, %cst_62 [1] : vector<128x128xf32> to vector<128xf32>
    %205 = vector.shape_cast %204 : vector<128xf32> to vector<128x1xf32>
    %206 = vector.broadcast %205 : vector<128x1xf32> to vector<128x128xf32>
    %207 = arith.subf %203, %206 : vector<128x128xf32>
    %208 = math.exp %207 : vector<128x128xf32>
    %cst_63 = arith.constant dense<0.000000e+00> : vector<128xf32>
    %209 = vector.multi_reduction <add>, %208, %cst_63 [1] : vector<128x128xf32> to vector<128xf32>
    %210 = vector.shape_cast %209 : vector<128xf32> to vector<128x1xf32>
    %211 = tpu.reciprocal %210 {approx = true} : vector<128x1xf32> -> vector<128x1xf32>
    %212 = vector.broadcast %211 : vector<128x1xf32> to vector<128x128xf32>
    %213 = arith.mulf %208, %212 : vector<128x128xf32>
    %c0_i32_64 = arith.constant 0 : i32
    %214 = arith.sitofp %c0_i32_64 : i32 to f32
    %215 = vector.shape_cast %197 : vector<32x1xi1> to vector<32x1xi1>
    %216 = vector.broadcast %215 : vector<32x1xi1> to vector<32x128xi1>
    %217 = vector.broadcast %214 : f32 to vector<32x128xf32>
    %218 = arith.select %216, %50, %217 : vector<32x128xi1>, vector<32x128xf32>
    "tpu.trace_start"() <{level = 10 : i32, message = "cm,lm->cl"}> : () -> ()
    %cst_65 = arith.constant dense<0.000000e+00> : vector<32x128xf32>
    %219 = tpu.matmul %218, %213, %cst_65 {dimension_numbers = #tpu.dot_dimension_numbers<[1], [1], [0], [0], [0, 0, 1, 0], [], []>} : vector<32x128xf32>, vector<128x128xf32>, vector<32x128xf32> -> vector<32x128xf32>
    "tpu.trace_stop"() : () -> ()
    %220 = arith.addf %192, %219 : vector<32x128xf32>
    %c24_i32_66 = arith.constant 24 : i32
    %221 = vector.broadcast %c24_i32_66 : i32 to vector<32x1xi32>
    %222 = arith.cmpi sge, %19, %221 : vector<32x1xi32>
    %c28_i32 = arith.constant 28 : i32
    %223 = vector.broadcast %c28_i32 : i32 to vector<32x1xi32>
    %224 = arith.cmpi slt, %19, %223 : vector<32x1xi32>
    %225 = arith.andi %222, %224 : vector<32x1xi1>
    %c0_i32_67 = arith.constant 0 : i32
    %226 = arith.sitofp %c0_i32_67 : i32 to f32
    %227 = vector.shape_cast %225 : vector<32x1xi1> to vector<32x1xi1>
    %228 = vector.broadcast %227 : vector<32x1xi1> to vector<32x128xi1>
    %229 = vector.broadcast %226 : f32 to vector<32x128xf32>
    %230 = arith.select %228, %49, %229 : vector<32x128xi1>, vector<32x128xf32>
    %cst_68 = arith.constant dense<0.000000e+00> : vector<128x128xf32>
    %231 = tpu.matmul %51, %230, %cst_68 {dimension_numbers = #tpu.dot_dimension_numbers<[1], [0], [0], [1], [0, 0, 1, 1], [], []>} : vector<128x32xf32>, vector<32x128xf32>, vector<128x128xf32> -> vector<128x128xf32>
    %cst_69 = arith.constant dense<0xFF800000> : vector<128xf32>
    %232 = vector.multi_reduction <maximumf>, %231, %cst_69 [1] : vector<128x128xf32> to vector<128xf32>
    %233 = vector.shape_cast %232 : vector<128xf32> to vector<128x1xf32>
    %234 = vector.broadcast %233 : vector<128x1xf32> to vector<128x128xf32>
    %235 = arith.subf %231, %234 : vector<128x128xf32>
    %236 = math.exp %235 : vector<128x128xf32>
    %cst_70 = arith.constant dense<0.000000e+00> : vector<128xf32>
    %237 = vector.multi_reduction <add>, %236, %cst_70 [1] : vector<128x128xf32> to vector<128xf32>
    %238 = vector.shape_cast %237 : vector<128xf32> to vector<128x1xf32>
    %239 = tpu.reciprocal %238 {approx = true} : vector<128x1xf32> -> vector<128x1xf32>
    %240 = vector.broadcast %239 : vector<128x1xf32> to vector<128x128xf32>
    %241 = arith.mulf %236, %240 : vector<128x128xf32>
    %c0_i32_71 = arith.constant 0 : i32
    %242 = arith.sitofp %c0_i32_71 : i32 to f32
    %243 = vector.shape_cast %225 : vector<32x1xi1> to vector<32x1xi1>
    %244 = vector.broadcast %243 : vector<32x1xi1> to vector<32x128xi1>
    %245 = vector.broadcast %242 : f32 to vector<32x128xf32>
    %246 = arith.select %244, %50, %245 : vector<32x128xi1>, vector<32x128xf32>
    "tpu.trace_start"() <{level = 10 : i32, message = "cm,lm->cl"}> : () -> ()
    %cst_72 = arith.constant dense<0.000000e+00> : vector<32x128xf32>
    %247 = tpu.matmul %246, %241, %cst_72 {dimension_numbers = #tpu.dot_dimension_numbers<[1], [1], [0], [0], [0, 0, 1, 0], [], []>} : vector<32x128xf32>, vector<128x128xf32>, vector<32x128xf32> -> vector<32x128xf32>
    "tpu.trace_stop"() : () -> ()
    %248 = arith.addf %220, %247 : vector<32x128xf32>
    %c28_i32_73 = arith.constant 28 : i32
    %249 = vector.broadcast %c28_i32_73 : i32 to vector<32x1xi32>
    %250 = arith.cmpi sge, %19, %249 : vector<32x1xi32>
    %c32_i32 = arith.constant 32 : i32
    %251 = vector.broadcast %c32_i32 : i32 to vector<32x1xi32>
    %252 = arith.cmpi slt, %19, %251 : vector<32x1xi32>
    %253 = arith.andi %250, %252 : vector<32x1xi1>
    %c0_i32_74 = arith.constant 0 : i32
    %254 = arith.sitofp %c0_i32_74 : i32 to f32
    %255 = vector.shape_cast %253 : vector<32x1xi1> to vector<32x1xi1>
    %256 = vector.broadcast %255 : vector<32x1xi1> to vector<32x128xi1>
    %257 = vector.broadcast %254 : f32 to vector<32x128xf32>
    %258 = arith.select %256, %49, %257 : vector<32x128xi1>, vector<32x128xf32>
    %cst_75 = arith.constant dense<0.000000e+00> : vector<128x128xf32>
    %259 = tpu.matmul %51, %258, %cst_75 {dimension_numbers = #tpu.dot_dimension_numbers<[1], [0], [0], [1], [0, 0, 1, 1], [], []>} : vector<128x32xf32>, vector<32x128xf32>, vector<128x128xf32> -> vector<128x128xf32>
    %cst_76 = arith.constant dense<0xFF800000> : vector<128xf32>
    %260 = vector.multi_reduction <maximumf>, %259, %cst_76 [1] : vector<128x128xf32> to vector<128xf32>
    %261 = vector.shape_cast %260 : vector<128xf32> to vector<128x1xf32>
    %262 = vector.broadcast %261 : vector<128x1xf32> to vector<128x128xf32>
    %263 = arith.subf %259, %262 : vector<128x128xf32>
    %264 = math.exp %263 : vector<128x128xf32>
    %cst_77 = arith.constant dense<0.000000e+00> : vector<128xf32>
    %265 = vector.multi_reduction <add>, %264, %cst_77 [1] : vector<128x128xf32> to vector<128xf32>
    %266 = vector.shape_cast %265 : vector<128xf32> to vector<128x1xf32>
    %267 = tpu.reciprocal %266 {approx = true} : vector<128x1xf32> -> vector<128x1xf32>
    %268 = vector.broadcast %267 : vector<128x1xf32> to vector<128x128xf32>
    %269 = arith.mulf %264, %268 : vector<128x128xf32>
    %c0_i32_78 = arith.constant 0 : i32
    %270 = arith.sitofp %c0_i32_78 : i32 to f32
    %271 = vector.shape_cast %253 : vector<32x1xi1> to vector<32x1xi1>
    %272 = vector.broadcast %271 : vector<32x1xi1> to vector<32x128xi1>
    %273 = vector.broadcast %270 : f32 to vector<32x128xf32>
    %274 = arith.select %272, %50, %273 : vector<32x128xi1>, vector<32x128xf32>
    "tpu.trace_start"() <{level = 10 : i32, message = "cm,lm->cl"}> : () -> ()
    %cst_79 = arith.constant dense<0.000000e+00> : vector<32x128xf32>
    %275 = tpu.matmul %274, %269, %cst_79 {dimension_numbers = #tpu.dot_dimension_numbers<[1], [1], [0], [0], [0, 0, 1, 0], [], []>} : vector<32x128xf32>, vector<128x128xf32>, vector<32x128xf32> -> vector<32x128xf32>
    "tpu.trace_stop"() : () -> ()
    %276 = arith.addf %248, %275 : vector<32x128xf32>
    %cst_80 = arith.constant dense<0.000000e+00> : vector<32x128xf32>
    %277 = tpu.matmul %14, %276, %cst_80 {dimension_numbers = #tpu.dot_dimension_numbers<[1], [0], [0], [1], [0, 0, 1, 1], [], []>} : vector<32x32xf32>, vector<32x128xf32>, vector<32x128xf32> -> vector<32x128xf32>
    %278 = vector.broadcast %9 : vector<32x1xf32> to vector<32x128xf32>
    %279 = arith.addf %277, %278 : vector<32x128xf32>
    %cst_81 = arith.constant dense<0.000000e+00> : vector<128xf32>
    %280 = vector.multi_reduction <add>, %279, %cst_81 [0] : vector<32x128xf32> to vector<128xf32>
    %281 = vector.shape_cast %280 : vector<128xf32> to vector<1x128xf32>
    %cst_82 = arith.constant 3.200000e+01 : f32
    %282 = vector.broadcast %cst_82 : f32 to vector<1x128xf32>
    %283 = arith.divf %281, %282 : vector<1x128xf32>
    %284 = vector.broadcast %283 : vector<1x128xf32> to vector<32x128xf32>
    %285 = arith.subf %279, %284 : vector<32x128xf32>
    %286 = arith.mulf %285, %285 : vector<32x128xf32>
    %cst_83 = arith.constant dense<0.000000e+00> : vector<128xf32>
    %287 = vector.multi_reduction <add>, %286, %cst_83 [0] : vector<32x128xf32> to vector<128xf32>
    %288 = vector.shape_cast %287 : vector<128xf32> to vector<1x128xf32>
    %cst_84 = arith.constant 3.200000e+01 : f32
    %289 = vector.broadcast %cst_84 : f32 to vector<1x128xf32>
    %290 = arith.divf %288, %289 : vector<1x128xf32>
    %291 = vector.broadcast %283 : vector<1x128xf32> to vector<32x128xf32>
    %292 = arith.subf %279, %291 : vector<32x128xf32>
    %cst_85 = arith.constant 9.99999974E-6 : f32
    %293 = vector.broadcast %cst_85 : f32 to vector<1x128xf32>
    %294 = arith.addf %290, %293 : vector<1x128xf32>
    %295 = math.rsqrt %294 : vector<1x128xf32>
    %296 = vector.broadcast %295 : vector<1x128xf32> to vector<32x128xf32>
    %297 = arith.mulf %292, %296 : vector<32x128xf32>
    %298 = vector.broadcast %3 : vector<32x1xf32> to vector<32x128xf32>
    %299 = arith.mulf %297, %298 : vector<32x128xf32>
    %300 = vector.broadcast %4 : vector<32x1xf32> to vector<32x128xf32>
    %301 = arith.addf %299, %300 : vector<32x128xf32>
    %302 = arith.addf %301, %21 : vector<32x128xf32>
    %303 = vector.shape_cast %302 : vector<32x128xf32> to vector<1x32x128xf32>
    %cst_86 = arith.constant dense<0.000000e+00> : vector<1xf32>
    %304 = vector.multi_reduction <add>, %303, %cst_86 [1, 2] : vector<1x32x128xf32> to vector<1xf32>
    %305 = vector.shape_cast %304 : vector<1xf32> to vector<1x1x1xf32>
    %306 = vector.extract %305[0, 0, 0] : f32 from vector<1x1x1xf32>
    %307 = vector.broadcast %306 : f32 to vector<1x1xf32>
    %cst_87 = arith.constant 4.096000e+03 : f32
    %308 = vector.broadcast %cst_87 : f32 to vector<1x1xf32>
    %309 = arith.divf %307, %308 : vector<1x1xf32>
    %310 = vector.broadcast %309 : vector<1x1xf32> to vector<32x128xf32>
    %311 = arith.subf %302, %310 : vector<32x128xf32>
    %312 = arith.mulf %311, %311 : vector<32x128xf32>
    %313 = vector.shape_cast %312 : vector<32x128xf32> to vector<1x32x128xf32>
    %cst_88 = arith.constant dense<0.000000e+00> : vector<1xf32>
    %314 = vector.multi_reduction <add>, %313, %cst_88 [1, 2] : vector<1x32x128xf32> to vector<1xf32>
    %315 = vector.shape_cast %314 : vector<1xf32> to vector<1x1x1xf32>
    %316 = vector.extract %315[0, 0, 0] : f32 from vector<1x1x1xf32>
    %317 = vector.broadcast %316 : f32 to vector<1x1xf32>
    %cst_89 = arith.constant 4.096000e+03 : f32
    %318 = vector.broadcast %cst_89 : f32 to vector<1x1xf32>
    %319 = arith.divf %317, %318 : vector<1x1xf32>
    %320 = vector.broadcast %309 : vector<1x1xf32> to vector<32x128xf32>
    %321 = arith.subf %302, %320 : vector<32x128xf32>
    %cst_90 = arith.constant 9.99999974E-6 : f32
    %322 = vector.broadcast %cst_90 : f32 to vector<1x1xf32>
    %323 = arith.addf %319, %322 : vector<1x1xf32>
    %324 = math.rsqrt %323 : vector<1x1xf32>
    %325 = vector.broadcast %324 : vector<1x1xf32> to vector<32x128xf32>
    %326 = arith.mulf %321, %325 : vector<32x128xf32>
    %327 = vector.broadcast %5 : vector<32x1xf32> to vector<32x128xf32>
    %328 = arith.mulf %326, %327 : vector<32x128xf32>
    %329 = vector.broadcast %6 : vector<32x1xf32> to vector<32x128xf32>
    %330 = arith.addf %328, %329 : vector<32x128xf32>
    %cst_91 = arith.constant dense<0.000000e+00> : vector<64x128xf32>
    %331 = tpu.matmul %15, %330, %cst_91 {dimension_numbers = #tpu.dot_dimension_numbers<[1], [0], [0], [1], [0, 0, 1, 1], [], []>} : vector<64x32xf32>, vector<32x128xf32>, vector<64x128xf32> -> vector<64x128xf32>
    %332 = vector.broadcast %17 : vector<64x1xf32> to vector<64x128xf32>
    %333 = arith.addf %331, %332 : vector<64x128xf32>
    %cst_92 = arith.constant 0.000000e+00 : f32
    %334 = vector.broadcast %cst_92 : f32 to vector<64x128xf32>
    %335 = arith.cmpf oge, %333, %334 : vector<64x128xf32>
    %336 = vector.broadcast %18 : f32 to vector<64x128xf32>
    %337 = arith.mulf %336, %333 : vector<64x128xf32>
    %338 = arith.select %335, %333, %337 : vector<64x128xi1>, vector<64x128xf32>
    %cst_93 = arith.constant dense<0.000000e+00> : vector<32x128xf32>
    %339 = tpu.matmul %16, %338, %cst_93 {dimension_numbers = #tpu.dot_dimension_numbers<[1], [0], [0], [1], [0, 0, 1, 1], [], []>} : vector<32x64xf32>, vector<64x128xf32>, vector<32x128xf32> -> vector<32x128xf32>
    %340 = vector.broadcast %10 : vector<32x1xf32> to vector<32x128xf32>
    %341 = arith.addf %339, %340 : vector<32x128xf32>
    %342 = vector.shape_cast %341 : vector<32x128xf32> to vector<1x32x128xf32>
    %cst_94 = arith.constant dense<0.000000e+00> : vector<1xf32>
    %343 = vector.multi_reduction <add>, %342, %cst_94 [1, 2] : vector<1x32x128xf32> to vector<1xf32>
    %344 = vector.shape_cast %343 : vector<1xf32> to vector<1x1x1xf32>
    %345 = vector.extract %344[0, 0, 0] : f32 from vector<1x1x1xf32>
    %346 = vector.broadcast %345 : f32 to vector<1x1xf32>
    %cst_95 = arith.constant 4.096000e+03 : f32
    %347 = vector.broadcast %cst_95 : f32 to vector<1x1xf32>
    %348 = arith.divf %346, %347 : vector<1x1xf32>
    %349 = vector.broadcast %348 : vector<1x1xf32> to vector<32x128xf32>
    %350 = arith.subf %341, %349 : vector<32x128xf32>
    %351 = arith.mulf %350, %350 : vector<32x128xf32>
    %352 = vector.shape_cast %351 : vector<32x128xf32> to vector<1x32x128xf32>
    %cst_96 = arith.constant dense<0.000000e+00> : vector<1xf32>
    %353 = vector.multi_reduction <add>, %352, %cst_96 [1, 2] : vector<1x32x128xf32> to vector<1xf32>
    %354 = vector.shape_cast %353 : vector<1xf32> to vector<1x1x1xf32>
    %355 = vector.extract %354[0, 0, 0] : f32 from vector<1x1x1xf32>
    %356 = vector.broadcast %355 : f32 to vector<1x1xf32>
    %cst_97 = arith.constant 4.096000e+03 : f32
    %357 = vector.broadcast %cst_97 : f32 to vector<1x1xf32>
    %358 = arith.divf %356, %357 : vector<1x1xf32>
    %359 = vector.broadcast %348 : vector<1x1xf32> to vector<32x128xf32>
    %360 = arith.subf %341, %359 : vector<32x128xf32>
    %cst_98 = arith.constant 9.99999974E-6 : f32
    %361 = vector.broadcast %cst_98 : f32 to vector<1x1xf32>
    %362 = arith.addf %358, %361 : vector<1x1xf32>
    %363 = math.rsqrt %362 : vector<1x1xf32>
    %364 = vector.broadcast %363 : vector<1x1xf32> to vector<32x128xf32>
    %365 = arith.mulf %360, %364 : vector<32x128xf32>
    %366 = vector.broadcast %7 : vector<32x1xf32> to vector<32x128xf32>
    %367 = arith.mulf %365, %366 : vector<32x128xf32>
    %368 = vector.broadcast %8 : vector<32x1xf32> to vector<32x128xf32>
    %369 = arith.addf %367, %368 : vector<32x128xf32>
    %370 = arith.addf %369, %302 : vector<32x128xf32>
    %371 = arith.addf %370, %21 : vector<32x128xf32>
    %c0_99 = arith.constant 0 : index
    %c0_100 = arith.constant 0 : index
    %c0_101 = arith.constant 0 : index
    %372 = vector.load %arg11[%c0_99, %c0_100, %c0_101] : memref<2x32x128xf32, #tpu.memory_space<vmem>>, vector<1x32x128xf32>
    %373 = vector.shape_cast %372 : vector<1x32x128xf32> to vector<32x128xf32>
    %374 = vector.shape_cast %371 : vector<32x128xf32> to vector<1x32x128xf32>
    tpu.vector_store %arg11[%c0_99, %c0_100, %c0_101], %374 {strides = array<i32>} : memref<2x32x128xf32, #tpu.memory_space<vmem>>, vector<1x32x128xf32>,
    %c1 = arith.constant 1 : index
    %c0_102 = arith.constant 0 : index
    %c0_103 = arith.constant 0 : index
    %375 = vector.load %arg1[%c1, %c0_102, %c0_103] : memref<2x32x128xf32, #tpu.memory_space<vmem>>, vector<1x32x128xf32>
    %376 = vector.shape_cast %375 : vector<1x32x128xf32> to vector<32x128xf32>
    %cst_104 = arith.constant dense<0.000000e+00> : vector<128xf32>
    %377 = vector.multi_reduction <add>, %376, %cst_104 [0] : vector<32x128xf32> to vector<128xf32>
    %378 = vector.shape_cast %377 : vector<128xf32> to vector<1x128xf32>
    %cst_105 = arith.constant 3.200000e+01 : f32
    %379 = vector.broadcast %cst_105 : f32 to vector<1x128xf32>
    %380 = arith.divf %378, %379 : vector<1x128xf32>
    %381 = vector.broadcast %380 : vector<1x128xf32> to vector<32x128xf32>
    %382 = arith.subf %376, %381 : vector<32x128xf32>
    %383 = arith.mulf %382, %382 : vector<32x128xf32>
    %cst_106 = arith.constant dense<0.000000e+00> : vector<128xf32>
    %384 = vector.multi_reduction <add>, %383, %cst_106 [0] : vector<32x128xf32> to vector<128xf32>
    %385 = vector.shape_cast %384 : vector<128xf32> to vector<1x128xf32>
    %cst_107 = arith.constant 3.200000e+01 : f32
    %386 = vector.broadcast %cst_107 : f32 to vector<1x128xf32>
    %387 = arith.divf %385, %386 : vector<1x128xf32>
    %388 = vector.broadcast %380 : vector<1x128xf32> to vector<32x128xf32>
    %389 = arith.subf %376, %388 : vector<32x128xf32>
    %cst_108 = arith.constant 9.99999974E-6 : f32
    %390 = vector.broadcast %cst_108 : f32 to vector<1x128xf32>
    %391 = arith.addf %387, %390 : vector<1x128xf32>
    %392 = math.rsqrt %391 : vector<1x128xf32>
    %393 = vector.broadcast %392 : vector<1x128xf32> to vector<32x128xf32>
    %394 = arith.mulf %389, %393 : vector<32x128xf32>
    %395 = vector.broadcast %1 : vector<32x1xf32> to vector<32x128xf32>
    %396 = arith.mulf %394, %395 : vector<32x128xf32>
    %397 = vector.broadcast %2 : vector<32x1xf32> to vector<32x128xf32>
    %398 = arith.addf %396, %397 : vector<32x128xf32>
    %399 = arith.addf %398, %11 : vector<32x128xf32>
    %cst_109 = arith.constant dense<0.000000e+00> : vector<96x128xf32>
    %400 = tpu.matmul %12, %399, %cst_109 {dimension_numbers = #tpu.dot_dimension_numbers<[1], [0], [0], [1], [0, 0, 1, 1], [], []>} : vector<96x32xf32>, vector<32x128xf32>, vector<96x128xf32> -> vector<96x128xf32>
    %401 = vector.broadcast %13 : vector<96x1xf32> to vector<96x128xf32>
    %402 = arith.addf %400, %401 : vector<96x128xf32>
    %403 = vector.extract_strided_slice %402 {offsets = [0, 0], sizes = [32, 128], strides = [1, 1]} : vector<96x128xf32> to vector<32x128xf32>
    %404 = vector.extract_strided_slice %402 {offsets = [32, 0], sizes = [32, 128], strides = [1, 1]} : vector<96x128xf32> to vector<32x128xf32>
    %405 = vector.extract_strided_slice %402 {offsets = [64, 0], sizes = [32, 128], strides = [1, 1]} : vector<96x128xf32> to vector<32x128xf32>
    %406 = tpu.transpose %403, [1, 0] : vector<32x128xf32> -> vector<128x32xf32>
    %cst_110 = arith.constant 0.000000e+00 : f32
    %407 = vector.broadcast %cst_110 : f32 to vector<32x128xf32>
    %c0_i32_111 = arith.constant 0 : i32
    %408 = vector.broadcast %c0_i32_111 : i32 to vector<32x1xi32>
    %409 = arith.cmpi sge, %19, %408 : vector<32x1xi32>
    %c4_i32_112 = arith.constant 4 : i32
    %410 = vector.broadcast %c4_i32_112 : i32 to vector<32x1xi32>
    %411 = arith.cmpi slt, %19, %410 : vector<32x1xi32>
    %412 = arith.andi %409, %411 : vector<32x1xi1>
    %c0_i32_113 = arith.constant 0 : i32
    %413 = arith.sitofp %c0_i32_113 : i32 to f32
    %414 = vector.shape_cast %412 : vector<32x1xi1> to vector<32x1xi1>
    %415 = vector.broadcast %414 : vector<32x1xi1> to vector<32x128xi1>
    %416 = vector.broadcast %413 : f32 to vector<32x128xf32>
    %417 = arith.select %415, %404, %416 : vector<32x128xi1>, vector<32x128xf32>
    %cst_114 = arith.constant dense<0.000000e+00> : vector<128x128xf32>
    %418 = tpu.matmul %406, %417, %cst_114 {dimension_numbers = #tpu.dot_dimension_numbers<[1], [0], [0], [1], [0, 0, 1, 1], [], []>} : vector<128x32xf32>, vector<32x128xf32>, vector<128x128xf32> -> vector<128x128xf32>
    %cst_115 = arith.constant dense<0xFF800000> : vector<128xf32>
    %419 = vector.multi_reduction <maximumf>, %418, %cst_115 [1] : vector<128x128xf32> to vector<128xf32>
    %420 = vector.shape_cast %419 : vector<128xf32> to vector<128x1xf32>
    %421 = vector.broadcast %420 : vector<128x1xf32> to vector<128x128xf32>
    %422 = arith.subf %418, %421 : vector<128x128xf32>
    %423 = math.exp %422 : vector<128x128xf32>
    %cst_116 = arith.constant dense<0.000000e+00> : vector<128xf32>
    %424 = vector.multi_reduction <add>, %423, %cst_116 [1] : vector<128x128xf32> to vector<128xf32>
    %425 = vector.shape_cast %424 : vector<128xf32> to vector<128x1xf32>
    %426 = tpu.reciprocal %425 {approx = true} : vector<128x1xf32> -> vector<128x1xf32>
    %427 = vector.broadcast %426 : vector<128x1xf32> to vector<128x128xf32>
    %428 = arith.mulf %423, %427 : vector<128x128xf32>
    %c0_i32_117 = arith.constant 0 : i32
    %429 = arith.sitofp %c0_i32_117 : i32 to f32
    %430 = vector.shape_cast %412 : vector<32x1xi1> to vector<32x1xi1>
    %431 = vector.broadcast %430 : vector<32x1xi1> to vector<32x128xi1>
    %432 = vector.broadcast %429 : f32 to vector<32x128xf32>
    %433 = arith.select %431, %405, %432 : vector<32x128xi1>, vector<32x128xf32>
    "tpu.trace_start"() <{level = 10 : i32, message = "cm,lm->cl"}> : () -> ()
    %cst_118 = arith.constant dense<0.000000e+00> : vector<32x128xf32>
    %434 = tpu.matmul %433, %428, %cst_118 {dimension_numbers = #tpu.dot_dimension_numbers<[1], [1], [0], [0], [0, 0, 1, 0], [], []>} : vector<32x128xf32>, vector<128x128xf32>, vector<32x128xf32> -> vector<32x128xf32>
    "tpu.trace_stop"() : () -> ()
    %435 = arith.addf %407, %434 : vector<32x128xf32>
    %c4_i32_119 = arith.constant 4 : i32
    %436 = vector.broadcast %c4_i32_119 : i32 to vector<32x1xi32>
    %437 = arith.cmpi sge, %19, %436 : vector<32x1xi32>
    %c8_i32_120 = arith.constant 8 : i32
    %438 = vector.broadcast %c8_i32_120 : i32 to vector<32x1xi32>
    %439 = arith.cmpi slt, %19, %438 : vector<32x1xi32>
    %440 = arith.andi %437, %439 : vector<32x1xi1>
    %c0_i32_121 = arith.constant 0 : i32
    %441 = arith.sitofp %c0_i32_121 : i32 to f32
    %442 = vector.shape_cast %440 : vector<32x1xi1> to vector<32x1xi1>
    %443 = vector.broadcast %442 : vector<32x1xi1> to vector<32x128xi1>
    %444 = vector.broadcast %441 : f32 to vector<32x128xf32>
    %445 = arith.select %443, %404, %444 : vector<32x128xi1>, vector<32x128xf32>
    %cst_122 = arith.constant dense<0.000000e+00> : vector<128x128xf32>
    %446 = tpu.matmul %406, %445, %cst_122 {dimension_numbers = #tpu.dot_dimension_numbers<[1], [0], [0], [1], [0, 0, 1, 1], [], []>} : vector<128x32xf32>, vector<32x128xf32>, vector<128x128xf32> -> vector<128x128xf32>
    %cst_123 = arith.constant dense<0xFF800000> : vector<128xf32>
    %447 = vector.multi_reduction <maximumf>, %446, %cst_123 [1] : vector<128x128xf32> to vector<128xf32>
    %448 = vector.shape_cast %447 : vector<128xf32> to vector<128x1xf32>
    %449 = vector.broadcast %448 : vector<128x1xf32> to vector<128x128xf32>
    %450 = arith.subf %446, %449 : vector<128x128xf32>
    %451 = math.exp %450 : vector<128x128xf32>
    %cst_124 = arith.constant dense<0.000000e+00> : vector<128xf32>
    %452 = vector.multi_reduction <add>, %451, %cst_124 [1] : vector<128x128xf32> to vector<128xf32>
    %453 = vector.shape_cast %452 : vector<128xf32> to vector<128x1xf32>
    %454 = tpu.reciprocal %453 {approx = true} : vector<128x1xf32> -> vector<128x1xf32>
    %455 = vector.broadcast %454 : vector<128x1xf32> to vector<128x128xf32>
    %456 = arith.mulf %451, %455 : vector<128x128xf32>
    %c0_i32_125 = arith.constant 0 : i32
    %457 = arith.sitofp %c0_i32_125 : i32 to f32
    %458 = vector.shape_cast %440 : vector<32x1xi1> to vector<32x1xi1>
    %459 = vector.broadcast %458 : vector<32x1xi1> to vector<32x128xi1>
    %460 = vector.broadcast %457 : f32 to vector<32x128xf32>
    %461 = arith.select %459, %405, %460 : vector<32x128xi1>, vector<32x128xf32>
    "tpu.trace_start"() <{level = 10 : i32, message = "cm,lm->cl"}> : () -> ()
    %cst_126 = arith.constant dense<0.000000e+00> : vector<32x128xf32>
    %462 = tpu.matmul %461, %456, %cst_126 {dimension_numbers = #tpu.dot_dimension_numbers<[1], [1], [0], [0], [0, 0, 1, 0], [], []>} : vector<32x128xf32>, vector<128x128xf32>, vector<32x128xf32> -> vector<32x128xf32>
    "tpu.trace_stop"() : () -> ()
    %463 = arith.addf %435, %462 : vector<32x128xf32>
    %c8_i32_127 = arith.constant 8 : i32
    %464 = vector.broadcast %c8_i32_127 : i32 to vector<32x1xi32>
    %465 = arith.cmpi sge, %19, %464 : vector<32x1xi32>
    %c12_i32_128 = arith.constant 12 : i32
    %466 = vector.broadcast %c12_i32_128 : i32 to vector<32x1xi32>
    %467 = arith.cmpi slt, %19, %466 : vector<32x1xi32>
    %468 = arith.andi %465, %467 : vector<32x1xi1>
    %c0_i32_129 = arith.constant 0 : i32
    %469 = arith.sitofp %c0_i32_129 : i32 to f32
    %470 = vector.shape_cast %468 : vector<32x1xi1> to vector<32x1xi1>
    %471 = vector.broadcast %470 : vector<32x1xi1> to vector<32x128xi1>
    %472 = vector.broadcast %469 : f32 to vector<32x128xf32>
    %473 = arith.select %471, %404, %472 : vector<32x128xi1>, vector<32x128xf32>
    %cst_130 = arith.constant dense<0.000000e+00> : vector<128x128xf32>
    %474 = tpu.matmul %406, %473, %cst_130 {dimension_numbers = #tpu.dot_dimension_numbers<[1], [0], [0], [1], [0, 0, 1, 1], [], []>} : vector<128x32xf32>, vector<32x128xf32>, vector<128x128xf32> -> vector<128x128xf32>
    %cst_131 = arith.constant dense<0xFF800000> : vector<128xf32>
    %475 = vector.multi_reduction <maximumf>, %474, %cst_131 [1] : vector<128x128xf32> to vector<128xf32>
    %476 = vector.shape_cast %475 : vector<128xf32> to vector<128x1xf32>
    %477 = vector.broadcast %476 : vector<128x1xf32> to vector<128x128xf32>
    %478 = arith.subf %474, %477 : vector<128x128xf32>
    %479 = math.exp %478 : vector<128x128xf32>
    %cst_132 = arith.constant dense<0.000000e+00> : vector<128xf32>
    %480 = vector.multi_reduction <add>, %479, %cst_132 [1] : vector<128x128xf32> to vector<128xf32>
    %481 = vector.shape_cast %480 : vector<128xf32> to vector<128x1xf32>
    %482 = tpu.reciprocal %481 {approx = true} : vector<128x1xf32> -> vector<128x1xf32>
    %483 = vector.broadcast %482 : vector<128x1xf32> to vector<128x128xf32>
    %484 = arith.mulf %479, %483 : vector<128x128xf32>
    %c0_i32_133 = arith.constant 0 : i32
    %485 = arith.sitofp %c0_i32_133 : i32 to f32
    %486 = vector.shape_cast %468 : vector<32x1xi1> to vector<32x1xi1>
    %487 = vector.broadcast %486 : vector<32x1xi1> to vector<32x128xi1>
    %488 = vector.broadcast %485 : f32 to vector<32x128xf32>
    %489 = arith.select %487, %405, %488 : vector<32x128xi1>, vector<32x128xf32>
    "tpu.trace_start"() <{level = 10 : i32, message = "cm,lm->cl"}> : () -> ()
    %cst_134 = arith.constant dense<0.000000e+00> : vector<32x128xf32>
    %490 = tpu.matmul %489, %484, %cst_134 {dimension_numbers = #tpu.dot_dimension_numbers<[1], [1], [0], [0], [0, 0, 1, 0], [], []>} : vector<32x128xf32>, vector<128x128xf32>, vector<32x128xf32> -> vector<32x128xf32>
    "tpu.trace_stop"() : () -> ()
    %491 = arith.addf %463, %490 : vector<32x128xf32>
    %c12_i32_135 = arith.constant 12 : i32
    %492 = vector.broadcast %c12_i32_135 : i32 to vector<32x1xi32>
    %493 = arith.cmpi sge, %19, %492 : vector<32x1xi32>
    %c16_i32_136 = arith.constant 16 : i32
    %494 = vector.broadcast %c16_i32_136 : i32 to vector<32x1xi32>
    %495 = arith.cmpi slt, %19, %494 : vector<32x1xi32>
    %496 = arith.andi %493, %495 : vector<32x1xi1>
    %c0_i32_137 = arith.constant 0 : i32
    %497 = arith.sitofp %c0_i32_137 : i32 to f32
    %498 = vector.shape_cast %496 : vector<32x1xi1> to vector<32x1xi1>
    %499 = vector.broadcast %498 : vector<32x1xi1> to vector<32x128xi1>
    %500 = vector.broadcast %497 : f32 to vector<32x128xf32>
    %501 = arith.select %499, %404, %500 : vector<32x128xi1>, vector<32x128xf32>
    %cst_138 = arith.constant dense<0.000000e+00> : vector<128x128xf32>
    %502 = tpu.matmul %406, %501, %cst_138 {dimension_numbers = #tpu.dot_dimension_numbers<[1], [0], [0], [1], [0, 0, 1, 1], [], []>} : vector<128x32xf32>, vector<32x128xf32>, vector<128x128xf32> -> vector<128x128xf32>
    %cst_139 = arith.constant dense<0xFF800000> : vector<128xf32>
    %503 = vector.multi_reduction <maximumf>, %502, %cst_139 [1] : vector<128x128xf32> to vector<128xf32>
    %504 = vector.shape_cast %503 : vector<128xf32> to vector<128x1xf32>
    %505 = vector.broadcast %504 : vector<128x1xf32> to vector<128x128xf32>
    %506 = arith.subf %502, %505 : vector<128x128xf32>
    %507 = math.exp %506 : vector<128x128xf32>
    %cst_140 = arith.constant dense<0.000000e+00> : vector<128xf32>
    %508 = vector.multi_reduction <add>, %507, %cst_140 [1] : vector<128x128xf32> to vector<128xf32>
    %509 = vector.shape_cast %508 : vector<128xf32> to vector<128x1xf32>
    %510 = tpu.reciprocal %509 {approx = true} : vector<128x1xf32> -> vector<128x1xf32>
    %511 = vector.broadcast %510 : vector<128x1xf32> to vector<128x128xf32>
    %512 = arith.mulf %507, %511 : vector<128x128xf32>
    %c0_i32_141 = arith.constant 0 : i32
    %513 = arith.sitofp %c0_i32_141 : i32 to f32
    %514 = vector.shape_cast %496 : vector<32x1xi1> to vector<32x1xi1>
    %515 = vector.broadcast %514 : vector<32x1xi1> to vector<32x128xi1>
    %516 = vector.broadcast %513 : f32 to vector<32x128xf32>
    %517 = arith.select %515, %405, %516 : vector<32x128xi1>, vector<32x128xf32>
    "tpu.trace_start"() <{level = 10 : i32, message = "cm,lm->cl"}> : () -> ()
    %cst_142 = arith.constant dense<0.000000e+00> : vector<32x128xf32>
    %518 = tpu.matmul %517, %512, %cst_142 {dimension_numbers = #tpu.dot_dimension_numbers<[1], [1], [0], [0], [0, 0, 1, 0], [], []>} : vector<32x128xf32>, vector<128x128xf32>, vector<32x128xf32> -> vector<32x128xf32>
    "tpu.trace_stop"() : () -> ()
    %519 = arith.addf %491, %518 : vector<32x128xf32>
    %c16_i32_143 = arith.constant 16 : i32
    %520 = vector.broadcast %c16_i32_143 : i32 to vector<32x1xi32>
    %521 = arith.cmpi sge, %19, %520 : vector<32x1xi32>
    %c20_i32_144 = arith.constant 20 : i32
    %522 = vector.broadcast %c20_i32_144 : i32 to vector<32x1xi32>
    %523 = arith.cmpi slt, %19, %522 : vector<32x1xi32>
    %524 = arith.andi %521, %523 : vector<32x1xi1>
    %c0_i32_145 = arith.constant 0 : i32
    %525 = arith.sitofp %c0_i32_145 : i32 to f32
    %526 = vector.shape_cast %524 : vector<32x1xi1> to vector<32x1xi1>
    %527 = vector.broadcast %526 : vector<32x1xi1> to vector<32x128xi1>
    %528 = vector.broadcast %525 : f32 to vector<32x128xf32>
    %529 = arith.select %527, %404, %528 : vector<32x128xi1>, vector<32x128xf32>
    %cst_146 = arith.constant dense<0.000000e+00> : vector<128x128xf32>
    %530 = tpu.matmul %406, %529, %cst_146 {dimension_numbers = #tpu.dot_dimension_numbers<[1], [0], [0], [1], [0, 0, 1, 1], [], []>} : vector<128x32xf32>, vector<32x128xf32>, vector<128x128xf32> -> vector<128x128xf32>
    %cst_147 = arith.constant dense<0xFF800000> : vector<128xf32>
    %531 = vector.multi_reduction <maximumf>, %530, %cst_147 [1] : vector<128x128xf32> to vector<128xf32>
    %532 = vector.shape_cast %531 : vector<128xf32> to vector<128x1xf32>
    %533 = vector.broadcast %532 : vector<128x1xf32> to vector<128x128xf32>
    %534 = arith.subf %530, %533 : vector<128x128xf32>
    %535 = math.exp %534 : vector<128x128xf32>
    %cst_148 = arith.constant dense<0.000000e+00> : vector<128xf32>
    %536 = vector.multi_reduction <add>, %535, %cst_148 [1] : vector<128x128xf32> to vector<128xf32>
    %537 = vector.shape_cast %536 : vector<128xf32> to vector<128x1xf32>
    %538 = tpu.reciprocal %537 {approx = true} : vector<128x1xf32> -> vector<128x1xf32>
    %539 = vector.broadcast %538 : vector<128x1xf32> to vector<128x128xf32>
    %540 = arith.mulf %535, %539 : vector<128x128xf32>
    %c0_i32_149 = arith.constant 0 : i32
    %541 = arith.sitofp %c0_i32_149 : i32 to f32
    %542 = vector.shape_cast %524 : vector<32x1xi1> to vector<32x1xi1>
    %543 = vector.broadcast %542 : vector<32x1xi1> to vector<32x128xi1>
    %544 = vector.broadcast %541 : f32 to vector<32x128xf32>
    %545 = arith.select %543, %405, %544 : vector<32x128xi1>, vector<32x128xf32>
    "tpu.trace_start"() <{level = 10 : i32, message = "cm,lm->cl"}> : () -> ()
    %cst_150 = arith.constant dense<0.000000e+00> : vector<32x128xf32>
    %546 = tpu.matmul %545, %540, %cst_150 {dimension_numbers = #tpu.dot_dimension_numbers<[1], [1], [0], [0], [0, 0, 1, 0], [], []>} : vector<32x128xf32>, vector<128x128xf32>, vector<32x128xf32> -> vector<32x128xf32>
    "tpu.trace_stop"() : () -> ()
    %547 = arith.addf %519, %546 : vector<32x128xf32>
    %c20_i32_151 = arith.constant 20 : i32
    %548 = vector.broadcast %c20_i32_151 : i32 to vector<32x1xi32>
    %549 = arith.cmpi sge, %19, %548 : vector<32x1xi32>
    %c24_i32_152 = arith.constant 24 : i32
    %550 = vector.broadcast %c24_i32_152 : i32 to vector<32x1xi32>
    %551 = arith.cmpi slt, %19, %550 : vector<32x1xi32>
    %552 = arith.andi %549, %551 : vector<32x1xi1>
    %c0_i32_153 = arith.constant 0 : i32
    %553 = arith.sitofp %c0_i32_153 : i32 to f32
    %554 = vector.shape_cast %552 : vector<32x1xi1> to vector<32x1xi1>
    %555 = vector.broadcast %554 : vector<32x1xi1> to vector<32x128xi1>
    %556 = vector.broadcast %553 : f32 to vector<32x128xf32>
    %557 = arith.select %555, %404, %556 : vector<32x128xi1>, vector<32x128xf32>
    %cst_154 = arith.constant dense<0.000000e+00> : vector<128x128xf32>
    %558 = tpu.matmul %406, %557, %cst_154 {dimension_numbers = #tpu.dot_dimension_numbers<[1], [0], [0], [1], [0, 0, 1, 1], [], []>} : vector<128x32xf32>, vector<32x128xf32>, vector<128x128xf32> -> vector<128x128xf32>
    %cst_155 = arith.constant dense<0xFF800000> : vector<128xf32>
    %559 = vector.multi_reduction <maximumf>, %558, %cst_155 [1] : vector<128x128xf32> to vector<128xf32>
    %560 = vector.shape_cast %559 : vector<128xf32> to vector<128x1xf32>
    %561 = vector.broadcast %560 : vector<128x1xf32> to vector<128x128xf32>
    %562 = arith.subf %558, %561 : vector<128x128xf32>
    %563 = math.exp %562 : vector<128x128xf32>
    %cst_156 = arith.constant dense<0.000000e+00> : vector<128xf32>
    %564 = vector.multi_reduction <add>, %563, %cst_156 [1] : vector<128x128xf32> to vector<128xf32>
    %565 = vector.shape_cast %564 : vector<128xf32> to vector<128x1xf32>
    %566 = tpu.reciprocal %565 {approx = true} : vector<128x1xf32> -> vector<128x1xf32>
    %567 = vector.broadcast %566 : vector<128x1xf32> to vector<128x128xf32>
    %568 = arith.mulf %563, %567 : vector<128x128xf32>
    %c0_i32_157 = arith.constant 0 : i32
    %569 = arith.sitofp %c0_i32_157 : i32 to f32
    %570 = vector.shape_cast %552 : vector<32x1xi1> to vector<32x1xi1>
    %571 = vector.broadcast %570 : vector<32x1xi1> to vector<32x128xi1>
    %572 = vector.broadcast %569 : f32 to vector<32x128xf32>
    %573 = arith.select %571, %405, %572 : vector<32x128xi1>, vector<32x128xf32>
    "tpu.trace_start"() <{level = 10 : i32, message = "cm,lm->cl"}> : () -> ()
    %cst_158 = arith.constant dense<0.000000e+00> : vector<32x128xf32>
    %574 = tpu.matmul %573, %568, %cst_158 {dimension_numbers = #tpu.dot_dimension_numbers<[1], [1], [0], [0], [0, 0, 1, 0], [], []>} : vector<32x128xf32>, vector<128x128xf32>, vector<32x128xf32> -> vector<32x128xf32>
    "tpu.trace_stop"() : () -> ()
    %575 = arith.addf %547, %574 : vector<32x128xf32>
    %c24_i32_159 = arith.constant 24 : i32
    %576 = vector.broadcast %c24_i32_159 : i32 to vector<32x1xi32>
    %577 = arith.cmpi sge, %19, %576 : vector<32x1xi32>
    %c28_i32_160 = arith.constant 28 : i32
    %578 = vector.broadcast %c28_i32_160 : i32 to vector<32x1xi32>
    %579 = arith.cmpi slt, %19, %578 : vector<32x1xi32>
    %580 = arith.andi %577, %579 : vector<32x1xi1>
    %c0_i32_161 = arith.constant 0 : i32
    %581 = arith.sitofp %c0_i32_161 : i32 to f32
    %582 = vector.shape_cast %580 : vector<32x1xi1> to vector<32x1xi1>
    %583 = vector.broadcast %582 : vector<32x1xi1> to vector<32x128xi1>
    %584 = vector.broadcast %581 : f32 to vector<32x128xf32>
    %585 = arith.select %583, %404, %584 : vector<32x128xi1>, vector<32x128xf32>
    %cst_162 = arith.constant dense<0.000000e+00> : vector<128x128xf32>
    %586 = tpu.matmul %406, %585, %cst_162 {dimension_numbers = #tpu.dot_dimension_numbers<[1], [0], [0], [1], [0, 0, 1, 1], [], []>} : vector<128x32xf32>, vector<32x128xf32>, vector<128x128xf32> -> vector<128x128xf32>
    %cst_163 = arith.constant dense<0xFF800000> : vector<128xf32>
    %587 = vector.multi_reduction <maximumf>, %586, %cst_163 [1] : vector<128x128xf32> to vector<128xf32>
    %588 = vector.shape_cast %587 : vector<128xf32> to vector<128x1xf32>
    %589 = vector.broadcast %588 : vector<128x1xf32> to vector<128x128xf32>
    %590 = arith.subf %586, %589 : vector<128x128xf32>
    %591 = math.exp %590 : vector<128x128xf32>
    %cst_164 = arith.constant dense<0.000000e+00> : vector<128xf32>
    %592 = vector.multi_reduction <add>, %591, %cst_164 [1] : vector<128x128xf32> to vector<128xf32>
    %593 = vector.shape_cast %592 : vector<128xf32> to vector<128x1xf32>
    %594 = tpu.reciprocal %593 {approx = true} : vector<128x1xf32> -> vector<128x1xf32>
    %595 = vector.broadcast %594 : vector<128x1xf32> to vector<128x128xf32>
    %596 = arith.mulf %591, %595 : vector<128x128xf32>
    %c0_i32_165 = arith.constant 0 : i32
    %597 = arith.sitofp %c0_i32_165 : i32 to f32
    %598 = vector.shape_cast %580 : vector<32x1xi1> to vector<32x1xi1>
    %599 = vector.broadcast %598 : vector<32x1xi1> to vector<32x128xi1>
    %600 = vector.broadcast %597 : f32 to vector<32x128xf32>
    %601 = arith.select %599, %405, %600 : vector<32x128xi1>, vector<32x128xf32>
    "tpu.trace_start"() <{level = 10 : i32, message = "cm,lm->cl"}> : () -> ()
    %cst_166 = arith.constant dense<0.000000e+00> : vector<32x128xf32>
    %602 = tpu.matmul %601, %596, %cst_166 {dimension_numbers = #tpu.dot_dimension_numbers<[1], [1], [0], [0], [0, 0, 1, 0], [], []>} : vector<32x128xf32>, vector<128x128xf32>, vector<32x128xf32> -> vector<32x128xf32>
    "tpu.trace_stop"() : () -> ()
    %603 = arith.addf %575, %602 : vector<32x128xf32>
    %c28_i32_167 = arith.constant 28 : i32
    %604 = vector.broadcast %c28_i32_167 : i32 to vector<32x1xi32>
    %605 = arith.cmpi sge, %19, %604 : vector<32x1xi32>
    %c32_i32_168 = arith.constant 32 : i32
    %606 = vector.broadcast %c32_i32_168 : i32 to vector<32x1xi32>
    %607 = arith.cmpi slt, %19, %606 : vector<32x1xi32>
    %608 = arith.andi %605, %607 : vector<32x1xi1>
    %c0_i32_169 = arith.constant 0 : i32
    %609 = arith.sitofp %c0_i32_169 : i32 to f32
    %610 = vector.shape_cast %608 : vector<32x1xi1> to vector<32x1xi1>
    %611 = vector.broadcast %610 : vector<32x1xi1> to vector<32x128xi1>
    %612 = vector.broadcast %609 : f32 to vector<32x128xf32>
    %613 = arith.select %611, %404, %612 : vector<32x128xi1>, vector<32x128xf32>
    %cst_170 = arith.constant dense<0.000000e+00> : vector<128x128xf32>
    %614 = tpu.matmul %406, %613, %cst_170 {dimension_numbers = #tpu.dot_dimension_numbers<[1], [0], [0], [1], [0, 0, 1, 1], [], []>} : vector<128x32xf32>, vector<32x128xf32>, vector<128x128xf32> -> vector<128x128xf32>
    %cst_171 = arith.constant dense<0xFF800000> : vector<128xf32>
    %615 = vector.multi_reduction <maximumf>, %614, %cst_171 [1] : vector<128x128xf32> to vector<128xf32>
    %616 = vector.shape_cast %615 : vector<128xf32> to vector<128x1xf32>
    %617 = vector.broadcast %616 : vector<128x1xf32> to vector<128x128xf32>
    %618 = arith.subf %614, %617 : vector<128x128xf32>
    %619 = math.exp %618 : vector<128x128xf32>
    %cst_172 = arith.constant dense<0.000000e+00> : vector<128xf32>
    %620 = vector.multi_reduction <add>, %619, %cst_172 [1] : vector<128x128xf32> to vector<128xf32>
    %621 = vector.shape_cast %620 : vector<128xf32> to vector<128x1xf32>
    %622 = tpu.reciprocal %621 {approx = true} : vector<128x1xf32> -> vector<128x1xf32>
    %623 = vector.broadcast %622 : vector<128x1xf32> to vector<128x128xf32>
    %624 = arith.mulf %619, %623 : vector<128x128xf32>
    %c0_i32_173 = arith.constant 0 : i32
    %625 = arith.sitofp %c0_i32_173 : i32 to f32
    %626 = vector.shape_cast %608 : vector<32x1xi1> to vector<32x1xi1>
    %627 = vector.broadcast %626 : vector<32x1xi1> to vector<32x128xi1>
    %628 = vector.broadcast %625 : f32 to vector<32x128xf32>
    %629 = arith.select %627, %405, %628 : vector<32x128xi1>, vector<32x128xf32>
    "tpu.trace_start"() <{level = 10 : i32, message = "cm,lm->cl"}> : () -> ()
    %cst_174 = arith.constant dense<0.000000e+00> : vector<32x128xf32>
    %630 = tpu.matmul %629, %624, %cst_174 {dimension_numbers = #tpu.dot_dimension_numbers<[1], [1], [0], [0], [0, 0, 1, 0], [], []>} : vector<32x128xf32>, vector<128x128xf32>, vector<32x128xf32> -> vector<32x128xf32>
    "tpu.trace_stop"() : () -> ()
    %631 = arith.addf %603, %630 : vector<32x128xf32>
    %cst_175 = arith.constant dense<0.000000e+00> : vector<32x128xf32>
    %632 = tpu.matmul %14, %631, %cst_175 {dimension_numbers = #tpu.dot_dimension_numbers<[1], [0], [0], [1], [0, 0, 1, 1], [], []>} : vector<32x32xf32>, vector<32x128xf32>, vector<32x128xf32> -> vector<32x128xf32>
    %633 = vector.broadcast %9 : vector<32x1xf32> to vector<32x128xf32>
    %634 = arith.addf %632, %633 : vector<32x128xf32>
    %cst_176 = arith.constant dense<0.000000e+00> : vector<128xf32>
    %635 = vector.multi_reduction <add>, %634, %cst_176 [0] : vector<32x128xf32> to vector<128xf32>
    %636 = vector.shape_cast %635 : vector<128xf32> to vector<1x128xf32>
    %cst_177 = arith.constant 3.200000e+01 : f32
    %637 = vector.broadcast %cst_177 : f32 to vector<1x128xf32>
    %638 = arith.divf %636, %637 : vector<1x128xf32>
    %639 = vector.broadcast %638 : vector<1x128xf32> to vector<32x128xf32>
    %640 = arith.subf %634, %639 : vector<32x128xf32>
    %641 = arith.mulf %640, %640 : vector<32x128xf32>
    %cst_178 = arith.constant dense<0.000000e+00> : vector<128xf32>
    %642 = vector.multi_reduction <add>, %641, %cst_178 [0] : vector<32x128xf32> to vector<128xf32>
    %643 = vector.shape_cast %642 : vector<128xf32> to vector<1x128xf32>
    %cst_179 = arith.constant 3.200000e+01 : f32
    %644 = vector.broadcast %cst_179 : f32 to vector<1x128xf32>
    %645 = arith.divf %643, %644 : vector<1x128xf32>
    %646 = vector.broadcast %638 : vector<1x128xf32> to vector<32x128xf32>
    %647 = arith.subf %634, %646 : vector<32x128xf32>
    %cst_180 = arith.constant 9.99999974E-6 : f32
    %648 = vector.broadcast %cst_180 : f32 to vector<1x128xf32>
    %649 = arith.addf %645, %648 : vector<1x128xf32>
    %650 = math.rsqrt %649 : vector<1x128xf32>
    %651 = vector.broadcast %650 : vector<1x128xf32> to vector<32x128xf32>
    %652 = arith.mulf %647, %651 : vector<32x128xf32>
    %653 = vector.broadcast %3 : vector<32x1xf32> to vector<32x128xf32>
    %654 = arith.mulf %652, %653 : vector<32x128xf32>
    %655 = vector.broadcast %4 : vector<32x1xf32> to vector<32x128xf32>
    %656 = arith.addf %654, %655 : vector<32x128xf32>
    %657 = arith.addf %656, %376 : vector<32x128xf32>
    %658 = vector.shape_cast %657 : vector<32x128xf32> to vector<1x32x128xf32>
    %cst_181 = arith.constant dense<0.000000e+00> : vector<1xf32>
    %659 = vector.multi_reduction <add>, %658, %cst_181 [1, 2] : vector<1x32x128xf32> to vector<1xf32>
    %660 = vector.shape_cast %659 : vector<1xf32> to vector<1x1x1xf32>
    %661 = vector.extract %660[0, 0, 0] : f32 from vector<1x1x1xf32>
    %662 = vector.broadcast %661 : f32 to vector<1x1xf32>
    %cst_182 = arith.constant 4.096000e+03 : f32
    %663 = vector.broadcast %cst_182 : f32 to vector<1x1xf32>
    %664 = arith.divf %662, %663 : vector<1x1xf32>
    %665 = vector.broadcast %664 : vector<1x1xf32> to vector<32x128xf32>
    %666 = arith.subf %657, %665 : vector<32x128xf32>
    %667 = arith.mulf %666, %666 : vector<32x128xf32>
    %668 = vector.shape_cast %667 : vector<32x128xf32> to vector<1x32x128xf32>
    %cst_183 = arith.constant dense<0.000000e+00> : vector<1xf32>
    %669 = vector.multi_reduction <add>, %668, %cst_183 [1, 2] : vector<1x32x128xf32> to vector<1xf32>
    %670 = vector.shape_cast %669 : vector<1xf32> to vector<1x1x1xf32>
    %671 = vector.extract %670[0, 0, 0] : f32 from vector<1x1x1xf32>
    %672 = vector.broadcast %671 : f32 to vector<1x1xf32>
    %cst_184 = arith.constant 4.096000e+03 : f32
    %673 = vector.broadcast %cst_184 : f32 to vector<1x1xf32>
    %674 = arith.divf %672, %673 : vector<1x1xf32>
    %675 = vector.broadcast %664 : vector<1x1xf32> to vector<32x128xf32>
    %676 = arith.subf %657, %675 : vector<32x128xf32>
    %cst_185 = arith.constant 9.99999974E-6 : f32
    %677 = vector.broadcast %cst_185 : f32 to vector<1x1xf32>
    %678 = arith.addf %674, %677 : vector<1x1xf32>
    %679 = math.rsqrt %678 : vector<1x1xf32>
    %680 = vector.broadcast %679 : vector<1x1xf32> to vector<32x128xf32>
    %681 = arith.mulf %676, %680 : vector<32x128xf32>
    %682 = vector.broadcast %5 : vector<32x1xf32> to vector<32x128xf32>
    %683 = arith.mulf %681, %682 : vector<32x128xf32>
    %684 = vector.broadcast %6 : vector<32x1xf32> to vector<32x128xf32>
    %685 = arith.addf %683, %684 : vector<32x128xf32>
    %cst_186 = arith.constant dense<0.000000e+00> : vector<64x128xf32>
    %686 = tpu.matmul %15, %685, %cst_186 {dimension_numbers = #tpu.dot_dimension_numbers<[1], [0], [0], [1], [0, 0, 1, 1], [], []>} : vector<64x32xf32>, vector<32x128xf32>, vector<64x128xf32> -> vector<64x128xf32>
    %687 = vector.broadcast %17 : vector<64x1xf32> to vector<64x128xf32>
    %688 = arith.addf %686, %687 : vector<64x128xf32>
    %cst_187 = arith.constant 0.000000e+00 : f32
    %689 = vector.broadcast %cst_187 : f32 to vector<64x128xf32>
    %690 = arith.cmpf oge, %688, %689 : vector<64x128xf32>
    %691 = vector.broadcast %18 : f32 to vector<64x128xf32>
    %692 = arith.mulf %691, %688 : vector<64x128xf32>
    %693 = arith.select %690, %688, %692 : vector<64x128xi1>, vector<64x128xf32>
    %cst_188 = arith.constant dense<0.000000e+00> : vector<32x128xf32>
    %694 = tpu.matmul %16, %693, %cst_188 {dimension_numbers = #tpu.dot_dimension_numbers<[1], [0], [0], [1], [0, 0, 1, 1], [], []>} : vector<32x64xf32>, vector<64x128xf32>, vector<32x128xf32> -> vector<32x128xf32>
    %695 = vector.broadcast %10 : vector<32x1xf32> to vector<32x128xf32>
    %696 = arith.addf %694, %695 : vector<32x128xf32>
    %697 = vector.shape_cast %696 : vector<32x128xf32> to vector<1x32x128xf32>
    %cst_189 = arith.constant dense<0.000000e+00> : vector<1xf32>
    %698 = vector.multi_reduction <add>, %697, %cst_189 [1, 2] : vector<1x32x128xf32> to vector<1xf32>
    %699 = vector.shape_cast %698 : vector<1xf32> to vector<1x1x1xf32>
    %700 = vector.extract %699[0, 0, 0] : f32 from vector<1x1x1xf32>
    %701 = vector.broadcast %700 : f32 to vector<1x1xf32>
    %cst_190 = arith.constant 4.096000e+03 : f32
    %702 = vector.broadcast %cst_190 : f32 to vector<1x1xf32>
    %703 = arith.divf %701, %702 : vector<1x1xf32>
    %704 = vector.broadcast %703 : vector<1x1xf32> to vector<32x128xf32>
    %705 = arith.subf %696, %704 : vector<32x128xf32>
    %706 = arith.mulf %705, %705 : vector<32x128xf32>
    %707 = vector.shape_cast %706 : vector<32x128xf32> to vector<1x32x128xf32>
    %cst_191 = arith.constant dense<0.000000e+00> : vector<1xf32>
    %708 = vector.multi_reduction <add>, %707, %cst_191 [1, 2] : vector<1x32x128xf32> to vector<1xf32>
    %709 = vector.shape_cast %708 : vector<1xf32> to vector<1x1x1xf32>
    %710 = vector.extract %709[0, 0, 0] : f32 from vector<1x1x1xf32>
    %711 = vector.broadcast %710 : f32 to vector<1x1xf32>
    %cst_192 = arith.constant 4.096000e+03 : f32
    %712 = vector.broadcast %cst_192 : f32 to vector<1x1xf32>
    %713 = arith.divf %711, %712 : vector<1x1xf32>
    %714 = vector.broadcast %703 : vector<1x1xf32> to vector<32x128xf32>
    %715 = arith.subf %696, %714 : vector<32x128xf32>
    %cst_193 = arith.constant 9.99999974E-6 : f32
    %716 = vector.broadcast %cst_193 : f32 to vector<1x1xf32>
    %717 = arith.addf %713, %716 : vector<1x1xf32>
    %718 = math.rsqrt %717 : vector<1x1xf32>
    %719 = vector.broadcast %718 : vector<1x1xf32> to vector<32x128xf32>
    %720 = arith.mulf %715, %719 : vector<32x128xf32>
    %721 = vector.broadcast %7 : vector<32x1xf32> to vector<32x128xf32>
    %722 = arith.mulf %720, %721 : vector<32x128xf32>
    %723 = vector.broadcast %8 : vector<32x1xf32> to vector<32x128xf32>
    %724 = arith.addf %722, %723 : vector<32x128xf32>
    %725 = arith.addf %724, %657 : vector<32x128xf32>
    %726 = arith.addf %725, %376 : vector<32x128xf32>
    %c1_194 = arith.constant 1 : index
    %c0_195 = arith.constant 0 : index
    %c0_196 = arith.constant 0 : index
    %727 = vector.load %arg11[%c1_194, %c0_195, %c0_196] : memref<2x32x128xf32, #tpu.memory_space<vmem>>, vector<1x32x128xf32>
    %728 = vector.shape_cast %727 : vector<1x32x128xf32> to vector<32x128xf32>
    %729 = vector.shape_cast %726 : vector<32x128xf32> to vector<1x32x128xf32>
    tpu.vector_store %arg11[%c1_194, %c0_195, %c0_196], %729 {strides = array<i32>} : memref<2x32x128xf32, #tpu.memory_space<vmem>>, vector<1x32x128xf32>,
    return
  }
  func.func @transform_0(%arg0: i32) -> (i32, i32, i32) {
    %c0_i32 = arith.constant 0 : i32
    %c0_i32_0 = arith.constant 0 : i32
    %c0_i32_1 = arith.constant 0 : i32
    return %arg0, %c0_i32, %c0_i32_0 : i32, i32, i32
  }
  func.func @transform_1(%arg0: i32) -> (i32, i32) {
    %c0_i32 = arith.constant 0 : i32
    %c0_i32_0 = arith.constant 0 : i32
    %c0_i32_1 = arith.constant 0 : i32
    return %c0_i32, %c0_i32_0 : i32, i32
  }
  func.func @transform_2(%arg0: i32) -> (i32, i32) {
    %c0_i32 = arith.constant 0 : i32
    %c0_i32_0 = arith.constant 0 : i32
    %c0_i32_1 = arith.constant 0 : i32
    return %c0_i32, %c0_i32_0 : i32, i32
  }
  func.func @transform_3(%arg0: i32) -> (i32, i32) {
    %c0_i32 = arith.constant 0 : i32
    %c0_i32_0 = arith.constant 0 : i32
    %c0_i32_1 = arith.constant 0 : i32
    return %c0_i32, %c0_i32_0 : i32, i32
  }
  func.func @transform_4(%arg0: i32) -> (i32, i32) {
    %c0_i32 = arith.constant 0 : i32
    %c0_i32_0 = arith.constant 0 : i32
    %c0_i32_1 = arith.constant 0 : i32
    return %c0_i32, %c0_i32_0 : i32, i32
  }
  func.func @transform_5(%arg0: i32) -> (i32, i32) {
    %c0_i32 = arith.constant 0 : i32
    %c0_i32_0 = arith.constant 0 : i32
    %c0_i32_1 = arith.constant 0 : i32
    return %c0_i32, %c0_i32_0 : i32, i32
  }
  func.func @transform_6(%arg0: i32) -> (i32, i32) {
    %c0_i32 = arith.constant 0 : i32
    %c0_i32_0 = arith.constant 0 : i32
    %c0_i32_1 = arith.constant 0 : i32
    return %c0_i32, %c0_i32_0 : i32, i32
  }
  func.func @transform_7(%arg0: i32) -> (i32, i32) {
    %c0_i32 = arith.constant 0 : i32
    %c0_i32_0 = arith.constant 0 : i32
    %c0_i32_1 = arith.constant 0 : i32
    return %c0_i32, %c0_i32_0 : i32, i32
  }
  func.func @transform_8(%arg0: i32) -> (i32, i32) {
    %c0_i32 = arith.constant 0 : i32
    %c0_i32_0 = arith.constant 0 : i32
    %c0_i32_1 = arith.constant 0 : i32
    return %c0_i32, %c0_i32_0 : i32, i32
  }
  func.func @transform_9(%arg0: i32) -> i32 {
    %c0_i32 = arith.constant 0 : i32
    %c0_i32_0 = arith.constant 0 : i32
    return %c0_i32 : i32
  }
  func.func @transform_10(%arg0: i32) -> (i32, i32, i32) {
    %c0_i32 = arith.constant 0 : i32
    %c0_i32_0 = arith.constant 0 : i32
    %c0_i32_1 = arith.constant 0 : i32
    return %arg0, %c0_i32, %c0_i32_0 : i32, i32, i32
  }
}

</mosaic_0001>

<llo_original>
// kernel: tpu_custom_call.1
$region0: #{tpu_custom_call.1}
  #allocation0 [shape = 'u32[]', space=smem, size = 0x4, offset = 0x4, fixed_abs, tag = 'smem constant byte address 0x4 - core index']
  #allocation1 [shape = 'u32[144,128]{1,0:T(1,128)}', space=vmem, size = 0x12000, scoped, tag = 'internal scratch']
  #allocation2 [shape = 'f32[1]{0:T(128)S(6)}', space=smem, size = 0x200, scoped, tag = 'scoped memory for tpu_custom_call.1']
  %s0 = inlined_call_operand.vmem [shape: f32[4,32,128], index: 0, kind: input, shape index: {}]
  %s1 = inlined_call_operand.vmem [shape: f32[32,128], index: 1, kind: input, shape index: {}]
  %s2 = inlined_call_operand.vmem [shape: f32[96,32], index: 2, kind: input, shape index: {}]
  %s3 = inlined_call_operand.vmem [shape: f32[96,1], index: 3, kind: input, shape index: {}]
  %s4 = inlined_call_operand.vmem [shape: f32[32,32], index: 4, kind: input, shape index: {}]
  %s5 = inlined_call_operand.vmem [shape: f32[64,32], index: 5, kind: input, shape index: {}]
  %s6 = inlined_call_operand.vmem [shape: f32[32,64], index: 6, kind: input, shape index: {}]
  %s7 = inlined_call_operand.vmem [shape: f32[64,1], index: 7, kind: input, shape index: {}]
  %s8 = inlined_call_operand.vmem [shape: f32[32,10], index: 8, kind: input, shape index: {}]
  %s9 = inlined_call_operand.<no memory space> [shape: f32[1], index: 9, kind: input, shape index: {}]
  %s10 = inlined_call_operand.hbm [shape: f32[4,32,128], index: 10, kind: output, shape index: {}]
  %s11 = sld [smem:[#allocation0]]
  $region73: #{tpu_custom_call.1} parent=0
    _
  %s13 = ssub.s32 1, %s11
  %s14 = scalar_select 0, %s13, %s11
  %15 = sst [smem:[#allocation2]] %s9
  $region1: #{tpu_custom_call.1} parent=0
    #allocation3 [shape = 'u8[65536]{0}', space=vmem, size = 0x10000, scoped, tag = 'output window, operand 0']
    #allocation4 [shape = 's32[2]{0}', space=sflag, size = 0x8, scoped, tag = 'scoped memory for tpu_custom_call.1']
    %16 = vsyncpa [#allocation4], 0
    %s17 = scalar_lea.sflag [#allocation4], 1
    %18 = vsyncpa %s17, 0
    loop: start=0, step=1, limit=4
    $region2: #{tpu_custom_call.1} parent=1 // loop_pre_header
      _
    $region3: #{tpu_custom_call.1} parent=1 // loop_header
      %s20 = sphi 0, %s24
      %p21 = scmp.ge.s32.totalorder %s20, 4
      %s30 = sphi 0, %s32
      %s33 = sphi 0, %s30
      %s34 = sphi 0, %s33
      %s50 = sphi 0, %s34
      %s54 = sphi 0, %s54
      %s56 = sphi 0, %s54
      %s57 = sphi 0, %s56
      %s71 = sphi 0, %s57
      %s75 = sphi 0, %s75
      %s77 = sphi 0, %s75
      %s78 = sphi 0, %s77
      %s92 = sphi 0, %s78
      %s96 = sphi 0, %s96
      %s98 = sphi 0, %s96
      %s99 = sphi 0, %s98
      %s113 = sphi 0, %s99
      %s117 = sphi 0, %s117
      %s119 = sphi 0, %s117
      %s120 = sphi 0, %s119
      %s134 = sphi 0, %s120
      %s138 = sphi 0, %s138
      %s140 = sphi 0, %s138
      %s141 = sphi 0, %s140
      %s155 = sphi 0, %s141
      %s159 = sphi 0, %s159
      %s161 = sphi 0, %s159
      %s162 = sphi 0, %s161
      %s176 = sphi 0, %s162
      %s180 = sphi 0, %s180
      %s182 = sphi 0, %s180
      %s183 = sphi 0, %s182
      %s197 = sphi 0, %s183
      %s201 = sphi 0, %s201
      %s203 = sphi 0, %s201
      %s204 = sphi 0, %s203
      %s218 = sphi 0, %s204
      %s222 = sphi 0, %s222
      %s224 = sphi 0, %s222
      %s225 = sphi 0, %s224
      %s239 = sphi 0, %s225
      %s245 = sphi 0, %s247
      %s248 = sphi 0, %s245
      %s249 = sphi 0, %s248
      %s265 = sphi 0, %s249
    $region4: #{tpu_custom_call.1} parent=1 // loop_header_branch
      %23 = sbr.rel (%p21) target = $region8
    $region5: #{tpu_custom_call.1} parent=1 // loop_body
      %s25 = ssub.s32 %s20, 1
      %s26 = ssub.s32 %s20, 2
      %s27 = sadd.s32 %s20, 1
      %s28 = ssub.s32 %s20, %s27
      %p29 = scmp.eq.s32.totalorder %s28, 0
      %s31 = sadd.s32 %s30, 1
      %s32 = scalar_select %p29, %s30, %s31
      %p35 = pneg %p29
      %p36 = scmp.eq.s32.totalorder %s20, 1
      %p37 = por %p35, %p36
      %p38 = scmp.ne.s32.totalorder %s30, %s33
      %p39 = scmp.eq.s32.totalorder %s20, 0
      %p40 = por %p38, %p39
      %p41 = scmp.ne.s32.totalorder %s30, %s33
      %p42 = scmp.eq.s32.totalorder %s25, 1
      %p43 = por %p41, %p42
      %p44 = scmp.ne.s32.totalorder %s33, %s34
      %p45 = scmp.eq.s32.totalorder %s25, 0
      %p46 = por %p44, %p45
      %p47 = scmp.ne.s32.totalorder %s33, %s34
      %p48 = scmp.eq.s32.totalorder %s26, 1
      %p49 = por %p47, %p48
      %p51 = scmp.ne.s32.totalorder %s34, %s50
      %p52 = scmp.eq.s32.totalorder %s26, 0
      %p53 = por %p51, %p52
      %s55 = sadd.s32 %s54, 1
      %p58 = scmp.eq.s32.totalorder %s20, 1
      %p59 = scmp.ne.s32.totalorder %s54, %s56
      %p60 = scmp.eq.s32.totalorder %s20, 0
      %p61 = por %p59, %p60
      %p62 = scmp.ne.s32.totalorder %s54, %s56
      %p63 = scmp.eq.s32.totalorder %s25, 1
      %p64 = por %p62, %p63
      %p65 = scmp.ne.s32.totalorder %s56, %s57
      %p66 = scmp.eq.s32.totalorder %s25, 0
      %p67 = por %p65, %p66
      %p68 = scmp.ne.s32.totalorder %s56, %s57
      %p69 = scmp.eq.s32.totalorder %s26, 1
      %p70 = por %p68, %p69
      %p72 = scmp.ne.s32.totalorder %s57, %s71
      %p73 = scmp.eq.s32.totalorder %s26, 0
      %p74 = por %p72, %p73
      %s76 = sadd.s32 %s75, 1
      %p79 = scmp.eq.s32.totalorder %s20, 1
      %p80 = scmp.ne.s32.totalorder %s75, %s77
      %p81 = scmp.eq.s32.totalorder %s20, 0
      %p82 = por %p80, %p81
      %p83 = scmp.ne.s32.totalorder %s75, %s77
      %p84 = scmp.eq.s32.totalorder %s25, 1
      %p85 = por %p83, %p84
      %p86 = scmp.ne.s32.totalorder %s77, %s78
      %p87 = scmp.eq.s32.totalorder %s25, 0
      %p88 = por %p86, %p87
      %p89 = scmp.ne.s32.totalorder %s77, %s78
      %p90 = scmp.eq.s32.totalorder %s26, 1
      %p91 = por %p89, %p90
      %p93 = scmp.ne.s32.totalorder %s78, %s92
      %p94 = scmp.eq.s32.totalorder %s26, 0
      %p95 = por %p93, %p94
      %s97 = sadd.s32 %s96, 1
      %p100 = scmp.eq.s32.totalorder %s20, 1
      %p101 = scmp.ne.s32.totalorder %s96, %s98
      %p102 = scmp.eq.s32.totalorder %s20, 0
      %p103 = por %p101, %p102
      %p104 = scmp.ne.s32.totalorder %s96, %s98
      %p105 = scmp.eq.s32.totalorder %s25, 1
      %p106 = por %p104, %p105
      %p107 = scmp.ne.s32.totalorder %s98, %s99
      %p108 = scmp.eq.s32.totalorder %s25, 0
      %p109 = por %p107, %p108
      %p110 = scmp.ne.s32.totalorder %s98, %s99
      %p111 = scmp.eq.s32.totalorder %s26, 1
      %p112 = por %p110, %p111
      %p114 = scmp.ne.s32.totalorder %s99, %s113
      %p115 = scmp.eq.s32.totalorder %s26, 0
      %p116 = por %p114, %p115
      %s118 = sadd.s32 %s117, 1
      %p121 = scmp.eq.s32.totalorder %s20, 1
      %p122 = scmp.ne.s32.totalorder %s117, %s119
      %p123 = scmp.eq.s32.totalorder %s20, 0
      %p124 = por %p122, %p123
      %p125 = scmp.ne.s32.totalorder %s117, %s119
      %p126 = scmp.eq.s32.totalorder %s25, 1
      %p127 = por %p125, %p126
      %p128 = scmp.ne.s32.totalorder %s119, %s120
      %p129 = scmp.eq.s32.totalorder %s25, 0
      %p130 = por %p128, %p129
      %p131 = scmp.ne.s32.totalorder %s119, %s120
      %p132 = scmp.eq.s32.totalorder %s26, 1
      %p133 = por %p131, %p132
      %p135 = scmp.ne.s32.totalorder %s120, %s134
      %p136 = scmp.eq.s32.totalorder %s26, 0
      %p137 = por %p135, %p136
      %s139 = sadd.s32 %s138, 1
      %p142 = scmp.eq.s32.totalorder %s20, 1
      %p143 = scmp.ne.s32.totalorder %s138, %s140
      %p144 = scmp.eq.s32.totalorder %s20, 0
      %p145 = por %p143, %p144
      %p146 = scmp.ne.s32.totalorder %s138, %s140
      %p147 = scmp.eq.s32.totalorder %s25, 1
      %p148 = por %p146, %p147
      %p149 = scmp.ne.s32.totalorder %s140, %s141
      %p150 = scmp.eq.s32.totalorder %s25, 0
      %p151 = por %p149, %p150
      %p152 = scmp.ne.s32.totalorder %s140, %s141
      %p153 = scmp.eq.s32.totalorder %s26, 1
      %p154 = por %p152, %p153
      %p156 = scmp.ne.s32.totalorder %s141, %s155
      %p157 = scmp.eq.s32.totalorder %s26, 0
      %p158 = por %p156, %p157
      %s160 = sadd.s32 %s159, 1
      %p163 = scmp.eq.s32.totalorder %s20, 1
      %p164 = scmp.ne.s32.totalorder %s159, %s161
      %p165 = scmp.eq.s32.totalorder %s20, 0
      %p166 = por %p164, %p165
      %p167 = scmp.ne.s32.totalorder %s159, %s161
      %p168 = scmp.eq.s32.totalorder %s25, 1
      %p169 = por %p167, %p168
      %p170 = scmp.ne.s32.totalorder %s161, %s162
      %p171 = scmp.eq.s32.totalorder %s25, 0
      %p172 = por %p170, %p171
      %p173 = scmp.ne.s32.totalorder %s161, %s162
      %p174 = scmp.eq.s32.totalorder %s26, 1
      %p175 = por %p173, %p174
      %p177 = scmp.ne.s32.totalorder %s162, %s176
      %p178 = scmp.eq.s32.totalorder %s26, 0
      %p179 = por %p177, %p178
      %s181 = sadd.s32 %s180, 1
      %p184 = scmp.eq.s32.totalorder %s20, 1
      %p185 = scmp.ne.s32.totalorder %s180, %s182
      %p186 = scmp.eq.s32.totalorder %s20, 0
      %p187 = por %p185, %p186
      %p188 = scmp.ne.s32.totalorder %s180, %s182
      %p189 = scmp.eq.s32.totalorder %s25, 1
      %p190 = por %p188, %p189
      %p191 = scmp.ne.s32.totalorder %s182, %s183
      %p192 = scmp.eq.s32.totalorder %s25, 0
      %p193 = por %p191, %p192
      %p194 = scmp.ne.s32.totalorder %s182, %s183
      %p195 = scmp.eq.s32.totalorder %s26, 1
      %p196 = por %p194, %p195
      %p198 = scmp.ne.s32.totalorder %s183, %s197
      %p199 = scmp.eq.s32.totalorder %s26, 0
      %p200 = por %p198, %p199
      %s202 = sadd.s32 %s201, 1
      %p205 = scmp.eq.s32.totalorder %s20, 1
      %p206 = scmp.ne.s32.totalorder %s201, %s203
      %p207 = scmp.eq.s32.totalorder %s20, 0
      %p208 = por %p206, %p207
      %p209 = scmp.ne.s32.totalorder %s201, %s203
      %p210 = scmp.eq.s32.totalorder %s25, 1
      %p211 = por %p209, %p210
      %p212 = scmp.ne.s32.totalorder %s203, %s204
      %p213 = scmp.eq.s32.totalorder %s25, 0
      %p214 = por %p212, %p213
      %p215 = scmp.ne.s32.totalorder %s203, %s204
      %p216 = scmp.eq.s32.totalorder %s26, 1
      %p217 = por %p215, %p216
      %p219 = scmp.ne.s32.totalorder %s204, %s218
      %p220 = scmp.eq.s32.totalorder %s26, 0
      %p221 = por %p219, %p220
      %s223 = sadd.s32 %s222, 1
      %p226 = scmp.eq.s32.totalorder %s20, 1
      %p227 = scmp.ne.s32.totalorder %s222, %s224
      %p228 = scmp.eq.s32.totalorder %s20, 0
      %p229 = por %p227, %p228
      %p230 = scmp.ne.s32.totalorder %s222, %s224
      %p231 = scmp.eq.s32.totalorder %s25, 1
      %p232 = por %p230, %p231
      %p233 = scmp.ne.s32.totalorder %s224, %s225
      %p234 = scmp.eq.s32.totalorder %s25, 0
      %p235 = por %p233, %p234
      %p236 = scmp.ne.s32.totalorder %s224, %s225
      %p237 = scmp.eq.s32.totalorder %s26, 1
      %p238 = por %p236, %p237
      %p240 = scmp.ne.s32.totalorder %s225, %s239
      %p241 = scmp.eq.s32.totalorder %s26, 0
      %p242 = por %p240, %p241
      %s243 = ssub.s32 %s20, %s27
      %p244 = scmp.eq.s32.totalorder %s243, 0
      %s246 = sadd.s32 %s245, 1
      %s247 = scalar_select %p244, %s245, %s246
      %p250 = pneg %p244
      %p251 = scmp.eq.s32.totalorder %s20, 1
      %p252 = por %p250, %p251
      %p253 = scmp.ne.s32.totalorder %s245, %s248
      %p254 = scmp.eq.s32.totalorder %s20, 0
      %p255 = por %p253, %p254
      %p256 = scmp.ne.s32.totalorder %s245, %s248
      %p257 = scmp.eq.s32.totalorder %s25, 1
      %p258 = por %p256, %p257
      %p259 = scmp.ne.s32.totalorder %s248, %s249
      %p260 = scmp.eq.s32.totalorder %s25, 0
      %p261 = por %p259, %p260
      %p262 = scmp.ne.s32.totalorder %s248, %s249
      %p263 = scmp.eq.s32.totalorder %s26, 1
      %p264 = por %p262, %p263
      %p266 = scmp.ne.s32.totalorder %s249, %s265
      %p267 = scmp.eq.s32.totalorder %s26, 0
      %p268 = por %p266, %p267
      %p269 = scmp.le.s32.totalorder 1, %s20
      %p270 = scmp.lt.s32.totalorder %s20, 3
      %p271 = pnand %p269, %p270
      %p272 = pneg %p271
      // Predicated region
      $region9: #{tpu_custom_call.1} parent=5 // pred_check
        _
      $region10: #{tpu_custom_call.1} parent=5 // pred_check_branch
        %274 = sbr.rel (%p271) target = $region12
      $region11: #{tpu_custom_call.1} parent=5 // pred_region
        %s275 = ssub.s32 %s20, 1
        // Predicated region
        $region13: #{tpu_custom_call.1} parent=11 // pred_check
          %p276 = pneg %p67
        $region14: #{tpu_custom_call.1} parent=11 // pred_check_branch
          %278 = sbr.rel (%p276) target = $region16
        $region15: #{tpu_custom_call.1} parent=11 // pred_region
          _
        $region16: #{tpu_custom_call.1} parent=11 // pred_fallthru
          _
        // Predicated region
        $region17: #{tpu_custom_call.1} parent=11 // pred_check
          %p279 = pneg %p88
        $region18: #{tpu_custom_call.1} parent=11 // pred_check_branch
          %281 = sbr.rel (%p279) target = $region20
        $region19: #{tpu_custom_call.1} parent=11 // pred_region
          _
        $region20: #{tpu_custom_call.1} parent=11 // pred_fallthru
          _
        // Predicated region
        $region21: #{tpu_custom_call.1} parent=11 // pred_check
          %p282 = pneg %p109
        $region22: #{tpu_custom_call.1} parent=11 // pred_check_branch
          %284 = sbr.rel (%p282) target = $region24
        $region23: #{tpu_custom_call.1} parent=11 // pred_region
          _
        $region24: #{tpu_custom_call.1} parent=11 // pred_fallthru
          _
        // Predicated region
        $region25: #{tpu_custom_call.1} parent=11 // pred_check
          %p285 = pneg %p130
        $region26: #{tpu_custom_call.1} parent=11 // pred_check_branch
          %287 = sbr.rel (%p285) target = $region28
        $region27: #{tpu_custom_call.1} parent=11 // pred_region
          _
        $region28: #{tpu_custom_call.1} parent=11 // pred_fallthru
          _
        // Predicated region
        $region29: #{tpu_custom_call.1} parent=11 // pred_check
          %p288 = pneg %p151
        $region30: #{tpu_custom_call.1} parent=11 // pred_check_branch
          %290 = sbr.rel (%p288) target = $region32
        $region31: #{tpu_custom_call.1} parent=11 // pred_region
          _
        $region32: #{tpu_custom_call.1} parent=11 // pred_fallthru
          _
        // Predicated region
        $region33: #{tpu_custom_call.1} parent=11 // pred_check
          %p291 = pneg %p172
        $region34: #{tpu_custom_call.1} parent=11 // pred_check_branch
          %293 = sbr.rel (%p291) target = $region36
        $region35: #{tpu_custom_call.1} parent=11 // pred_region
          _
        $region36: #{tpu_custom_call.1} parent=11 // pred_fallthru
          _
        // Predicated region
        $region37: #{tpu_custom_call.1} parent=11 // pred_check
          %p294 = pneg %p193
        $region38: #{tpu_custom_call.1} parent=11 // pred_check_branch
          %296 = sbr.rel (%p294) target = $region40
        $region39: #{tpu_custom_call.1} parent=11 // pred_region
          _
        $region40: #{tpu_custom_call.1} parent=11 // pred_fallthru
          _
        // Predicated region
        $region41: #{tpu_custom_call.1} parent=11 // pred_check
          %p297 = pneg %p214
        $region42: #{tpu_custom_call.1} parent=11 // pred_check_branch
          %299 = sbr.rel (%p297) target = $region44
        $region43: #{tpu_custom_call.1} parent=11 // pred_region
          _
        $region44: #{tpu_custom_call.1} parent=11 // pred_fallthru
          _
        // Predicated region
        $region45: #{tpu_custom_call.1} parent=11 // pred_check
          %p300 = pneg %p235
        $region46: #{tpu_custom_call.1} parent=11 // pred_check_branch
          %302 = sbr.rel (%p300) target = $region48
        $region47: #{tpu_custom_call.1} parent=11 // pred_region
          _
        $region48: #{tpu_custom_call.1} parent=11 // pred_fallthru
          _
      $region12: #{tpu_custom_call.1} parent=5 // pred_fallthru
        _
      %p303 = scmp.lt.s32.totalorder %s20, 2
      // Predicated region
      $region49: #{tpu_custom_call.1} parent=5 // pred_check
        %p304 = pneg %p303
      $region50: #{tpu_custom_call.1} parent=5 // pred_check_branch
        %306 = sbr.rel (%p304) target = $region52
      $region51: #{tpu_custom_call.1} parent=5 // pred_region
        // Predicated region
        $region53: #{tpu_custom_call.1} parent=51 // pred_check
          %p307 = pneg %p40
        $region54: #{tpu_custom_call.1} parent=51 // pred_check_branch
          %309 = sbr.rel (%p307) target = $region56
        $region55: #{tpu_custom_call.1} parent=51 // pred_region
          %s310 = smul.u32 2, %s20
          %p311 = scmp.lt.s32.totalorder %s310, 3
          %s312 = scalar_select %p311, %s310, 3
          %s313 = smul.addr %s312, 4
          %s314 = smul.addr %s313, 8
          %s315 = scalar_lea.vmem %s0, %s314
          %s316 = smul.u32 2, %s20
        $region56: #{tpu_custom_call.1} parent=51 // pred_fallthru
          _
      $region52: #{tpu_custom_call.1} parent=5 // pred_fallthru
        _
      %p317 = scmp.le.s32.totalorder 1, %s20
      %p318 = scmp.lt.s32.totalorder %s20, 3
      %p319 = pnand %p317, %p318
      %p320 = pneg %p319
      // Predicated region
      $region57: #{tpu_custom_call.1} parent=5 // pred_check
        _
      $region58: #{tpu_custom_call.1} parent=5 // pred_check_branch
        %322 = sbr.rel (%p319) target = $region60
      $region59: #{tpu_custom_call.1} parent=5 // pred_region
        %s323 = ssub.s32 %s20, 1
        %s324 = smul.u32 2, %s25
        %p325 = scmp.lt.s32.totalorder %s324, 3
        %s326 = scalar_select %p325, %s324, 3
        %s327 = smul.addr %s326, 4
        %s328 = smul.addr %s327, 8
        %s329 = scalar_lea.vmem %s0, %s328
        %p330 = pneg %p46
        %p331 = pneg %p43
        %p332 = pneg %p67
        %p333 = pneg %p64
        %p334 = pneg %p88
        %p335 = pneg %p85
        %p336 = pneg %p109
        %p337 = pneg %p106
        %p338 = pneg %p130
        %p339 = pneg %p127
        %p340 = pneg %p151
        %p341 = pneg %p148
        %p342 = pneg %p172
        %p343 = pneg %p169
        %p344 = pneg %p193
        %p345 = pneg %p190
        %p346 = pneg %p214
        %p347 = pneg %p211
        %p348 = pneg %p235
        %p349 = pneg %p232
        %p350 = pneg %p261
        %p351 = pneg %p258
        %s352 = sand.u32 %s248, 1
        %s353 = scalar_lea.sflag [#allocation4], %s352
        %s354 = sand.u32 %s248, 1
        %s355 = smul.addr %s354, 64
        %s356 = scalar_lea.vmem [#allocation3], %s355
        %s357 = smul.u32 2, %s25
        %p358 = scmp.lt.s32.totalorder %s357, 3
        %s359 = scalar_select %p358, %s357, 3
        %s360 = smul.addr %s359, 4
        %s361 = smul.addr %s360, 8
        %s362 = scalar_lea.vmem %s0, %s361
        %s363 = smul.u32 2, %s25
        %s364 = smul.u32 2, %s25
        %v365 = vld [vmem:[%s8] sm:$0xff]
        %v366 = vld [vmem:[%s8 + $0x8] sm:$0xff]
        %v367 = vld [vmem:[%s8 + $0x10] sm:$0xff]
        %v368 = vld [vmem:[%s8 + $0x18] sm:$0xff]
        %v369 = vld [vmem:[%s1] sm:$0xff]
        %v370 = vld [vmem:[%s1 + $0x8] sm:$0xff]
        %v371 = vld [vmem:[%s1 + $0x10] sm:$0xff]
        %v372 = vld [vmem:[%s1 + $0x18] sm:$0xff]
        %v373 = vld [vmem:[%s2] sm:$0xff]
        %v374 = vld [vmem:[%s2 + $0x8] sm:$0xff]
        %v375 = vld [vmem:[%s2 + $0x10] sm:$0xff]
        %v376 = vld [vmem:[%s2 + $0x18] sm:$0xff]
        %v377 = vld [vmem:[%s2 + $0x20] sm:$0xff]
        %v378 = vld [vmem:[%s2 + $0x28] sm:$0xff]
        %v379 = vld [vmem:[%s2 + $0x30] sm:$0xff]
        %v380 = vld [vmem:[%s2 + $0x38] sm:$0xff]
        %v381 = vld [vmem:[%s2 + $0x40] sm:$0xff]
        %v382 = vld [vmem:[%s2 + $0x48] sm:$0xff]
        %v383 = vld [vmem:[%s2 + $0x50] sm:$0xff]
        %v384 = vld [vmem:[%s2 + $0x58] sm:$0xff]
        %v385 = vld [vmem:[%s3] sm:$0xff]
        %v386 = vld [vmem:[%s3 + $0x8] sm:$0xff]
        %v387 = vld [vmem:[%s3 + $0x10] sm:$0xff]
        %v388 = vld [vmem:[%s3 + $0x18] sm:$0xff]
        %v389 = vld [vmem:[%s3 + $0x20] sm:$0xff]
        %v390 = vld [vmem:[%s3 + $0x28] sm:$0xff]
        %v391 = vld [vmem:[%s3 + $0x30] sm:$0xff]
        %v392 = vld [vmem:[%s3 + $0x38] sm:$0xff]
        %v393 = vld [vmem:[%s3 + $0x40] sm:$0xff]
        %v394 = vld [vmem:[%s3 + $0x48] sm:$0xff]
        %v395 = vld [vmem:[%s3 + $0x50] sm:$0xff]
        %v396 = vld [vmem:[%s3 + $0x58] sm:$0xff]
        %v397 = vld [vmem:[%s4] sm:$0xff]
        %v398 = vld [vmem:[%s4 + $0x8] sm:$0xff]
        %v399 = vld [vmem:[%s4 + $0x10] sm:$0xff]
        %v400 = vld [vmem:[%s4 + $0x18] sm:$0xff]
        %v401 = vld [vmem:[%s5] sm:$0xff]
        %v402 = vld [vmem:[%s5 + $0x8] sm:$0xff]
        %v403 = vld [vmem:[%s5 + $0x10] sm:$0xff]
        %v404 = vld [vmem:[%s5 + $0x18] sm:$0xff]
        %v405 = vld [vmem:[%s5 + $0x20] sm:$0xff]
        %v406 = vld [vmem:[%s5 + $0x28] sm:$0xff]
        %v407 = vld [vmem:[%s5 + $0x30] sm:$0xff]
        %v408 = vld [vmem:[%s5 + $0x38] sm:$0xff]
        %v409 = vld [vmem:[%s6] sm:$0xff]
        %v410 = vld [vmem:[%s6 + $0x8] sm:$0xff]
        %v411 = vld [vmem:[%s6 + $0x10] sm:$0xff]
        %v412 = vld [vmem:[%s6 + $0x18] sm:$0xff]
        %v413 = vld [vmem:[%s7] sm:$0xff]
        %v414 = vld [vmem:[%s7 + $0x8] sm:$0xff]
        %v415 = vld [vmem:[%s7 + $0x10] sm:$0xff]
        %v416 = vld [vmem:[%s7 + $0x18] sm:$0xff]
        %v417 = vld [vmem:[%s7 + $0x20] sm:$0xff]
        %v418 = vld [vmem:[%s7 + $0x28] sm:$0xff]
        %v419 = vld [vmem:[%s7 + $0x30] sm:$0xff]
        %v420 = vld [vmem:[%s7 + $0x38] sm:$0xff]
        %s421 = sld [smem:[#allocation2]]
        %v422 = vlaneseq
        %v423 = vshrl.u32 %v422, 7
        %v424 = vadd.s32 %v423, 8
        %v425 = vadd.s32 %v423, 16
        %v426 = vadd.s32 %v423, 24
        %v427 = vld [vmem:[%s362] sm:$0xff]
        %v428 = vld [vmem:[%s362 + $0x8] sm:$0xff]
        %v429 = vld [vmem:[%s362 + $0x10] sm:$0xff]
        %v430 = vld [vmem:[%s362 + $0x18] sm:$0xff]
        %v431 = vadd.f32 %v427, %v428
        %v432 = vadd.f32 %v431, %v429
        %v433 = vadd.f32 %v432, %v430
        %v434 = vrot.slane %v433, 4
        %v435 = vadd.f32 %v433, %v434
        %v436 = vrot.slane %v435, 2
        %v437 = vadd.f32 %v435, %v436
        %v438 = vrot.slane %v437, 1
        %v439 = vadd.f32 %v437, %v438
        %v440 = vrcp.pop 32.0
        %v441 = vmul.f32 %v439, %v440
        %v442 = vsub.f32 %v427, %v441
        %v443 = vsub.f32 %v428, %v441
        %v444 = vsub.f32 %v429, %v441
        %v445 = vsub.f32 %v430, %v441
        %v446 = vmul.f32 %v442, %v442
        %v447 = vmul.f32 %v443, %v443
        %v448 = vmul.f32 %v444, %v444
        %v449 = vmul.f32 %v445, %v445
        %v450 = vadd.f32 %v446, %v447
        %v451 = vadd.f32 %v450, %v448
        %v452 = vadd.f32 %v451, %v449
        %v453 = vrot.slane %v452, 4
        %v454 = vadd.f32 %v452, %v453
        %v455 = vrot.slane %v454, 2
        %v456 = vadd.f32 %v454, %v455
        %v457 = vrot.slane %v456, 1
        %v458 = vadd.f32 %v456, %v457
        %v459 = vmul.f32 %v458, %v440
        %v460 = vadd.f32 %v459, 1e-05
        %v461 = vrsqrt.pop %v460
        %v462 = vmul.f32 %v442, %v461
        %v463 = vmul.f32 %v443, %v461
        %v464 = vmul.f32 %v444, %v461
        %v465 = vmul.f32 %v445, %v461
        %467 = vset.pattern.permute.xlu0 0
        %468 = vperm.xlu0 %467, %v365
        %v469 = vpop.permute.xlu0 %468
        %472 = vset.pattern.permute.xlu0 0
        %473 = vperm.xlu0 %472, %v366
        %v474 = vpop.permute.xlu0 %473
        %477 = vset.pattern.permute.xlu0 0
        %478 = vperm.xlu0 %477, %v367
        %v479 = vpop.permute.xlu0 %478
        %482 = vset.pattern.permute.xlu0 0
        %483 = vperm.xlu0 %482, %v368
        %v484 = vpop.permute.xlu0 %483
        %v486 = vmul.f32 %v462, %v469
        %v487 = vmul.f32 %v463, %v474
        %v488 = vmul.f32 %v464, %v479
        %v489 = vmul.f32 %v465, %v484
        %490 = vset.pattern.permute.xlu0 1
        %491 = vperm.xlu0 %490, %v365
        %v492 = vpop.permute.xlu0 %491
        %494 = vset.pattern.permute.xlu0 1
        %495 = vperm.xlu0 %494, %v366
        %v496 = vpop.permute.xlu0 %495
        %498 = vset.pattern.permute.xlu0 1
        %499 = vperm.xlu0 %498, %v367
        %v500 = vpop.permute.xlu0 %499
        %502 = vset.pattern.permute.xlu0 1
        %503 = vperm.xlu0 %502, %v368
        %v504 = vpop.permute.xlu0 %503
        %v506 = vadd.f32 %v486, %v492
        %v507 = vadd.f32 %v487, %v496
        %v508 = vadd.f32 %v488, %v500
        %v509 = vadd.f32 %v489, %v504
        %v510 = vadd.f32 %v506, %v369
        %v511 = vadd.f32 %v507, %v370
        %v512 = vadd.f32 %v508, %v371
        %v513 = vadd.f32 %v509, %v372
        %515 = vset.pattern.permute.xlu0 0
        %516 = vperm.xlu0 %515, %v385
        %v517 = vpop.permute.xlu0 %516
        %520 = vset.pattern.permute.xlu0 0
        %521 = vperm.xlu0 %520, %v386
        %v522 = vpop.permute.xlu0 %521
        %525 = vset.pattern.permute.xlu0 0
        %526 = vperm.xlu0 %525, %v387
        %v527 = vpop.permute.xlu0 %526
        %530 = vset.pattern.permute.xlu0 0
        %531 = vperm.xlu0 %530, %v388
        %v532 = vpop.permute.xlu0 %531
        %535 = vset.pattern.permute.xlu0 0
        %536 = vperm.xlu0 %535, %v389
        %v537 = vpop.permute.xlu0 %536
        %540 = vset.pattern.permute.xlu0 0
        %541 = vperm.xlu0 %540, %v390
        %v542 = vpop.permute.xlu0 %541
        %545 = vset.pattern.permute.xlu0 0
        %546 = vperm.xlu0 %545, %v391
        %v547 = vpop.permute.xlu0 %546
        %550 = vset.pattern.permute.xlu0 0
        %551 = vperm.xlu0 %550, %v392
        %v552 = vpop.permute.xlu0 %551
        %555 = vset.pattern.permute.xlu0 0
        %556 = vperm.xlu0 %555, %v393
        %v557 = vpop.permute.xlu0 %556
        %560 = vset.pattern.permute.xlu0 0
        %561 = vperm.xlu0 %560, %v394
        %v562 = vpop.permute.xlu0 %561
        %565 = vset.pattern.permute.xlu0 0
        %566 = vperm.xlu0 %565, %v395
        %v567 = vpop.permute.xlu0 %566
        %570 = vset.pattern.permute.xlu0 0
        %571 = vperm.xlu0 %570, %v396
        %v572 = vpop.permute.xlu0 %571
        %vm574 = vcmask 261120
        %v576 = vsel %vm574, %v373, 0
        %v579 = vsel %vm574, %v374, 0
        %v582 = vsel %vm574, %v375, 0
        %v585 = vsel %vm574, %v376, 0
        %v588 = vsel %vm574, %v377, 0
        %v591 = vsel %vm574, %v378, 0
        %v594 = vsel %vm574, %v379, 0
        %v597 = vsel %vm574, %v380, 0
        %v600 = vsel %vm574, %v381, 0
        %v603 = vsel %vm574, %v382, 0
        %v606 = vsel %vm574, %v383, 0
        %v609 = vsel %vm574, %v384, 0
        %611 = vmatprep.subr.mxu0 0.0
        %612 = vmatpush1.msra.mxu0 %v510
        %613 = vmatprep.subr.mxu0 0.0
        %614 = vmatpush1.msra.mxu0 %v511
        %615 = vmatprep.subr.mxu0 0.0
        %616 = vmatpush1.msra.mxu0 %v512
        %617 = vmatprep.subr.mxu0 0.0
        %618 = vmatpush1.msra.mxu0 %v513
        %619 = vmatprep.subr.mxu0 0.0
        %620 = vmatpush1.msra.mxu0 0.0
        %621 = vmatprep.subr.mxu0 0.0
        %622 = vmatpush1.msra.mxu0 0.0
        %623 = vmatprep.subr.mxu0 0.0
        %624 = vmatpush1.msra.mxu0 0.0
        %625 = vmatprep.subr.mxu0 0.0
        %626 = vmatpush1.msra.mxu0 0.0
        %627 = vmatprep.subr.mxu0 0.0
        %628 = vmatpush1.msra.mxu0 0.0
        %629 = vmatprep.subr.mxu0 0.0
        %630 = vmatpush1.msra.mxu0 0.0
        %631 = vmatprep.subr.mxu0 0.0
        %632 = vmatpush1.msra.mxu0 0.0
        %633 = vmatprep.subr.mxu0 0.0
        %634 = vmatpush1.msra.mxu0 0.0
        %635 = vmatprep.subr.mxu0 0.0
        %636 = vmatpush1.msra.mxu0 0.0
        %637 = vmatprep.subr.mxu0 0.0
        %638 = vmatpush1.msra.mxu0 0.0
        %639 = vmatprep.subr.mxu0 0.0
        %640 = vmatpush1.msra.mxu0 0.0
        %641 = vmatprep.subr.mxu0 0.0
        %642 = vmatpush1.msra.mxu0 0.0
        %643 = vmatprep.subr.mxu0 0.0
        %644 = vmatpush1.msra.mxu0 0.0
        %645 = vmatprep.subr.mxu0 0.0
        %646 = vmatpush1.msra.mxu0 0.0
        %647 = vmatprep.subr.mxu0 0.0
        %648 = vmatpush1.msra.mxu0 0.0
        %649 = vmatprep.subr.mxu0 0.0
        %650 = vmatpush1.msra.mxu0 0.0
        %651 = vmatprep.subr.mxu0 0.0
        %652 = vmatpush1.msra.mxu0 0.0
        %653 = vmatprep.subr.mxu0 0.0
        %654 = vmatpush1.msra.mxu0 0.0
        %655 = vmatprep.subr.mxu0 0.0
        %656 = vmatpush1.msra.mxu0 0.0
        %657 = vmatprep.subr.mxu0 0.0
        %658 = vmatpush1.msra.mxu0 0.0
        %659 = vmatprep.subr.mxu0 0.0
        %660 = vmatpush1.msra.mxu0 0.0
        %661 = vmatprep.subr.mxu0 0.0
        %662 = vmatpush1.msra.mxu0 0.0
        %663 = vmatprep.subr.mxu0 0.0
        %664 = vmatpush1.msra.mxu0 0.0
        %665 = vmatprep.subr.mxu0 0.0
        %666 = vmatpush1.msra.mxu0 0.0
        %667 = vmatprep.subr.mxu0 0.0
        %668 = vmatpush1.msra.mxu0 0.0
        %669 = vmatprep.subr.mxu0 0.0
        %670 = vmatpush1.msra.mxu0 0.0
        %671 = vmatprep.subr.mxu0 0.0
        %672 = vmatpush1.msra.mxu0 0.0
        %673 = vmatprep.subr.mxu0 0.0
        %674 = vmatpush1.msra.mxu0 0.0
        %675 = vmatprep.mubr.f32.mxu0 0.0
        %676 = vmatmul.mubr.f32.gmra.mrb[0].mxu0 %v576
        %v677 = vpop.f32.mrb[0].mxu0
        %v678 = vadd.f32 %v517, %v677
        %v679 = vpop.f32.mrb[0].mxu0
        %680 = vmatprep.mubr.f32.mxu0 0.0
        %681 = vmatmul.mubr.f32.gmra.mrb[0].mxu0 %v579
        %v682 = vpop.f32.mrb[0].mxu0
        %v683 = vadd.f32 %v522, %v682
        %v684 = vpop.f32.mrb[0].mxu0
        %685 = vmatprep.mubr.f32.mxu0 0.0
        %686 = vmatmul.mubr.f32.gmra.mrb[0].mxu0 %v582
        %v687 = vpop.f32.mrb[0].mxu0
        %v688 = vadd.f32 %v527, %v687
        %v689 = vpop.f32.mrb[0].mxu0
        %690 = vmatprep.mubr.f32.mxu0 0.0
        %691 = vmatmul.mubr.f32.gmra.mrb[0].mxu0 %v585
        %v692 = vpop.f32.mrb[0].mxu0
        %v693 = vadd.f32 %v532, %v692
        %v694 = vpop.f32.mrb[0].mxu0
        %695 = vmatprep.mubr.f32.mxu0 0.0
        %696 = vmatmul.mubr.f32.gmra.mrb[0].mxu0 %v588
        %v697 = vpop.f32.mrb[0].mxu0
        %v698 = vadd.f32 %v537, %v697
        %v699 = vpop.f32.mrb[0].mxu0
        %700 = vmatprep.mubr.f32.mxu0 0.0
        %701 = vmatmul.mubr.f32.gmra.mrb[0].mxu0 %v591
        %v702 = vpop.f32.mrb[0].mxu0
        %v703 = vadd.f32 %v542, %v702
        %v704 = vpop.f32.mrb[0].mxu0
        %705 = vmatprep.mubr.f32.mxu0 0.0
        %706 = vmatmul.mubr.f32.gmra.mrb[0].mxu0 %v594
        %v707 = vpop.f32.mrb[0].mxu0
        %v708 = vadd.f32 %v547, %v707
        %v709 = vpop.f32.mrb[0].mxu0
        %710 = vmatprep.mubr.f32.mxu0 0.0
        %711 = vmatmul.mubr.f32.gmra.mrb[0].mxu0 %v597
        %v712 = vpop.f32.mrb[0].mxu0
        %v713 = vadd.f32 %v552, %v712
        %v714 = vpop.f32.mrb[0].mxu0
        %715 = vmatprep.mubr.f32.mxu0 0.0
        %716 = vmatmul.mubr.f32.gmra.mrb[0].mxu0 %v600
        %v717 = vpop.f32.mrb[0].mxu0
        %v718 = vadd.f32 %v557, %v717
        %v719 = vpop.f32.mrb[0].mxu0
        %720 = vmatprep.mubr.f32.mxu0 0.0
        %721 = vmatmul.mubr.f32.gmra.mrb[0].mxu0 %v603
        %v722 = vpop.f32.mrb[0].mxu0
        %v723 = vadd.f32 %v562, %v722
        %v724 = vpop.f32.mrb[0].mxu0
        %725 = vmatprep.mubr.f32.mxu0 0.0
        %726 = vmatmul.mubr.f32.gmra.mrb[0].mxu0 %v606
        %v727 = vpop.f32.mrb[0].mxu0
        %v728 = vadd.f32 %v567, %v727
        %v729 = vpop.f32.mrb[0].mxu0
        %730 = vmatprep.mubr.f32.mxu0 0.0
        %731 = vmatmul.mubr.f32.gmra.mrb[0].mxu0 %v609
        %v732 = vpop.f32.mrb[0].mxu0
        %v733 = vadd.f32 %v572, %v732
        %v734 = vpop.f32.mrb[0].mxu0
        %735 = vdwg.mxu0
        %736 = vxpose.xlu0.b32.start [1/16] %v678, 128
        %737 = vxpose.xlu0.b32.cont [2/16] %v683, 128
        %738 = vxpose.xlu0.b32.cont [3/16] %v688, 128
        %739 = vxpose.xlu0.b32.cont [4/16] %v693, 128
        %740 = vxpose.xlu0.b32.cont [5/16] 0.0, 128
        %741 = vxpose.xlu0.b32.cont [6/16] 0.0, 128
        %742 = vxpose.xlu0.b32.cont [7/16] 0.0, 128
        %743 = vxpose.xlu0.b32.cont [8/16] 0.0, 128
        %744 = vxpose.xlu0.b32.cont [9/16] 0.0, 128
        %745 = vxpose.xlu0.b32.cont [10/16] 0.0, 128
        %746 = vxpose.xlu0.b32.cont [11/16] 0.0, 128
        %747 = vxpose.xlu0.b32.cont [12/16] 0.0, 128
        %748 = vxpose.xlu0.b32.cont [13/16] 0.0, 128
        %749 = vxpose.xlu0.b32.cont [14/16] 0.0, 128
        %750 = vxpose.xlu0.b32.cont [15/16] 0.0, 128
        %751 = vxpose.xlu0.b32.end [16/16] 0.0, 128
        %v752 = vpop.trf.xlu0
        %v753 = vpop.trf.xlu0
        %v754 = vpop.trf.xlu0
        %v755 = vpop.trf.xlu0
        %v756 = vpop.trf.xlu0
        %v757 = vpop.trf.xlu0
        %v758 = vpop.trf.xlu0
        %v759 = vpop.trf.xlu0
        %v760 = vpop.trf.xlu0
        %v761 = vpop.trf.xlu0
        %v762 = vpop.trf.xlu0
        %v763 = vpop.trf.xlu0
        %v764 = vpop.trf.xlu0
        %v765 = vpop.trf.xlu0
        %v766 = vpop.trf.xlu0
        %v767 = vpop.trf.xlu0
        %vm768 = vcmp.ge.s32.totalorder %v423, 0
        %vm769 = vcmp.ge.s32.totalorder %v424, 0
        %vm770 = vcmp.ge.s32.totalorder %v425, 0
        %vm771 = vcmp.ge.s32.totalorder %v426, 0
        %vm772 = vcmp.lt.s32.totalorder %v423, 4
        %vm773 = vcmp.lt.s32.totalorder %v424, 4
        %vm774 = vcmp.lt.s32.totalorder %v425, 4
        %vm775 = vcmp.lt.s32.totalorder %v426, 4
        %vm776 = vmand %vm768, %vm772
        %vm777 = vmand %vm769, %vm773
        %vm778 = vmand %vm770, %vm774
        %vm779 = vmand %vm771, %vm775
        %v780 = vsel %vm776, 1, 0
        %v781 = vsel %vm777, 1, 0
        %v782 = vsel %vm778, 1, 0
        %v783 = vsel %vm779, 1, 0
        %vm784 = vcmp.eq.s32.totalorder %v780, 1
        %vm785 = vcmp.eq.s32.totalorder %v781, 1
        %vm786 = vcmp.eq.s32.totalorder %v782, 1
        %vm787 = vcmp.eq.s32.totalorder %v783, 1
        %v788 = vsel %vm784, %v698, 0.0
        %v789 = vsel %vm785, %v703, 0.0
        %v790 = vsel %vm786, %v708, 0.0
        %v791 = vsel %vm787, %v713, 0.0
        %v793 = vsel %vm574, %v752, 0
        %v796 = vsel %vm574, %v753, 0
        %v799 = vsel %vm574, %v754, 0
        %v802 = vsel %vm574, %v755, 0
        %v805 = vsel %vm574, %v756, 0
        %v808 = vsel %vm574, %v757, 0
        %v811 = vsel %vm574, %v758, 0
        %v814 = vsel %vm574, %v759, 0
        %v817 = vsel %vm574, %v760, 0
        %v820 = vsel %vm574, %v761, 0
        %v823 = vsel %vm574, %v762, 0
        %v826 = vsel %vm574, %v763, 0
        %v829 = vsel %vm574, %v764, 0
        %v832 = vsel %vm574, %v765, 0
        %v835 = vsel %vm574, %v766, 0
        %v838 = vsel %vm574, %v767, 0
        %840 = vmatprep.subr.mxu0 0.0
        %841 = vmatpush1.msra.mxu0 %v788
        %842 = vmatprep.subr.mxu0 0.0
        %843 = vmatpush1.msra.mxu0 %v789
        %844 = vmatprep.subr.mxu0 0.0
        %845 = vmatpush1.msra.mxu0 %v790
        %846 = vmatprep.subr.mxu0 0.0
        %847 = vmatpush1.msra.mxu0 %v791
        %848 = vmatprep.subr.mxu0 0.0
        %849 = vmatpush1.msra.mxu0 0.0
        %850 = vmatprep.subr.mxu0 0.0
        %851 = vmatpush1.msra.mxu0 0.0
        %852 = vmatprep.subr.mxu0 0.0
        %853 = vmatpush1.msra.mxu0 0.0
        %854 = vmatprep.subr.mxu0 0.0
        %855 = vmatpush1.msra.mxu0 0.0
        %856 = vmatprep.subr.mxu0 0.0
        %857 = vmatpush1.msra.mxu0 0.0
        %858 = vmatprep.subr.mxu0 0.0
        %859 = vmatpush1.msra.mxu0 0.0
        %860 = vmatprep.subr.mxu0 0.0
        %861 = vmatpush1.msra.mxu0 0.0
        %862 = vmatprep.subr.mxu0 0.0
        %863 = vmatpush1.msra.mxu0 0.0
        %864 = vmatprep.subr.mxu0 0.0
        %865 = vmatpush1.msra.mxu0 0.0
        %866 = vmatprep.subr.mxu0 0.0
        %867 = vmatpush1.msra.mxu0 0.0
        %868 = vmatprep.subr.mxu0 0.0
        %869 = vmatpush1.msra.mxu0 0.0
        %870 = vmatprep.subr.mxu0 0.0
        %871 = vmatpush1.msra.mxu0 0.0
        %872 = vmatprep.subr.mxu0 0.0
        %873 = vmatpush1.msra.mxu0 0.0
        %874 = vmatprep.subr.mxu0 0.0
        %875 = vmatpush1.msra.mxu0 0.0
        %876 = vmatprep.subr.mxu0 0.0
        %877 = vmatpush1.msra.mxu0 0.0
        %878 = vmatprep.subr.mxu0 0.0
        %879 = vmatpush1.msra.mxu0 0.0
        %880 = vmatprep.subr.mxu0 0.0
        %881 = vmatpush1.msra.mxu0 0.0
        %882 = vmatprep.subr.mxu0 0.0
        %883 = vmatpush1.msra.mxu0 0.0
        %884 = vmatprep.subr.mxu0 0.0
        %885 = vmatpush1.msra.mxu0 0.0
        %886 = vmatprep.subr.mxu0 0.0
        %887 = vmatpush1.msra.mxu0 0.0
        %888 = vmatprep.subr.mxu0 0.0
        %889 = vmatpush1.msra.mxu0 0.0
        %890 = vmatprep.subr.mxu0 0.0
        %891 = vmatpush1.msra.mxu0 0.0
        %892 = vmatprep.subr.mxu0 0.0
        %893 = vmatpush1.msra.mxu0 0.0
        %894 = vmatprep.subr.mxu0 0.0
        %895 = vmatpush1.msra.mxu0 0.0
        %896 = vmatprep.subr.mxu0 0.0
        %897 = vmatpush1.msra.mxu0 0.0
        %898 = vmatprep.subr.mxu0 0.0
        %899 = vmatpush1.msra.mxu0 0.0
        %900 = vmatprep.subr.mxu0 0.0
        %901 = vmatpush1.msra.mxu0 0.0
        %902 = vmatprep.subr.mxu0 0.0
        %903 = vmatpush1.msra.mxu0 0.0
        %904 = vmatprep.mubr.f32.mxu0 0.0
        %905 = vmatmul.mubr.f32.gmra.mrb[0].mxu0 %v793
        %v906 = vpop.f32.mrb[0].mxu0
        %v907 = vadd.f32 0.0, %v906
        %v908 = vpop.f32.mrb[0].mxu0
        %909 = vmatprep.mubr.f32.mxu0 0.0
        %910 = vmatmul.mubr.f32.gmra.mrb[0].mxu0 %v796
        %v911 = vpop.f32.mrb[0].mxu0
        %v912 = vadd.f32 0.0, %v911
        %v913 = vpop.f32.mrb[0].mxu0
        %914 = vmatprep.mubr.f32.mxu0 0.0
        %915 = vmatmul.mubr.f32.gmra.mrb[0].mxu0 %v799
        %v916 = vpop.f32.mrb[0].mxu0
        %v917 = vadd.f32 0.0, %v916
        %v918 = vpop.f32.mrb[0].mxu0
        %919 = vmatprep.mubr.f32.mxu0 0.0
        %920 = vmatmul.mubr.f32.gmra.mrb[0].mxu0 %v802
        %v921 = vpop.f32.mrb[0].mxu0
        %v922 = vadd.f32 0.0, %v921
        %v923 = vpop.f32.mrb[0].mxu0
        %924 = vmatprep.mubr.f32.mxu0 0.0
        %925 = vmatmul.mubr.f32.gmra.mrb[0].mxu0 %v805
        %v926 = vpop.f32.mrb[0].mxu0
        %v927 = vadd.f32 0.0, %v926
        %v928 = vpop.f32.mrb[0].mxu0
        %929 = vmatprep.mubr.f32.mxu0 0.0
        %930 = vmatmul.mubr.f32.gmra.mrb[0].mxu0 %v808
        %v931 = vpop.f32.mrb[0].mxu0
        %v932 = vadd.f32 0.0, %v931
        %v933 = vpop.f32.mrb[0].mxu0
        %934 = vmatprep.mubr.f32.mxu0 0.0
        %935 = vmatmul.mubr.f32.gmra.mrb[0].mxu0 %v811
        %v936 = vpop.f32.mrb[0].mxu0
        %v937 = vadd.f32 0.0, %v936
        %v938 = vpop.f32.mrb[0].mxu0
        %939 = vmatprep.mubr.f32.mxu0 0.0
        %940 = vmatmul.mubr.f32.gmra.mrb[0].mxu0 %v814
        %v941 = vpop.f32.mrb[0].mxu0
        %v942 = vadd.f32 0.0, %v941
        %v943 = vpop.f32.mrb[0].mxu0
        %944 = vmatprep.mubr.f32.mxu0 0.0
        %945 = vmatmul.mubr.f32.gmra.mrb[0].mxu0 %v817
        %v946 = vpop.f32.mrb[0].mxu0
        %v947 = vadd.f32 0.0, %v946
        %v948 = vpop.f32.mrb[0].mxu0
        %949 = vmatprep.mubr.f32.mxu0 0.0
        %950 = vmatmul.mubr.f32.gmra.mrb[0].mxu0 %v820
        %v951 = vpop.f32.mrb[0].mxu0
        %v952 = vadd.f32 0.0, %v951
        %v953 = vpop.f32.mrb[0].mxu0
        %954 = vmatprep.mubr.f32.mxu0 0.0
        %955 = vmatmul.mubr.f32.gmra.mrb[0].mxu0 %v823
        %v956 = vpop.f32.mrb[0].mxu0
        %v957 = vadd.f32 0.0, %v956
        %v958 = vpop.f32.mrb[0].mxu0
        %959 = vmatprep.mubr.f32.mxu0 0.0
        %960 = vmatmul.mubr.f32.gmra.mrb[0].mxu0 %v826
        %v961 = vpop.f32.mrb[0].mxu0
        %v962 = vadd.f32 0.0, %v961
        %v963 = vpop.f32.mrb[0].mxu0
        %964 = vmatprep.mubr.f32.mxu0 0.0
        %965 = vmatmul.mubr.f32.gmra.mrb[0].mxu0 %v829
        %v966 = vpop.f32.mrb[0].mxu0
        %v967 = vadd.f32 0.0, %v966
        %v968 = vpop.f32.mrb[0].mxu0
        %969 = vmatprep.mubr.f32.mxu0 0.0
        %970 = vmatmul.mubr.f32.gmra.mrb[0].mxu0 %v832
        %v971 = vpop.f32.mrb[0].mxu0
        %v972 = vadd.f32 0.0, %v971
        %v973 = vpop.f32.mrb[0].mxu0
        %974 = vmatprep.mubr.f32.mxu0 0.0
        %975 = vmatmul.mubr.f32.gmra.mrb[0].mxu0 %v835
        %v976 = vpop.f32.mrb[0].mxu0
        %v977 = vadd.f32 0.0, %v976
        %v978 = vpop.f32.mrb[0].mxu0
        %979 = vmatprep.mubr.f32.mxu0 0.0
        %980 = vmatmul.mubr.f32.gmra.mrb[0].mxu0 %v838
        %v981 = vpop.f32.mrb[0].mxu0
        %v982 = vadd.f32 0.0, %v981
        %v983 = vpop.f32.mrb[0].mxu0
        %984 = vdwg.mxu0
        %985 = vmax.xlane.f32.xlu0 %v907
        %v986 = vpop.xlane.xlu0 %985
        %987 = vmax.xlane.f32.xlu0 %v912
        %v988 = vpop.xlane.xlu0 %987
        %989 = vmax.xlane.f32.xlu0 %v917
        %v990 = vpop.xlane.xlu0 %989
        %991 = vmax.xlane.f32.xlu0 %v922
        %v992 = vpop.xlane.xlu0 %991
        %993 = vmax.xlane.f32.xlu0 %v927
        %v994 = vpop.xlane.xlu0 %993
        %995 = vmax.xlane.f32.xlu0 %v932
        %v996 = vpop.xlane.xlu0 %995
        %997 = vmax.xlane.f32.xlu0 %v937
        %v998 = vpop.xlane.xlu0 %997
        %999 = vmax.xlane.f32.xlu0 %v942
        %v1000 = vpop.xlane.xlu0 %999
        %1001 = vmax.xlane.f32.xlu0 %v947
        %v1002 = vpop.xlane.xlu0 %1001
        %1003 = vmax.xlane.f32.xlu0 %v952
        %v1004 = vpop.xlane.xlu0 %1003
        %1005 = vmax.xlane.f32.xlu0 %v957
        %v1006 = vpop.xlane.xlu0 %1005
        %1007 = vmax.xlane.f32.xlu0 %v962
        %v1008 = vpop.xlane.xlu0 %1007
        %1009 = vmax.xlane.f32.xlu0 %v967
        %v1010 = vpop.xlane.xlu0 %1009
        %1011 = vmax.xlane.f32.xlu0 %v972
        %v1012 = vpop.xlane.xlu0 %1011
        %1013 = vmax.xlane.f32.xlu0 %v977
        %v1014 = vpop.xlane.xlu0 %1013
        %1015 = vmax.xlane.f32.xlu0 %v982
        %v1016 = vpop.xlane.xlu0 %1015
        %v1017 = vsub.f32 %v907, %v986
        %v1018 = vsub.f32 %v912, %v988
        %v1019 = vsub.f32 %v917, %v990
        %v1020 = vsub.f32 %v922, %v992
        %v1021 = vsub.f32 %v927, %v994
        %v1022 = vsub.f32 %v932, %v996
        %v1023 = vsub.f32 %v937, %v998
        %v1024 = vsub.f32 %v942, %v1000
        %v1025 = vsub.f32 %v947, %v1002
        %v1026 = vsub.f32 %v952, %v1004
        %v1027 = vsub.f32 %v957, %v1006
        %v1028 = vsub.f32 %v962, %v1008
        %v1029 = vsub.f32 %v967, %v1010
        %v1030 = vsub.f32 %v972, %v1012
        %v1031 = vsub.f32 %v977, %v1014
        %v1032 = vsub.f32 %v982, %v1016
        %v1033 = vmul.f32 %v1017, 1.442695
        %v1034 = vpow.pop %v1033
        %v1035 = vmul.f32 %v1018, 1.442695
        %v1036 = vpow.pop %v1035
        %v1037 = vmul.f32 %v1019, 1.442695
        %v1038 = vpow.pop %v1037
        %v1039 = vmul.f32 %v1020, 1.442695
        %v1040 = vpow.pop %v1039
        %v1041 = vmul.f32 %v1021, 1.442695
        %v1042 = vpow.pop %v1041
        %v1043 = vmul.f32 %v1022, 1.442695
        %v1044 = vpow.pop %v1043
        %v1045 = vmul.f32 %v1023, 1.442695
        %v1046 = vpow.pop %v1045
        %v1047 = vmul.f32 %v1024, 1.442695
        %v1048 = vpow.pop %v1047
        %v1049 = vmul.f32 %v1025, 1.442695
        %v1050 = vpow.pop %v1049
        %v1051 = vmul.f32 %v1026, 1.442695
        %v1052 = vpow.pop %v1051
        %v1053 = vmul.f32 %v1027, 1.442695
        %v1054 = vpow.pop %v1053
        %v1055 = vmul.f32 %v1028, 1.442695
        %v1056 = vpow.pop %v1055
        %v1057 = vmul.f32 %v1029, 1.442695
        %v1058 = vpow.pop %v1057
        %v1059 = vmul.f32 %v1030, 1.442695
        %v1060 = vpow.pop %v1059
        %v1061 = vmul.f32 %v1031, 1.442695
        %v1062 = vpow.pop %v1061
        %v1063 = vmul.f32 %v1032, 1.442695
        %v1064 = vpow.pop %v1063
        %1065 = vadd.xlane.f32.xlu0 %v1034
        %v1066 = vpop.xlane.xlu0 %1065
        %1067 = vadd.xlane.f32.xlu0 %v1036
        %v1068 = vpop.xlane.xlu0 %1067
        %1069 = vadd.xlane.f32.xlu0 %v1038
        %v1070 = vpop.xlane.xlu0 %1069
        %1071 = vadd.xlane.f32.xlu0 %v1040
        %v1072 = vpop.xlane.xlu0 %1071
        %1073 = vadd.xlane.f32.xlu0 %v1042
        %v1074 = vpop.xlane.xlu0 %1073
        %1075 = vadd.xlane.f32.xlu0 %v1044
        %v1076 = vpop.xlane.xlu0 %1075
        %1077 = vadd.xlane.f32.xlu0 %v1046
        %v1078 = vpop.xlane.xlu0 %1077
        %1079 = vadd.xlane.f32.xlu0 %v1048
        %v1080 = vpop.xlane.xlu0 %1079
        %1081 = vadd.xlane.f32.xlu0 %v1050
        %v1082 = vpop.xlane.xlu0 %1081
        %1083 = vadd.xlane.f32.xlu0 %v1052
        %v1084 = vpop.xlane.xlu0 %1083
        %1085 = vadd.xlane.f32.xlu0 %v1054
        %v1086 = vpop.xlane.xlu0 %1085
        %1087 = vadd.xlane.f32.xlu0 %v1056
        %v1088 = vpop.xlane.xlu0 %1087
        %1089 = vadd.xlane.f32.xlu0 %v1058
        %v1090 = vpop.xlane.xlu0 %1089
        %1091 = vadd.xlane.f32.xlu0 %v1060
        %v1092 = vpop.xlane.xlu0 %1091
        %1093 = vadd.xlane.f32.xlu0 %v1062
        %v1094 = vpop.xlane.xlu0 %1093
        %1095 = vadd.xlane.f32.xlu0 %v1064
        %v1096 = vpop.xlane.xlu0 %1095
        %v1097 = vrcp.pop %v1066
        %v1098 = vrcp.pop %v1068
        %v1099 = vrcp.pop %v1070
        %v1100 = vrcp.pop %v1072
        %v1101 = vrcp.pop %v1074
        %v1102 = vrcp.pop %v1076
        %v1103 = vrcp.pop %v1078
        %v1104 = vrcp.pop %v1080
        %v1105 = vrcp.pop %v1082
        %v1106 = vrcp.pop %v1084
        %v1107 = vrcp.pop %v1086
        %v1108 = vrcp.pop %v1088
        %v1109 = vrcp.pop %v1090
        %v1110 = vrcp.pop %v1092
        %v1111 = vrcp.pop %v1094
        %v1112 = vrcp.pop %v1096
        %v1113 = vmul.f32 %v1034, %v1097
        %v1114 = vmul.f32 %v1036, %v1098
        %v1115 = vmul.f32 %v1038, %v1099
        %v1116 = vmul.f32 %v1040, %v1100
        %v1117 = vmul.f32 %v1042, %v1101
        %v1118 = vmul.f32 %v1044, %v1102
        %v1119 = vmul.f32 %v1046, %v1103
        %v1120 = vmul.f32 %v1048, %v1104
        %v1121 = vmul.f32 %v1050, %v1105
        %v1122 = vmul.f32 %v1052, %v1106
        %v1123 = vmul.f32 %v1054, %v1107
        %v1124 = vmul.f32 %v1056, %v1108
        %v1125 = vmul.f32 %v1058, %v1109
        %v1126 = vmul.f32 %v1060, %v1110
        %v1127 = vmul.f32 %v1062, %v1111
        %v1128 = vmul.f32 %v1064, %v1112
        %v1129 = vsel %vm784, %v718, 0.0
        %v1130 = vsel %vm785, %v723, 0.0
        %v1131 = vsel %vm786, %v728, 0.0
        %v1132 = vsel %vm787, %v733, 0.0
        %vm1133 = vcmp.ge.s32.totalorder %v423, 4
        %vm1134 = vcmp.ge.s32.totalorder %v424, 4
        %vm1135 = vcmp.ge.s32.totalorder %v425, 4
        %vm1136 = vcmp.ge.s32.totalorder %v426, 4
        %vm1137 = vcmp.lt.s32.totalorder %v423, 8
        %vm1138 = vcmp.lt.s32.totalorder %v424, 8
        %vm1139 = vcmp.lt.s32.totalorder %v425, 8
        %vm1140 = vcmp.lt.s32.totalorder %v426, 8
        %vm1141 = vmand %vm1133, %vm1137
        %vm1142 = vmand %vm1134, %vm1138
        %vm1143 = vmand %vm1135, %vm1139
        %vm1144 = vmand %vm1136, %vm1140
        %v1145 = vsel %vm1141, 1, 0
        %v1146 = vsel %vm1142, 1, 0
        %v1147 = vsel %vm1143, 1, 0
        %v1148 = vsel %vm1144, 1, 0
        %vm1149 = vcmp.eq.s32.totalorder %v1145, 1
        %vm1150 = vcmp.eq.s32.totalorder %v1146, 1
        %vm1151 = vcmp.eq.s32.totalorder %v1147, 1
        %vm1152 = vcmp.eq.s32.totalorder %v1148, 1
        %v1153 = vsel %vm1149, %v698, 0.0
        %v1154 = vsel %vm1150, %v703, 0.0
        %v1155 = vsel %vm1151, %v708, 0.0
        %v1156 = vsel %vm1152, %v713, 0.0
        %1157 = vmatprep.subr.mxu0 0.0
        %1158 = vmatpush1.msra.mxu0 %v1153
        %1159 = vmatprep.subr.mxu0 0.0
        %1160 = vmatpush1.msra.mxu0 %v1154
        %1161 = vmatprep.subr.mxu0 0.0
        %1162 = vmatpush1.msra.mxu0 %v1155
        %1163 = vmatprep.subr.mxu0 0.0
        %1164 = vmatpush1.msra.mxu0 %v1156
        %1165 = vmatprep.subr.mxu0 0.0
        %1166 = vmatpush1.msra.mxu0 0.0
        %1167 = vmatprep.subr.mxu0 0.0
        %1168 = vmatpush1.msra.mxu0 0.0
        %1169 = vmatprep.subr.mxu0 0.0
        %1170 = vmatpush1.msra.mxu0 0.0
        %1171 = vmatprep.subr.mxu0 0.0
        %1172 = vmatpush1.msra.mxu0 0.0
        %1173 = vmatprep.subr.mxu0 0.0
        %1174 = vmatpush1.msra.mxu0 0.0
        %1175 = vmatprep.subr.mxu0 0.0
        %1176 = vmatpush1.msra.mxu0 0.0
        %1177 = vmatprep.subr.mxu0 0.0
        %1178 = vmatpush1.msra.mxu0 0.0
        %1179 = vmatprep.subr.mxu0 0.0
        %1180 = vmatpush1.msra.mxu0 0.0
        %1181 = vmatprep.subr.mxu0 0.0
        %1182 = vmatpush1.msra.mxu0 0.0
        %1183 = vmatprep.subr.mxu0 0.0
        %1184 = vmatpush1.msra.mxu0 0.0
        %1185 = vmatprep.subr.mxu0 0.0
        %1186 = vmatpush1.msra.mxu0 0.0
        %1187 = vmatprep.subr.mxu0 0.0
        %1188 = vmatpush1.msra.mxu0 0.0
        %1189 = vmatprep.subr.mxu0 0.0
        %1190 = vmatpush1.msra.mxu0 0.0
        %1191 = vmatprep.subr.mxu0 0.0
        %1192 = vmatpush1.msra.mxu0 0.0
        %1193 = vmatprep.subr.mxu0 0.0
        %1194 = vmatpush1.msra.mxu0 0.0
        %1195 = vmatprep.subr.mxu0 0.0
        %1196 = vmatpush1.msra.mxu0 0.0
        %1197 = vmatprep.subr.mxu0 0.0
        %1198 = vmatpush1.msra.mxu0 0.0
        %1199 = vmatprep.subr.mxu0 0.0
        %1200 = vmatpush1.msra.mxu0 0.0
        %1201 = vmatprep.subr.mxu0 0.0
        %1202 = vmatpush1.msra.mxu0 0.0
        %1203 = vmatprep.subr.mxu0 0.0
        %1204 = vmatpush1.msra.mxu0 0.0
        %1205 = vmatprep.subr.mxu0 0.0
        %1206 = vmatpush1.msra.mxu0 0.0
        %1207 = vmatprep.subr.mxu0 0.0
        %1208 = vmatpush1.msra.mxu0 0.0
        %1209 = vmatprep.subr.mxu0 0.0
        %1210 = vmatpush1.msra.mxu0 0.0
        %1211 = vmatprep.subr.mxu0 0.0
        %1212 = vmatpush1.msra.mxu0 0.0
        %1213 = vmatprep.subr.mxu0 0.0
        %1214 = vmatpush1.msra.mxu0 0.0
        %1215 = vmatprep.subr.mxu0 0.0
        %1216 = vmatpush1.msra.mxu0 0.0
        %1217 = vmatprep.subr.mxu0 0.0
        %1218 = vmatpush1.msra.mxu0 0.0
        %1219 = vmatprep.subr.mxu0 0.0
        %1220 = vmatpush1.msra.mxu0 0.0
        %1221 = vmatprep.mubr.f32.mxu0 0.0
        %1222 = vmatmul.mubr.f32.gmra.mrb[0].mxu0 %v793
        %v1223 = vpop.f32.mrb[0].mxu0
        %v1224 = vadd.f32 0.0, %v1223
        %v1225 = vpop.f32.mrb[0].mxu0
        %1226 = vmatprep.mubr.f32.mxu0 0.0
        %1227 = vmatmul.mubr.f32.gmra.mrb[0].mxu0 %v796
        %v1228 = vpop.f32.mrb[0].mxu0
        %v1229 = vadd.f32 0.0, %v1228
        %v1230 = vpop.f32.mrb[0].mxu0
        %1231 = vmatprep.mubr.f32.mxu0 0.0
        %1232 = vmatmul.mubr.f32.gmra.mrb[0].mxu0 %v799
        %v1233 = vpop.f32.mrb[0].mxu0
        %v1234 = vadd.f32 0.0, %v1233
        %v1235 = vpop.f32.mrb[0].mxu0
        %1236 = vmatprep.mubr.f32.mxu0 0.0
        %1237 = vmatmul.mubr.f32.gmra.mrb[0].mxu0 %v802
        %v1238 = vpop.f32.mrb[0].mxu0
        %v1239 = vadd.f32 0.0, %v1238
        %v1240 = vpop.f32.mrb[0].mxu0
        %1241 = vmatprep.mubr.f32.mxu0 0.0
        %1242 = vmatmul.mubr.f32.gmra.mrb[0].mxu0 %v805
        %v1243 = vpop.f32.mrb[0].mxu0
        %v1244 = vadd.f32 0.0, %v1243
        %v1245 = vpop.f32.mrb[0].mxu0
        %1246 = vmatprep.mubr.f32.mxu0 0.0
        %1247 = vmatmul.mubr.f32.gmra.mrb[0].mxu0 %v808
        %v1248 = vpop.f32.mrb[0].mxu0
        %v1249 = vadd.f32 0.0, %v1248
        %v1250 = vpop.f32.mrb[0].mxu0
        %1251 = vmatprep.mubr.f32.mxu0 0.0
        %1252 = vmatmul.mubr.f32.gmra.mrb[0].mxu0 %v811
        %v1253 = vpop.f32.mrb[0].mxu0
        %v1254 = vadd.f32 0.0, %v1253
        %v1255 = vpop.f32.mrb[0].mxu0
        %1256 = vmatprep.mubr.f32.mxu0 0.0
        %1257 = vmatmul.mubr.f32.gmra.mrb[0].mxu0 %v814
        %v1258 = vpop.f32.mrb[0].mxu0
        %v1259 = vadd.f32 0.0, %v1258
        %v1260 = vpop.f32.mrb[0].mxu0
        %1261 = vmatprep.mubr.f32.mxu0 0.0
        %1262 = vmatmul.mubr.f32.gmra.mrb[0].mxu0 %v817
        %v1263 = vpop.f32.mrb[0].mxu0
        %v1264 = vadd.f32 0.0, %v1263
        %v1265 = vpop.f32.mrb[0].mxu0
        %1266 = vmatprep.mubr.f32.mxu0 0.0
        %1267 = vmatmul.mubr.f32.gmra.mrb[0].mxu0 %v820
        %v1268 = vpop.f32.mrb[0].mxu0
        %v1269 = vadd.f32 0.0, %v1268
        %v1270 = vpop.f32.mrb[0].mxu0
        %1271 = vmatprep.mubr.f32.mxu0 0.0
        %1272 = vmatmul.mubr.f32.gmra.mrb[0].mxu0 %v823
        %v1273 = vpop.f32.mrb[0].mxu0
        %v1274 = vadd.f32 0.0, %v1273
        %v1275 = vpop.f32.mrb[0].mxu0
        %1276 = vmatprep.mubr.f32.mxu0 0.0
        %1277 = vmatmul.mubr.f32.gmra.mrb[0].mxu0 %v826
        %v1278 = vpop.f32.mrb[0].mxu0
        %v1279 = vadd.f32 0.0, %v1278
        %v1280 = vpop.f32.mrb[0].mxu0
        %1281 = vmatprep.mubr.f32.mxu0 0.0
        %1282 = vmatmul.mubr.f32.gmra.mrb[0].mxu0 %v829
        %v1283 = vpop.f32.mrb[0].mxu0
        %v1284 = vadd.f32 0.0, %v1283
        %v1285 = vpop.f32.mrb[0].mxu0
        %1286 = vmatprep.mubr.f32.mxu0 0.0
        %1287 = vmatmul.mubr.f32.gmra.mrb[0].mxu0 %v832
        %v1288 = vpop.f32.mrb[0].mxu0
        %v1289 = vadd.f32 0.0, %v1288
        %v1290 = vpop.f32.mrb[0].mxu0
        %1291 = vmatprep.mubr.f32.mxu0 0.0
        %1292 = vmatmul.mubr.f32.gmra.mrb[0].mxu0 %v835
        %v1293 = vpop.f32.mrb[0].mxu0
        %v1294 = vadd.f32 0.0, %v1293
        %v1295 = vpop.f32.mrb[0].mxu0
        %1296 = vmatprep.mubr.f32.mxu0 0.0
        %1297 = vmatmul.mubr.f32.gmra.mrb[0].mxu0 %v838
        %v1298 = vpop.f32.mrb[0].mxu0
        %v1299 = vadd.f32 0.0, %v1298
        %v1300 = vpop.f32.mrb[0].mxu0
        %1301 = vdwg.mxu0
        %1302 = vmax.xlane.f32.xlu0 %v1224
        %v1303 = vpop.xlane.xlu0 %1302
        %1304 = vmax.xlane.f32.xlu0 %v1229
        %v1305 = vpop.xlane.xlu0 %1304
        %1306 = vmax.xlane.f32.xlu0 %v1234
        %v1307 = vpop.xlane.xlu0 %1306
        %1308 = vmax.xlane.f32.xlu0 %v1239
        %v1309 = vpop.xlane.xlu0 %1308
        %1310 = vmax.xlane.f32.xlu0 %v1244
        %v1311 = vpop.xlane.xlu0 %1310
        %1312 = vmax.xlane.f32.xlu0 %v1249
        %v1313 = vpop.xlane.xlu0 %1312
        %1314 = vmax.xlane.f32.xlu0 %v1254
        %v1315 = vpop.xlane.xlu0 %1314
        %1316 = vmax.xlane.f32.xlu0 %v1259
        %v1317 = vpop.xlane.xlu0 %1316
        %1318 = vmax.xlane.f32.xlu0 %v1264
        %v1319 = vpop.xlane.xlu0 %1318
        %1320 = vmax.xlane.f32.xlu0 %v1269
        %v1321 = vpop.xlane.xlu0 %1320
        %1322 = vmax.xlane.f32.xlu0 %v1274
        %v1323 = vpop.xlane.xlu0 %1322
        %1324 = vmax.xlane.f32.xlu0 %v1279
        %v1325 = vpop.xlane.xlu0 %1324
        %1326 = vmax.xlane.f32.xlu0 %v1284
        %v1327 = vpop.xlane.xlu0 %1326
        %1328 = vmax.xlane.f32.xlu0 %v1289
        %v1329 = vpop.xlane.xlu0 %1328
        %1330 = vmax.xlane.f32.xlu0 %v1294
        %v1331 = vpop.xlane.xlu0 %1330
        %1332 = vmax.xlane.f32.xlu0 %v1299
        %v1333 = vpop.xlane.xlu0 %1332
        %v1334 = vsub.f32 %v1224, %v1303
        %v1335 = vsub.f32 %v1229, %v1305
        %v1336 = vsub.f32 %v1234, %v1307
        %v1337 = vsub.f32 %v1239, %v1309
        %v1338 = vsub.f32 %v1244, %v1311
        %v1339 = vsub.f32 %v1249, %v1313
        %v1340 = vsub.f32 %v1254, %v1315
        %v1341 = vsub.f32 %v1259, %v1317
        %v1342 = vsub.f32 %v1264, %v1319
        %v1343 = vsub.f32 %v1269, %v1321
        %v1344 = vsub.f32 %v1274, %v1323
        %v1345 = vsub.f32 %v1279, %v1325
        %v1346 = vsub.f32 %v1284, %v1327
        %v1347 = vsub.f32 %v1289, %v1329
        %v1348 = vsub.f32 %v1294, %v1331
        %v1349 = vsub.f32 %v1299, %v1333
        %v1350 = vmul.f32 %v1334, 1.442695
        %v1351 = vpow.pop %v1350
        %v1352 = vmul.f32 %v1335, 1.442695
        %v1353 = vpow.pop %v1352
        %v1354 = vmul.f32 %v1336, 1.442695
        %v1355 = vpow.pop %v1354
        %v1356 = vmul.f32 %v1337, 1.442695
        %v1357 = vpow.pop %v1356
        %v1358 = vmul.f32 %v1338, 1.442695
        %v1359 = vpow.pop %v1358
        %v1360 = vmul.f32 %v1339, 1.442695
        %v1361 = vpow.pop %v1360
        %v1362 = vmul.f32 %v1340, 1.442695
        %v1363 = vpow.pop %v1362
        %v1364 = vmul.f32 %v1341, 1.442695
        %v1365 = vpow.pop %v1364
        %v1366 = vmul.f32 %v1342, 1.442695
        %v1367 = vpow.pop %v1366
        %v1368 = vmul.f32 %v1343, 1.442695
        %v1369 = vpow.pop %v1368
        %v1370 = vmul.f32 %v1344, 1.442695
        %v1371 = vpow.pop %v1370
        %v1372 = vmul.f32 %v1345, 1.442695
        %v1373 = vpow.pop %v1372
        %v1374 = vmul.f32 %v1346, 1.442695
        %v1375 = vpow.pop %v1374
        %v1376 = vmul.f32 %v1347, 1.442695
        %v1377 = vpow.pop %v1376
        %v1378 = vmul.f32 %v1348, 1.442695
        %v1379 = vpow.pop %v1378
        %v1380 = vmul.f32 %v1349, 1.442695
        %v1381 = vpow.pop %v1380
        %1382 = vadd.xlane.f32.xlu0 %v1351
        %v1383 = vpop.xlane.xlu0 %1382
        %1384 = vadd.xlane.f32.xlu0 %v1353
        %v1385 = vpop.xlane.xlu0 %1384
        %1386 = vadd.xlane.f32.xlu0 %v1355
        %v1387 = vpop.xlane.xlu0 %1386
        %1388 = vadd.xlane.f32.xlu0 %v1357
        %v1389 = vpop.xlane.xlu0 %1388
        %1390 = vadd.xlane.f32.xlu0 %v1359
        %v1391 = vpop.xlane.xlu0 %1390
        %1392 = vadd.xlane.f32.xlu0 %v1361
        %v1393 = vpop.xlane.xlu0 %1392
        %1394 = vadd.xlane.f32.xlu0 %v1363
        %v1395 = vpop.xlane.xlu0 %1394
        %1396 = vadd.xlane.f32.xlu0 %v1365
        %v1397 = vpop.xlane.xlu0 %1396
        %1398 = vadd.xlane.f32.xlu0 %v1367
        %v1399 = vpop.xlane.xlu0 %1398
        %1400 = vadd.xlane.f32.xlu0 %v1369
        %v1401 = vpop.xlane.xlu0 %1400
        %1402 = vadd.xlane.f32.xlu0 %v1371
        %v1403 = vpop.xlane.xlu0 %1402
        %1404 = vadd.xlane.f32.xlu0 %v1373
        %v1405 = vpop.xlane.xlu0 %1404
        %1406 = vadd.xlane.f32.xlu0 %v1375
        %v1407 = vpop.xlane.xlu0 %1406
        %1408 = vadd.xlane.f32.xlu0 %v1377
        %v1409 = vpop.xlane.xlu0 %1408
        %1410 = vadd.xlane.f32.xlu0 %v1379
        %v1411 = vpop.xlane.xlu0 %1410
        %1412 = vadd.xlane.f32.xlu0 %v1381
        %v1413 = vpop.xlane.xlu0 %1412
        %v1414 = vrcp.pop %v1383
        %v1415 = vrcp.pop %v1385
        %v1416 = vrcp.pop %v1387
        %v1417 = vrcp.pop %v1389
        %v1418 = vrcp.pop %v1391
        %v1419 = vrcp.pop %v1393
        %v1420 = vrcp.pop %v1395
        %v1421 = vrcp.pop %v1397
        %v1422 = vrcp.pop %v1399
        %v1423 = vrcp.pop %v1401
        %v1424 = vrcp.pop %v1403
        %v1425 = vrcp.pop %v1405
        %v1426 = vrcp.pop %v1407
        %v1427 = vrcp.pop %v1409
        %v1428 = vrcp.pop %v1411
        %v1429 = vrcp.pop %v1413
        %v1430 = vmul.f32 %v1351, %v1414
        %v1431 = vmul.f32 %v1353, %v1415
        %v1432 = vmul.f32 %v1355, %v1416
        %v1433 = vmul.f32 %v1357, %v1417
        %v1434 = vmul.f32 %v1359, %v1418
        %v1435 = vmul.f32 %v1361, %v1419
        %v1436 = vmul.f32 %v1363, %v1420
        %v1437 = vmul.f32 %v1365, %v1421
        %v1438 = vmul.f32 %v1367, %v1422
        %v1439 = vmul.f32 %v1369, %v1423
        %v1440 = vmul.f32 %v1371, %v1424
        %v1441 = vmul.f32 %v1373, %v1425
        %v1442 = vmul.f32 %v1375, %v1426
        %v1443 = vmul.f32 %v1377, %v1427
        %v1444 = vmul.f32 %v1379, %v1428
        %v1445 = vmul.f32 %v1381, %v1429
        %v1446 = vsel %vm1149, %v718, 0.0
        %v1447 = vsel %vm1150, %v723, 0.0
        %v1448 = vsel %vm1151, %v728, 0.0
        %v1449 = vsel %vm1152, %v733, 0.0
        %1450 = vmatprep.subr.mxu0 0.0
        %1451 = vmatpush1.xpose.msra.mxu0 %v1430
        %1452 = vmatprep.subr.mxu0 0.0
        %1453 = vmatpush1.xpose.msra.mxu0 %v1431
        %1454 = vmatprep.subr.mxu0 0.0
        %1455 = vmatpush1.xpose.msra.mxu0 %v1432
        %1456 = vmatprep.subr.mxu0 0.0
        %1457 = vmatpush1.xpose.msra.mxu0 %v1433
        %1458 = vmatprep.subr.mxu0 0.0
        %1459 = vmatpush1.xpose.msra.mxu0 %v1434
        %1460 = vmatprep.subr.mxu0 0.0
        %1461 = vmatpush1.xpose.msra.mxu0 %v1435
        %1462 = vmatprep.subr.mxu0 0.0
        %1463 = vmatpush1.xpose.msra.mxu0 %v1436
        %1464 = vmatprep.subr.mxu0 0.0
        %1465 = vmatpush1.xpose.msra.mxu0 %v1437
        %1466 = vmatprep.subr.mxu0 0.0
        %1467 = vmatpush1.xpose.msra.mxu0 %v1438
        %1468 = vmatprep.subr.mxu0 0.0
        %1469 = vmatpush1.xpose.msra.mxu0 %v1439
        %1470 = vmatprep.subr.mxu0 0.0
        %1471 = vmatpush1.xpose.msra.mxu0 %v1440
        %1472 = vmatprep.subr.mxu0 0.0
        %1473 = vmatpush1.xpose.msra.mxu0 %v1441
        %1474 = vmatprep.subr.mxu0 0.0
        %1475 = vmatpush1.xpose.msra.mxu0 %v1442
        %1476 = vmatprep.subr.mxu0 0.0
        %1477 = vmatpush1.xpose.msra.mxu0 %v1443
        %1478 = vmatprep.subr.mxu0 0.0
        %1479 = vmatpush1.xpose.msra.mxu0 %v1444
        %1480 = vmatprep.subr.mxu0 0.0
        %1481 = vmatpush1.xpose.msra.mxu0 %v1445
        %1482 = vmatprep.subr.mxu0 0.0
        %1483 = vmatpush1.xpose.msra.mxu0 0.0
        %1484 = vmatprep.subr.mxu0 0.0
        %1485 = vmatpush1.xpose.msra.mxu0 0.0
        %1486 = vmatprep.subr.mxu0 0.0
        %1487 = vmatpush1.xpose.msra.mxu0 0.0
        %1488 = vmatprep.subr.mxu0 0.0
        %1489 = vmatpush1.xpose.msra.mxu0 0.0
        %1490 = vmatprep.subr.mxu0 0.0
        %1491 = vmatpush1.xpose.msra.mxu0 0.0
        %1492 = vmatprep.subr.mxu0 0.0
        %1493 = vmatpush1.xpose.msra.mxu0 0.0
        %1494 = vmatprep.subr.mxu0 0.0
        %1495 = vmatpush1.xpose.msra.mxu0 0.0
        %1496 = vmatprep.subr.mxu0 0.0
        %1497 = vmatpush1.xpose.msra.mxu0 0.0
        %1498 = vmatprep.subr.mxu0 0.0
        %1499 = vmatpush1.xpose.msra.mxu0 0.0
        %1500 = vmatprep.subr.mxu0 0.0
        %1501 = vmatpush1.xpose.msra.mxu0 0.0
        %1502 = vmatprep.subr.mxu0 0.0
        %1503 = vmatpush1.xpose.msra.mxu0 0.0
        %1504 = vmatprep.subr.mxu0 0.0
        %1505 = vmatpush1.xpose.msra.mxu0 0.0
        %1506 = vmatprep.subr.mxu0 0.0
        %1507 = vmatpush1.xpose.msra.mxu0 0.0
        %1508 = vmatprep.subr.mxu0 0.0
        %1509 = vmatpush1.xpose.msra.mxu0 0.0
        %1510 = vmatprep.subr.mxu0 0.0
        %1511 = vmatpush1.xpose.msra.mxu0 0.0
        %1512 = vmatprep.subr.mxu0 0.0
        %1513 = vmatpush1.xpose.msra.mxu0 0.0
        %1514 = vmatprep.mubr.f32.mxu0 0.0
        %1515 = vmatmul.mubr.f32.gmra.mrb[0].mxu0 %v1446
        %v1516 = vpop.f32.mrb[0].mxu0
        %v1517 = vadd.f32 0.0, %v1516
        %v1518 = vpop.f32.mrb[0].mxu0
        %1519 = vmatprep.mubr.f32.mxu0 0.0
        %1520 = vmatmul.mubr.f32.gmra.mrb[0].mxu0 %v1447
        %v1521 = vpop.f32.mrb[0].mxu0
        %v1522 = vadd.f32 0.0, %v1521
        %v1523 = vpop.f32.mrb[0].mxu0
        %1524 = vmatprep.mubr.f32.mxu0 0.0
        %1525 = vmatmul.mubr.f32.gmra.mrb[0].mxu0 %v1448
        %v1526 = vpop.f32.mrb[0].mxu0
        %v1527 = vadd.f32 0.0, %v1526
        %v1528 = vpop.f32.mrb[0].mxu0
        %1529 = vmatprep.mubr.f32.mxu0 0.0
        %1530 = vmatmul.mubr.f32.gmra.mrb[0].mxu0 %v1449
        %v1531 = vpop.f32.mrb[0].mxu0
        %v1532 = vadd.f32 0.0, %v1531
        %v1533 = vpop.f32.mrb[0].mxu0
        %1534 = vdwg.mxu0
        %1535 = vmatprep.subr.mxu0 0.0
        %1536 = vmatpush1.xpose.msra.mxu0 %v1113
        %1537 = vmatprep.subr.mxu0 0.0
        %1538 = vmatpush1.xpose.msra.mxu0 %v1114
        %1539 = vmatprep.subr.mxu0 0.0
        %1540 = vmatpush1.xpose.msra.mxu0 %v1115
        %1541 = vmatprep.subr.mxu0 0.0
        %1542 = vmatpush1.xpose.msra.mxu0 %v1116
        %1543 = vmatprep.subr.mxu0 0.0
        %1544 = vmatpush1.xpose.msra.mxu0 %v1117
        %1545 = vmatprep.subr.mxu0 0.0
        %1546 = vmatpush1.xpose.msra.mxu0 %v1118
        %1547 = vmatprep.subr.mxu0 0.0
        %1548 = vmatpush1.xpose.msra.mxu0 %v1119
        %1549 = vmatprep.subr.mxu0 0.0
        %1550 = vmatpush1.xpose.msra.mxu0 %v1120
        %1551 = vmatprep.subr.mxu0 0.0
        %1552 = vmatpush1.xpose.msra.mxu0 %v1121
        %1553 = vmatprep.subr.mxu0 0.0
        %1554 = vmatpush1.xpose.msra.mxu0 %v1122
        %1555 = vmatprep.subr.mxu0 0.0
        %1556 = vmatpush1.xpose.msra.mxu0 %v1123
        %1557 = vmatprep.subr.mxu0 0.0
        %1558 = vmatpush1.xpose.msra.mxu0 %v1124
        %1559 = vmatprep.subr.mxu0 0.0
        %1560 = vmatpush1.xpose.msra.mxu0 %v1125
        %1561 = vmatprep.subr.mxu0 0.0
        %1562 = vmatpush1.xpose.msra.mxu0 %v1126
        %1563 = vmatprep.subr.mxu0 0.0
        %1564 = vmatpush1.xpose.msra.mxu0 %v1127
        %1565 = vmatprep.subr.mxu0 0.0
        %1566 = vmatpush1.xpose.msra.mxu0 %v1128
        %1567 = vmatprep.subr.mxu0 0.0
        %1568 = vmatpush1.xpose.msra.mxu0 0.0
        %1569 = vmatprep.subr.mxu0 0.0
        %1570 = vmatpush1.xpose.msra.mxu0 0.0
        %1571 = vmatprep.subr.mxu0 0.0
        %1572 = vmatpush1.xpose.msra.mxu0 0.0
        %1573 = vmatprep.subr.mxu0 0.0
        %1574 = vmatpush1.xpose.msra.mxu0 0.0
        %1575 = vmatprep.subr.mxu0 0.0
        %1576 = vmatpush1.xpose.msra.mxu0 0.0
        %1577 = vmatprep.subr.mxu0 0.0
        %1578 = vmatpush1.xpose.msra.mxu0 0.0
        %1579 = vmatprep.subr.mxu0 0.0
        %1580 = vmatpush1.xpose.msra.mxu0 0.0
        %1581 = vmatprep.subr.mxu0 0.0
        %1582 = vmatpush1.xpose.msra.mxu0 0.0
        %1583 = vmatprep.subr.mxu0 0.0
        %1584 = vmatpush1.xpose.msra.mxu0 0.0
        %1585 = vmatprep.subr.mxu0 0.0
        %1586 = vmatpush1.xpose.msra.mxu0 0.0
        %1587 = vmatprep.subr.mxu0 0.0
        %1588 = vmatpush1.xpose.msra.mxu0 0.0
        %1589 = vmatprep.subr.mxu0 0.0
        %1590 = vmatpush1.xpose.msra.mxu0 0.0
        %1591 = vmatprep.subr.mxu0 0.0
        %1592 = vmatpush1.xpose.msra.mxu0 0.0
        %1593 = vmatprep.subr.mxu0 0.0
        %1594 = vmatpush1.xpose.msra.mxu0 0.0
        %1595 = vmatprep.subr.mxu0 0.0
        %1596 = vmatpush1.xpose.msra.mxu0 0.0
        %1597 = vmatprep.subr.mxu0 0.0
        %1598 = vmatpush1.xpose.msra.mxu0 0.0
        %1599 = vmatprep.mubr.f32.mxu0 0.0
        %1600 = vmatmul.mubr.f32.gmra.mrb[0].mxu0 %v1129
        %v1601 = vpop.f32.mrb[0].mxu0
        %v1602 = vadd.f32 %v1517, %v1601
        %v1603 = vpop.f32.mrb[0].mxu0
        %1604 = vmatprep.mubr.f32.mxu0 0.0
        %1605 = vmatmul.mubr.f32.gmra.mrb[0].mxu0 %v1130
        %v1606 = vpop.f32.mrb[0].mxu0
        %v1607 = vadd.f32 %v1522, %v1606
        %v1608 = vpop.f32.mrb[0].mxu0
        %1609 = vmatprep.mubr.f32.mxu0 0.0
        %1610 = vmatmul.mubr.f32.gmra.mrb[0].mxu0 %v1131
        %v1611 = vpop.f32.mrb[0].mxu0
        %v1612 = vadd.f32 %v1527, %v1611
        %v1613 = vpop.f32.mrb[0].mxu0
        %1614 = vmatprep.mubr.f32.mxu0 0.0
        %1615 = vmatmul.mubr.f32.gmra.mrb[0].mxu0 %v1132
        %v1616 = vpop.f32.mrb[0].mxu0
        %v1617 = vadd.f32 %v1532, %v1616
        %v1618 = vpop.f32.mrb[0].mxu0
        %1619 = vdwg.mxu0
        %vm1620 = vcmp.ge.s32.totalorder %v423, 8
        %vm1621 = vcmp.ge.s32.totalorder %v424, 8
        %vm1622 = vcmp.ge.s32.totalorder %v425, 8
        %vm1623 = vcmp.ge.s32.totalorder %v426, 8
        %vm1624 = vcmp.lt.s32.totalorder %v423, 12
        %vm1625 = vcmp.lt.s32.totalorder %v424, 12
        %vm1626 = vcmp.lt.s32.totalorder %v425, 12
        %vm1627 = vcmp.lt.s32.totalorder %v426, 12
        %vm1628 = vmand %vm1620, %vm1624
        %vm1629 = vmand %vm1621, %vm1625
        %vm1630 = vmand %vm1622, %vm1626
        %vm1631 = vmand %vm1623, %vm1627
        %v1632 = vsel %vm1628, 1, 0
        %v1633 = vsel %vm1629, 1, 0
        %v1634 = vsel %vm1630, 1, 0
        %v1635 = vsel %vm1631, 1, 0
        %vm1636 = vcmp.eq.s32.totalorder %v1632, 1
        %vm1637 = vcmp.eq.s32.totalorder %v1633, 1
        %vm1638 = vcmp.eq.s32.totalorder %v1634, 1
        %vm1639 = vcmp.eq.s32.totalorder %v1635, 1
        %v1640 = vsel %vm1636, %v698, 0.0
        %v1641 = vsel %vm1637, %v703, 0.0
        %v1642 = vsel %vm1638, %v708, 0.0
        %v1643 = vsel %vm1639, %v713, 0.0
        %1644 = vmatprep.subr.mxu0 0.0
        %1645 = vmatpush1.msra.mxu0 %v1640
        %1646 = vmatprep.subr.mxu0 0.0
        %1647 = vmatpush1.msra.mxu0 %v1641
        %1648 = vmatprep.subr.mxu0 0.0
        %1649 = vmatpush1.msra.mxu0 %v1642
        %1650 = vmatprep.subr.mxu0 0.0
        %1651 = vmatpush1.msra.mxu0 %v1643
        %1652 = vmatprep.subr.mxu0 0.0
        %1653 = vmatpush1.msra.mxu0 0.0
        %1654 = vmatprep.subr.mxu0 0.0
        %1655 = vmatpush1.msra.mxu0 0.0
        %1656 = vmatprep.subr.mxu0 0.0
        %1657 = vmatpush1.msra.mxu0 0.0
        %1658 = vmatprep.subr.mxu0 0.0
        %1659 = vmatpush1.msra.mxu0 0.0
        %1660 = vmatprep.subr.mxu0 0.0
        %1661 = vmatpush1.msra.mxu0 0.0
        %1662 = vmatprep.subr.mxu0 0.0
        %1663 = vmatpush1.msra.mxu0 0.0
        %1664 = vmatprep.subr.mxu0 0.0
        %1665 = vmatpush1.msra.mxu0 0.0
        %1666 = vmatprep.subr.mxu0 0.0
        %1667 = vmatpush1.msra.mxu0 0.0
        %1668 = vmatprep.subr.mxu0 0.0
        %1669 = vmatpush1.msra.mxu0 0.0
        %1670 = vmatprep.subr.mxu0 0.0
        %1671 = vmatpush1.msra.mxu0 0.0
        %1672 = vmatprep.subr.mxu0 0.0
        %1673 = vmatpush1.msra.mxu0 0.0
        %1674 = vmatprep.subr.mxu0 0.0
        %1675 = vmatpush1.msra.mxu0 0.0
        %1676 = vmatprep.subr.mxu0 0.0
        %1677 = vmatpush1.msra.mxu0 0.0
        %1678 = vmatprep.subr.mxu0 0.0
        %1679 = vmatpush1.msra.mxu0 0.0
        %1680 = vmatprep.subr.mxu0 0.0
        %1681 = vmatpush1.msra.mxu0 0.0
        %1682 = vmatprep.subr.mxu0 0.0
        %1683 = vmatpush1.msra.mxu0 0.0
        %1684 = vmatprep.subr.mxu0 0.0
        %1685 = vmatpush1.msra.mxu0 0.0
        %1686 = vmatprep.subr.mxu0 0.0
        %1687 = vmatpush1.msra.mxu0 0.0
        %1688 = vmatprep.subr.mxu0 0.0
        %1689 = vmatpush1.msra.mxu0 0.0
        %1690 = vmatprep.subr.mxu0 0.0
        %1691 = vmatpush1.msra.mxu0 0.0
        %1692 = vmatprep.subr.mxu0 0.0
        %1693 = vmatpush1.msra.mxu0 0.0
        %1694 = vmatprep.subr.mxu0 0.0
        %1695 = vmatpush1.msra.mxu0 0.0
        %1696 = vmatprep.subr.mxu0 0.0
        %1697 = vmatpush1.msra.mxu0 0.0
        %1698 = vmatprep.subr.mxu0 0.0
        %1699 = vmatpush1.msra.mxu0 0.0
        %1700 = vmatprep.subr.mxu0 0.0
        %1701 = vmatpush1.msra.mxu0 0.0
        %1702 = vmatprep.subr.mxu0 0.0
        %1703 = vmatpush1.msra.mxu0 0.0
        %1704 = vmatprep.subr.mxu0 0.0
        %1705 = vmatpush1.msra.mxu0 0.0
        %1706 = vmatprep.subr.mxu0 0.0
        %1707 = vmatpush1.msra.mxu0 0.0
        %1708 = vmatprep.mubr.f32.mxu0 0.0
        %1709 = vmatmul.mubr.f32.gmra.mrb[0].mxu0 %v793
        %v1710 = vpop.f32.mrb[0].mxu0
        %v1711 = vadd.f32 0.0, %v1710
        %v1712 = vpop.f32.mrb[0].mxu0
        %1713 = vmatprep.mubr.f32.mxu0 0.0
        %1714 = vmatmul.mubr.f32.gmra.mrb[0].mxu0 %v796
        %v1715 = vpop.f32.mrb[0].mxu0
        %v1716 = vadd.f32 0.0, %v1715
        %v1717 = vpop.f32.mrb[0].mxu0
        %1718 = vmatprep.mubr.f32.mxu0 0.0
        %1719 = vmatmul.mubr.f32.gmra.mrb[0].mxu0 %v799
        %v1720 = vpop.f32.mrb[0].mxu0
        %v1721 = vadd.f32 0.0, %v1720
        %v1722 = vpop.f32.mrb[0].mxu0
        %1723 = vmatprep.mubr.f32.mxu0 0.0
        %1724 = vmatmul.mubr.f32.gmra.mrb[0].mxu0 %v802
        %v1725 = vpop.f32.mrb[0].mxu0
        %v1726 = vadd.f32 0.0, %v1725
        %v1727 = vpop.f32.mrb[0].mxu0
        %1728 = vmatprep.mubr.f32.mxu0 0.0
        %1729 = vmatmul.mubr.f32.gmra.mrb[0].mxu0 %v805
        %v1730 = vpop.f32.mrb[0].mxu0
        %v1731 = vadd.f32 0.0, %v1730
        %v1732 = vpop.f32.mrb[0].mxu0
        %1733 = vmatprep.mubr.f32.mxu0 0.0
        %1734 = vmatmul.mubr.f32.gmra.mrb[0].mxu0 %v808
        %v1735 = vpop.f32.mrb[0].mxu0
        %v1736 = vadd.f32 0.0, %v1735
        %v1737 = vpop.f32.mrb[0].mxu0
        %1738 = vmatprep.mubr.f32.mxu0 0.0
        %1739 = vmatmul.mubr.f32.gmra.mrb[0].mxu0 %v811
        %v1740 = vpop.f32.mrb[0].mxu0
        %v1741 = vadd.f32 0.0, %v1740
        %v1742 = vpop.f32.mrb[0].mxu0
        %1743 = vmatprep.mubr.f32.mxu0 0.0
        %1744 = vmatmul.mubr.f32.gmra.mrb[0].mxu0 %v814
        %v1745 = vpop.f32.mrb[0].mxu0
        %v1746 = vadd.f32 0.0, %v1745
        %v1747 = vpop.f32.mrb[0].mxu0
        %1748 = vmatprep.mubr.f32.mxu0 0.0
        %1749 = vmatmul.mubr.f32.gmra.mrb[0].mxu0 %v817
        %v1750 = vpop.f32.mrb[0].mxu0
        %v1751 = vadd.f32 0.0, %v1750
        %v1752 = vpop.f32.mrb[0].mxu0
        %1753 = vmatprep.mubr.f32.mxu0 0.0
        %1754 = vmatmul.mubr.f32.gmra.mrb[0].mxu0 %v820
        %v1755 = vpop.f32.mrb[0].mxu0
        %v1756 = vadd.f32 0.0, %v1755
        %v1757 = vpop.f32.mrb[0].mxu0
        %1758 = vmatprep.mubr.f32.mxu0 0.0
        %1759 = vmatmul.mubr.f32.gmra.mrb[0].mxu0 %v823
        %v1760 = vpop.f32.mrb[0].mxu0
        %v1761 = vadd.f32 0.0, %v1760
        %v1762 = vpop.f32.mrb[0].mxu0
        %1763 = vmatprep.mubr.f32.mxu0 0.0
        %1764 = vmatmul.mubr.f32.gmra.mrb[0].mxu0 %v826
        %v1765 = vpop.f32.mrb[0].mxu0
        %v1766 = vadd.f32 0.0, %v1765
        %v1767 = vpop.f32.mrb[0].mxu0
        %1768 = vmatprep.mubr.f32.mxu0 0.0
        %1769 = vmatmul.mubr.f32.gmra.mrb[0].mxu0 %v829
        %v1770 = vpop.f32.mrb[0].mxu0
        %v1771 = vadd.f32 0.0, %v1770
        %v1772 = vpop.f32.mrb[0].mxu0
        %1773 = vmatprep.mubr.f32.mxu0 0.0
        %1774 = vmatmul.mubr.f32.gmra.mrb[0].mxu0 %v832
        %v1775 = vpop.f32.mrb[0].mxu0
        %v1776 = vadd.f32 0.0, %v1775
        %v1777 = vpop.f32.mrb[0].mxu0
        %1778 = vmatprep.mubr.f32.mxu0 0.0
        %1779 = vmatmul.mubr.f32.gmra.mrb[0].mxu0 %v835
        %v1780 = vpop.f32.mrb[0].mxu0
        %v1781 = vadd.f32 0.0, %v1780
        %v1782 = vpop.f32.mrb[0].mxu0
        %1783 = vmatprep.mubr.f32.mxu0 0.0
        %1784 = vmatmul.mubr.f32.gmra.mrb[0].mxu0 %v838
        %v1785 = vpop.f32.mrb[0].mxu0
        %v1786 = vadd.f32 0.0, %v1785
        %v1787 = vpop.f32.mrb[0].mxu0
        %1788 = vdwg.mxu0
        %1789 = vmax.xlane.f32.xlu0 %v1711
        %v1790 = vpop.xlane.xlu0 %1789
        %1791 = vmax.xlane.f32.xlu0 %v1716
        %v1792 = vpop.xlane.xlu0 %1791
        %1793 = vmax.xlane.f32.xlu0 %v1721
        %v1794 = vpop.xlane.xlu0 %1793
        %1795 = vmax.xlane.f32.xlu0 %v1726
        %v1796 = vpop.xlane.xlu0 %1795
        %1797 = vmax.xlane.f32.xlu0 %v1731
        %v1798 = vpop.xlane.xlu0 %1797
        %1799 = vmax.xlane.f32.xlu0 %v1736
        %v1800 = vpop.xlane.xlu0 %1799
        %1801 = vmax.xlane.f32.xlu0 %v1741
        %v1802 = vpop.xlane.xlu0 %1801
        %1803 = vmax.xlane.f32.xlu0 %v1746
        %v1804 = vpop.xlane.xlu0 %1803
        %1805 = vmax.xlane.f32.xlu0 %v1751
        %v1806 = vpop.xlane.xlu0 %1805
        %1807 = vmax.xlane.f32.xlu0 %v1756
        %v1808 = vpop.xlane.xlu0 %1807
        %1809 = vmax.xlane.f32.xlu0 %v1761
        %v1810 = vpop.xlane.xlu0 %1809
        %1811 = vmax.xlane.f32.xlu0 %v1766
        %v1812 = vpop.xlane.xlu0 %1811
        %1813 = vmax.xlane.f32.xlu0 %v1771
        %v1814 = vpop.xlane.xlu0 %1813
        %1815 = vmax.xlane.f32.xlu0 %v1776
        %v1816 = vpop.xlane.xlu0 %1815
        %1817 = vmax.xlane.f32.xlu0 %v1781
        %v1818 = vpop.xlane.xlu0 %1817
        %1819 = vmax.xlane.f32.xlu0 %v1786
        %v1820 = vpop.xlane.xlu0 %1819
        %v1821 = vsub.f32 %v1711, %v1790
        %v1822 = vsub.f32 %v1716, %v1792
        %v1823 = vsub.f32 %v1721, %v1794
        %v1824 = vsub.f32 %v1726, %v1796
        %v1825 = vsub.f32 %v1731, %v1798
        %v1826 = vsub.f32 %v1736, %v1800
        %v1827 = vsub.f32 %v1741, %v1802
        %v1828 = vsub.f32 %v1746, %v1804
        %v1829 = vsub.f32 %v1751, %v1806
        %v1830 = vsub.f32 %v1756, %v1808
        %v1831 = vsub.f32 %v1761, %v1810
        %v1832 = vsub.f32 %v1766, %v1812
        %v1833 = vsub.f32 %v1771, %v1814
        %v1834 = vsub.f32 %v1776, %v1816
        %v1835 = vsub.f32 %v1781, %v1818
        %v1836 = vsub.f32 %v1786, %v1820
        %v1837 = vmul.f32 %v1821, 1.442695
        %v1838 = vpow.pop %v1837
        %v1839 = vmul.f32 %v1822, 1.442695
        %v1840 = vpow.pop %v1839
        %v1841 = vmul.f32 %v1823, 1.442695
        %v1842 = vpow.pop %v1841
        %v1843 = vmul.f32 %v1824, 1.442695
        %v1844 = vpow.pop %v1843
        %v1845 = vmul.f32 %v1825, 1.442695
        %v1846 = vpow.pop %v1845
        %v1847 = vmul.f32 %v1826, 1.442695
        %v1848 = vpow.pop %v1847
        %v1849 = vmul.f32 %v1827, 1.442695
        %v1850 = vpow.pop %v1849
        %v1851 = vmul.f32 %v1828, 1.442695
        %v1852 = vpow.pop %v1851
        %v1853 = vmul.f32 %v1829, 1.442695
        %v1854 = vpow.pop %v1853
        %v1855 = vmul.f32 %v1830, 1.442695
        %v1856 = vpow.pop %v1855
        %v1857 = vmul.f32 %v1831, 1.442695
        %v1858 = vpow.pop %v1857
        %v1859 = vmul.f32 %v1832, 1.442695
        %v1860 = vpow.pop %v1859
        %v1861 = vmul.f32 %v1833, 1.442695
        %v1862 = vpow.pop %v1861
        %v1863 = vmul.f32 %v1834, 1.442695
        %v1864 = vpow.pop %v1863
        %v1865 = vmul.f32 %v1835, 1.442695
        %v1866 = vpow.pop %v1865
        %v1867 = vmul.f32 %v1836, 1.442695
        %v1868 = vpow.pop %v1867
        %1869 = vadd.xlane.f32.xlu0 %v1838
        %v1870 = vpop.xlane.xlu0 %1869
        %1871 = vadd.xlane.f32.xlu0 %v1840
        %v1872 = vpop.xlane.xlu0 %1871
        %1873 = vadd.xlane.f32.xlu0 %v1842
        %v1874 = vpop.xlane.xlu0 %1873
        %1875 = vadd.xlane.f32.xlu0 %v1844
        %v1876 = vpop.xlane.xlu0 %1875
        %1877 = vadd.xlane.f32.xlu0 %v1846
        %v1878 = vpop.xlane.xlu0 %1877
        %1879 = vadd.xlane.f32.xlu0 %v1848
        %v1880 = vpop.xlane.xlu0 %1879
        %1881 = vadd.xlane.f32.xlu0 %v1850
        %v1882 = vpop.xlane.xlu0 %1881
        %1883 = vadd.xlane.f32.xlu0 %v1852
        %v1884 = vpop.xlane.xlu0 %1883
        %1885 = vadd.xlane.f32.xlu0 %v1854
        %v1886 = vpop.xlane.xlu0 %1885
        %1887 = vadd.xlane.f32.xlu0 %v1856
        %v1888 = vpop.xlane.xlu0 %1887
        %1889 = vadd.xlane.f32.xlu0 %v1858
        %v1890 = vpop.xlane.xlu0 %1889
        %1891 = vadd.xlane.f32.xlu0 %v1860
        %v1892 = vpop.xlane.xlu0 %1891
        %1893 = vadd.xlane.f32.xlu0 %v1862
        %v1894 = vpop.xlane.xlu0 %1893
        %1895 = vadd.xlane.f32.xlu0 %v1864
        %v1896 = vpop.xlane.xlu0 %1895
        %1897 = vadd.xlane.f32.xlu0 %v1866
        %v1898 = vpop.xlane.xlu0 %1897
        %1899 = vadd.xlane.f32.xlu0 %v1868
        %v1900 = vpop.xlane.xlu0 %1899
        %v1901 = vrcp.pop %v1870
        %v1902 = vrcp.pop %v1872
        %v1903 = vrcp.pop %v1874
        %v1904 = vrcp.pop %v1876
        %v1905 = vrcp.pop %v1878
        %v1906 = vrcp.pop %v1880
        %v1907 = vrcp.pop %v1882
        %v1908 = vrcp.pop %v1884
        %v1909 = vrcp.pop %v1886
        %v1910 = vrcp.pop %v1888
        %v1911 = vrcp.pop %v1890
        %v1912 = vrcp.pop %v1892
        %v1913 = vrcp.pop %v1894
        %v1914 = vrcp.pop %v1896
        %v1915 = vrcp.pop %v1898
        %v1916 = vrcp.pop %v1900
        %v1917 = vmul.f32 %v1838, %v1901
        %v1918 = vmul.f32 %v1840, %v1902
        %v1919 = vmul.f32 %v1842, %v1903
        %v1920 = vmul.f32 %v1844, %v1904
        %v1921 = vmul.f32 %v1846, %v1905
        %v1922 = vmul.f32 %v1848, %v1906
        %v1923 = vmul.f32 %v1850, %v1907
        %v1924 = vmul.f32 %v1852, %v1908
        %v1925 = vmul.f32 %v1854, %v1909
        %v1926 = vmul.f32 %v1856, %v1910
        %v1927 = vmul.f32 %v1858, %v1911
        %v1928 = vmul.f32 %v1860, %v1912
        %v1929 = vmul.f32 %v1862, %v1913
        %v1930 = vmul.f32 %v1864, %v1914
        %v1931 = vmul.f32 %v1866, %v1915
        %v1932 = vmul.f32 %v1868, %v1916
        %v1933 = vsel %vm1636, %v718, 0.0
        %v1934 = vsel %vm1637, %v723, 0.0
        %v1935 = vsel %vm1638, %v728, 0.0
        %v1936 = vsel %vm1639, %v733, 0.0
        %1937 = vmatprep.subr.mxu0 0.0
        %1938 = vmatpush1.xpose.msra.mxu0 %v1917
        %1939 = vmatprep.subr.mxu0 0.0
        %1940 = vmatpush1.xpose.msra.mxu0 %v1918
        %1941 = vmatprep.subr.mxu0 0.0
        %1942 = vmatpush1.xpose.msra.mxu0 %v1919
        %1943 = vmatprep.subr.mxu0 0.0
        %1944 = vmatpush1.xpose.msra.mxu0 %v1920
        %1945 = vmatprep.subr.mxu0 0.0
        %1946 = vmatpush1.xpose.msra.mxu0 %v1921
        %1947 = vmatprep.subr.mxu0 0.0
        %1948 = vmatpush1.xpose.msra.mxu0 %v1922
        %1949 = vmatprep.subr.mxu0 0.0
        %1950 = vmatpush1.xpose.msra.mxu0 %v1923
        %1951 = vmatprep.subr.mxu0 0.0
        %1952 = vmatpush1.xpose.msra.mxu0 %v1924
        %1953 = vmatprep.subr.mxu0 0.0
        %1954 = vmatpush1.xpose.msra.mxu0 %v1925
        %1955 = vmatprep.subr.mxu0 0.0
        %1956 = vmatpush1.xpose.msra.mxu0 %v1926
        %1957 = vmatprep.subr.mxu0 0.0
        %1958 = vmatpush1.xpose.msra.mxu0 %v1927
        %1959 = vmatprep.subr.mxu0 0.0
        %1960 = vmatpush1.xpose.msra.mxu0 %v1928
        %1961 = vmatprep.subr.mxu0 0.0
        %1962 = vmatpush1.xpose.msra.mxu0 %v1929
        %1963 = vmatprep.subr.mxu0 0.0
        %1964 = vmatpush1.xpose.msra.mxu0 %v1930
        %1965 = vmatprep.subr.mxu0 0.0
        %1966 = vmatpush1.xpose.msra.mxu0 %v1931
        %1967 = vmatprep.subr.mxu0 0.0
        %1968 = vmatpush1.xpose.msra.mxu0 %v1932
        %1969 = vmatprep.subr.mxu0 0.0
        %1970 = vmatpush1.xpose.msra.mxu0 0.0
        %1971 = vmatprep.subr.mxu0 0.0
        %1972 = vmatpush1.xpose.msra.mxu0 0.0
        %1973 = vmatprep.subr.mxu0 0.0
        %1974 = vmatpush1.xpose.msra.mxu0 0.0
        %1975 = vmatprep.subr.mxu0 0.0
        %1976 = vmatpush1.xpose.msra.mxu0 0.0
        %1977 = vmatprep.subr.mxu0 0.0
        %1978 = vmatpush1.xpose.msra.mxu0 0.0
        %1979 = vmatprep.subr.mxu0 0.0
        %1980 = vmatpush1.xpose.msra.mxu0 0.0
        %1981 = vmatprep.subr.mxu0 0.0
        %1982 = vmatpush1.xpose.msra.mxu0 0.0
        %1983 = vmatprep.subr.mxu0 0.0
        %1984 = vmatpush1.xpose.msra.mxu0 0.0
        %1985 = vmatprep.subr.mxu0 0.0
        %1986 = vmatpush1.xpose.msra.mxu0 0.0
        %1987 = vmatprep.subr.mxu0 0.0
        %1988 = vmatpush1.xpose.msra.mxu0 0.0
        %1989 = vmatprep.subr.mxu0 0.0
        %1990 = vmatpush1.xpose.msra.mxu0 0.0
        %1991 = vmatprep.subr.mxu0 0.0
        %1992 = vmatpush1.xpose.msra.mxu0 0.0
        %1993 = vmatprep.subr.mxu0 0.0
        %1994 = vmatpush1.xpose.msra.mxu0 0.0
        %1995 = vmatprep.subr.mxu0 0.0
        %1996 = vmatpush1.xpose.msra.mxu0 0.0
        %1997 = vmatprep.subr.mxu0 0.0
        %1998 = vmatpush1.xpose.msra.mxu0 0.0
        %1999 = vmatprep.subr.mxu0 0.0
        %2000 = vmatpush1.xpose.msra.mxu0 0.0
        %2001 = vmatprep.mubr.f32.mxu0 0.0
        %2002 = vmatmul.mubr.f32.gmra.mrb[0].mxu0 %v1933
        %v2003 = vpop.f32.mrb[0].mxu0
        %v2004 = vadd.f32 0.0, %v2003
        %v2005 = vpop.f32.mrb[0].mxu0
        %2006 = vmatprep.mubr.f32.mxu0 0.0
        %2007 = vmatmul.mubr.f32.gmra.mrb[0].mxu0 %v1934
        %v2008 = vpop.f32.mrb[0].mxu0
        %v2009 = vadd.f32 0.0, %v2008
        %v2010 = vpop.f32.mrb[0].mxu0
        %2011 = vmatprep.mubr.f32.mxu0 0.0
        %2012 = vmatmul.mubr.f32.gmra.mrb[0].mxu0 %v1935
        %v2013 = vpop.f32.mrb[0].mxu0
        %v2014 = vadd.f32 0.0, %v2013
        %v2015 = vpop.f32.mrb[0].mxu0
        %2016 = vmatprep.mubr.f32.mxu0 0.0
        %2017 = vmatmul.mubr.f32.gmra.mrb[0].mxu0 %v1936
        %v2018 = vpop.f32.mrb[0].mxu0
        %v2019 = vadd.f32 0.0, %v2018
        %v2020 = vpop.f32.mrb[0].mxu0
        %2021 = vdwg.mxu0
        %v2022 = vadd.f32 %v1602, %v2004
        %v2023 = vadd.f32 %v1607, %v2009
        %v2024 = vadd.f32 %v1612, %v2014
        %v2025 = vadd.f32 %v1617, %v2019
        %vm2026 = vcmp.ge.s32.totalorder %v423, 12
        %vm2027 = vcmp.ge.s32.totalorder %v424, 12
        %vm2028 = vcmp.ge.s32.totalorder %v425, 12
        %vm2029 = vcmp.ge.s32.totalorder %v426, 12
        %vm2030 = vcmp.lt.s32.totalorder %v423, 16
        %vm2031 = vcmp.lt.s32.totalorder %v424, 16
        %vm2032 = vcmp.lt.s32.totalorder %v425, 16
        %vm2033 = vcmp.lt.s32.totalorder %v426, 16
        %vm2034 = vmand %vm2026, %vm2030
        %vm2035 = vmand %vm2027, %vm2031
        %vm2036 = vmand %vm2028, %vm2032
        %vm2037 = vmand %vm2029, %vm2033
        %v2038 = vsel %vm2034, 1, 0
        %v2039 = vsel %vm2035, 1, 0
        %v2040 = vsel %vm2036, 1, 0
        %v2041 = vsel %vm2037, 1, 0
        %vm2042 = vcmp.eq.s32.totalorder %v2038, 1
        %vm2043 = vcmp.eq.s32.totalorder %v2039, 1
        %vm2044 = vcmp.eq.s32.totalorder %v2040, 1
        %vm2045 = vcmp.eq.s32.totalorder %v2041, 1
        %v2046 = vsel %vm2042, %v698, 0.0
        %v2047 = vsel %vm2043, %v703, 0.0
        %v2048 = vsel %vm2044, %v708, 0.0
        %v2049 = vsel %vm2045, %v713, 0.0
        %2050 = vmatprep.subr.mxu0 0.0
        %2051 = vmatpush1.msra.mxu0 %v2046
        %2052 = vmatprep.subr.mxu0 0.0
        %2053 = vmatpush1.msra.mxu0 %v2047
        %2054 = vmatprep.subr.mxu0 0.0
        %2055 = vmatpush1.msra.mxu0 %v2048
        %2056 = vmatprep.subr.mxu0 0.0
        %2057 = vmatpush1.msra.mxu0 %v2049
        %2058 = vmatprep.subr.mxu0 0.0
        %2059 = vmatpush1.msra.mxu0 0.0
        %2060 = vmatprep.subr.mxu0 0.0
        %2061 = vmatpush1.msra.mxu0 0.0
        %2062 = vmatprep.subr.mxu0 0.0
        %2063 = vmatpush1.msra.mxu0 0.0
        %2064 = vmatprep.subr.mxu0 0.0
        %2065 = vmatpush1.msra.mxu0 0.0
        %2066 = vmatprep.subr.mxu0 0.0
        %2067 = vmatpush1.msra.mxu0 0.0
        %2068 = vmatprep.subr.mxu0 0.0
        %2069 = vmatpush1.msra.mxu0 0.0
        %2070 = vmatprep.subr.mxu0 0.0
        %2071 = vmatpush1.msra.mxu0 0.0
        %2072 = vmatprep.subr.mxu0 0.0
        %2073 = vmatpush1.msra.mxu0 0.0
        %2074 = vmatprep.subr.mxu0 0.0
        %2075 = vmatpush1.msra.mxu0 0.0
        %2076 = vmatprep.subr.mxu0 0.0
        %2077 = vmatpush1.msra.mxu0 0.0
        %2078 = vmatprep.subr.mxu0 0.0
        %2079 = vmatpush1.msra.mxu0 0.0
        %2080 = vmatprep.subr.mxu0 0.0
        %2081 = vmatpush1.msra.mxu0 0.0
        %2082 = vmatprep.subr.mxu0 0.0
        %2083 = vmatpush1.msra.mxu0 0.0
        %2084 = vmatprep.subr.mxu0 0.0
        %2085 = vmatpush1.msra.mxu0 0.0
        %2086 = vmatprep.subr.mxu0 0.0
        %2087 = vmatpush1.msra.mxu0 0.0
        %2088 = vmatprep.subr.mxu0 0.0
        %2089 = vmatpush1.msra.mxu0 0.0
        %2090 = vmatprep.subr.mxu0 0.0
        %2091 = vmatpush1.msra.mxu0 0.0
        %2092 = vmatprep.subr.mxu0 0.0
        %2093 = vmatpush1.msra.mxu0 0.0
        %2094 = vmatprep.subr.mxu0 0.0
        %2095 = vmatpush1.msra.mxu0 0.0
        %2096 = vmatprep.subr.mxu0 0.0
        %2097 = vmatpush1.msra.mxu0 0.0
        %2098 = vmatprep.subr.mxu0 0.0
        %2099 = vmatpush1.msra.mxu0 0.0
        %2100 = vmatprep.subr.mxu0 0.0
        %2101 = vmatpush1.msra.mxu0 0.0
        %2102 = vmatprep.subr.mxu0 0.0
        %2103 = vmatpush1.msra.mxu0 0.0
        %2104 = vmatprep.subr.mxu0 0.0
        %2105 = vmatpush1.msra.mxu0 0.0
        %2106 = vmatprep.subr.mxu0 0.0
        %2107 = vmatpush1.msra.mxu0 0.0
        %2108 = vmatprep.subr.mxu0 0.0
        %2109 = vmatpush1.msra.mxu0 0.0
        %2110 = vmatprep.subr.mxu0 0.0
        %2111 = vmatpush1.msra.mxu0 0.0
        %2112 = vmatprep.subr.mxu0 0.0
        %2113 = vmatpush1.msra.mxu0 0.0
        %2114 = vmatprep.mubr.f32.mxu0 0.0
        %2115 = vmatmul.mubr.f32.gmra.mrb[0].mxu0 %v793
        %v2116 = vpop.f32.mrb[0].mxu0
        %v2117 = vadd.f32 0.0, %v2116
        %v2118 = vpop.f32.mrb[0].mxu0
        %2119 = vmatprep.mubr.f32.mxu0 0.0
        %2120 = vmatmul.mubr.f32.gmra.mrb[0].mxu0 %v796
        %v2121 = vpop.f32.mrb[0].mxu0
        %v2122 = vadd.f32 0.0, %v2121
        %v2123 = vpop.f32.mrb[0].mxu0
        %2124 = vmatprep.mubr.f32.mxu0 0.0
        %2125 = vmatmul.mubr.f32.gmra.mrb[0].mxu0 %v799
        %v2126 = vpop.f32.mrb[0].mxu0
        %v2127 = vadd.f32 0.0, %v2126
        %v2128 = vpop.f32.mrb[0].mxu0
        %2129 = vmatprep.mubr.f32.mxu0 0.0
        %2130 = vmatmul.mubr.f32.gmra.mrb[0].mxu0 %v802
        %v2131 = vpop.f32.mrb[0].mxu0
        %v2132 = vadd.f32 0.0, %v2131
        %v2133 = vpop.f32.mrb[0].mxu0
        %2134 = vmatprep.mubr.f32.mxu0 0.0
        %2135 = vmatmul.mubr.f32.gmra.mrb[0].mxu0 %v805
        %v2136 = vpop.f32.mrb[0].mxu0
        %v2137 = vadd.f32 0.0, %v2136
        %v2138 = vpop.f32.mrb[0].mxu0
        %2139 = vmatprep.mubr.f32.mxu0 0.0
        %2140 = vmatmul.mubr.f32.gmra.mrb[0].mxu0 %v808
        %v2141 = vpop.f32.mrb[0].mxu0
        %v2142 = vadd.f32 0.0, %v2141
        %v2143 = vpop.f32.mrb[0].mxu0
        %2144 = vmatprep.mubr.f32.mxu0 0.0
        %2145 = vmatmul.mubr.f32.gmra.mrb[0].mxu0 %v811
        %v2146 = vpop.f32.mrb[0].mxu0
        %v2147 = vadd.f32 0.0, %v2146
        %v2148 = vpop.f32.mrb[0].mxu0
        %2149 = vmatprep.mubr.f32.mxu0 0.0
        %2150 = vmatmul.mubr.f32.gmra.mrb[0].mxu0 %v814
        %v2151 = vpop.f32.mrb[0].mxu0
        %v2152 = vadd.f32 0.0, %v2151
        %v2153 = vpop.f32.mrb[0].mxu0
        %2154 = vmatprep.mubr.f32.mxu0 0.0
        %2155 = vmatmul.mubr.f32.gmra.mrb[0].mxu0 %v817
        %v2156 = vpop.f32.mrb[0].mxu0
        %v2157 = vadd.f32 0.0, %v2156
        %v2158 = vpop.f32.mrb[0].mxu0
        %2159 = vmatprep.mubr.f32.mxu0 0.0
        %2160 = vmatmul.mubr.f32.gmra.mrb[0].mxu0 %v820
        %v2161 = vpop.f32.mrb[0].mxu0
        %v2162 = vadd.f32 0.0, %v2161
        %v2163 = vpop.f32.mrb[0].mxu0
        %2164 = vmatprep.mubr.f32.mxu0 0.0
        %2165 = vmatmul.mubr.f32.gmra.mrb[0].mxu0 %v823
        %v2166 = vpop.f32.mrb[0].mxu0
        %v2167 = vadd.f32 0.0, %v2166
        %v2168 = vpop.f32.mrb[0].mxu0
        %2169 = vmatprep.mubr.f32.mxu0 0.0
        %2170 = vmatmul.mubr.f32.gmra.mrb[0].mxu0 %v826
        %v2171 = vpop.f32.mrb[0].mxu0
        %v2172 = vadd.f32 0.0, %v2171
        %v2173 = vpop.f32.mrb[0].mxu0
        %2174 = vmatprep.mubr.f32.mxu0 0.0
        %2175 = vmatmul.mubr.f32.gmra.mrb[0].mxu0 %v829
        %v2176 = vpop.f32.mrb[0].mxu0
        %v2177 = vadd.f32 0.0, %v2176
        %v2178 = vpop.f32.mrb[0].mxu0
        %2179 = vmatprep.mubr.f32.mxu0 0.0
        %2180 = vmatmul.mubr.f32.gmra.mrb[0].mxu0 %v832
        %v2181 = vpop.f32.mrb[0].mxu0
        %v2182 = vadd.f32 0.0, %v2181
        %v2183 = vpop.f32.mrb[0].mxu0
        %2184 = vmatprep.mubr.f32.mxu0 0.0
        %2185 = vmatmul.mubr.f32.gmra.mrb[0].mxu0 %v835
        %v2186 = vpop.f32.mrb[0].mxu0
        %v2187 = vadd.f32 0.0, %v2186
        %v2188 = vpop.f32.mrb[0].mxu0
        %2189 = vmatprep.mubr.f32.mxu0 0.0
        %2190 = vmatmul.mubr.f32.gmra.mrb[0].mxu0 %v838
        %v2191 = vpop.f32.mrb[0].mxu0
        %v2192 = vadd.f32 0.0, %v2191
        %v2193 = vpop.f32.mrb[0].mxu0
        %2194 = vdwg.mxu0
        %2195 = vmax.xlane.f32.xlu0 %v2117
        %v2196 = vpop.xlane.xlu0 %2195
        %2197 = vmax.xlane.f32.xlu0 %v2122
        %v2198 = vpop.xlane.xlu0 %2197
        %2199 = vmax.xlane.f32.xlu0 %v2127
        %v2200 = vpop.xlane.xlu0 %2199
        %2201 = vmax.xlane.f32.xlu0 %v2132
        %v2202 = vpop.xlane.xlu0 %2201
        %2203 = vmax.xlane.f32.xlu0 %v2137
        %v2204 = vpop.xlane.xlu0 %2203
        %2205 = vmax.xlane.f32.xlu0 %v2142
        %v2206 = vpop.xlane.xlu0 %2205
        %2207 = vmax.xlane.f32.xlu0 %v2147
        %v2208 = vpop.xlane.xlu0 %2207
        %2209 = vmax.xlane.f32.xlu0 %v2152
        %v2210 = vpop.xlane.xlu0 %2209
        %2211 = vmax.xlane.f32.xlu0 %v2157
        %v2212 = vpop.xlane.xlu0 %2211
        %2213 = vmax.xlane.f32.xlu0 %v2162
        %v2214 = vpop.xlane.xlu0 %2213
        %2215 = vmax.xlane.f32.xlu0 %v2167
        %v2216 = vpop.xlane.xlu0 %2215
        %2217 = vmax.xlane.f32.xlu0 %v2172
        %v2218 = vpop.xlane.xlu0 %2217
        %2219 = vmax.xlane.f32.xlu0 %v2177
        %v2220 = vpop.xlane.xlu0 %2219
        %2221 = vmax.xlane.f32.xlu0 %v2182
        %v2222 = vpop.xlane.xlu0 %2221
        %2223 = vmax.xlane.f32.xlu0 %v2187
        %v2224 = vpop.xlane.xlu0 %2223
        %2225 = vmax.xlane.f32.xlu0 %v2192
        %v2226 = vpop.xlane.xlu0 %2225
        %v2227 = vsub.f32 %v2117, %v2196
        %v2228 = vsub.f32 %v2122, %v2198
        %v2229 = vsub.f32 %v2127, %v2200
        %v2230 = vsub.f32 %v2132, %v2202
        %v2231 = vsub.f32 %v2137, %v2204
        %v2232 = vsub.f32 %v2142, %v2206
        %v2233 = vsub.f32 %v2147, %v2208
        %v2234 = vsub.f32 %v2152, %v2210
        %v2235 = vsub.f32 %v2157, %v2212
        %v2236 = vsub.f32 %v2162, %v2214
        %v2237 = vsub.f32 %v2167, %v2216
        %v2238 = vsub.f32 %v2172, %v2218
        %v2239 = vsub.f32 %v2177, %v2220
        %v2240 = vsub.f32 %v2182, %v2222
        %v2241 = vsub.f32 %v2187, %v2224
        %v2242 = vsub.f32 %v2192, %v2226
        %v2243 = vmul.f32 %v2227, 1.442695
        %v2244 = vpow.pop %v2243
        %v2245 = vmul.f32 %v2228, 1.442695
        %v2246 = vpow.pop %v2245
        %v2247 = vmul.f32 %v2229, 1.442695
        %v2248 = vpow.pop %v2247
        %v2249 = vmul.f32 %v2230, 1.442695
        %v2250 = vpow.pop %v2249
        %v2251 = vmul.f32 %v2231, 1.442695
        %v2252 = vpow.pop %v2251
        %v2253 = vmul.f32 %v2232, 1.442695
        %v2254 = vpow.pop %v2253
        %v2255 = vmul.f32 %v2233, 1.442695
        %v2256 = vpow.pop %v2255
        %v2257 = vmul.f32 %v2234, 1.442695
        %v2258 = vpow.pop %v2257
        %v2259 = vmul.f32 %v2235, 1.442695
        %v2260 = vpow.pop %v2259
        %v2261 = vmul.f32 %v2236, 1.442695
        %v2262 = vpow.pop %v2261
        %v2263 = vmul.f32 %v2237, 1.442695
        %v2264 = vpow.pop %v2263
        %v2265 = vmul.f32 %v2238, 1.442695
        %v2266 = vpow.pop %v2265
        %v2267 = vmul.f32 %v2239, 1.442695
        %v2268 = vpow.pop %v2267
        %v2269 = vmul.f32 %v2240, 1.442695
        %v2270 = vpow.pop %v2269
        %v2271 = vmul.f32 %v2241, 1.442695
        %v2272 = vpow.pop %v2271
        %v2273 = vmul.f32 %v2242, 1.442695
        %v2274 = vpow.pop %v2273
        %2275 = vadd.xlane.f32.xlu0 %v2244
        %v2276 = vpop.xlane.xlu0 %2275
        %2277 = vadd.xlane.f32.xlu0 %v2246
        %v2278 = vpop.xlane.xlu0 %2277
        %2279 = vadd.xlane.f32.xlu0 %v2248
        %v2280 = vpop.xlane.xlu0 %2279
        %2281 = vadd.xlane.f32.xlu0 %v2250
        %v2282 = vpop.xlane.xlu0 %2281
        %2283 = vadd.xlane.f32.xlu0 %v2252
        %v2284 = vpop.xlane.xlu0 %2283
        %2285 = vadd.xlane.f32.xlu0 %v2254
        %v2286 = vpop.xlane.xlu0 %2285
        %2287 = vadd.xlane.f32.xlu0 %v2256
        %v2288 = vpop.xlane.xlu0 %2287
        %2289 = vadd.xlane.f32.xlu0 %v2258
        %v2290 = vpop.xlane.xlu0 %2289
        %2291 = vadd.xlane.f32.xlu0 %v2260
        %v2292 = vpop.xlane.xlu0 %2291
        %2293 = vadd.xlane.f32.xlu0 %v2262
        %v2294 = vpop.xlane.xlu0 %2293
        %2295 = vadd.xlane.f32.xlu0 %v2264
        %v2296 = vpop.xlane.xlu0 %2295
        %2297 = vadd.xlane.f32.xlu0 %v2266
        %v2298 = vpop.xlane.xlu0 %2297
        %2299 = vadd.xlane.f32.xlu0 %v2268
        %v2300 = vpop.xlane.xlu0 %2299
        %2301 = vadd.xlane.f32.xlu0 %v2270
        %v2302 = vpop.xlane.xlu0 %2301
        %2303 = vadd.xlane.f32.xlu0 %v2272
        %v2304 = vpop.xlane.xlu0 %2303
        %2305 = vadd.xlane.f32.xlu0 %v2274
        %v2306 = vpop.xlane.xlu0 %2305
        %v2307 = vrcp.pop %v2276
        %v2308 = vrcp.pop %v2278
        %v2309 = vrcp.pop %v2280
        %v2310 = vrcp.pop %v2282
        %v2311 = vrcp.pop %v2284
        %v2312 = vrcp.pop %v2286
        %v2313 = vrcp.pop %v2288
        %v2314 = vrcp.pop %v2290
        %v2315 = vrcp.pop %v2292
        %v2316 = vrcp.pop %v2294
        %v2317 = vrcp.pop %v2296
        %v2318 = vrcp.pop %v2298
        %v2319 = vrcp.pop %v2300
        %v2320 = vrcp.pop %v2302
        %v2321 = vrcp.pop %v2304
        %v2322 = vrcp.pop %v2306
        %v2323 = vmul.f32 %v2244, %v2307
        %v2324 = vmul.f32 %v2246, %v2308
        %v2325 = vmul.f32 %v2248, %v2309
        %v2326 = vmul.f32 %v2250, %v2310
        %v2327 = vmul.f32 %v2252, %v2311
        %v2328 = vmul.f32 %v2254, %v2312
        %v2329 = vmul.f32 %v2256, %v2313
        %v2330 = vmul.f32 %v2258, %v2314
        %v2331 = vmul.f32 %v2260, %v2315
        %v2332 = vmul.f32 %v2262, %v2316
        %v2333 = vmul.f32 %v2264, %v2317
        %v2334 = vmul.f32 %v2266, %v2318
        %v2335 = vmul.f32 %v2268, %v2319
        %v2336 = vmul.f32 %v2270, %v2320
        %v2337 = vmul.f32 %v2272, %v2321
        %v2338 = vmul.f32 %v2274, %v2322
        %v2339 = vsel %vm2042, %v718, 0.0
        %v2340 = vsel %vm2043, %v723, 0.0
        %v2341 = vsel %vm2044, %v728, 0.0
        %v2342 = vsel %vm2045, %v733, 0.0
        %2343 = vmatprep.subr.mxu0 0.0
        %2344 = vmatpush1.xpose.msra.mxu0 %v2323
        %2345 = vmatprep.subr.mxu0 0.0
        %2346 = vmatpush1.xpose.msra.mxu0 %v2324
        %2347 = vmatprep.subr.mxu0 0.0
        %2348 = vmatpush1.xpose.msra.mxu0 %v2325
        %2349 = vmatprep.subr.mxu0 0.0
        %2350 = vmatpush1.xpose.msra.mxu0 %v2326
        %2351 = vmatprep.subr.mxu0 0.0
        %2352 = vmatpush1.xpose.msra.mxu0 %v2327
        %2353 = vmatprep.subr.mxu0 0.0
        %2354 = vmatpush1.xpose.msra.mxu0 %v2328
        %2355 = vmatprep.subr.mxu0 0.0
        %2356 = vmatpush1.xpose.msra.mxu0 %v2329
        %2357 = vmatprep.subr.mxu0 0.0
        %2358 = vmatpush1.xpose.msra.mxu0 %v2330
        %2359 = vmatprep.subr.mxu0 0.0
        %2360 = vmatpush1.xpose.msra.mxu0 %v2331
        %2361 = vmatprep.subr.mxu0 0.0
        %2362 = vmatpush1.xpose.msra.mxu0 %v2332
        %2363 = vmatprep.subr.mxu0 0.0
        %2364 = vmatpush1.xpose.msra.mxu0 %v2333
        %2365 = vmatprep.subr.mxu0 0.0
        %2366 = vmatpush1.xpose.msra.mxu0 %v2334
        %2367 = vmatprep.subr.mxu0 0.0
        %2368 = vmatpush1.xpose.msra.mxu0 %v2335
        %2369 = vmatprep.subr.mxu0 0.0
        %2370 = vmatpush1.xpose.msra.mxu0 %v2336
        %2371 = vmatprep.subr.mxu0 0.0
        %2372 = vmatpush1.xpose.msra.mxu0 %v2337
        %2373 = vmatprep.subr.mxu0 0.0
        %2374 = vmatpush1.xpose.msra.mxu0 %v2338
        %2375 = vmatprep.subr.mxu0 0.0
        %2376 = vmatpush1.xpose.msra.mxu0 0.0
        %2377 = vmatprep.subr.mxu0 0.0
        %2378 = vmatpush1.xpose.msra.mxu0 0.0
        %2379 = vmatprep.subr.mxu0 0.0
        %2380 = vmatpush1.xpose.msra.mxu0 0.0
        %2381 = vmatprep.subr.mxu0 0.0
        %2382 = vmatpush1.xpose.msra.mxu0 0.0
        %2383 = vmatprep.subr.mxu0 0.0
        %2384 = vmatpush1.xpose.msra.mxu0 0.0
        %2385 = vmatprep.subr.mxu0 0.0
        %2386 = vmatpush1.xpose.msra.mxu0 0.0
        %2387 = vmatprep.subr.mxu0 0.0
        %2388 = vmatpush1.xpose.msra.mxu0 0.0
        %2389 = vmatprep.subr.mxu0 0.0
        %2390 = vmatpush1.xpose.msra.mxu0 0.0
        %2391 = vmatprep.subr.mxu0 0.0
        %2392 = vmatpush1.xpose.msra.mxu0 0.0
        %2393 = vmatprep.subr.mxu0 0.0
        %2394 = vmatpush1.xpose.msra.mxu0 0.0
        %2395 = vmatprep.subr.mxu0 0.0
        %2396 = vmatpush1.xpose.msra.mxu0 0.0
        %2397 = vmatprep.subr.mxu0 0.0
        %2398 = vmatpush1.xpose.msra.mxu0 0.0
        %2399 = vmatprep.subr.mxu0 0.0
        %2400 = vmatpush1.xpose.msra.mxu0 0.0
        %2401 = vmatprep.subr.mxu0 0.0
        %2402 = vmatpush1.xpose.msra.mxu0 0.0
        %2403 = vmatprep.subr.mxu0 0.0
        %2404 = vmatpush1.xpose.msra.mxu0 0.0
        %2405 = vmatprep.subr.mxu0 0.0
        %2406 = vmatpush1.xpose.msra.mxu0 0.0
        %2407 = vmatprep.mubr.f32.mxu0 0.0
        %2408 = vmatmul.mubr.f32.gmra.mrb[0].mxu0 %v2339
        %v2409 = vpop.f32.mrb[0].mxu0
        %v2410 = vadd.f32 0.0, %v2409
        %v2411 = vpop.f32.mrb[0].mxu0
        %2412 = vmatprep.mubr.f32.mxu0 0.0
        %2413 = vmatmul.mubr.f32.gmra.mrb[0].mxu0 %v2340
        %v2414 = vpop.f32.mrb[0].mxu0
        %v2415 = vadd.f32 0.0, %v2414
        %v2416 = vpop.f32.mrb[0].mxu0
        %2417 = vmatprep.mubr.f32.mxu0 0.0
        %2418 = vmatmul.mubr.f32.gmra.mrb[0].mxu0 %v2341
        %v2419 = vpop.f32.mrb[0].mxu0
        %v2420 = vadd.f32 0.0, %v2419
        %v2421 = vpop.f32.mrb[0].mxu0
        %2422 = vmatprep.mubr.f32.mxu0 0.0
        %2423 = vmatmul.mubr.f32.gmra.mrb[0].mxu0 %v2342
        %v2424 = vpop.f32.mrb[0].mxu0
        %v2425 = vadd.f32 0.0, %v2424
        %v2426 = vpop.f32.mrb[0].mxu0
        %2427 = vdwg.mxu0
        %v2428 = vadd.f32 %v2022, %v2410
        %v2429 = vadd.f32 %v2023, %v2415
        %v2430 = vadd.f32 %v2024, %v2420
        %v2431 = vadd.f32 %v2025, %v2425
        %vm2432 = vcmp.ge.s32.totalorder %v423, 16
        %vm2433 = vcmp.ge.s32.totalorder %v424, 16
        %vm2434 = vcmp.ge.s32.totalorder %v425, 16
        %vm2435 = vcmp.ge.s32.totalorder %v426, 16
        %vm2436 = vcmp.lt.s32.totalorder %v423, 20
        %vm2437 = vcmp.lt.s32.totalorder %v424, 20
        %vm2438 = vcmp.lt.s32.totalorder %v425, 20
        %vm2439 = vcmp.lt.s32.totalorder %v426, 20
        %vm2440 = vmand %vm2432, %vm2436
        %vm2441 = vmand %vm2433, %vm2437
        %vm2442 = vmand %vm2434, %vm2438
        %vm2443 = vmand %vm2435, %vm2439
        %v2444 = vsel %vm2440, 1, 0
        %v2445 = vsel %vm2441, 1, 0
        %v2446 = vsel %vm2442, 1, 0
        %v2447 = vsel %vm2443, 1, 0
        %vm2448 = vcmp.eq.s32.totalorder %v2444, 1
        %vm2449 = vcmp.eq.s32.totalorder %v2445, 1
        %vm2450 = vcmp.eq.s32.totalorder %v2446, 1
        %vm2451 = vcmp.eq.s32.totalorder %v2447, 1
        %v2452 = vsel %vm2448, %v698, 0.0
        %v2453 = vsel %vm2449, %v703, 0.0
        %v2454 = vsel %vm2450, %v708, 0.0
        %v2455 = vsel %vm2451, %v713, 0.0
        %2456 = vmatprep.subr.mxu0 0.0
        %2457 = vmatpush1.msra.mxu0 %v2452
        %2458 = vmatprep.subr.mxu0 0.0
        %2459 = vmatpush1.msra.mxu0 %v2453
        %2460 = vmatprep.subr.mxu0 0.0
        %2461 = vmatpush1.msra.mxu0 %v2454
        %2462 = vmatprep.subr.mxu0 0.0
        %2463 = vmatpush1.msra.mxu0 %v2455
        %2464 = vmatprep.subr.mxu0 0.0
        %2465 = vmatpush1.msra.mxu0 0.0
        %2466 = vmatprep.subr.mxu0 0.0
        %2467 = vmatpush1.msra.mxu0 0.0
        %2468 = vmatprep.subr.mxu0 0.0
        %2469 = vmatpush1.msra.mxu0 0.0
        %2470 = vmatprep.subr.mxu0 0.0
        %2471 = vmatpush1.msra.mxu0 0.0
        %2472 = vmatprep.subr.mxu0 0.0
        %2473 = vmatpush1.msra.mxu0 0.0
        %2474 = vmatprep.subr.mxu0 0.0
        %2475 = vmatpush1.msra.mxu0 0.0
        %2476 = vmatprep.subr.mxu0 0.0
        %2477 = vmatpush1.msra.mxu0 0.0
        %2478 = vmatprep.subr.mxu0 0.0
        %2479 = vmatpush1.msra.mxu0 0.0
        %2480 = vmatprep.subr.mxu0 0.0
        %2481 = vmatpush1.msra.mxu0 0.0
        %2482 = vmatprep.subr.mxu0 0.0
        %2483 = vmatpush1.msra.mxu0 0.0
        %2484 = vmatprep.subr.mxu0 0.0
        %2485 = vmatpush1.msra.mxu0 0.0
        %2486 = vmatprep.subr.mxu0 0.0
        %2487 = vmatpush1.msra.mxu0 0.0
        %2488 = vmatprep.subr.mxu0 0.0
        %2489 = vmatpush1.msra.mxu0 0.0
        %2490 = vmatprep.subr.mxu0 0.0
        %2491 = vmatpush1.msra.mxu0 0.0
        %2492 = vmatprep.subr.mxu0 0.0
        %2493 = vmatpush1.msra.mxu0 0.0
        %2494 = vmatprep.subr.mxu0 0.0
        %2495 = vmatpush1.msra.mxu0 0.0
        %2496 = vmatprep.subr.mxu0 0.0
        %2497 = vmatpush1.msra.mxu0 0.0
        %2498 = vmatprep.subr.mxu0 0.0
        %2499 = vmatpush1.msra.mxu0 0.0
        %2500 = vmatprep.subr.mxu0 0.0
        %2501 = vmatpush1.msra.mxu0 0.0
        %2502 = vmatprep.subr.mxu0 0.0
        %2503 = vmatpush1.msra.mxu0 0.0
        %2504 = vmatprep.subr.mxu0 0.0
        %2505 = vmatpush1.msra.mxu0 0.0
        %2506 = vmatprep.subr.mxu0 0.0
        %2507 = vmatpush1.msra.mxu0 0.0
        %2508 = vmatprep.subr.mxu0 0.0
        %2509 = vmatpush1.msra.mxu0 0.0
        %2510 = vmatprep.subr.mxu0 0.0
        %2511 = vmatpush1.msra.mxu0 0.0
        %2512 = vmatprep.subr.mxu0 0.0
        %2513 = vmatpush1.msra.mxu0 0.0
        %2514 = vmatprep.subr.mxu0 0.0
        %2515 = vmatpush1.msra.mxu0 0.0
        %2516 = vmatprep.subr.mxu0 0.0
        %2517 = vmatpush1.msra.mxu0 0.0
        %2518 = vmatprep.subr.mxu0 0.0
        %2519 = vmatpush1.msra.mxu0 0.0
        %2520 = vmatprep.mubr.f32.mxu0 0.0
        %2521 = vmatmul.mubr.f32.gmra.mrb[0].mxu0 %v793
        %v2522 = vpop.f32.mrb[0].mxu0
        %v2523 = vadd.f32 0.0, %v2522
        %v2524 = vpop.f32.mrb[0].mxu0
        %2525 = vmatprep.mubr.f32.mxu0 0.0
        %2526 = vmatmul.mubr.f32.gmra.mrb[0].mxu0 %v796
        %v2527 = vpop.f32.mrb[0].mxu0
        %v2528 = vadd.f32 0.0, %v2527
        %v2529 = vpop.f32.mrb[0].mxu0
        %2530 = vmatprep.mubr.f32.mxu0 0.0
        %2531 = vmatmul.mubr.f32.gmra.mrb[0].mxu0 %v799
        %v2532 = vpop.f32.mrb[0].mxu0
        %v2533 = vadd.f32 0.0, %v2532
        %v2534 = vpop.f32.mrb[0].mxu0
        %2535 = vmatprep.mubr.f32.mxu0 0.0
        %2536 = vmatmul.mubr.f32.gmra.mrb[0].mxu0 %v802
        %v2537 = vpop.f32.mrb[0].mxu0
        %v2538 = vadd.f32 0.0, %v2537
        %v2539 = vpop.f32.mrb[0].mxu0
        %2540 = vmatprep.mubr.f32.mxu0 0.0
        %2541 = vmatmul.mubr.f32.gmra.mrb[0].mxu0 %v805
        %v2542 = vpop.f32.mrb[0].mxu0
        %v2543 = vadd.f32 0.0, %v2542
        %v2544 = vpop.f32.mrb[0].mxu0
        %2545 = vmatprep.mubr.f32.mxu0 0.0
        %2546 = vmatmul.mubr.f32.gmra.mrb[0].mxu0 %v808
        %v2547 = vpop.f32.mrb[0].mxu0
        %v2548 = vadd.f32 0.0, %v2547
        %v2549 = vpop.f32.mrb[0].mxu0
        %2550 = vmatprep.mubr.f32.mxu0 0.0
        %2551 = vmatmul.mubr.f32.gmra.mrb[0].mxu0 %v811
        %v2552 = vpop.f32.mrb[0].mxu0
        %v2553 = vadd.f32 0.0, %v2552
        %v2554 = vpop.f32.mrb[0].mxu0
        %2555 = vmatprep.mubr.f32.mxu0 0.0
        %2556 = vmatmul.mubr.f32.gmra.mrb[0].mxu0 %v814
        %v2557 = vpop.f32.mrb[0].mxu0
        %v2558 = vadd.f32 0.0, %v2557
        %v2559 = vpop.f32.mrb[0].mxu0
        %2560 = vmatprep.mubr.f32.mxu0 0.0
        %2561 = vmatmul.mubr.f32.gmra.mrb[0].mxu0 %v817
        %v2562 = vpop.f32.mrb[0].mxu0
        %v2563 = vadd.f32 0.0, %v2562
        %v2564 = vpop.f32.mrb[0].mxu0
        %2565 = vmatprep.mubr.f32.mxu0 0.0
        %2566 = vmatmul.mubr.f32.gmra.mrb[0].mxu0 %v820
        %v2567 = vpop.f32.mrb[0].mxu0
        %v2568 = vadd.f32 0.0, %v2567
        %v2569 = vpop.f32.mrb[0].mxu0
        %2570 = vmatprep.mubr.f32.mxu0 0.0
        %2571 = vmatmul.mubr.f32.gmra.mrb[0].mxu0 %v823
        %v2572 = vpop.f32.mrb[0].mxu0
        %v2573 = vadd.f32 0.0, %v2572
        %v2574 = vpop.f32.mrb[0].mxu0
        %2575 = vmatprep.mubr.f32.mxu0 0.0
        %2576 = vmatmul.mubr.f32.gmra.mrb[0].mxu0 %v826
        %v2577 = vpop.f32.mrb[0].mxu0
        %v2578 = vadd.f32 0.0, %v2577
        %v2579 = vpop.f32.mrb[0].mxu0
        %2580 = vmatprep.mubr.f32.mxu0 0.0
        %2581 = vmatmul.mubr.f32.gmra.mrb[0].mxu0 %v829
        %v2582 = vpop.f32.mrb[0].mxu0
        %v2583 = vadd.f32 0.0, %v2582
        %v2584 = vpop.f32.mrb[0].mxu0
        %2585 = vmatprep.mubr.f32.mxu0 0.0
        %2586 = vmatmul.mubr.f32.gmra.mrb[0].mxu0 %v832
        %v2587 = vpop.f32.mrb[0].mxu0
        %v2588 = vadd.f32 0.0, %v2587
        %v2589 = vpop.f32.mrb[0].mxu0
        %2590 = vmatprep.mubr.f32.mxu0 0.0
        %2591 = vmatmul.mubr.f32.gmra.mrb[0].mxu0 %v835
        %v2592 = vpop.f32.mrb[0].mxu0
        %v2593 = vadd.f32 0.0, %v2592
        %v2594 = vpop.f32.mrb[0].mxu0
        %2595 = vmatprep.mubr.f32.mxu0 0.0
        %2596 = vmatmul.mubr.f32.gmra.mrb[0].mxu0 %v838
        %v2597 = vpop.f32.mrb[0].mxu0
        %v2598 = vadd.f32 0.0, %v2597
        %v2599 = vpop.f32.mrb[0].mxu0
        %2600 = vdwg.mxu0
        %2601 = vmax.xlane.f32.xlu0 %v2523
        %v2602 = vpop.xlane.xlu0 %2601
        %2603 = vmax.xlane.f32.xlu0 %v2528
        %v2604 = vpop.xlane.xlu0 %2603
        %2605 = vmax.xlane.f32.xlu0 %v2533
        %v2606 = vpop.xlane.xlu0 %2605
        %2607 = vmax.xlane.f32.xlu0 %v2538
        %v2608 = vpop.xlane.xlu0 %2607
        %2609 = vmax.xlane.f32.xlu0 %v2543
        %v2610 = vpop.xlane.xlu0 %2609
        %2611 = vmax.xlane.f32.xlu0 %v2548
        %v2612 = vpop.xlane.xlu0 %2611
        %2613 = vmax.xlane.f32.xlu0 %v2553
        %v2614 = vpop.xlane.xlu0 %2613
        %2615 = vmax.xlane.f32.xlu0 %v2558
        %v2616 = vpop.xlane.xlu0 %2615
        %2617 = vmax.xlane.f32.xlu0 %v2563
        %v2618 = vpop.xlane.xlu0 %2617
        %2619 = vmax.xlane.f32.xlu0 %v2568
        %v2620 = vpop.xlane.xlu0 %2619
        %2621 = vmax.xlane.f32.xlu0 %v2573
        %v2622 = vpop.xlane.xlu0 %2621
        %2623 = vmax.xlane.f32.xlu0 %v2578
        %v2624 = vpop.xlane.xlu0 %2623
        %2625 = vmax.xlane.f32.xlu0 %v2583
        %v2626 = vpop.xlane.xlu0 %2625
        %2627 = vmax.xlane.f32.xlu0 %v2588
        %v2628 = vpop.xlane.xlu0 %2627
        %2629 = vmax.xlane.f32.xlu0 %v2593
        %v2630 = vpop.xlane.xlu0 %2629
        %2631 = vmax.xlane.f32.xlu0 %v2598
        %v2632 = vpop.xlane.xlu0 %2631
        %v2633 = vsub.f32 %v2523, %v2602
        %v2634 = vsub.f32 %v2528, %v2604
        %v2635 = vsub.f32 %v2533, %v2606
        %v2636 = vsub.f32 %v2538, %v2608
        %v2637 = vsub.f32 %v2543, %v2610
        %v2638 = vsub.f32 %v2548, %v2612
        %v2639 = vsub.f32 %v2553, %v2614
        %v2640 = vsub.f32 %v2558, %v2616
        %v2641 = vsub.f32 %v2563, %v2618
        %v2642 = vsub.f32 %v2568, %v2620
        %v2643 = vsub.f32 %v2573, %v2622
        %v2644 = vsub.f32 %v2578, %v2624
        %v2645 = vsub.f32 %v2583, %v2626
        %v2646 = vsub.f32 %v2588, %v2628
        %v2647 = vsub.f32 %v2593, %v2630
        %v2648 = vsub.f32 %v2598, %v2632
        %v2649 = vmul.f32 %v2633, 1.442695
        %v2650 = vpow.pop %v2649
        %v2651 = vmul.f32 %v2634, 1.442695
        %v2652 = vpow.pop %v2651
        %v2653 = vmul.f32 %v2635, 1.442695
        %v2654 = vpow.pop %v2653
        %v2655 = vmul.f32 %v2636, 1.442695
        %v2656 = vpow.pop %v2655
        %v2657 = vmul.f32 %v2637, 1.442695
        %v2658 = vpow.pop %v2657
        %v2659 = vmul.f32 %v2638, 1.442695
        %v2660 = vpow.pop %v2659
        %v2661 = vmul.f32 %v2639, 1.442695
        %v2662 = vpow.pop %v2661
        %v2663 = vmul.f32 %v2640, 1.442695
        %v2664 = vpow.pop %v2663
        %v2665 = vmul.f32 %v2641, 1.442695
        %v2666 = vpow.pop %v2665
        %v2667 = vmul.f32 %v2642, 1.442695
        %v2668 = vpow.pop %v2667
        %v2669 = vmul.f32 %v2643, 1.442695
        %v2670 = vpow.pop %v2669
        %v2671 = vmul.f32 %v2644, 1.442695
        %v2672 = vpow.pop %v2671
        %v2673 = vmul.f32 %v2645, 1.442695
        %v2674 = vpow.pop %v2673
        %v2675 = vmul.f32 %v2646, 1.442695
        %v2676 = vpow.pop %v2675
        %v2677 = vmul.f32 %v2647, 1.442695
        %v2678 = vpow.pop %v2677
        %v2679 = vmul.f32 %v2648, 1.442695
        %v2680 = vpow.pop %v2679
        %2681 = vadd.xlane.f32.xlu0 %v2650
        %v2682 = vpop.xlane.xlu0 %2681
        %2683 = vadd.xlane.f32.xlu0 %v2652
        %v2684 = vpop.xlane.xlu0 %2683
        %2685 = vadd.xlane.f32.xlu0 %v2654
        %v2686 = vpop.xlane.xlu0 %2685
        %2687 = vadd.xlane.f32.xlu0 %v2656
        %v2688 = vpop.xlane.xlu0 %2687
        %2689 = vadd.xlane.f32.xlu0 %v2658
        %v2690 = vpop.xlane.xlu0 %2689
        %2691 = vadd.xlane.f32.xlu0 %v2660
        %v2692 = vpop.xlane.xlu0 %2691
        %2693 = vadd.xlane.f32.xlu0 %v2662
        %v2694 = vpop.xlane.xlu0 %2693
        %2695 = vadd.xlane.f32.xlu0 %v2664
        %v2696 = vpop.xlane.xlu0 %2695
        %2697 = vadd.xlane.f32.xlu0 %v2666
        %v2698 = vpop.xlane.xlu0 %2697
        %2699 = vadd.xlane.f32.xlu0 %v2668
        %v2700 = vpop.xlane.xlu0 %2699
        %2701 = vadd.xlane.f32.xlu0 %v2670
        %v2702 = vpop.xlane.xlu0 %2701
        %2703 = vadd.xlane.f32.xlu0 %v2672
        %v2704 = vpop.xlane.xlu0 %2703
        %2705 = vadd.xlane.f32.xlu0 %v2674
        %v2706 = vpop.xlane.xlu0 %2705
        %2707 = vadd.xlane.f32.xlu0 %v2676
        %v2708 = vpop.xlane.xlu0 %2707
        %2709 = vadd.xlane.f32.xlu0 %v2678
        %v2710 = vpop.xlane.xlu0 %2709
        %2711 = vadd.xlane.f32.xlu0 %v2680
        %v2712 = vpop.xlane.xlu0 %2711
        %v2713 = vrcp.pop %v2682
        %v2714 = vrcp.pop %v2684
        %v2715 = vrcp.pop %v2686
        %v2716 = vrcp.pop %v2688
        %v2717 = vrcp.pop %v2690
        %v2718 = vrcp.pop %v2692
        %v2719 = vrcp.pop %v2694
        %v2720 = vrcp.pop %v2696
        %v2721 = vrcp.pop %v2698
        %v2722 = vrcp.pop %v2700
        %v2723 = vrcp.pop %v2702
        %v2724 = vrcp.pop %v2704
        %v2725 = vrcp.pop %v2706
        %v2726 = vrcp.pop %v2708
        %v2727 = vrcp.pop %v2710
        %v2728 = vrcp.pop %v2712
        %v2729 = vmul.f32 %v2650, %v2713
        %v2730 = vmul.f32 %v2652, %v2714
        %v2731 = vmul.f32 %v2654, %v2715
        %v2732 = vmul.f32 %v2656, %v2716
        %v2733 = vmul.f32 %v2658, %v2717
        %v2734 = vmul.f32 %v2660, %v2718
        %v2735 = vmul.f32 %v2662, %v2719
        %v2736 = vmul.f32 %v2664, %v2720
        %v2737 = vmul.f32 %v2666, %v2721
        %v2738 = vmul.f32 %v2668, %v2722
        %v2739 = vmul.f32 %v2670, %v2723
        %v2740 = vmul.f32 %v2672, %v2724
        %v2741 = vmul.f32 %v2674, %v2725
        %v2742 = vmul.f32 %v2676, %v2726
        %v2743 = vmul.f32 %v2678, %v2727
        %v2744 = vmul.f32 %v2680, %v2728
        %v2745 = vsel %vm2448, %v718, 0.0
        %v2746 = vsel %vm2449, %v723, 0.0
        %v2747 = vsel %vm2450, %v728, 0.0
        %v2748 = vsel %vm2451, %v733, 0.0
        %2749 = vmatprep.subr.mxu0 0.0
        %2750 = vmatpush1.xpose.msra.mxu0 %v2729
        %2751 = vmatprep.subr.mxu0 0.0
        %2752 = vmatpush1.xpose.msra.mxu0 %v2730
        %2753 = vmatprep.subr.mxu0 0.0
        %2754 = vmatpush1.xpose.msra.mxu0 %v2731
        %2755 = vmatprep.subr.mxu0 0.0
        %2756 = vmatpush1.xpose.msra.mxu0 %v2732
        %2757 = vmatprep.subr.mxu0 0.0
        %2758 = vmatpush1.xpose.msra.mxu0 %v2733
        %2759 = vmatprep.subr.mxu0 0.0
        %2760 = vmatpush1.xpose.msra.mxu0 %v2734
        %2761 = vmatprep.subr.mxu0 0.0
        %2762 = vmatpush1.xpose.msra.mxu0 %v2735
        %2763 = vmatprep.subr.mxu0 0.0
        %2764 = vmatpush1.xpose.msra.mxu0 %v2736
        %2765 = vmatprep.subr.mxu0 0.0
        %2766 = vmatpush1.xpose.msra.mxu0 %v2737
        %2767 = vmatprep.subr.mxu0 0.0
        %2768 = vmatpush1.xpose.msra.mxu0 %v2738
        %2769 = vmatprep.subr.mxu0 0.0
        %2770 = vmatpush1.xpose.msra.mxu0 %v2739
        %2771 = vmatprep.subr.mxu0 0.0
        %2772 = vmatpush1.xpose.msra.mxu0 %v2740
        %2773 = vmatprep.subr.mxu0 0.0
        %2774 = vmatpush1.xpose.msra.mxu0 %v2741
        %2775 = vmatprep.subr.mxu0 0.0
        %2776 = vmatpush1.xpose.msra.mxu0 %v2742
        %2777 = vmatprep.subr.mxu0 0.0
        %2778 = vmatpush1.xpose.msra.mxu0 %v2743
        %2779 = vmatprep.subr.mxu0 0.0
        %2780 = vmatpush1.xpose.msra.mxu0 %v2744
        %2781 = vmatprep.subr.mxu0 0.0
        %2782 = vmatpush1.xpose.msra.mxu0 0.0
        %2783 = vmatprep.subr.mxu0 0.0
        %2784 = vmatpush1.xpose.msra.mxu0 0.0
        %2785 = vmatprep.subr.mxu0 0.0
        %2786 = vmatpush1.xpose.msra.mxu0 0.0
        %2787 = vmatprep.subr.mxu0 0.0
        %2788 = vmatpush1.xpose.msra.mxu0 0.0
        %2789 = vmatprep.subr.mxu0 0.0
        %2790 = vmatpush1.xpose.msra.mxu0 0.0
        %2791 = vmatprep.subr.mxu0 0.0
        %2792 = vmatpush1.xpose.msra.mxu0 0.0
        %2793 = vmatprep.subr.mxu0 0.0
        %2794 = vmatpush1.xpose.msra.mxu0 0.0
        %2795 = vmatprep.subr.mxu0 0.0
        %2796 = vmatpush1.xpose.msra.mxu0 0.0
        %2797 = vmatprep.subr.mxu0 0.0
        %2798 = vmatpush1.xpose.msra.mxu0 0.0
        %2799 = vmatprep.subr.mxu0 0.0
        %2800 = vmatpush1.xpose.msra.mxu0 0.0
        %2801 = vmatprep.subr.mxu0 0.0
        %2802 = vmatpush1.xpose.msra.mxu0 0.0
        %2803 = vmatprep.subr.mxu0 0.0
        %2804 = vmatpush1.xpose.msra.mxu0 0.0
        %2805 = vmatprep.subr.mxu0 0.0
        %2806 = vmatpush1.xpose.msra.mxu0 0.0
        %2807 = vmatprep.subr.mxu0 0.0
        %2808 = vmatpush1.xpose.msra.mxu0 0.0
        %2809 = vmatprep.subr.mxu0 0.0
        %2810 = vmatpush1.xpose.msra.mxu0 0.0
        %2811 = vmatprep.subr.mxu0 0.0
        %2812 = vmatpush1.xpose.msra.mxu0 0.0
        %2813 = vmatprep.mubr.f32.mxu0 0.0
        %2814 = vmatmul.mubr.f32.gmra.mrb[0].mxu0 %v2745
        %v2815 = vpop.f32.mrb[0].mxu0
        %v2816 = vadd.f32 0.0, %v2815
        %v2817 = vpop.f32.mrb[0].mxu0
        %2818 = vmatprep.mubr.f32.mxu0 0.0
        %2819 = vmatmul.mubr.f32.gmra.mrb[0].mxu0 %v2746
        %v2820 = vpop.f32.mrb[0].mxu0
        %v2821 = vadd.f32 0.0, %v2820
        %v2822 = vpop.f32.mrb[0].mxu0
        %2823 = vmatprep.mubr.f32.mxu0 0.0
        %2824 = vmatmul.mubr.f32.gmra.mrb[0].mxu0 %v2747
        %v2825 = vpop.f32.mrb[0].mxu0
        %v2826 = vadd.f32 0.0, %v2825
        %v2827 = vpop.f32.mrb[0].mxu0
        %2828 = vmatprep.mubr.f32.mxu0 0.0
        %2829 = vmatmul.mubr.f32.gmra.mrb[0].mxu0 %v2748
        %v2830 = vpop.f32.mrb[0].mxu0
        %v2831 = vadd.f32 0.0, %v2830
        %v2832 = vpop.f32.mrb[0].mxu0
        %2833 = vdwg.mxu0
        %v2834 = vadd.f32 %v2428, %v2816
        %v2835 = vadd.f32 %v2429, %v2821
        %v2836 = vadd.f32 %v2430, %v2826
        %v2837 = vadd.f32 %v2431, %v2831
        %vm2838 = vcmp.ge.s32.totalorder %v423, 20
        %vm2839 = vcmp.ge.s32.totalorder %v424, 20
        %vm2840 = vcmp.ge.s32.totalorder %v425, 20
        %vm2841 = vcmp.ge.s32.totalorder %v426, 20
        %vm2842 = vcmp.lt.s32.totalorder %v423, 24
        %vm2843 = vcmp.lt.s32.totalorder %v424, 24
        %vm2844 = vcmp.lt.s32.totalorder %v425, 24
        %vm2845 = vcmp.lt.s32.totalorder %v426, 24
        %vm2846 = vmand %vm2838, %vm2842
        %vm2847 = vmand %vm2839, %vm2843
        %vm2848 = vmand %vm2840, %vm2844
        %vm2849 = vmand %vm2841, %vm2845
        %v2850 = vsel %vm2846, 1, 0
        %v2851 = vsel %vm2847, 1, 0
        %v2852 = vsel %vm2848, 1, 0
        %v2853 = vsel %vm2849, 1, 0
        %vm2854 = vcmp.eq.s32.totalorder %v2850, 1
        %vm2855 = vcmp.eq.s32.totalorder %v2851, 1
        %vm2856 = vcmp.eq.s32.totalorder %v2852, 1
        %vm2857 = vcmp.eq.s32.totalorder %v2853, 1
        %v2858 = vsel %vm2854, %v698, 0.0
        %v2859 = vsel %vm2855, %v703, 0.0
        %v2860 = vsel %vm2856, %v708, 0.0
        %v2861 = vsel %vm2857, %v713, 0.0
        %2862 = vmatprep.subr.mxu0 0.0
        %2863 = vmatpush1.msra.mxu0 %v2858
        %2864 = vmatprep.subr.mxu0 0.0
        %2865 = vmatpush1.msra.mxu0 %v2859
        %2866 = vmatprep.subr.mxu0 0.0
        %2867 = vmatpush1.msra.mxu0 %v2860
        %2868 = vmatprep.subr.mxu0 0.0
        %2869 = vmatpush1.msra.mxu0 %v2861
        %2870 = vmatprep.subr.mxu0 0.0
        %2871 = vmatpush1.msra.mxu0 0.0
        %2872 = vmatprep.subr.mxu0 0.0
        %2873 = vmatpush1.msra.mxu0 0.0
        %2874 = vmatprep.subr.mxu0 0.0
        %2875 = vmatpush1.msra.mxu0 0.0
        %2876 = vmatprep.subr.mxu0 0.0
        %2877 = vmatpush1.msra.mxu0 0.0
        %2878 = vmatprep.subr.mxu0 0.0
        %2879 = vmatpush1.msra.mxu0 0.0
        %2880 = vmatprep.subr.mxu0 0.0
        %2881 = vmatpush1.msra.mxu0 0.0
        %2882 = vmatprep.subr.mxu0 0.0
        %2883 = vmatpush1.msra.mxu0 0.0
        %2884 = vmatprep.subr.mxu0 0.0
        %2885 = vmatpush1.msra.mxu0 0.0
        %2886 = vmatprep.subr.mxu0 0.0
        %2887 = vmatpush1.msra.mxu0 0.0
        %2888 = vmatprep.subr.mxu0 0.0
        %2889 = vmatpush1.msra.mxu0 0.0
        %2890 = vmatprep.subr.mxu0 0.0
        %2891 = vmatpush1.msra.mxu0 0.0
        %2892 = vmatprep.subr.mxu0 0.0
        %2893 = vmatpush1.msra.mxu0 0.0
        %2894 = vmatprep.subr.mxu0 0.0
        %2895 = vmatpush1.msra.mxu0 0.0
        %2896 = vmatprep.subr.mxu0 0.0
        %2897 = vmatpush1.msra.mxu0 0.0
        %2898 = vmatprep.subr.mxu0 0.0
        %2899 = vmatpush1.msra.mxu0 0.0
        %2900 = vmatprep.subr.mxu0 0.0
        %2901 = vmatpush1.msra.mxu0 0.0
        %2902 = vmatprep.subr.mxu0 0.0
        %2903 = vmatpush1.msra.mxu0 0.0
        %2904 = vmatprep.subr.mxu0 0.0
        %2905 = vmatpush1.msra.mxu0 0.0
        %2906 = vmatprep.subr.mxu0 0.0
        %2907 = vmatpush1.msra.mxu0 0.0
        %2908 = vmatprep.subr.mxu0 0.0
        %2909 = vmatpush1.msra.mxu0 0.0
        %2910 = vmatprep.subr.mxu0 0.0
        %2911 = vmatpush1.msra.mxu0 0.0
        %2912 = vmatprep.subr.mxu0 0.0
        %2913 = vmatpush1.msra.mxu0 0.0
        %2914 = vmatprep.subr.mxu0 0.0
        %2915 = vmatpush1.msra.mxu0 0.0
        %2916 = vmatprep.subr.mxu0 0.0
        %2917 = vmatpush1.msra.mxu0 0.0
        %2918 = vmatprep.subr.mxu0 0.0
        %2919 = vmatpush1.msra.mxu0 0.0
        %2920 = vmatprep.subr.mxu0 0.0
        %2921 = vmatpush1.msra.mxu0 0.0
        %2922 = vmatprep.subr.mxu0 0.0
        %2923 = vmatpush1.msra.mxu0 0.0
        %2924 = vmatprep.subr.mxu0 0.0
        %2925 = vmatpush1.msra.mxu0 0.0
        %2926 = vmatprep.mubr.f32.mxu0 0.0
        %2927 = vmatmul.mubr.f32.gmra.mrb[0].mxu0 %v793
        %v2928 = vpop.f32.mrb[0].mxu0
        %v2929 = vadd.f32 0.0, %v2928
        %v2930 = vpop.f32.mrb[0].mxu0
        %2931 = vmatprep.mubr.f32.mxu0 0.0
        %2932 = vmatmul.mubr.f32.gmra.mrb[0].mxu0 %v796
        %v2933 = vpop.f32.mrb[0].mxu0
        %v2934 = vadd.f32 0.0, %v2933
        %v2935 = vpop.f32.mrb[0].mxu0
        %2936 = vmatprep.mubr.f32.mxu0 0.0
        %2937 = vmatmul.mubr.f32.gmra.mrb[0].mxu0 %v799
        %v2938 = vpop.f32.mrb[0].mxu0
        %v2939 = vadd.f32 0.0, %v2938
        %v2940 = vpop.f32.mrb[0].mxu0
        %2941 = vmatprep.mubr.f32.mxu0 0.0
        %2942 = vmatmul.mubr.f32.gmra.mrb[0].mxu0 %v802
        %v2943 = vpop.f32.mrb[0].mxu0
        %v2944 = vadd.f32 0.0, %v2943
        %v2945 = vpop.f32.mrb[0].mxu0
        %2946 = vmatprep.mubr.f32.mxu0 0.0
        %2947 = vmatmul.mubr.f32.gmra.mrb[0].mxu0 %v805
        %v2948 = vpop.f32.mrb[0].mxu0
        %v2949 = vadd.f32 0.0, %v2948
        %v2950 = vpop.f32.mrb[0].mxu0
        %2951 = vmatprep.mubr.f32.mxu0 0.0
        %2952 = vmatmul.mubr.f32.gmra.mrb[0].mxu0 %v808
        %v2953 = vpop.f32.mrb[0].mxu0
        %v2954 = vadd.f32 0.0, %v2953
        %v2955 = vpop.f32.mrb[0].mxu0
        %2956 = vmatprep.mubr.f32.mxu0 0.0
        %2957 = vmatmul.mubr.f32.gmra.mrb[0].mxu0 %v811
        %v2958 = vpop.f32.mrb[0].mxu0
        %v2959 = vadd.f32 0.0, %v2958
        %v2960 = vpop.f32.mrb[0].mxu0
        %2961 = vmatprep.mubr.f32.mxu0 0.0
        %2962 = vmatmul.mubr.f32.gmra.mrb[0].mxu0 %v814
        %v2963 = vpop.f32.mrb[0].mxu0
        %v2964 = vadd.f32 0.0, %v2963
        %v2965 = vpop.f32.mrb[0].mxu0
        %2966 = vmatprep.mubr.f32.mxu0 0.0
        %2967 = vmatmul.mubr.f32.gmra.mrb[0].mxu0 %v817
        %v2968 = vpop.f32.mrb[0].mxu0
        %v2969 = vadd.f32 0.0, %v2968
        %v2970 = vpop.f32.mrb[0].mxu0
        %2971 = vmatprep.mubr.f32.mxu0 0.0
        %2972 = vmatmul.mubr.f32.gmra.mrb[0].mxu0 %v820
        %v2973 = vpop.f32.mrb[0].mxu0
        %v2974 = vadd.f32 0.0, %v2973
        %v2975 = vpop.f32.mrb[0].mxu0
        %2976 = vmatprep.mubr.f32.mxu0 0.0
        %2977 = vmatmul.mubr.f32.gmra.mrb[0].mxu0 %v823
        %v2978 = vpop.f32.mrb[0].mxu0
        %v2979 = vadd.f32 0.0, %v2978
        %v2980 = vpop.f32.mrb[0].mxu0
        %2981 = vmatprep.mubr.f32.mxu0 0.0
        %2982 = vmatmul.mubr.f32.gmra.mrb[0].mxu0 %v826
        %v2983 = vpop.f32.mrb[0].mxu0
        %v2984 = vadd.f32 0.0, %v2983
        %v2985 = vpop.f32.mrb[0].mxu0
        %2986 = vmatprep.mubr.f32.mxu0 0.0
        %2987 = vmatmul.mubr.f32.gmra.mrb[0].mxu0 %v829
        %v2988 = vpop.f32.mrb[0].mxu0
        %v2989 = vadd.f32 0.0, %v2988
        %v2990 = vpop.f32.mrb[0].mxu0
        %2991 = vmatprep.mubr.f32.mxu0 0.0
        %2992 = vmatmul.mubr.f32.gmra.mrb[0].mxu0 %v832
        %v2993 = vpop.f32.mrb[0].mxu0
        %v2994 = vadd.f32 0.0, %v2993
        %v2995 = vpop.f32.mrb[0].mxu0
        %2996 = vmatprep.mubr.f32.mxu0 0.0
        %2997 = vmatmul.mubr.f32.gmra.mrb[0].mxu0 %v835
        %v2998 = vpop.f32.mrb[0].mxu0
        %v2999 = vadd.f32 0.0, %v2998
        %v3000 = vpop.f32.mrb[0].mxu0
        %3001 = vmatprep.mubr.f32.mxu0 0.0
        %3002 = vmatmul.mubr.f32.gmra.mrb[0].mxu0 %v838
        %v3003 = vpop.f32.mrb[0].mxu0
        %v3004 = vadd.f32 0.0, %v3003
        %v3005 = vpop.f32.mrb[0].mxu0
        %3006 = vdwg.mxu0
        %3007 = vmax.xlane.f32.xlu0 %v2929
        %v3008 = vpop.xlane.xlu0 %3007
        %3009 = vmax.xlane.f32.xlu0 %v2934
        %v3010 = vpop.xlane.xlu0 %3009
        %3011 = vmax.xlane.f32.xlu0 %v2939
        %v3012 = vpop.xlane.xlu0 %3011
        %3013 = vmax.xlane.f32.xlu0 %v2944
        %v3014 = vpop.xlane.xlu0 %3013
        %3015 = vmax.xlane.f32.xlu0 %v2949
        %v3016 = vpop.xlane.xlu0 %3015
        %3017 = vmax.xlane.f32.xlu0 %v2954
        %v3018 = vpop.xlane.xlu0 %3017
        %3019 = vmax.xlane.f32.xlu0 %v2959
        %v3020 = vpop.xlane.xlu0 %3019
        %3021 = vmax.xlane.f32.xlu0 %v2964
        %v3022 = vpop.xlane.xlu0 %3021
        %3023 = vmax.xlane.f32.xlu0 %v2969
        %v3024 = vpop.xlane.xlu0 %3023
        %3025 = vmax.xlane.f32.xlu0 %v2974
        %v3026 = vpop.xlane.xlu0 %3025
        %3027 = vmax.xlane.f32.xlu0 %v2979
        %v3028 = vpop.xlane.xlu0 %3027
        %3029 = vmax.xlane.f32.xlu0 %v2984
        %v3030 = vpop.xlane.xlu0 %3029
        %3031 = vmax.xlane.f32.xlu0 %v2989
        %v3032 = vpop.xlane.xlu0 %3031
        %3033 = vmax.xlane.f32.xlu0 %v2994
        %v3034 = vpop.xlane.xlu0 %3033
        %3035 = vmax.xlane.f32.xlu0 %v2999
        %v3036 = vpop.xlane.xlu0 %3035
        %3037 = vmax.xlane.f32.xlu0 %v3004
        %v3038 = vpop.xlane.xlu0 %3037
        %v3039 = vsub.f32 %v2929, %v3008
        %v3040 = vsub.f32 %v2934, %v3010
        %v3041 = vsub.f32 %v2939, %v3012
        %v3042 = vsub.f32 %v2944, %v3014
        %v3043 = vsub.f32 %v2949, %v3016
        %v3044 = vsub.f32 %v2954, %v3018
        %v3045 = vsub.f32 %v2959, %v3020
        %v3046 = vsub.f32 %v2964, %v3022
        %v3047 = vsub.f32 %v2969, %v3024
        %v3048 = vsub.f32 %v2974, %v3026
        %v3049 = vsub.f32 %v2979, %v3028
        %v3050 = vsub.f32 %v2984, %v3030
        %v3051 = vsub.f32 %v2989, %v3032
        %v3052 = vsub.f32 %v2994, %v3034
        %v3053 = vsub.f32 %v2999, %v3036
        %v3054 = vsub.f32 %v3004, %v3038
        %v3055 = vmul.f32 %v3039, 1.442695
        %v3056 = vpow.pop %v3055
        %v3057 = vmul.f32 %v3040, 1.442695
        %v3058 = vpow.pop %v3057
        %v3059 = vmul.f32 %v3041, 1.442695
        %v3060 = vpow.pop %v3059
        %v3061 = vmul.f32 %v3042, 1.442695
        %v3062 = vpow.pop %v3061
        %v3063 = vmul.f32 %v3043, 1.442695
        %v3064 = vpow.pop %v3063
        %v3065 = vmul.f32 %v3044, 1.442695
        %v3066 = vpow.pop %v3065
        %v3067 = vmul.f32 %v3045, 1.442695
        %v3068 = vpow.pop %v3067
        %v3069 = vmul.f32 %v3046, 1.442695
        %v3070 = vpow.pop %v3069
        %v3071 = vmul.f32 %v3047, 1.442695
        %v3072 = vpow.pop %v3071
        %v3073 = vmul.f32 %v3048, 1.442695
        %v3074 = vpow.pop %v3073
        %v3075 = vmul.f32 %v3049, 1.442695
        %v3076 = vpow.pop %v3075
        %v3077 = vmul.f32 %v3050, 1.442695
        %v3078 = vpow.pop %v3077
        %v3079 = vmul.f32 %v3051, 1.442695
        %v3080 = vpow.pop %v3079
        %v3081 = vmul.f32 %v3052, 1.442695
        %v3082 = vpow.pop %v3081
        %v3083 = vmul.f32 %v3053, 1.442695
        %v3084 = vpow.pop %v3083
        %v3085 = vmul.f32 %v3054, 1.442695
        %v3086 = vpow.pop %v3085
        %3087 = vadd.xlane.f32.xlu0 %v3056
        %v3088 = vpop.xlane.xlu0 %3087
        %3089 = vadd.xlane.f32.xlu0 %v3058
        %v3090 = vpop.xlane.xlu0 %3089
        %3091 = vadd.xlane.f32.xlu0 %v3060
        %v3092 = vpop.xlane.xlu0 %3091
        %3093 = vadd.xlane.f32.xlu0 %v3062
        %v3094 = vpop.xlane.xlu0 %3093
        %3095 = vadd.xlane.f32.xlu0 %v3064
        %v3096 = vpop.xlane.xlu0 %3095
        %3097 = vadd.xlane.f32.xlu0 %v3066
        %v3098 = vpop.xlane.xlu0 %3097
        %3099 = vadd.xlane.f32.xlu0 %v3068
        %v3100 = vpop.xlane.xlu0 %3099
        %3101 = vadd.xlane.f32.xlu0 %v3070
        %v3102 = vpop.xlane.xlu0 %3101
        %3103 = vadd.xlane.f32.xlu0 %v3072
        %v3104 = vpop.xlane.xlu0 %3103
        %3105 = vadd.xlane.f32.xlu0 %v3074
        %v3106 = vpop.xlane.xlu0 %3105
        %3107 = vadd.xlane.f32.xlu0 %v3076
        %v3108 = vpop.xlane.xlu0 %3107
        %3109 = vadd.xlane.f32.xlu0 %v3078
        %v3110 = vpop.xlane.xlu0 %3109
        %3111 = vadd.xlane.f32.xlu0 %v3080
        %v3112 = vpop.xlane.xlu0 %3111
        %3113 = vadd.xlane.f32.xlu0 %v3082
        %v3114 = vpop.xlane.xlu0 %3113
        %3115 = vadd.xlane.f32.xlu0 %v3084
        %v3116 = vpop.xlane.xlu0 %3115
        %3117 = vadd.xlane.f32.xlu0 %v3086
        %v3118 = vpop.xlane.xlu0 %3117
        %v3119 = vrcp.pop %v3088
        %v3120 = vrcp.pop %v3090
        %v3121 = vrcp.pop %v3092
        %v3122 = vrcp.pop %v3094
        %v3123 = vrcp.pop %v3096
        %v3124 = vrcp.pop %v3098
        %v3125 = vrcp.pop %v3100
        %v3126 = vrcp.pop %v3102
        %v3127 = vrcp.pop %v3104
        %v3128 = vrcp.pop %v3106
        %v3129 = vrcp.pop %v3108
        %v3130 = vrcp.pop %v3110
        %v3131 = vrcp.pop %v3112
        %v3132 = vrcp.pop %v3114
        %v3133 = vrcp.pop %v3116
        %v3134 = vrcp.pop %v3118
        %v3135 = vmul.f32 %v3056, %v3119
        %v3136 = vmul.f32 %v3058, %v3120
        %v3137 = vmul.f32 %v3060, %v3121
        %v3138 = vmul.f32 %v3062, %v3122
        %v3139 = vmul.f32 %v3064, %v3123
        %v3140 = vmul.f32 %v3066, %v3124
        %v3141 = vmul.f32 %v3068, %v3125
        %v3142 = vmul.f32 %v3070, %v3126
        %v3143 = vmul.f32 %v3072, %v3127
        %v3144 = vmul.f32 %v3074, %v3128
        %v3145 = vmul.f32 %v3076, %v3129
        %v3146 = vmul.f32 %v3078, %v3130
        %v3147 = vmul.f32 %v3080, %v3131
        %v3148 = vmul.f32 %v3082, %v3132
        %v3149 = vmul.f32 %v3084, %v3133
        %v3150 = vmul.f32 %v3086, %v3134
        %v3151 = vsel %vm2854, %v718, 0.0
        %v3152 = vsel %vm2855, %v723, 0.0
        %v3153 = vsel %vm2856, %v728, 0.0
        %v3154 = vsel %vm2857, %v733, 0.0
        %3155 = vmatprep.subr.mxu0 0.0
        %3156 = vmatpush1.xpose.msra.mxu0 %v3135
        %3157 = vmatprep.subr.mxu0 0.0
        %3158 = vmatpush1.xpose.msra.mxu0 %v3136
        %3159 = vmatprep.subr.mxu0 0.0
        %3160 = vmatpush1.xpose.msra.mxu0 %v3137
        %3161 = vmatprep.subr.mxu0 0.0
        %3162 = vmatpush1.xpose.msra.mxu0 %v3138
        %3163 = vmatprep.subr.mxu0 0.0
        %3164 = vmatpush1.xpose.msra.mxu0 %v3139
        %3165 = vmatprep.subr.mxu0 0.0
        %3166 = vmatpush1.xpose.msra.mxu0 %v3140
        %3167 = vmatprep.subr.mxu0 0.0
        %3168 = vmatpush1.xpose.msra.mxu0 %v3141
        %3169 = vmatprep.subr.mxu0 0.0
        %3170 = vmatpush1.xpose.msra.mxu0 %v3142
        %3171 = vmatprep.subr.mxu0 0.0
        %3172 = vmatpush1.xpose.msra.mxu0 %v3143
        %3173 = vmatprep.subr.mxu0 0.0
        %3174 = vmatpush1.xpose.msra.mxu0 %v3144
        %3175 = vmatprep.subr.mxu0 0.0
        %3176 = vmatpush1.xpose.msra.mxu0 %v3145
        %3177 = vmatprep.subr.mxu0 0.0
        %3178 = vmatpush1.xpose.msra.mxu0 %v3146
        %3179 = vmatprep.subr.mxu0 0.0
        %3180 = vmatpush1.xpose.msra.mxu0 %v3147
        %3181 = vmatprep.subr.mxu0 0.0
        %3182 = vmatpush1.xpose.msra.mxu0 %v3148
        %3183 = vmatprep.subr.mxu0 0.0
        %3184 = vmatpush1.xpose.msra.mxu0 %v3149
        %3185 = vmatprep.subr.mxu0 0.0
        %3186 = vmatpush1.xpose.msra.mxu0 %v3150
        %3187 = vmatprep.subr.mxu0 0.0
        %3188 = vmatpush1.xpose.msra.mxu0 0.0
        %3189 = vmatprep.subr.mxu0 0.0
        %3190 = vmatpush1.xpose.msra.mxu0 0.0
        %3191 = vmatprep.subr.mxu0 0.0
        %3192 = vmatpush1.xpose.msra.mxu0 0.0
        %3193 = vmatprep.subr.mxu0 0.0
        %3194 = vmatpush1.xpose.msra.mxu0 0.0
        %3195 = vmatprep.subr.mxu0 0.0
        %3196 = vmatpush1.xpose.msra.mxu0 0.0
        %3197 = vmatprep.subr.mxu0 0.0
        %3198 = vmatpush1.xpose.msra.mxu0 0.0
        %3199 = vmatprep.subr.mxu0 0.0
        %3200 = vmatpush1.xpose.msra.mxu0 0.0
        %3201 = vmatprep.subr.mxu0 0.0
        %3202 = vmatpush1.xpose.msra.mxu0 0.0
        %3203 = vmatprep.subr.mxu0 0.0
        %3204 = vmatpush1.xpose.msra.mxu0 0.0
        %3205 = vmatprep.subr.mxu0 0.0
        %3206 = vmatpush1.xpose.msra.mxu0 0.0
        %3207 = vmatprep.subr.mxu0 0.0
        %3208 = vmatpush1.xpose.msra.mxu0 0.0
        %3209 = vmatprep.subr.mxu0 0.0
        %3210 = vmatpush1.xpose.msra.mxu0 0.0
        %3211 = vmatprep.subr.mxu0 0.0
        %3212 = vmatpush1.xpose.msra.mxu0 0.0
        %3213 = vmatprep.subr.mxu0 0.0
        %3214 = vmatpush1.xpose.msra.mxu0 0.0
        %3215 = vmatprep.subr.mxu0 0.0
        %3216 = vmatpush1.xpose.msra.mxu0 0.0
        %3217 = vmatprep.subr.mxu0 0.0
        %3218 = vmatpush1.xpose.msra.mxu0 0.0
        %3219 = vmatprep.mubr.f32.mxu0 0.0
        %3220 = vmatmul.mubr.f32.gmra.mrb[0].mxu0 %v3151
        %v3221 = vpop.f32.mrb[0].mxu0
        %v3222 = vadd.f32 0.0, %v3221
        %v3223 = vpop.f32.mrb[0].mxu0
        %3224 = vmatprep.mubr.f32.mxu0 0.0
        %3225 = vmatmul.mubr.f32.gmra.mrb[0].mxu0 %v3152
        %v3226 = vpop.f32.mrb[0].mxu0
        %v3227 = vadd.f32 0.0, %v3226
        %v3228 = vpop.f32.mrb[0].mxu0
        %3229 = vmatprep.mubr.f32.mxu0 0.0
        %3230 = vmatmul.mubr.f32.gmra.mrb[0].mxu0 %v3153
        %v3231 = vpop.f32.mrb[0].mxu0
        %v3232 = vadd.f32 0.0, %v3231
        %v3233 = vpop.f32.mrb[0].mxu0
        %3234 = vmatprep.mubr.f32.mxu0 0.0
        %3235 = vmatmul.mubr.f32.gmra.mrb[0].mxu0 %v3154
        %v3236 = vpop.f32.mrb[0].mxu0
        %v3237 = vadd.f32 0.0, %v3236
        %v3238 = vpop.f32.mrb[0].mxu0
        %3239 = vdwg.mxu0
        %v3240 = vadd.f32 %v2834, %v3222
        %v3241 = vadd.f32 %v2835, %v3227
        %v3242 = vadd.f32 %v2836, %v3232
        %v3243 = vadd.f32 %v2837, %v3237
        %vm3244 = vcmp.ge.s32.totalorder %v423, 24
        %vm3245 = vcmp.ge.s32.totalorder %v424, 24
        %vm3246 = vcmp.ge.s32.totalorder %v425, 24
        %vm3247 = vcmp.ge.s32.totalorder %v426, 24
        %vm3248 = vcmp.lt.s32.totalorder %v423, 28
        %vm3249 = vcmp.lt.s32.totalorder %v424, 28
        %vm3250 = vcmp.lt.s32.totalorder %v425, 28
        %vm3251 = vcmp.lt.s32.totalorder %v426, 28
        %vm3252 = vmand %vm3244, %vm3248
        %vm3253 = vmand %vm3245, %vm3249
        %vm3254 = vmand %vm3246, %vm3250
        %vm3255 = vmand %vm3247, %vm3251
        %v3256 = vsel %vm3252, 1, 0
        %v3257 = vsel %vm3253, 1, 0
        %v3258 = vsel %vm3254, 1, 0
        %v3259 = vsel %vm3255, 1, 0
        %vm3260 = vcmp.eq.s32.totalorder %v3256, 1
        %vm3261 = vcmp.eq.s32.totalorder %v3257, 1
        %vm3262 = vcmp.eq.s32.totalorder %v3258, 1
        %vm3263 = vcmp.eq.s32.totalorder %v3259, 1
        %v3264 = vsel %vm3260, %v698, 0.0
        %v3265 = vsel %vm3261, %v703, 0.0
        %v3266 = vsel %vm3262, %v708, 0.0
        %v3267 = vsel %vm3263, %v713, 0.0
        %3268 = vmatprep.subr.mxu0 0.0
        %3269 = vmatpush1.msra.mxu0 %v3264
        %3270 = vmatprep.subr.mxu0 0.0
        %3271 = vmatpush1.msra.mxu0 %v3265
        %3272 = vmatprep.subr.mxu0 0.0
        %3273 = vmatpush1.msra.mxu0 %v3266
        %3274 = vmatprep.subr.mxu0 0.0
        %3275 = vmatpush1.msra.mxu0 %v3267
        %3276 = vmatprep.subr.mxu0 0.0
        %3277 = vmatpush1.msra.mxu0 0.0
        %3278 = vmatprep.subr.mxu0 0.0
        %3279 = vmatpush1.msra.mxu0 0.0
        %3280 = vmatprep.subr.mxu0 0.0
        %3281 = vmatpush1.msra.mxu0 0.0
        %3282 = vmatprep.subr.mxu0 0.0
        %3283 = vmatpush1.msra.mxu0 0.0
        %3284 = vmatprep.subr.mxu0 0.0
        %3285 = vmatpush1.msra.mxu0 0.0
        %3286 = vmatprep.subr.mxu0 0.0
        %3287 = vmatpush1.msra.mxu0 0.0
        %3288 = vmatprep.subr.mxu0 0.0
        %3289 = vmatpush1.msra.mxu0 0.0
        %3290 = vmatprep.subr.mxu0 0.0
        %3291 = vmatpush1.msra.mxu0 0.0
        %3292 = vmatprep.subr.mxu0 0.0
        %3293 = vmatpush1.msra.mxu0 0.0
        %3294 = vmatprep.subr.mxu0 0.0
        %3295 = vmatpush1.msra.mxu0 0.0
        %3296 = vmatprep.subr.mxu0 0.0
        %3297 = vmatpush1.msra.mxu0 0.0
        %3298 = vmatprep.subr.mxu0 0.0
        %3299 = vmatpush1.msra.mxu0 0.0
        %3300 = vmatprep.subr.mxu0 0.0
        %3301 = vmatpush1.msra.mxu0 0.0
        %3302 = vmatprep.subr.mxu0 0.0
        %3303 = vmatpush1.msra.mxu0 0.0
        %3304 = vmatprep.subr.mxu0 0.0
        %3305 = vmatpush1.msra.mxu0 0.0
        %3306 = vmatprep.subr.mxu0 0.0
        %3307 = vmatpush1.msra.mxu0 0.0
        %3308 = vmatprep.subr.mxu0 0.0
        %3309 = vmatpush1.msra.mxu0 0.0
        %3310 = vmatprep.subr.mxu0 0.0
        %3311 = vmatpush1.msra.mxu0 0.0
        %3312 = vmatprep.subr.mxu0 0.0
        %3313 = vmatpush1.msra.mxu0 0.0
        %3314 = vmatprep.subr.mxu0 0.0
        %3315 = vmatpush1.msra.mxu0 0.0
        %3316 = vmatprep.subr.mxu0 0.0
        %3317 = vmatpush1.msra.mxu0 0.0
        %3318 = vmatprep.subr.mxu0 0.0
        %3319 = vmatpush1.msra.mxu0 0.0
        %3320 = vmatprep.subr.mxu0 0.0
        %3321 = vmatpush1.msra.mxu0 0.0
        %3322 = vmatprep.subr.mxu0 0.0
        %3323 = vmatpush1.msra.mxu0 0.0
        %3324 = vmatprep.subr.mxu0 0.0
        %3325 = vmatpush1.msra.mxu0 0.0
        %3326 = vmatprep.subr.mxu0 0.0
        %3327 = vmatpush1.msra.mxu0 0.0
        %3328 = vmatprep.subr.mxu0 0.0
        %3329 = vmatpush1.msra.mxu0 0.0
        %3330 = vmatprep.subr.mxu0 0.0
        %3331 = vmatpush1.msra.mxu0 0.0
        %3332 = vmatprep.mubr.f32.mxu0 0.0
        %3333 = vmatmul.mubr.f32.gmra.mrb[0].mxu0 %v793
        %v3334 = vpop.f32.mrb[0].mxu0
        %v3335 = vadd.f32 0.0, %v3334
        %v3336 = vpop.f32.mrb[0].mxu0
        %3337 = vmatprep.mubr.f32.mxu0 0.0
        %3338 = vmatmul.mubr.f32.gmra.mrb[0].mxu0 %v796
        %v3339 = vpop.f32.mrb[0].mxu0
        %v3340 = vadd.f32 0.0, %v3339
        %v3341 = vpop.f32.mrb[0].mxu0
        %3342 = vmatprep.mubr.f32.mxu0 0.0
        %3343 = vmatmul.mubr.f32.gmra.mrb[0].mxu0 %v799
        %v3344 = vpop.f32.mrb[0].mxu0
        %v3345 = vadd.f32 0.0, %v3344
        %v3346 = vpop.f32.mrb[0].mxu0
        %3347 = vmatprep.mubr.f32.mxu0 0.0
        %3348 = vmatmul.mubr.f32.gmra.mrb[0].mxu0 %v802
        %v3349 = vpop.f32.mrb[0].mxu0
        %v3350 = vadd.f32 0.0, %v3349
        %v3351 = vpop.f32.mrb[0].mxu0
        %3352 = vmatprep.mubr.f32.mxu0 0.0
        %3353 = vmatmul.mubr.f32.gmra.mrb[0].mxu0 %v805
        %v3354 = vpop.f32.mrb[0].mxu0
        %v3355 = vadd.f32 0.0, %v3354
        %v3356 = vpop.f32.mrb[0].mxu0
        %3357 = vmatprep.mubr.f32.mxu0 0.0
        %3358 = vmatmul.mubr.f32.gmra.mrb[0].mxu0 %v808
        %v3359 = vpop.f32.mrb[0].mxu0
        %v3360 = vadd.f32 0.0, %v3359
        %v3361 = vpop.f32.mrb[0].mxu0
        %3362 = vmatprep.mubr.f32.mxu0 0.0
        %3363 = vmatmul.mubr.f32.gmra.mrb[0].mxu0 %v811
        %v3364 = vpop.f32.mrb[0].mxu0
        %v3365 = vadd.f32 0.0, %v3364
        %v3366 = vpop.f32.mrb[0].mxu0
        %3367 = vmatprep.mubr.f32.mxu0 0.0
        %3368 = vmatmul.mubr.f32.gmra.mrb[0].mxu0 %v814
        %v3369 = vpop.f32.mrb[0].mxu0
        %v3370 = vadd.f32 0.0, %v3369
        %v3371 = vpop.f32.mrb[0].mxu0
        %3372 = vmatprep.mubr.f32.mxu0 0.0
        %3373 = vmatmul.mubr.f32.gmra.mrb[0].mxu0 %v817
        %v3374 = vpop.f32.mrb[0].mxu0
        %v3375 = vadd.f32 0.0, %v3374
        %v3376 = vpop.f32.mrb[0].mxu0
        %3377 = vmatprep.mubr.f32.mxu0 0.0
        %3378 = vmatmul.mubr.f32.gmra.mrb[0].mxu0 %v820
        %v3379 = vpop.f32.mrb[0].mxu0
        %v3380 = vadd.f32 0.0, %v3379
        %v3381 = vpop.f32.mrb[0].mxu0
        %3382 = vmatprep.mubr.f32.mxu0 0.0
        %3383 = vmatmul.mubr.f32.gmra.mrb[0].mxu0 %v823
        %v3384 = vpop.f32.mrb[0].mxu0
        %v3385 = vadd.f32 0.0, %v3384
        %v3386 = vpop.f32.mrb[0].mxu0
        %3387 = vmatprep.mubr.f32.mxu0 0.0
        %3388 = vmatmul.mubr.f32.gmra.mrb[0].mxu0 %v826
        %v3389 = vpop.f32.mrb[0].mxu0
        %v3390 = vadd.f32 0.0, %v3389
        %v3391 = vpop.f32.mrb[0].mxu0
        %3392 = vmatprep.mubr.f32.mxu0 0.0
        %3393 = vmatmul.mubr.f32.gmra.mrb[0].mxu0 %v829
        %v3394 = vpop.f32.mrb[0].mxu0
        %v3395 = vadd.f32 0.0, %v3394
        %v3396 = vpop.f32.mrb[0].mxu0
        %3397 = vmatprep.mubr.f32.mxu0 0.0
        %3398 = vmatmul.mubr.f32.gmra.mrb[0].mxu0 %v832
        %v3399 = vpop.f32.mrb[0].mxu0
        %v3400 = vadd.f32 0.0, %v3399
        %v3401 = vpop.f32.mrb[0].mxu0
        %3402 = vmatprep.mubr.f32.mxu0 0.0
        %3403 = vmatmul.mubr.f32.gmra.mrb[0].mxu0 %v835
        %v3404 = vpop.f32.mrb[0].mxu0
        %v3405 = vadd.f32 0.0, %v3404
        %v3406 = vpop.f32.mrb[0].mxu0
        %3407 = vmatprep.mubr.f32.mxu0 0.0
        %3408 = vmatmul.mubr.f32.gmra.mrb[0].mxu0 %v838
        %v3409 = vpop.f32.mrb[0].mxu0
        %v3410 = vadd.f32 0.0, %v3409
        %v3411 = vpop.f32.mrb[0].mxu0
        %3412 = vdwg.mxu0
        %3413 = vmax.xlane.f32.xlu0 %v3335
        %v3414 = vpop.xlane.xlu0 %3413
        %3415 = vmax.xlane.f32.xlu0 %v3340
        %v3416 = vpop.xlane.xlu0 %3415
        %3417 = vmax.xlane.f32.xlu0 %v3345
        %v3418 = vpop.xlane.xlu0 %3417
        %3419 = vmax.xlane.f32.xlu0 %v3350
        %v3420 = vpop.xlane.xlu0 %3419
        %3421 = vmax.xlane.f32.xlu0 %v3355
        %v3422 = vpop.xlane.xlu0 %3421
        %3423 = vmax.xlane.f32.xlu0 %v3360
        %v3424 = vpop.xlane.xlu0 %3423
        %3425 = vmax.xlane.f32.xlu0 %v3365
        %v3426 = vpop.xlane.xlu0 %3425
        %3427 = vmax.xlane.f32.xlu0 %v3370
        %v3428 = vpop.xlane.xlu0 %3427
        %3429 = vmax.xlane.f32.xlu0 %v3375
        %v3430 = vpop.xlane.xlu0 %3429
        %3431 = vmax.xlane.f32.xlu0 %v3380
        %v3432 = vpop.xlane.xlu0 %3431
        %3433 = vmax.xlane.f32.xlu0 %v3385
        %v3434 = vpop.xlane.xlu0 %3433
        %3435 = vmax.xlane.f32.xlu0 %v3390
        %v3436 = vpop.xlane.xlu0 %3435
        %3437 = vmax.xlane.f32.xlu0 %v3395
        %v3438 = vpop.xlane.xlu0 %3437
        %3439 = vmax.xlane.f32.xlu0 %v3400
        %v3440 = vpop.xlane.xlu0 %3439
        %3441 = vmax.xlane.f32.xlu0 %v3405
        %v3442 = vpop.xlane.xlu0 %3441
        %3443 = vmax.xlane.f32.xlu0 %v3410
        %v3444 = vpop.xlane.xlu0 %3443
        %v3445 = vsub.f32 %v3335, %v3414
        %v3446 = vsub.f32 %v3340, %v3416
        %v3447 = vsub.f32 %v3345, %v3418
        %v3448 = vsub.f32 %v3350, %v3420
        %v3449 = vsub.f32 %v3355, %v3422
        %v3450 = vsub.f32 %v3360, %v3424
        %v3451 = vsub.f32 %v3365, %v3426
        %v3452 = vsub.f32 %v3370, %v3428
        %v3453 = vsub.f32 %v3375, %v3430
        %v3454 = vsub.f32 %v3380, %v3432
        %v3455 = vsub.f32 %v3385, %v3434
        %v3456 = vsub.f32 %v3390, %v3436
        %v3457 = vsub.f32 %v3395, %v3438
        %v3458 = vsub.f32 %v3400, %v3440
        %v3459 = vsub.f32 %v3405, %v3442
        %v3460 = vsub.f32 %v3410, %v3444
        %v3461 = vmul.f32 %v3445, 1.442695
        %v3462 = vpow.pop %v3461
        %v3463 = vmul.f32 %v3446, 1.442695
        %v3464 = vpow.pop %v3463
        %v3465 = vmul.f32 %v3447, 1.442695
        %v3466 = vpow.pop %v3465
        %v3467 = vmul.f32 %v3448, 1.442695
        %v3468 = vpow.pop %v3467
        %v3469 = vmul.f32 %v3449, 1.442695
        %v3470 = vpow.pop %v3469
        %v3471 = vmul.f32 %v3450, 1.442695
        %v3472 = vpow.pop %v3471
        %v3473 = vmul.f32 %v3451, 1.442695
        %v3474 = vpow.pop %v3473
        %v3475 = vmul.f32 %v3452, 1.442695
        %v3476 = vpow.pop %v3475
        %v3477 = vmul.f32 %v3453, 1.442695
        %v3478 = vpow.pop %v3477
        %v3479 = vmul.f32 %v3454, 1.442695
        %v3480 = vpow.pop %v3479
        %v3481 = vmul.f32 %v3455, 1.442695
        %v3482 = vpow.pop %v3481
        %v3483 = vmul.f32 %v3456, 1.442695
        %v3484 = vpow.pop %v3483
        %v3485 = vmul.f32 %v3457, 1.442695
        %v3486 = vpow.pop %v3485
        %v3487 = vmul.f32 %v3458, 1.442695
        %v3488 = vpow.pop %v3487
        %v3489 = vmul.f32 %v3459, 1.442695
        %v3490 = vpow.pop %v3489
        %v3491 = vmul.f32 %v3460, 1.442695
        %v3492 = vpow.pop %v3491
        %3493 = vadd.xlane.f32.xlu0 %v3462
        %v3494 = vpop.xlane.xlu0 %3493
        %3495 = vadd.xlane.f32.xlu0 %v3464
        %v3496 = vpop.xlane.xlu0 %3495
        %3497 = vadd.xlane.f32.xlu0 %v3466
        %v3498 = vpop.xlane.xlu0 %3497
        %3499 = vadd.xlane.f32.xlu0 %v3468
        %v3500 = vpop.xlane.xlu0 %3499
        %3501 = vadd.xlane.f32.xlu0 %v3470
        %v3502 = vpop.xlane.xlu0 %3501
        %3503 = vadd.xlane.f32.xlu0 %v3472
        %v3504 = vpop.xlane.xlu0 %3503
        %3505 = vadd.xlane.f32.xlu0 %v3474
        %v3506 = vpop.xlane.xlu0 %3505
        %3507 = vadd.xlane.f32.xlu0 %v3476
        %v3508 = vpop.xlane.xlu0 %3507
        %3509 = vadd.xlane.f32.xlu0 %v3478
        %v3510 = vpop.xlane.xlu0 %3509
        %3511 = vadd.xlane.f32.xlu0 %v3480
        %v3512 = vpop.xlane.xlu0 %3511
        %3513 = vadd.xlane.f32.xlu0 %v3482
        %v3514 = vpop.xlane.xlu0 %3513
        %3515 = vadd.xlane.f32.xlu0 %v3484
        %v3516 = vpop.xlane.xlu0 %3515
        %3517 = vadd.xlane.f32.xlu0 %v3486
        %v3518 = vpop.xlane.xlu0 %3517
        %3519 = vadd.xlane.f32.xlu0 %v3488
        %v3520 = vpop.xlane.xlu0 %3519
        %3521 = vadd.xlane.f32.xlu0 %v3490
        %v3522 = vpop.xlane.xlu0 %3521
        %3523 = vadd.xlane.f32.xlu0 %v3492
        %v3524 = vpop.xlane.xlu0 %3523
        %v3525 = vrcp.pop %v3494
        %v3526 = vrcp.pop %v3496
        %v3527 = vrcp.pop %v3498
        %v3528 = vrcp.pop %v3500
        %v3529 = vrcp.pop %v3502
        %v3530 = vrcp.pop %v3504
        %v3531 = vrcp.pop %v3506
        %v3532 = vrcp.pop %v3508
        %v3533 = vrcp.pop %v3510
        %v3534 = vrcp.pop %v3512
        %v3535 = vrcp.pop %v3514
        %v3536 = vrcp.pop %v3516
        %v3537 = vrcp.pop %v3518
        %v3538 = vrcp.pop %v3520
        %v3539 = vrcp.pop %v3522
        %v3540 = vrcp.pop %v3524
        %v3541 = vmul.f32 %v3462, %v3525
        %v3542 = vmul.f32 %v3464, %v3526
        %v3543 = vmul.f32 %v3466, %v3527
        %v3544 = vmul.f32 %v3468, %v3528
        %v3545 = vmul.f32 %v3470, %v3529
        %v3546 = vmul.f32 %v3472, %v3530
        %v3547 = vmul.f32 %v3474, %v3531
        %v3548 = vmul.f32 %v3476, %v3532
        %v3549 = vmul.f32 %v3478, %v3533
        %v3550 = vmul.f32 %v3480, %v3534
        %v3551 = vmul.f32 %v3482, %v3535
        %v3552 = vmul.f32 %v3484, %v3536
        %v3553 = vmul.f32 %v3486, %v3537
        %v3554 = vmul.f32 %v3488, %v3538
        %v3555 = vmul.f32 %v3490, %v3539
        %v3556 = vmul.f32 %v3492, %v3540
        %v3557 = vsel %vm3260, %v718, 0.0
        %v3558 = vsel %vm3261, %v723, 0.0
        %v3559 = vsel %vm3262, %v728, 0.0
        %v3560 = vsel %vm3263, %v733, 0.0
        %3561 = vmatprep.subr.mxu0 0.0
        %3562 = vmatpush1.xpose.msra.mxu0 %v3541
        %3563 = vmatprep.subr.mxu0 0.0
        %3564 = vmatpush1.xpose.msra.mxu0 %v3542
        %3565 = vmatprep.subr.mxu0 0.0
        %3566 = vmatpush1.xpose.msra.mxu0 %v3543
        %3567 = vmatprep.subr.mxu0 0.0
        %3568 = vmatpush1.xpose.msra.mxu0 %v3544
        %3569 = vmatprep.subr.mxu0 0.0
        %3570 = vmatpush1.xpose.msra.mxu0 %v3545
        %3571 = vmatprep.subr.mxu0 0.0
        %3572 = vmatpush1.xpose.msra.mxu0 %v3546
        %3573 = vmatprep.subr.mxu0 0.0
        %3574 = vmatpush1.xpose.msra.mxu0 %v3547
        %3575 = vmatprep.subr.mxu0 0.0
        %3576 = vmatpush1.xpose.msra.mxu0 %v3548
        %3577 = vmatprep.subr.mxu0 0.0
        %3578 = vmatpush1.xpose.msra.mxu0 %v3549
        %3579 = vmatprep.subr.mxu0 0.0
        %3580 = vmatpush1.xpose.msra.mxu0 %v3550
        %3581 = vmatprep.subr.mxu0 0.0
        %3582 = vmatpush1.xpose.msra.mxu0 %v3551
        %3583 = vmatprep.subr.mxu0 0.0
        %3584 = vmatpush1.xpose.msra.mxu0 %v3552
        %3585 = vmatprep.subr.mxu0 0.0
        %3586 = vmatpush1.xpose.msra.mxu0 %v3553
        %3587 = vmatprep.subr.mxu0 0.0
        %3588 = vmatpush1.xpose.msra.mxu0 %v3554
        %3589 = vmatprep.subr.mxu0 0.0
        %3590 = vmatpush1.xpose.msra.mxu0 %v3555
        %3591 = vmatprep.subr.mxu0 0.0
        %3592 = vmatpush1.xpose.msra.mxu0 %v3556
        %3593 = vmatprep.subr.mxu0 0.0
        %3594 = vmatpush1.xpose.msra.mxu0 0.0
        %3595 = vmatprep.subr.mxu0 0.0
        %3596 = vmatpush1.xpose.msra.mxu0 0.0
        %3597 = vmatprep.subr.mxu0 0.0
        %3598 = vmatpush1.xpose.msra.mxu0 0.0
        %3599 = vmatprep.subr.mxu0 0.0
        %3600 = vmatpush1.xpose.msra.mxu0 0.0
        %3601 = vmatprep.subr.mxu0 0.0
        %3602 = vmatpush1.xpose.msra.mxu0 0.0
        %3603 = vmatprep.subr.mxu0 0.0
        %3604 = vmatpush1.xpose.msra.mxu0 0.0
        %3605 = vmatprep.subr.mxu0 0.0
        %3606 = vmatpush1.xpose.msra.mxu0 0.0
        %3607 = vmatprep.subr.mxu0 0.0
        %3608 = vmatpush1.xpose.msra.mxu0 0.0
        %3609 = vmatprep.subr.mxu0 0.0
        %3610 = vmatpush1.xpose.msra.mxu0 0.0
        %3611 = vmatprep.subr.mxu0 0.0
        %3612 = vmatpush1.xpose.msra.mxu0 0.0
        %3613 = vmatprep.subr.mxu0 0.0
        %3614 = vmatpush1.xpose.msra.mxu0 0.0
        %3615 = vmatprep.subr.mxu0 0.0
        %3616 = vmatpush1.xpose.msra.mxu0 0.0
        %3617 = vmatprep.subr.mxu0 0.0
        %3618 = vmatpush1.xpose.msra.mxu0 0.0
        %3619 = vmatprep.subr.mxu0 0.0
        %3620 = vmatpush1.xpose.msra.mxu0 0.0
        %3621 = vmatprep.subr.mxu0 0.0
        %3622 = vmatpush1.xpose.msra.mxu0 0.0
        %3623 = vmatprep.subr.mxu0 0.0
        %3624 = vmatpush1.xpose.msra.mxu0 0.0
        %3625 = vmatprep.mubr.f32.mxu0 0.0
        %3626 = vmatmul.mubr.f32.gmra.mrb[0].mxu0 %v3557
        %v3627 = vpop.f32.mrb[0].mxu0
        %v3628 = vadd.f32 0.0, %v3627
        %v3629 = vpop.f32.mrb[0].mxu0
        %3630 = vmatprep.mubr.f32.mxu0 0.0
        %3631 = vmatmul.mubr.f32.gmra.mrb[0].mxu0 %v3558
        %v3632 = vpop.f32.mrb[0].mxu0
        %v3633 = vadd.f32 0.0, %v3632
        %v3634 = vpop.f32.mrb[0].mxu0
        %3635 = vmatprep.mubr.f32.mxu0 0.0
        %3636 = vmatmul.mubr.f32.gmra.mrb[0].mxu0 %v3559
        %v3637 = vpop.f32.mrb[0].mxu0
        %v3638 = vadd.f32 0.0, %v3637
        %v3639 = vpop.f32.mrb[0].mxu0
        %3640 = vmatprep.mubr.f32.mxu0 0.0
        %3641 = vmatmul.mubr.f32.gmra.mrb[0].mxu0 %v3560
        %v3642 = vpop.f32.mrb[0].mxu0
        %v3643 = vadd.f32 0.0, %v3642
        %v3644 = vpop.f32.mrb[0].mxu0
        %3645 = vdwg.mxu0
        %v3646 = vadd.f32 %v3240, %v3628
        %v3647 = vadd.f32 %v3241, %v3633
        %v3648 = vadd.f32 %v3242, %v3638
        %v3649 = vadd.f32 %v3243, %v3643
        %vm3650 = vcmp.ge.s32.totalorder %v423, 28
        %vm3651 = vcmp.ge.s32.totalorder %v424, 28
        %vm3652 = vcmp.ge.s32.totalorder %v425, 28
        %vm3653 = vcmp.ge.s32.totalorder %v426, 28
        %vm3654 = vcmp.lt.s32.totalorder %v423, 32
        %vm3655 = vcmp.lt.s32.totalorder %v424, 32
        %vm3656 = vcmp.lt.s32.totalorder %v425, 32
        %vm3657 = vcmp.lt.s32.totalorder %v426, 32
        %vm3658 = vmand %vm3650, %vm3654
        %vm3659 = vmand %vm3651, %vm3655
        %vm3660 = vmand %vm3652, %vm3656
        %vm3661 = vmand %vm3653, %vm3657
        %v3662 = vsel %vm3658, 1, 0
        %v3663 = vsel %vm3659, 1, 0
        %v3664 = vsel %vm3660, 1, 0
        %v3665 = vsel %vm3661, 1, 0
        %vm3666 = vcmp.eq.s32.totalorder %v3662, 1
        %vm3667 = vcmp.eq.s32.totalorder %v3663, 1
        %vm3668 = vcmp.eq.s32.totalorder %v3664, 1
        %vm3669 = vcmp.eq.s32.totalorder %v3665, 1
        %v3670 = vsel %vm3666, %v698, 0.0
        %v3671 = vsel %vm3667, %v703, 0.0
        %v3672 = vsel %vm3668, %v708, 0.0
        %v3673 = vsel %vm3669, %v713, 0.0
        %3674 = vmatprep.subr.mxu0 0.0
        %3675 = vmatpush1.msra.mxu0 %v3670
        %3676 = vmatprep.subr.mxu0 0.0
        %3677 = vmatpush1.msra.mxu0 %v3671
        %3678 = vmatprep.subr.mxu0 0.0
        %3679 = vmatpush1.msra.mxu0 %v3672
        %3680 = vmatprep.subr.mxu0 0.0
        %3681 = vmatpush1.msra.mxu0 %v3673
        %3682 = vmatprep.subr.mxu0 0.0
        %3683 = vmatpush1.msra.mxu0 0.0
        %3684 = vmatprep.subr.mxu0 0.0
        %3685 = vmatpush1.msra.mxu0 0.0
        %3686 = vmatprep.subr.mxu0 0.0
        %3687 = vmatpush1.msra.mxu0 0.0
        %3688 = vmatprep.subr.mxu0 0.0
        %3689 = vmatpush1.msra.mxu0 0.0
        %3690 = vmatprep.subr.mxu0 0.0
        %3691 = vmatpush1.msra.mxu0 0.0
        %3692 = vmatprep.subr.mxu0 0.0
        %3693 = vmatpush1.msra.mxu0 0.0
        %3694 = vmatprep.subr.mxu0 0.0
        %3695 = vmatpush1.msra.mxu0 0.0
        %3696 = vmatprep.subr.mxu0 0.0
        %3697 = vmatpush1.msra.mxu0 0.0
        %3698 = vmatprep.subr.mxu0 0.0
        %3699 = vmatpush1.msra.mxu0 0.0
        %3700 = vmatprep.subr.mxu0 0.0
        %3701 = vmatpush1.msra.mxu0 0.0
        %3702 = vmatprep.subr.mxu0 0.0
        %3703 = vmatpush1.msra.mxu0 0.0
        %3704 = vmatprep.subr.mxu0 0.0
        %3705 = vmatpush1.msra.mxu0 0.0
        %3706 = vmatprep.subr.mxu0 0.0
        %3707 = vmatpush1.msra.mxu0 0.0
        %3708 = vmatprep.subr.mxu0 0.0
        %3709 = vmatpush1.msra.mxu0 0.0
        %3710 = vmatprep.subr.mxu0 0.0
        %3711 = vmatpush1.msra.mxu0 0.0
        %3712 = vmatprep.subr.mxu0 0.0
        %3713 = vmatpush1.msra.mxu0 0.0
        %3714 = vmatprep.subr.mxu0 0.0
        %3715 = vmatpush1.msra.mxu0 0.0
        %3716 = vmatprep.subr.mxu0 0.0
        %3717 = vmatpush1.msra.mxu0 0.0
        %3718 = vmatprep.subr.mxu0 0.0
        %3719 = vmatpush1.msra.mxu0 0.0
        %3720 = vmatprep.subr.mxu0 0.0
        %3721 = vmatpush1.msra.mxu0 0.0
        %3722 = vmatprep.subr.mxu0 0.0
        %3723 = vmatpush1.msra.mxu0 0.0
        %3724 = vmatprep.subr.mxu0 0.0
        %3725 = vmatpush1.msra.mxu0 0.0
        %3726 = vmatprep.subr.mxu0 0.0
        %3727 = vmatpush1.msra.mxu0 0.0
        %3728 = vmatprep.subr.mxu0 0.0
        %3729 = vmatpush1.msra.mxu0 0.0
        %3730 = vmatprep.subr.mxu0 0.0
        %3731 = vmatpush1.msra.mxu0 0.0
        %3732 = vmatprep.subr.mxu0 0.0
        %3733 = vmatpush1.msra.mxu0 0.0
        %3734 = vmatprep.subr.mxu0 0.0
        %3735 = vmatpush1.msra.mxu0 0.0
        %3736 = vmatprep.subr.mxu0 0.0
        %3737 = vmatpush1.msra.mxu0 0.0
        %3738 = vmatprep.mubr.f32.mxu0 0.0
        %3739 = vmatmul.mubr.f32.gmra.mrb[0].mxu0 %v793
        %v3740 = vpop.f32.mrb[0].mxu0
        %v3741 = vadd.f32 0.0, %v3740
        %v3742 = vpop.f32.mrb[0].mxu0
        %3743 = vmatprep.mubr.f32.mxu0 0.0
        %3744 = vmatmul.mubr.f32.gmra.mrb[0].mxu0 %v796
        %v3745 = vpop.f32.mrb[0].mxu0
        %v3746 = vadd.f32 0.0, %v3745
        %v3747 = vpop.f32.mrb[0].mxu0
        %3748 = vmatprep.mubr.f32.mxu0 0.0
        %3749 = vmatmul.mubr.f32.gmra.mrb[0].mxu0 %v799
        %v3750 = vpop.f32.mrb[0].mxu0
        %v3751 = vadd.f32 0.0, %v3750
        %v3752 = vpop.f32.mrb[0].mxu0
        %3753 = vmatprep.mubr.f32.mxu0 0.0
        %3754 = vmatmul.mubr.f32.gmra.mrb[0].mxu0 %v802
        %v3755 = vpop.f32.mrb[0].mxu0
        %v3756 = vadd.f32 0.0, %v3755
        %v3757 = vpop.f32.mrb[0].mxu0
        %3758 = vmatprep.mubr.f32.mxu0 0.0
        %3759 = vmatmul.mubr.f32.gmra.mrb[0].mxu0 %v805
        %v3760 = vpop.f32.mrb[0].mxu0
        %v3761 = vadd.f32 0.0, %v3760
        %v3762 = vpop.f32.mrb[0].mxu0
        %3763 = vmatprep.mubr.f32.mxu0 0.0
        %3764 = vmatmul.mubr.f32.gmra.mrb[0].mxu0 %v808
        %v3765 = vpop.f32.mrb[0].mxu0
        %v3766 = vadd.f32 0.0, %v3765
        %v3767 = vpop.f32.mrb[0].mxu0
        %3768 = vmatprep.mubr.f32.mxu0 0.0
        %3769 = vmatmul.mubr.f32.gmra.mrb[0].mxu0 %v811
        %v3770 = vpop.f32.mrb[0].mxu0
        %v3771 = vadd.f32 0.0, %v3770
        %v3772 = vpop.f32.mrb[0].mxu0
        %3773 = vmatprep.mubr.f32.mxu0 0.0
        %3774 = vmatmul.mubr.f32.gmra.mrb[0].mxu0 %v814
        %v3775 = vpop.f32.mrb[0].mxu0
        %v3776 = vadd.f32 0.0, %v3775
        %v3777 = vpop.f32.mrb[0].mxu0
        %3778 = vmatprep.mubr.f32.mxu0 0.0
        %3779 = vmatmul.mubr.f32.gmra.mrb[0].mxu0 %v817
        %v3780 = vpop.f32.mrb[0].mxu0
        %v3781 = vadd.f32 0.0, %v3780
        %v3782 = vpop.f32.mrb[0].mxu0
        %3783 = vmatprep.mubr.f32.mxu0 0.0
        %3784 = vmatmul.mubr.f32.gmra.mrb[0].mxu0 %v820
        %v3785 = vpop.f32.mrb[0].mxu0
        %v3786 = vadd.f32 0.0, %v3785
        %v3787 = vpop.f32.mrb[0].mxu0
        %3788 = vmatprep.mubr.f32.mxu0 0.0
        %3789 = vmatmul.mubr.f32.gmra.mrb[0].mxu0 %v823
        %v3790 = vpop.f32.mrb[0].mxu0
        %v3791 = vadd.f32 0.0, %v3790
        %v3792 = vpop.f32.mrb[0].mxu0
        %3793 = vmatprep.mubr.f32.mxu0 0.0
        %3794 = vmatmul.mubr.f32.gmra.mrb[0].mxu0 %v826
        %v3795 = vpop.f32.mrb[0].mxu0
        %v3796 = vadd.f32 0.0, %v3795
        %v3797 = vpop.f32.mrb[0].mxu0
        %3798 = vmatprep.mubr.f32.mxu0 0.0
        %3799 = vmatmul.mubr.f32.gmra.mrb[0].mxu0 %v829
        %v3800 = vpop.f32.mrb[0].mxu0
        %v3801 = vadd.f32 0.0, %v3800
        %v3802 = vpop.f32.mrb[0].mxu0
        %3803 = vmatprep.mubr.f32.mxu0 0.0
        %3804 = vmatmul.mubr.f32.gmra.mrb[0].mxu0 %v832
        %v3805 = vpop.f32.mrb[0].mxu0
        %v3806 = vadd.f32 0.0, %v3805
        %v3807 = vpop.f32.mrb[0].mxu0
        %3808 = vmatprep.mubr.f32.mxu0 0.0
        %3809 = vmatmul.mubr.f32.gmra.mrb[0].mxu0 %v835
        %v3810 = vpop.f32.mrb[0].mxu0
        %v3811 = vadd.f32 0.0, %v3810
        %v3812 = vpop.f32.mrb[0].mxu0
        %3813 = vmatprep.mubr.f32.mxu0 0.0
        %3814 = vmatmul.mubr.f32.gmra.mrb[0].mxu0 %v838
        %v3815 = vpop.f32.mrb[0].mxu0
        %v3816 = vadd.f32 0.0, %v3815
        %v3817 = vpop.f32.mrb[0].mxu0
        %3818 = vdwg.mxu0
        %3819 = vmax.xlane.f32.xlu0 %v3741
        %v3820 = vpop.xlane.xlu0 %3819
        %3821 = vmax.xlane.f32.xlu0 %v3746
        %v3822 = vpop.xlane.xlu0 %3821
        %3823 = vmax.xlane.f32.xlu0 %v3751
        %v3824 = vpop.xlane.xlu0 %3823
        %3825 = vmax.xlane.f32.xlu0 %v3756
        %v3826 = vpop.xlane.xlu0 %3825
        %3827 = vmax.xlane.f32.xlu0 %v3761
        %v3828 = vpop.xlane.xlu0 %3827
        %3829 = vmax.xlane.f32.xlu0 %v3766
        %v3830 = vpop.xlane.xlu0 %3829
        %3831 = vmax.xlane.f32.xlu0 %v3771
        %v3832 = vpop.xlane.xlu0 %3831
        %3833 = vmax.xlane.f32.xlu0 %v3776
        %v3834 = vpop.xlane.xlu0 %3833
        %3835 = vmax.xlane.f32.xlu0 %v3781
        %v3836 = vpop.xlane.xlu0 %3835
        %3837 = vmax.xlane.f32.xlu0 %v3786
        %v3838 = vpop.xlane.xlu0 %3837
        %3839 = vmax.xlane.f32.xlu0 %v3791
        %v3840 = vpop.xlane.xlu0 %3839
        %3841 = vmax.xlane.f32.xlu0 %v3796
        %v3842 = vpop.xlane.xlu0 %3841
        %3843 = vmax.xlane.f32.xlu0 %v3801
        %v3844 = vpop.xlane.xlu0 %3843
        %3845 = vmax.xlane.f32.xlu0 %v3806
        %v3846 = vpop.xlane.xlu0 %3845
        %3847 = vmax.xlane.f32.xlu0 %v3811
        %v3848 = vpop.xlane.xlu0 %3847
        %3849 = vmax.xlane.f32.xlu0 %v3816
        %v3850 = vpop.xlane.xlu0 %3849
        %v3851 = vsub.f32 %v3741, %v3820
        %v3852 = vsub.f32 %v3746, %v3822
        %v3853 = vsub.f32 %v3751, %v3824
        %v3854 = vsub.f32 %v3756, %v3826
        %v3855 = vsub.f32 %v3761, %v3828
        %v3856 = vsub.f32 %v3766, %v3830
        %v3857 = vsub.f32 %v3771, %v3832
        %v3858 = vsub.f32 %v3776, %v3834
        %v3859 = vsub.f32 %v3781, %v3836
        %v3860 = vsub.f32 %v3786, %v3838
        %v3861 = vsub.f32 %v3791, %v3840
        %v3862 = vsub.f32 %v3796, %v3842
        %v3863 = vsub.f32 %v3801, %v3844
        %v3864 = vsub.f32 %v3806, %v3846
        %v3865 = vsub.f32 %v3811, %v3848
        %v3866 = vsub.f32 %v3816, %v3850
        %v3867 = vmul.f32 %v3851, 1.442695
        %v3868 = vpow.pop %v3867
        %v3869 = vmul.f32 %v3852, 1.442695
        %v3870 = vpow.pop %v3869
        %v3871 = vmul.f32 %v3853, 1.442695
        %v3872 = vpow.pop %v3871
        %v3873 = vmul.f32 %v3854, 1.442695
        %v3874 = vpow.pop %v3873
        %v3875 = vmul.f32 %v3855, 1.442695
        %v3876 = vpow.pop %v3875
        %v3877 = vmul.f32 %v3856, 1.442695
        %v3878 = vpow.pop %v3877
        %v3879 = vmul.f32 %v3857, 1.442695
        %v3880 = vpow.pop %v3879
        %v3881 = vmul.f32 %v3858, 1.442695
        %v3882 = vpow.pop %v3881
        %v3883 = vmul.f32 %v3859, 1.442695
        %v3884 = vpow.pop %v3883
        %v3885 = vmul.f32 %v3860, 1.442695
        %v3886 = vpow.pop %v3885
        %v3887 = vmul.f32 %v3861, 1.442695
        %v3888 = vpow.pop %v3887
        %v3889 = vmul.f32 %v3862, 1.442695
        %v3890 = vpow.pop %v3889
        %v3891 = vmul.f32 %v3863, 1.442695
        %v3892 = vpow.pop %v3891
        %v3893 = vmul.f32 %v3864, 1.442695
        %v3894 = vpow.pop %v3893
        %v3895 = vmul.f32 %v3865, 1.442695
        %v3896 = vpow.pop %v3895
        %v3897 = vmul.f32 %v3866, 1.442695
        %v3898 = vpow.pop %v3897
        %3899 = vadd.xlane.f32.xlu0 %v3868
        %v3900 = vpop.xlane.xlu0 %3899
        %3901 = vadd.xlane.f32.xlu0 %v3870
        %v3902 = vpop.xlane.xlu0 %3901
        %3903 = vadd.xlane.f32.xlu0 %v3872
        %v3904 = vpop.xlane.xlu0 %3903
        %3905 = vadd.xlane.f32.xlu0 %v3874
        %v3906 = vpop.xlane.xlu0 %3905
        %3907 = vadd.xlane.f32.xlu0 %v3876
        %v3908 = vpop.xlane.xlu0 %3907
        %3909 = vadd.xlane.f32.xlu0 %v3878
        %v3910 = vpop.xlane.xlu0 %3909
        %3911 = vadd.xlane.f32.xlu0 %v3880
        %v3912 = vpop.xlane.xlu0 %3911
        %3913 = vadd.xlane.f32.xlu0 %v3882
        %v3914 = vpop.xlane.xlu0 %3913
        %3915 = vadd.xlane.f32.xlu0 %v3884
        %v3916 = vpop.xlane.xlu0 %3915
        %3917 = vadd.xlane.f32.xlu0 %v3886
        %v3918 = vpop.xlane.xlu0 %3917
        %3919 = vadd.xlane.f32.xlu0 %v3888
        %v3920 = vpop.xlane.xlu0 %3919
        %3921 = vadd.xlane.f32.xlu0 %v3890
        %v3922 = vpop.xlane.xlu0 %3921
        %3923 = vadd.xlane.f32.xlu0 %v3892
        %v3924 = vpop.xlane.xlu0 %3923
        %3925 = vadd.xlane.f32.xlu0 %v3894
        %v3926 = vpop.xlane.xlu0 %3925
        %3927 = vadd.xlane.f32.xlu0 %v3896
        %v3928 = vpop.xlane.xlu0 %3927
        %3929 = vadd.xlane.f32.xlu0 %v3898
        %v3930 = vpop.xlane.xlu0 %3929
        %v3931 = vrcp.pop %v3900
        %v3932 = vrcp.pop %v3902
        %v3933 = vrcp.pop %v3904
        %v3934 = vrcp.pop %v3906
        %v3935 = vrcp.pop %v3908
        %v3936 = vrcp.pop %v3910
        %v3937 = vrcp.pop %v3912
        %v3938 = vrcp.pop %v3914
        %v3939 = vrcp.pop %v3916
        %v3940 = vrcp.pop %v3918
        %v3941 = vrcp.pop %v3920
        %v3942 = vrcp.pop %v3922
        %v3943 = vrcp.pop %v3924
        %v3944 = vrcp.pop %v3926
        %v3945 = vrcp.pop %v3928
        %v3946 = vrcp.pop %v3930
        %v3947 = vmul.f32 %v3868, %v3931
        %v3948 = vmul.f32 %v3870, %v3932
        %v3949 = vmul.f32 %v3872, %v3933
        %v3950 = vmul.f32 %v3874, %v3934
        %v3951 = vmul.f32 %v3876, %v3935
        %v3952 = vmul.f32 %v3878, %v3936
        %v3953 = vmul.f32 %v3880, %v3937
        %v3954 = vmul.f32 %v3882, %v3938
        %v3955 = vmul.f32 %v3884, %v3939
        %v3956 = vmul.f32 %v3886, %v3940
        %v3957 = vmul.f32 %v3888, %v3941
        %v3958 = vmul.f32 %v3890, %v3942
        %v3959 = vmul.f32 %v3892, %v3943
        %v3960 = vmul.f32 %v3894, %v3944
        %v3961 = vmul.f32 %v3896, %v3945
        %v3962 = vmul.f32 %v3898, %v3946
        %v3963 = vsel %vm3666, %v718, 0.0
        %v3964 = vsel %vm3667, %v723, 0.0
        %v3965 = vsel %vm3668, %v728, 0.0
        %v3966 = vsel %vm3669, %v733, 0.0
        %3967 = vmatprep.subr.mxu0 0.0
        %3968 = vmatpush1.xpose.msra.mxu0 %v3947
        %3969 = vmatprep.subr.mxu0 0.0
        %3970 = vmatpush1.xpose.msra.mxu0 %v3948
        %3971 = vmatprep.subr.mxu0 0.0
        %3972 = vmatpush1.xpose.msra.mxu0 %v3949
        %3973 = vmatprep.subr.mxu0 0.0
        %3974 = vmatpush1.xpose.msra.mxu0 %v3950
        %3975 = vmatprep.subr.mxu0 0.0
        %3976 = vmatpush1.xpose.msra.mxu0 %v3951
        %3977 = vmatprep.subr.mxu0 0.0
        %3978 = vmatpush1.xpose.msra.mxu0 %v3952
        %3979 = vmatprep.subr.mxu0 0.0
        %3980 = vmatpush1.xpose.msra.mxu0 %v3953
        %3981 = vmatprep.subr.mxu0 0.0
        %3982 = vmatpush1.xpose.msra.mxu0 %v3954
        %3983 = vmatprep.subr.mxu0 0.0
        %3984 = vmatpush1.xpose.msra.mxu0 %v3955
        %3985 = vmatprep.subr.mxu0 0.0
        %3986 = vmatpush1.xpose.msra.mxu0 %v3956
        %3987 = vmatprep.subr.mxu0 0.0
        %3988 = vmatpush1.xpose.msra.mxu0 %v3957
        %3989 = vmatprep.subr.mxu0 0.0
        %3990 = vmatpush1.xpose.msra.mxu0 %v3958
        %3991 = vmatprep.subr.mxu0 0.0
        %3992 = vmatpush1.xpose.msra.mxu0 %v3959
        %3993 = vmatprep.subr.mxu0 0.0
        %3994 = vmatpush1.xpose.msra.mxu0 %v3960
        %3995 = vmatprep.subr.mxu0 0.0
        %3996 = vmatpush1.xpose.msra.mxu0 %v3961
        %3997 = vmatprep.subr.mxu0 0.0
        %3998 = vmatpush1.xpose.msra.mxu0 %v3962
        %3999 = vmatprep.subr.mxu0 0.0
        %4000 = vmatpush1.xpose.msra.mxu0 0.0
        %4001 = vmatprep.subr.mxu0 0.0
        %4002 = vmatpush1.xpose.msra.mxu0 0.0
        %4003 = vmatprep.subr.mxu0 0.0
        %4004 = vmatpush1.xpose.msra.mxu0 0.0
        %4005 = vmatprep.subr.mxu0 0.0
        %4006 = vmatpush1.xpose.msra.mxu0 0.0
        %4007 = vmatprep.subr.mxu0 0.0
        %4008 = vmatpush1.xpose.msra.mxu0 0.0
        %4009 = vmatprep.subr.mxu0 0.0
        %4010 = vmatpush1.xpose.msra.mxu0 0.0
        %4011 = vmatprep.subr.mxu0 0.0
        %4012 = vmatpush1.xpose.msra.mxu0 0.0
        %4013 = vmatprep.subr.mxu0 0.0
        %4014 = vmatpush1.xpose.msra.mxu0 0.0
        %4015 = vmatprep.subr.mxu0 0.0
        %4016 = vmatpush1.xpose.msra.mxu0 0.0
        %4017 = vmatprep.subr.mxu0 0.0
        %4018 = vmatpush1.xpose.msra.mxu0 0.0
        %4019 = vmatprep.subr.mxu0 0.0
        %4020 = vmatpush1.xpose.msra.mxu0 0.0
        %4021 = vmatprep.subr.mxu0 0.0
        %4022 = vmatpush1.xpose.msra.mxu0 0.0
        %4023 = vmatprep.subr.mxu0 0.0
        %4024 = vmatpush1.xpose.msra.mxu0 0.0
        %4025 = vmatprep.subr.mxu0 0.0
        %4026 = vmatpush1.xpose.msra.mxu0 0.0
        %4027 = vmatprep.subr.mxu0 0.0
        %4028 = vmatpush1.xpose.msra.mxu0 0.0
        %4029 = vmatprep.subr.mxu0 0.0
        %4030 = vmatpush1.xpose.msra.mxu0 0.0
        %4031 = vmatprep.mubr.f32.mxu0 0.0
        %4032 = vmatmul.mubr.f32.gmra.mrb[0].mxu0 %v3963
        %v4033 = vpop.f32.mrb[0].mxu0
        %v4034 = vadd.f32 0.0, %v4033
        %v4035 = vpop.f32.mrb[0].mxu0
        %4036 = vmatprep.mubr.f32.mxu0 0.0
        %4037 = vmatmul.mubr.f32.gmra.mrb[0].mxu0 %v3964
        %v4038 = vpop.f32.mrb[0].mxu0
        %v4039 = vadd.f32 0.0, %v4038
        %v4040 = vpop.f32.mrb[0].mxu0
        %4041 = vmatprep.mubr.f32.mxu0 0.0
        %4042 = vmatmul.mubr.f32.gmra.mrb[0].mxu0 %v3965
        %v4043 = vpop.f32.mrb[0].mxu0
        %v4044 = vadd.f32 0.0, %v4043
        %v4045 = vpop.f32.mrb[0].mxu0
        %4046 = vmatprep.mubr.f32.mxu0 0.0
        %4047 = vmatmul.mubr.f32.gmra.mrb[0].mxu0 %v3966
        %v4048 = vpop.f32.mrb[0].mxu0
        %v4049 = vadd.f32 0.0, %v4048
        %v4050 = vpop.f32.mrb[0].mxu0
        %4051 = vdwg.mxu0
        %v4052 = vadd.f32 %v3646, %v4034
        %v4053 = vadd.f32 %v3647, %v4039
        %v4054 = vadd.f32 %v3648, %v4044
        %v4055 = vadd.f32 %v3649, %v4049
        %4056 = vset.pattern.permute.xlu0 8
        %4057 = vperm.xlu0 %4056, %v365
        %v4058 = vpop.permute.xlu0 %4057
        %4060 = vset.pattern.permute.xlu0 8
        %4061 = vperm.xlu0 %4060, %v366
        %v4062 = vpop.permute.xlu0 %4061
        %4064 = vset.pattern.permute.xlu0 8
        %4065 = vperm.xlu0 %4064, %v367
        %v4066 = vpop.permute.xlu0 %4065
        %4068 = vset.pattern.permute.xlu0 8
        %4069 = vperm.xlu0 %4068, %v368
        %v4070 = vpop.permute.xlu0 %4069
        %v4073 = vsel %vm574, %v397, 0
        %v4076 = vsel %vm574, %v398, 0
        %v4079 = vsel %vm574, %v399, 0
        %v4082 = vsel %vm574, %v400, 0
        %4084 = vmatprep.subr.mxu0 0.0
        %4085 = vmatpush1.msra.mxu0 %v4052
        %4086 = vmatprep.subr.mxu0 0.0
        %4087 = vmatpush1.msra.mxu0 %v4053
        %4088 = vmatprep.subr.mxu0 0.0
        %4089 = vmatpush1.msra.mxu0 %v4054
        %4090 = vmatprep.subr.mxu0 0.0
        %4091 = vmatpush1.msra.mxu0 %v4055
        %4092 = vmatprep.subr.mxu0 0.0
        %4093 = vmatpush1.msra.mxu0 0.0
        %4094 = vmatprep.subr.mxu0 0.0
        %4095 = vmatpush1.msra.mxu0 0.0
        %4096 = vmatprep.subr.mxu0 0.0
        %4097 = vmatpush1.msra.mxu0 0.0
        %4098 = vmatprep.subr.mxu0 0.0
        %4099 = vmatpush1.msra.mxu0 0.0
        %4100 = vmatprep.subr.mxu0 0.0
        %4101 = vmatpush1.msra.mxu0 0.0
        %4102 = vmatprep.subr.mxu0 0.0
        %4103 = vmatpush1.msra.mxu0 0.0
        %4104 = vmatprep.subr.mxu0 0.0
        %4105 = vmatpush1.msra.mxu0 0.0
        %4106 = vmatprep.subr.mxu0 0.0
        %4107 = vmatpush1.msra.mxu0 0.0
        %4108 = vmatprep.subr.mxu0 0.0
        %4109 = vmatpush1.msra.mxu0 0.0
        %4110 = vmatprep.subr.mxu0 0.0
        %4111 = vmatpush1.msra.mxu0 0.0
        %4112 = vmatprep.subr.mxu0 0.0
        %4113 = vmatpush1.msra.mxu0 0.0
        %4114 = vmatprep.subr.mxu0 0.0
        %4115 = vmatpush1.msra.mxu0 0.0
        %4116 = vmatprep.subr.mxu0 0.0
        %4117 = vmatpush1.msra.mxu0 0.0
        %4118 = vmatprep.subr.mxu0 0.0
        %4119 = vmatpush1.msra.mxu0 0.0
        %4120 = vmatprep.subr.mxu0 0.0
        %4121 = vmatpush1.msra.mxu0 0.0
        %4122 = vmatprep.subr.mxu0 0.0
        %4123 = vmatpush1.msra.mxu0 0.0
        %4124 = vmatprep.subr.mxu0 0.0
        %4125 = vmatpush1.msra.mxu0 0.0
        %4126 = vmatprep.subr.mxu0 0.0
        %4127 = vmatpush1.msra.mxu0 0.0
        %4128 = vmatprep.subr.mxu0 0.0
        %4129 = vmatpush1.msra.mxu0 0.0
        %4130 = vmatprep.subr.mxu0 0.0
        %4131 = vmatpush1.msra.mxu0 0.0
        %4132 = vmatprep.subr.mxu0 0.0
        %4133 = vmatpush1.msra.mxu0 0.0
        %4134 = vmatprep.subr.mxu0 0.0
        %4135 = vmatpush1.msra.mxu0 0.0
        %4136 = vmatprep.subr.mxu0 0.0
        %4137 = vmatpush1.msra.mxu0 0.0
        %4138 = vmatprep.subr.mxu0 0.0
        %4139 = vmatpush1.msra.mxu0 0.0
        %4140 = vmatprep.subr.mxu0 0.0
        %4141 = vmatpush1.msra.mxu0 0.0
        %4142 = vmatprep.subr.mxu0 0.0
        %4143 = vmatpush1.msra.mxu0 0.0
        %4144 = vmatprep.subr.mxu0 0.0
        %4145 = vmatpush1.msra.mxu0 0.0
        %4146 = vmatprep.subr.mxu0 0.0
        %4147 = vmatpush1.msra.mxu0 0.0
        %4148 = vmatprep.mubr.f32.mxu0 0.0
        %4149 = vmatmul.mubr.f32.gmra.mrb[0].mxu0 %v4073
        %v4150 = vpop.f32.mrb[0].mxu0
        %v4151 = vadd.f32 %v4058, %v4150
        %v4152 = vpop.f32.mrb[0].mxu0
        %4153 = vmatprep.mubr.f32.mxu0 0.0
        %4154 = vmatmul.mubr.f32.gmra.mrb[0].mxu0 %v4076
        %v4155 = vpop.f32.mrb[0].mxu0
        %v4156 = vadd.f32 %v4062, %v4155
        %v4157 = vpop.f32.mrb[0].mxu0
        %4158 = vmatprep.mubr.f32.mxu0 0.0
        %4159 = vmatmul.mubr.f32.gmra.mrb[0].mxu0 %v4079
        %v4160 = vpop.f32.mrb[0].mxu0
        %v4161 = vadd.f32 %v4066, %v4160
        %v4162 = vpop.f32.mrb[0].mxu0
        %4163 = vmatprep.mubr.f32.mxu0 0.0
        %4164 = vmatmul.mubr.f32.gmra.mrb[0].mxu0 %v4082
        %v4165 = vpop.f32.mrb[0].mxu0
        %v4166 = vadd.f32 %v4070, %v4165
        %v4167 = vpop.f32.mrb[0].mxu0
        %4168 = vdwg.mxu0
        %v4169 = vadd.f32 %v4151, %v4156
        %v4170 = vadd.f32 %v4169, %v4161
        %v4171 = vadd.f32 %v4170, %v4166
        %v4172 = vrot.slane %v4171, 4
        %v4173 = vadd.f32 %v4171, %v4172
        %v4174 = vrot.slane %v4173, 2
        %v4175 = vadd.f32 %v4173, %v4174
        %v4176 = vrot.slane %v4175, 1
        %v4177 = vadd.f32 %v4175, %v4176
        %v4178 = vmul.f32 %v4177, %v440
        %v4179 = vsub.f32 %v4151, %v4178
        %v4180 = vsub.f32 %v4156, %v4178
        %v4181 = vsub.f32 %v4161, %v4178
        %v4182 = vsub.f32 %v4166, %v4178
        %v4183 = vmul.f32 %v4179, %v4179
        %v4184 = vmul.f32 %v4180, %v4180
        %v4185 = vmul.f32 %v4181, %v4181
        %v4186 = vmul.f32 %v4182, %v4182
        %v4187 = vadd.f32 %v4183, %v4184
        %v4188 = vadd.f32 %v4187, %v4185
        %v4189 = vadd.f32 %v4188, %v4186
        %v4190 = vrot.slane %v4189, 4
        %v4191 = vadd.f32 %v4189, %v4190
        %v4192 = vrot.slane %v4191, 2
        %v4193 = vadd.f32 %v4191, %v4192
        %v4194 = vrot.slane %v4193, 1
        %v4195 = vadd.f32 %v4193, %v4194
        %v4196 = vmul.f32 %v4195, %v440
        %v4197 = vadd.f32 %v4196, 1e-05
        %v4198 = vrsqrt.pop %v4197
        %v4199 = vmul.f32 %v4179, %v4198
        %v4200 = vmul.f32 %v4180, %v4198
        %v4201 = vmul.f32 %v4181, %v4198
        %v4202 = vmul.f32 %v4182, %v4198
        %4203 = vset.pattern.permute.xlu0 2
        %4204 = vperm.xlu0 %4203, %v365
        %v4205 = vpop.permute.xlu0 %4204
        %4207 = vset.pattern.permute.xlu0 2
        %4208 = vperm.xlu0 %4207, %v366
        %v4209 = vpop.permute.xlu0 %4208
        %4211 = vset.pattern.permute.xlu0 2
        %4212 = vperm.xlu0 %4211, %v367
        %v4213 = vpop.permute.xlu0 %4212
        %4215 = vset.pattern.permute.xlu0 2
        %4216 = vperm.xlu0 %4215, %v368
        %v4217 = vpop.permute.xlu0 %4216
        %v4219 = vmul.f32 %v4199, %v4205
        %v4220 = vmul.f32 %v4200, %v4209
        %v4221 = vmul.f32 %v4201, %v4213
        %v4222 = vmul.f32 %v4202, %v4217
        %4223 = vset.pattern.permute.xlu0 3
        %4224 = vperm.xlu0 %4223, %v365
        %v4225 = vpop.permute.xlu0 %4224
        %4227 = vset.pattern.permute.xlu0 3
        %4228 = vperm.xlu0 %4227, %v366
        %v4229 = vpop.permute.xlu0 %4228
        %4231 = vset.pattern.permute.xlu0 3
        %4232 = vperm.xlu0 %4231, %v367
        %v4233 = vpop.permute.xlu0 %4232
        %4235 = vset.pattern.permute.xlu0 3
        %4236 = vperm.xlu0 %4235, %v368
        %v4237 = vpop.permute.xlu0 %4236
        %v4239 = vadd.f32 %v4219, %v4225
        %v4240 = vadd.f32 %v4220, %v4229
        %v4241 = vadd.f32 %v4221, %v4233
        %v4242 = vadd.f32 %v4222, %v4237
        %v4243 = vadd.f32 %v4239, %v427
        %v4244 = vadd.f32 %v4240, %v428
        %v4245 = vadd.f32 %v4241, %v429
        %v4246 = vadd.f32 %v4242, %v430
        %v4247 = vadd.f32 %v4243, %v4244
        %v4248 = vadd.f32 %v4247, %v4245
        %v4249 = vadd.f32 %v4248, %v4246
        %4250 = vadd.xlane.f32.xlu0 %v4249
        %v4251 = vpop.xlane.xlu0 %4250
        %v4252 = vrot.slane %v4251, 4
        %v4253 = vadd.f32 %v4251, %v4252
        %v4254 = vrot.slane %v4253, 2
        %v4255 = vadd.f32 %v4253, %v4254
        %v4256 = vrot.slane %v4255, 1
        %v4257 = vadd.f32 %v4255, %v4256
        %s4258 = vtos %v4257
        %v4259 = vstv %s4258
        %v4260 = vrcp.pop 4096.0
        %v4261 = vmul.f32 %v4259, %v4260
        %v4262 = vsub.f32 %v4243, %v4261
        %v4263 = vsub.f32 %v4244, %v4261
        %v4264 = vsub.f32 %v4245, %v4261
        %v4265 = vsub.f32 %v4246, %v4261
        %v4266 = vmul.f32 %v4262, %v4262
        %v4267 = vmul.f32 %v4263, %v4263
        %v4268 = vmul.f32 %v4264, %v4264
        %v4269 = vmul.f32 %v4265, %v4265
        %v4270 = vadd.f32 %v4266, %v4267
        %v4271 = vadd.f32 %v4270, %v4268
        %v4272 = vadd.f32 %v4271, %v4269
        %4273 = vadd.xlane.f32.xlu0 %v4272
        %v4274 = vpop.xlane.xlu0 %4273
        %v4275 = vrot.slane %v4274, 4
        %v4276 = vadd.f32 %v4274, %v4275
        %v4277 = vrot.slane %v4276, 2
        %v4278 = vadd.f32 %v4276, %v4277
        %v4279 = vrot.slane %v4278, 1
        %v4280 = vadd.f32 %v4278, %v4279
        %s4281 = vtos %v4280
        %v4282 = vstv %s4281
        %v4283 = vmul.f32 %v4282, %v4260
        %v4284 = vadd.f32 %v4283, 1e-05
        %v4285 = vrsqrt.pop %v4284
        %v4286 = vmul.f32 %v4262, %v4285
        %v4287 = vmul.f32 %v4263, %v4285
        %v4288 = vmul.f32 %v4264, %v4285
        %v4289 = vmul.f32 %v4265, %v4285
        %4290 = vset.pattern.permute.xlu0 4
        %4291 = vperm.xlu0 %4290, %v365
        %v4292 = vpop.permute.xlu0 %4291
        %4294 = vset.pattern.permute.xlu0 4
        %4295 = vperm.xlu0 %4294, %v366
        %v4296 = vpop.permute.xlu0 %4295
        %4298 = vset.pattern.permute.xlu0 4
        %4299 = vperm.xlu0 %4298, %v367
        %v4300 = vpop.permute.xlu0 %4299
        %4302 = vset.pattern.permute.xlu0 4
        %4303 = vperm.xlu0 %4302, %v368
        %v4304 = vpop.permute.xlu0 %4303
        %v4306 = vmul.f32 %v4286, %v4292
        %v4307 = vmul.f32 %v4287, %v4296
        %v4308 = vmul.f32 %v4288, %v4300
        %v4309 = vmul.f32 %v4289, %v4304
        %4310 = vset.pattern.permute.xlu0 5
        %4311 = vperm.xlu0 %4310, %v365
        %v4312 = vpop.permute.xlu0 %4311
        %4314 = vset.pattern.permute.xlu0 5
        %4315 = vperm.xlu0 %4314, %v366
        %v4316 = vpop.permute.xlu0 %4315
        %4318 = vset.pattern.permute.xlu0 5
        %4319 = vperm.xlu0 %4318, %v367
        %v4320 = vpop.permute.xlu0 %4319
        %4322 = vset.pattern.permute.xlu0 5
        %4323 = vperm.xlu0 %4322, %v368
        %v4324 = vpop.permute.xlu0 %4323
        %v4326 = vadd.f32 %v4306, %v4312
        %v4327 = vadd.f32 %v4307, %v4316
        %v4328 = vadd.f32 %v4308, %v4320
        %v4329 = vadd.f32 %v4309, %v4324
        %4331 = vset.pattern.permute.xlu0 0
        %4332 = vperm.xlu0 %4331, %v413
        %v4333 = vpop.permute.xlu0 %4332
        %4336 = vset.pattern.permute.xlu0 0
        %4337 = vperm.xlu0 %4336, %v414
        %v4338 = vpop.permute.xlu0 %4337
        %4341 = vset.pattern.permute.xlu0 0
        %4342 = vperm.xlu0 %4341, %v415
        %v4343 = vpop.permute.xlu0 %4342
        %4346 = vset.pattern.permute.xlu0 0
        %4347 = vperm.xlu0 %4346, %v416
        %v4348 = vpop.permute.xlu0 %4347
        %4351 = vset.pattern.permute.xlu0 0
        %4352 = vperm.xlu0 %4351, %v417
        %v4353 = vpop.permute.xlu0 %4352
        %4356 = vset.pattern.permute.xlu0 0
        %4357 = vperm.xlu0 %4356, %v418
        %v4358 = vpop.permute.xlu0 %4357
        %4361 = vset.pattern.permute.xlu0 0
        %4362 = vperm.xlu0 %4361, %v419
        %v4363 = vpop.permute.xlu0 %4362
        %4366 = vset.pattern.permute.xlu0 0
        %4367 = vperm.xlu0 %4366, %v420
        %v4368 = vpop.permute.xlu0 %4367
        %v4371 = vsel %vm574, %v401, 0
        %v4374 = vsel %vm574, %v402, 0
        %v4377 = vsel %vm574, %v403, 0
        %v4380 = vsel %vm574, %v404, 0
        %v4383 = vsel %vm574, %v405, 0
        %v4386 = vsel %vm574, %v406, 0
        %v4389 = vsel %vm574, %v407, 0
        %v4392 = vsel %vm574, %v408, 0
        %4394 = vmatprep.subr.mxu0 0.0
        %4395 = vmatpush1.msra.mxu0 %v4326
        %4396 = vmatprep.subr.mxu0 0.0
        %4397 = vmatpush1.msra.mxu0 %v4327
        %4398 = vmatprep.subr.mxu0 0.0
        %4399 = vmatpush1.msra.mxu0 %v4328
        %4400 = vmatprep.subr.mxu0 0.0
        %4401 = vmatpush1.msra.mxu0 %v4329
        %4402 = vmatprep.subr.mxu0 0.0
        %4403 = vmatpush1.msra.mxu0 0.0
        %4404 = vmatprep.subr.mxu0 0.0
        %4405 = vmatpush1.msra.mxu0 0.0
        %4406 = vmatprep.subr.mxu0 0.0
        %4407 = vmatpush1.msra.mxu0 0.0
        %4408 = vmatprep.subr.mxu0 0.0
        %4409 = vmatpush1.msra.mxu0 0.0
        %4410 = vmatprep.subr.mxu0 0.0
        %4411 = vmatpush1.msra.mxu0 0.0
        %4412 = vmatprep.subr.mxu0 0.0
        %4413 = vmatpush1.msra.mxu0 0.0
        %4414 = vmatprep.subr.mxu0 0.0
        %4415 = vmatpush1.msra.mxu0 0.0
        %4416 = vmatprep.subr.mxu0 0.0
        %4417 = vmatpush1.msra.mxu0 0.0
        %4418 = vmatprep.subr.mxu0 0.0
        %4419 = vmatpush1.msra.mxu0 0.0
        %4420 = vmatprep.subr.mxu0 0.0
        %4421 = vmatpush1.msra.mxu0 0.0
        %4422 = vmatprep.subr.mxu0 0.0
        %4423 = vmatpush1.msra.mxu0 0.0
        %4424 = vmatprep.subr.mxu0 0.0
        %4425 = vmatpush1.msra.mxu0 0.0
        %4426 = vmatprep.subr.mxu0 0.0
        %4427 = vmatpush1.msra.mxu0 0.0
        %4428 = vmatprep.subr.mxu0 0.0
        %4429 = vmatpush1.msra.mxu0 0.0
        %4430 = vmatprep.subr.mxu0 0.0
        %4431 = vmatpush1.msra.mxu0 0.0
        %4432 = vmatprep.subr.mxu0 0.0
        %4433 = vmatpush1.msra.mxu0 0.0
        %4434 = vmatprep.subr.mxu0 0.0
        %4435 = vmatpush1.msra.mxu0 0.0
        %4436 = vmatprep.subr.mxu0 0.0
        %4437 = vmatpush1.msra.mxu0 0.0
        %4438 = vmatprep.subr.mxu0 0.0
        %4439 = vmatpush1.msra.mxu0 0.0
        %4440 = vmatprep.subr.mxu0 0.0
        %4441 = vmatpush1.msra.mxu0 0.0
        %4442 = vmatprep.subr.mxu0 0.0
        %4443 = vmatpush1.msra.mxu0 0.0
        %4444 = vmatprep.subr.mxu0 0.0
        %4445 = vmatpush1.msra.mxu0 0.0
        %4446 = vmatprep.subr.mxu0 0.0
        %4447 = vmatpush1.msra.mxu0 0.0
        %4448 = vmatprep.subr.mxu0 0.0
        %4449 = vmatpush1.msra.mxu0 0.0
        %4450 = vmatprep.subr.mxu0 0.0
        %4451 = vmatpush1.msra.mxu0 0.0
        %4452 = vmatprep.subr.mxu0 0.0
        %4453 = vmatpush1.msra.mxu0 0.0
        %4454 = vmatprep.subr.mxu0 0.0
        %4455 = vmatpush1.msra.mxu0 0.0
        %4456 = vmatprep.subr.mxu0 0.0
        %4457 = vmatpush1.msra.mxu0 0.0
        %4458 = vmatprep.mubr.f32.mxu0 0.0
        %4459 = vmatmul.mubr.f32.gmra.mrb[0].mxu0 %v4371
        %v4460 = vpop.f32.mrb[0].mxu0
        %v4461 = vadd.f32 %v4333, %v4460
        %v4462 = vpop.f32.mrb[0].mxu0
        %4463 = vmatprep.mubr.f32.mxu0 0.0
        %4464 = vmatmul.mubr.f32.gmra.mrb[0].mxu0 %v4374
        %v4465 = vpop.f32.mrb[0].mxu0
        %v4466 = vadd.f32 %v4338, %v4465
        %v4467 = vpop.f32.mrb[0].mxu0
        %4468 = vmatprep.mubr.f32.mxu0 0.0
        %4469 = vmatmul.mubr.f32.gmra.mrb[0].mxu0 %v4377
        %v4470 = vpop.f32.mrb[0].mxu0
        %v4471 = vadd.f32 %v4343, %v4470
        %v4472 = vpop.f32.mrb[0].mxu0
        %4473 = vmatprep.mubr.f32.mxu0 0.0
        %4474 = vmatmul.mubr.f32.gmra.mrb[0].mxu0 %v4380
        %v4475 = vpop.f32.mrb[0].mxu0
        %v4476 = vadd.f32 %v4348, %v4475
        %v4477 = vpop.f32.mrb[0].mxu0
        %4478 = vmatprep.mubr.f32.mxu0 0.0
        %4479 = vmatmul.mubr.f32.gmra.mrb[0].mxu0 %v4383
        %v4480 = vpop.f32.mrb[0].mxu0
        %v4481 = vadd.f32 %v4353, %v4480
        %v4482 = vpop.f32.mrb[0].mxu0
        %4483 = vmatprep.mubr.f32.mxu0 0.0
        %4484 = vmatmul.mubr.f32.gmra.mrb[0].mxu0 %v4386
        %v4485 = vpop.f32.mrb[0].mxu0
        %v4486 = vadd.f32 %v4358, %v4485
        %v4487 = vpop.f32.mrb[0].mxu0
        %4488 = vmatprep.mubr.f32.mxu0 0.0
        %4489 = vmatmul.mubr.f32.gmra.mrb[0].mxu0 %v4389
        %v4490 = vpop.f32.mrb[0].mxu0
        %v4491 = vadd.f32 %v4363, %v4490
        %v4492 = vpop.f32.mrb[0].mxu0
        %4493 = vmatprep.mubr.f32.mxu0 0.0
        %4494 = vmatmul.mubr.f32.gmra.mrb[0].mxu0 %v4392
        %v4495 = vpop.f32.mrb[0].mxu0
        %v4496 = vadd.f32 %v4368, %v4495
        %v4497 = vpop.f32.mrb[0].mxu0
        %4498 = vdwg.mxu0
        %vm4499 = vcmp.ge.f32.partialorder %v4461, 0.0
        %vm4500 = vcmp.ge.f32.partialorder %v4466, 0.0
        %vm4501 = vcmp.ge.f32.partialorder %v4471, 0.0
        %vm4502 = vcmp.ge.f32.partialorder %v4476, 0.0
        %vm4503 = vcmp.ge.f32.partialorder %v4481, 0.0
        %vm4504 = vcmp.ge.f32.partialorder %v4486, 0.0
        %vm4505 = vcmp.ge.f32.partialorder %v4491, 0.0
        %vm4506 = vcmp.ge.f32.partialorder %v4496, 0.0
        %v4507 = vstv %s421
        %v4508 = vmul.f32 %v4507, %v4461
        %v4509 = vmul.f32 %v4507, %v4466
        %v4510 = vmul.f32 %v4507, %v4471
        %v4511 = vmul.f32 %v4507, %v4476
        %v4512 = vmul.f32 %v4507, %v4481
        %v4513 = vmul.f32 %v4507, %v4486
        %v4514 = vmul.f32 %v4507, %v4491
        %v4515 = vmul.f32 %v4507, %v4496
        %v4516 = vsel %vm4499, %v4461, %v4508
        %v4517 = vsel %vm4500, %v4466, %v4509
        %v4518 = vsel %vm4501, %v4471, %v4510
        %v4519 = vsel %vm4502, %v4476, %v4511
        %v4520 = vsel %vm4503, %v4481, %v4512
        %v4521 = vsel %vm4504, %v4486, %v4513
        %v4522 = vsel %vm4505, %v4491, %v4514
        %v4523 = vsel %vm4506, %v4496, %v4515
        %4524 = vset.pattern.permute.xlu0 9
        %4525 = vperm.xlu0 %4524, %v365
        %v4526 = vpop.permute.xlu0 %4525
        %4528 = vset.pattern.permute.xlu0 9
        %4529 = vperm.xlu0 %4528, %v366
        %v4530 = vpop.permute.xlu0 %4529
        %4532 = vset.pattern.permute.xlu0 9
        %4533 = vperm.xlu0 %4532, %v367
        %v4534 = vpop.permute.xlu0 %4533
        %4536 = vset.pattern.permute.xlu0 9
        %4537 = vperm.xlu0 %4536, %v368
        %v4538 = vpop.permute.xlu0 %4537
        %vm4540 = vcmask 523264
        %v4542 = vsel %vm4540, %v409, 0
        %v4545 = vsel %vm4540, %v410, 0
        %v4548 = vsel %vm4540, %v411, 0
        %v4551 = vsel %vm4540, %v412, 0
        %4553 = vmatprep.subr.mxu0 0.0
        %4554 = vmatpush1.msra.mxu0 %v4516
        %4555 = vmatprep.subr.mxu0 0.0
        %4556 = vmatpush1.msra.mxu0 %v4517
        %4557 = vmatprep.subr.mxu0 0.0
        %4558 = vmatpush1.msra.mxu0 %v4518
        %4559 = vmatprep.subr.mxu0 0.0
        %4560 = vmatpush1.msra.mxu0 %v4519
        %4561 = vmatprep.subr.mxu0 0.0
        %4562 = vmatpush1.msra.mxu0 %v4520
        %4563 = vmatprep.subr.mxu0 0.0
        %4564 = vmatpush1.msra.mxu0 %v4521
        %4565 = vmatprep.subr.mxu0 0.0
        %4566 = vmatpush1.msra.mxu0 %v4522
        %4567 = vmatprep.subr.mxu0 0.0
        %4568 = vmatpush1.msra.mxu0 %v4523
        %4569 = vmatprep.subr.mxu0 0.0
        %4570 = vmatpush1.msra.mxu0 0.0
        %4571 = vmatprep.subr.mxu0 0.0
        %4572 = vmatpush1.msra.mxu0 0.0
        %4573 = vmatprep.subr.mxu0 0.0
        %4574 = vmatpush1.msra.mxu0 0.0
        %4575 = vmatprep.subr.mxu0 0.0
        %4576 = vmatpush1.msra.mxu0 0.0
        %4577 = vmatprep.subr.mxu0 0.0
        %4578 = vmatpush1.msra.mxu0 0.0
        %4579 = vmatprep.subr.mxu0 0.0
        %4580 = vmatpush1.msra.mxu0 0.0
        %4581 = vmatprep.subr.mxu0 0.0
        %4582 = vmatpush1.msra.mxu0 0.0
        %4583 = vmatprep.subr.mxu0 0.0
        %4584 = vmatpush1.msra.mxu0 0.0
        %4585 = vmatprep.subr.mxu0 0.0
        %4586 = vmatpush1.msra.mxu0 0.0
        %4587 = vmatprep.subr.mxu0 0.0
        %4588 = vmatpush1.msra.mxu0 0.0
        %4589 = vmatprep.subr.mxu0 0.0
        %4590 = vmatpush1.msra.mxu0 0.0
        %4591 = vmatprep.subr.mxu0 0.0
        %4592 = vmatpush1.msra.mxu0 0.0
        %4593 = vmatprep.subr.mxu0 0.0
        %4594 = vmatpush1.msra.mxu0 0.0
        %4595 = vmatprep.subr.mxu0 0.0
        %4596 = vmatpush1.msra.mxu0 0.0
        %4597 = vmatprep.subr.mxu0 0.0
        %4598 = vmatpush1.msra.mxu0 0.0
        %4599 = vmatprep.subr.mxu0 0.0
        %4600 = vmatpush1.msra.mxu0 0.0
        %4601 = vmatprep.subr.mxu0 0.0
        %4602 = vmatpush1.msra.mxu0 0.0
        %4603 = vmatprep.subr.mxu0 0.0
        %4604 = vmatpush1.msra.mxu0 0.0
        %4605 = vmatprep.subr.mxu0 0.0
        %4606 = vmatpush1.msra.mxu0 0.0
        %4607 = vmatprep.subr.mxu0 0.0
        %4608 = vmatpush1.msra.mxu0 0.0
        %4609 = vmatprep.subr.mxu0 0.0
        %4610 = vmatpush1.msra.mxu0 0.0
        %4611 = vmatprep.subr.mxu0 0.0
        %4612 = vmatpush1.msra.mxu0 0.0
        %4613 = vmatprep.subr.mxu0 0.0
        %4614 = vmatpush1.msra.mxu0 0.0
        %4615 = vmatprep.subr.mxu0 0.0
        %4616 = vmatpush1.msra.mxu0 0.0
        %4617 = vmatprep.mubr.f32.mxu0 0.0
        %4618 = vmatmul.mubr.f32.gmra.mrb[0].mxu0 %v4542
        %v4619 = vpop.f32.mrb[0].mxu0
        %v4620 = vadd.f32 %v4526, %v4619
        %v4621 = vpop.f32.mrb[0].mxu0
        %4622 = vmatprep.mubr.f32.mxu0 0.0
        %4623 = vmatmul.mubr.f32.gmra.mrb[0].mxu0 %v4545
        %v4624 = vpop.f32.mrb[0].mxu0
        %v4625 = vadd.f32 %v4530, %v4624
        %v4626 = vpop.f32.mrb[0].mxu0
        %4627 = vmatprep.mubr.f32.mxu0 0.0
        %4628 = vmatmul.mubr.f32.gmra.mrb[0].mxu0 %v4548
        %v4629 = vpop.f32.mrb[0].mxu0
        %v4630 = vadd.f32 %v4534, %v4629
        %v4631 = vpop.f32.mrb[0].mxu0
        %4632 = vmatprep.mubr.f32.mxu0 0.0
        %4633 = vmatmul.mubr.f32.gmra.mrb[0].mxu0 %v4551
        %v4634 = vpop.f32.mrb[0].mxu0
        %v4635 = vadd.f32 %v4538, %v4634
        %v4636 = vpop.f32.mrb[0].mxu0
        %4637 = vdwg.mxu0
        %v4638 = vadd.f32 %v4620, %v4625
        %v4639 = vadd.f32 %v4638, %v4630
        %v4640 = vadd.f32 %v4639, %v4635
        %4641 = vadd.xlane.f32.xlu0 %v4640
        %v4642 = vpop.xlane.xlu0 %4641
        %v4643 = vrot.slane %v4642, 4
        %v4644 = vadd.f32 %v4642, %v4643
        %v4645 = vrot.slane %v4644, 2
        %v4646 = vadd.f32 %v4644, %v4645
        %v4647 = vrot.slane %v4646, 1
        %v4648 = vadd.f32 %v4646, %v4647
        %s4649 = vtos %v4648
        %v4650 = vstv %s4649
        %v4651 = vmul.f32 %v4650, %v4260
        %v4652 = vsub.f32 %v4620, %v4651
        %v4653 = vsub.f32 %v4625, %v4651
        %v4654 = vsub.f32 %v4630, %v4651
        %v4655 = vsub.f32 %v4635, %v4651
        %v4656 = vmul.f32 %v4652, %v4652
        %v4657 = vmul.f32 %v4653, %v4653
        %v4658 = vmul.f32 %v4654, %v4654
        %v4659 = vmul.f32 %v4655, %v4655
        %v4660 = vadd.f32 %v4656, %v4657
        %v4661 = vadd.f32 %v4660, %v4658
        %v4662 = vadd.f32 %v4661, %v4659
        %4663 = vadd.xlane.f32.xlu0 %v4662
        %v4664 = vpop.xlane.xlu0 %4663
        %v4665 = vrot.slane %v4664, 4
        %v4666 = vadd.f32 %v4664, %v4665
        %v4667 = vrot.slane %v4666, 2
        %v4668 = vadd.f32 %v4666, %v4667
        %v4669 = vrot.slane %v4668, 1
        %v4670 = vadd.f32 %v4668, %v4669
        %s4671 = vtos %v4670
        %v4672 = vstv %s4671
        %v4673 = vmul.f32 %v4672, %v4260
        %v4674 = vadd.f32 %v4673, 1e-05
        %v4675 = vrsqrt.pop %v4674
        %v4676 = vmul.f32 %v4652, %v4675
        %v4677 = vmul.f32 %v4653, %v4675
        %v4678 = vmul.f32 %v4654, %v4675
        %v4679 = vmul.f32 %v4655, %v4675
        %4680 = vset.pattern.permute.xlu0 6
        %4681 = vperm.xlu0 %4680, %v365
        %v4682 = vpop.permute.xlu0 %4681
        %4684 = vset.pattern.permute.xlu0 6
        %4685 = vperm.xlu0 %4684, %v366
        %v4686 = vpop.permute.xlu0 %4685
        %4688 = vset.pattern.permute.xlu0 6
        %4689 = vperm.xlu0 %4688, %v367
        %v4690 = vpop.permute.xlu0 %4689
        %4692 = vset.pattern.permute.xlu0 6
        %4693 = vperm.xlu0 %4692, %v368
        %v4694 = vpop.permute.xlu0 %4693
        %v4696 = vmul.f32 %v4676, %v4682
        %v4697 = vmul.f32 %v4677, %v4686
        %v4698 = vmul.f32 %v4678, %v4690
        %v4699 = vmul.f32 %v4679, %v4694
        %4700 = vset.pattern.permute.xlu0 7
        %4701 = vperm.xlu0 %4700, %v365
        %v4702 = vpop.permute.xlu0 %4701
        %4704 = vset.pattern.permute.xlu0 7
        %4705 = vperm.xlu0 %4704, %v366
        %v4706 = vpop.permute.xlu0 %4705
        %4708 = vset.pattern.permute.xlu0 7
        %4709 = vperm.xlu0 %4708, %v367
        %v4710 = vpop.permute.xlu0 %4709
        %4712 = vset.pattern.permute.xlu0 7
        %4713 = vperm.xlu0 %4712, %v368
        %v4714 = vpop.permute.xlu0 %4713
        %v4716 = vadd.f32 %v4696, %v4702
        %v4717 = vadd.f32 %v4697, %v4706
        %v4718 = vadd.f32 %v4698, %v4710
        %v4719 = vadd.f32 %v4699, %v4714
        %v4720 = vadd.f32 %v4716, %v4243
        %v4721 = vadd.f32 %v4717, %v4244
        %v4722 = vadd.f32 %v4718, %v4245
        %v4723 = vadd.f32 %v4719, %v4246
        %v4724 = vadd.f32 %v4720, %v427
        %v4725 = vadd.f32 %v4721, %v428
        %v4726 = vadd.f32 %v4722, %v429
        %v4727 = vadd.f32 %v4723, %v430
        %4728 = vst [vmem:[%s356] sm:$0xff] %v4724
        %4729 = vst [vmem:[%s356 + $0x8] sm:$0xff] %v4725
        %4730 = vst [vmem:[%s356 + $0x10] sm:$0xff] %v4726
        %4731 = vst [vmem:[%s356 + $0x18] sm:$0xff] %v4727
        %s4732 = scalar_lea.vmem %s362, 32
        %v4733 = vld [vmem:[%s4732] sm:$0xff]
        %v4734 = vld [vmem:[%s4732 + $0x8] sm:$0xff]
        %v4735 = vld [vmem:[%s4732 + $0x10] sm:$0xff]
        %v4736 = vld [vmem:[%s4732 + $0x18] sm:$0xff]
        %v4737 = vadd.f32 %v4733, %v4734
        %v4738 = vadd.f32 %v4737, %v4735
        %v4739 = vadd.f32 %v4738, %v4736
        %v4740 = vrot.slane %v4739, 4
        %v4741 = vadd.f32 %v4739, %v4740
        %v4742 = vrot.slane %v4741, 2
        %v4743 = vadd.f32 %v4741, %v4742
        %v4744 = vrot.slane %v4743, 1
        %v4745 = vadd.f32 %v4743, %v4744
        %v4746 = vmul.f32 %v4745, %v440
        %v4747 = vsub.f32 %v4733, %v4746
        %v4748 = vsub.f32 %v4734, %v4746
        %v4749 = vsub.f32 %v4735, %v4746
        %v4750 = vsub.f32 %v4736, %v4746
        %v4751 = vmul.f32 %v4747, %v4747
        %v4752 = vmul.f32 %v4748, %v4748
        %v4753 = vmul.f32 %v4749, %v4749
        %v4754 = vmul.f32 %v4750, %v4750
        %v4755 = vadd.f32 %v4751, %v4752
        %v4756 = vadd.f32 %v4755, %v4753
        %v4757 = vadd.f32 %v4756, %v4754
        %v4758 = vrot.slane %v4757, 4
        %v4759 = vadd.f32 %v4757, %v4758
        %v4760 = vrot.slane %v4759, 2
        %v4761 = vadd.f32 %v4759, %v4760
        %v4762 = vrot.slane %v4761, 1
        %v4763 = vadd.f32 %v4761, %v4762
        %v4764 = vmul.f32 %v4763, %v440
        %v4765 = vadd.f32 %v4764, 1e-05
        %v4766 = vrsqrt.pop %v4765
        %v4767 = vmul.f32 %v4747, %v4766
        %v4768 = vmul.f32 %v4748, %v4766
        %v4769 = vmul.f32 %v4749, %v4766
        %v4770 = vmul.f32 %v4750, %v4766
        %v4771 = vmul.f32 %v4767, %v469
        %v4772 = vmul.f32 %v4768, %v474
        %v4773 = vmul.f32 %v4769, %v479
        %v4774 = vmul.f32 %v4770, %v484
        %v4775 = vadd.f32 %v4771, %v492
        %v4776 = vadd.f32 %v4772, %v496
        %v4777 = vadd.f32 %v4773, %v500
        %v4778 = vadd.f32 %v4774, %v504
        %v4779 = vadd.f32 %v4775, %v369
        %v4780 = vadd.f32 %v4776, %v370
        %v4781 = vadd.f32 %v4777, %v371
        %v4782 = vadd.f32 %v4778, %v372
        %4783 = vmatprep.subr.mxu0 0.0
        %4784 = vmatpush1.msra.mxu0 %v4779
        %4785 = vmatprep.subr.mxu0 0.0
        %4786 = vmatpush1.msra.mxu0 %v4780
        %4787 = vmatprep.subr.mxu0 0.0
        %4788 = vmatpush1.msra.mxu0 %v4781
        %4789 = vmatprep.subr.mxu0 0.0
        %4790 = vmatpush1.msra.mxu0 %v4782
        %4791 = vmatprep.subr.mxu0 0.0
        %4792 = vmatpush1.msra.mxu0 0.0
        %4793 = vmatprep.subr.mxu0 0.0
        %4794 = vmatpush1.msra.mxu0 0.0
        %4795 = vmatprep.subr.mxu0 0.0
        %4796 = vmatpush1.msra.mxu0 0.0
        %4797 = vmatprep.subr.mxu0 0.0
        %4798 = vmatpush1.msra.mxu0 0.0
        %4799 = vmatprep.subr.mxu0 0.0
        %4800 = vmatpush1.msra.mxu0 0.0
        %4801 = vmatprep.subr.mxu0 0.0
        %4802 = vmatpush1.msra.mxu0 0.0
        %4803 = vmatprep.subr.mxu0 0.0
        %4804 = vmatpush1.msra.mxu0 0.0
        %4805 = vmatprep.subr.mxu0 0.0
        %4806 = vmatpush1.msra.mxu0 0.0
        %4807 = vmatprep.subr.mxu0 0.0
        %4808 = vmatpush1.msra.mxu0 0.0
        %4809 = vmatprep.subr.mxu0 0.0
        %4810 = vmatpush1.msra.mxu0 0.0
        %4811 = vmatprep.subr.mxu0 0.0
        %4812 = vmatpush1.msra.mxu0 0.0
        %4813 = vmatprep.subr.mxu0 0.0
        %4814 = vmatpush1.msra.mxu0 0.0
        %4815 = vmatprep.subr.mxu0 0.0
        %4816 = vmatpush1.msra.mxu0 0.0
        %4817 = vmatprep.subr.mxu0 0.0
        %4818 = vmatpush1.msra.mxu0 0.0
        %4819 = vmatprep.subr.mxu0 0.0
        %4820 = vmatpush1.msra.mxu0 0.0
        %4821 = vmatprep.subr.mxu0 0.0
        %4822 = vmatpush1.msra.mxu0 0.0
        %4823 = vmatprep.subr.mxu0 0.0
        %4824 = vmatpush1.msra.mxu0 0.0
        %4825 = vmatprep.subr.mxu0 0.0
        %4826 = vmatpush1.msra.mxu0 0.0
        %4827 = vmatprep.subr.mxu0 0.0
        %4828 = vmatpush1.msra.mxu0 0.0
        %4829 = vmatprep.subr.mxu0 0.0
        %4830 = vmatpush1.msra.mxu0 0.0
        %4831 = vmatprep.subr.mxu0 0.0
        %4832 = vmatpush1.msra.mxu0 0.0
        %4833 = vmatprep.subr.mxu0 0.0
        %4834 = vmatpush1.msra.mxu0 0.0
        %4835 = vmatprep.subr.mxu0 0.0
        %4836 = vmatpush1.msra.mxu0 0.0
        %4837 = vmatprep.subr.mxu0 0.0
        %4838 = vmatpush1.msra.mxu0 0.0
        %4839 = vmatprep.subr.mxu0 0.0
        %4840 = vmatpush1.msra.mxu0 0.0
        %4841 = vmatprep.subr.mxu0 0.0
        %4842 = vmatpush1.msra.mxu0 0.0
        %4843 = vmatprep.subr.mxu0 0.0
        %4844 = vmatpush1.msra.mxu0 0.0
        %4845 = vmatprep.subr.mxu0 0.0
        %4846 = vmatpush1.msra.mxu0 0.0
        %4847 = vmatprep.mubr.f32.mxu0 0.0
        %4848 = vmatmul.mubr.f32.gmra.mrb[0].mxu0 %v576
        %v4849 = vpop.f32.mrb[0].mxu0
        %v4850 = vadd.f32 %v517, %v4849
        %v4851 = vpop.f32.mrb[0].mxu0
        %4852 = vmatprep.mubr.f32.mxu0 0.0
        %4853 = vmatmul.mubr.f32.gmra.mrb[0].mxu0 %v579
        %v4854 = vpop.f32.mrb[0].mxu0
        %v4855 = vadd.f32 %v522, %v4854
        %v4856 = vpop.f32.mrb[0].mxu0
        %4857 = vmatprep.mubr.f32.mxu0 0.0
        %4858 = vmatmul.mubr.f32.gmra.mrb[0].mxu0 %v582
        %v4859 = vpop.f32.mrb[0].mxu0
        %v4860 = vadd.f32 %v527, %v4859
        %v4861 = vpop.f32.mrb[0].mxu0
        %4862 = vmatprep.mubr.f32.mxu0 0.0
        %4863 = vmatmul.mubr.f32.gmra.mrb[0].mxu0 %v585
        %v4864 = vpop.f32.mrb[0].mxu0
        %v4865 = vadd.f32 %v532, %v4864
        %v4866 = vpop.f32.mrb[0].mxu0
        %4867 = vmatprep.mubr.f32.mxu0 0.0
        %4868 = vmatmul.mubr.f32.gmra.mrb[0].mxu0 %v588
        %v4869 = vpop.f32.mrb[0].mxu0
        %v4870 = vadd.f32 %v537, %v4869
        %v4871 = vpop.f32.mrb[0].mxu0
        %4872 = vmatprep.mubr.f32.mxu0 0.0
        %4873 = vmatmul.mubr.f32.gmra.mrb[0].mxu0 %v591
        %v4874 = vpop.f32.mrb[0].mxu0
        %v4875 = vadd.f32 %v542, %v4874
        %v4876 = vpop.f32.mrb[0].mxu0
        %4877 = vmatprep.mubr.f32.mxu0 0.0
        %4878 = vmatmul.mubr.f32.gmra.mrb[0].mxu0 %v594
        %v4879 = vpop.f32.mrb[0].mxu0
        %v4880 = vadd.f32 %v547, %v4879
        %v4881 = vpop.f32.mrb[0].mxu0
        %4882 = vmatprep.mubr.f32.mxu0 0.0
        %4883 = vmatmul.mubr.f32.gmra.mrb[0].mxu0 %v597
        %v4884 = vpop.f32.mrb[0].mxu0
        %v4885 = vadd.f32 %v552, %v4884
        %v4886 = vpop.f32.mrb[0].mxu0
        %4887 = vmatprep.mubr.f32.mxu0 0.0
        %4888 = vmatmul.mubr.f32.gmra.mrb[0].mxu0 %v600
        %v4889 = vpop.f32.mrb[0].mxu0
        %v4890 = vadd.f32 %v557, %v4889
        %v4891 = vpop.f32.mrb[0].mxu0
        %4892 = vmatprep.mubr.f32.mxu0 0.0
        %4893 = vmatmul.mubr.f32.gmra.mrb[0].mxu0 %v603
        %v4894 = vpop.f32.mrb[0].mxu0
        %v4895 = vadd.f32 %v562, %v4894
        %v4896 = vpop.f32.mrb[0].mxu0
        %4897 = vmatprep.mubr.f32.mxu0 0.0
        %4898 = vmatmul.mubr.f32.gmra.mrb[0].mxu0 %v606
        %v4899 = vpop.f32.mrb[0].mxu0
        %v4900 = vadd.f32 %v567, %v4899
        %v4901 = vpop.f32.mrb[0].mxu0
        %4902 = vmatprep.mubr.f32.mxu0 0.0
        %4903 = vmatmul.mubr.f32.gmra.mrb[0].mxu0 %v609
        %v4904 = vpop.f32.mrb[0].mxu0
        %v4905 = vadd.f32 %v572, %v4904
        %v4906 = vpop.f32.mrb[0].mxu0
        %4907 = vdwg.mxu0
        %4908 = vxpose.xlu0.b32.start [1/16] %v4850, 128
        %4909 = vxpose.xlu0.b32.cont [2/16] %v4855, 128
        %4910 = vxpose.xlu0.b32.cont [3/16] %v4860, 128
        %4911 = vxpose.xlu0.b32.cont [4/16] %v4865, 128
        %4912 = vxpose.xlu0.b32.cont [5/16] 0.0, 128
        %4913 = vxpose.xlu0.b32.cont [6/16] 0.0, 128
        %4914 = vxpose.xlu0.b32.cont [7/16] 0.0, 128
        %4915 = vxpose.xlu0.b32.cont [8/16] 0.0, 128
        %4916 = vxpose.xlu0.b32.cont [9/16] 0.0, 128
        %4917 = vxpose.xlu0.b32.cont [10/16] 0.0, 128
        %4918 = vxpose.xlu0.b32.cont [11/16] 0.0, 128
        %4919 = vxpose.xlu0.b32.cont [12/16] 0.0, 128
        %4920 = vxpose.xlu0.b32.cont [13/16] 0.0, 128
        %4921 = vxpose.xlu0.b32.cont [14/16] 0.0, 128
        %4922 = vxpose.xlu0.b32.cont [15/16] 0.0, 128
        %4923 = vxpose.xlu0.b32.end [16/16] 0.0, 128
        %v4924 = vpop.trf.xlu0
        %v4925 = vpop.trf.xlu0
        %v4926 = vpop.trf.xlu0
        %v4927 = vpop.trf.xlu0
        %v4928 = vpop.trf.xlu0
        %v4929 = vpop.trf.xlu0
        %v4930 = vpop.trf.xlu0
        %v4931 = vpop.trf.xlu0
        %v4932 = vpop.trf.xlu0
        %v4933 = vpop.trf.xlu0
        %v4934 = vpop.trf.xlu0
        %v4935 = vpop.trf.xlu0
        %v4936 = vpop.trf.xlu0
        %v4937 = vpop.trf.xlu0
        %v4938 = vpop.trf.xlu0
        %v4939 = vpop.trf.xlu0
        %v4940 = vsel %vm784, %v4870, 0.0
        %v4941 = vsel %vm785, %v4875, 0.0
        %v4942 = vsel %vm786, %v4880, 0.0
        %v4943 = vsel %vm787, %v4885, 0.0
        %v4945 = vsel %vm574, %v4924, 0
        %v4948 = vsel %vm574, %v4925, 0
        %v4951 = vsel %vm574, %v4926, 0
        %v4954 = vsel %vm574, %v4927, 0
        %v4957 = vsel %vm574, %v4928, 0
        %v4960 = vsel %vm574, %v4929, 0
        %v4963 = vsel %vm574, %v4930, 0
        %v4966 = vsel %vm574, %v4931, 0
        %v4969 = vsel %vm574, %v4932, 0
        %v4972 = vsel %vm574, %v4933, 0
        %v4975 = vsel %vm574, %v4934, 0
        %v4978 = vsel %vm574, %v4935, 0
        %v4981 = vsel %vm574, %v4936, 0
        %v4984 = vsel %vm574, %v4937, 0
        %v4987 = vsel %vm574, %v4938, 0
        %v4990 = vsel %vm574, %v4939, 0
        %4992 = vmatprep.subr.mxu0 0.0
        %4993 = vmatpush1.msra.mxu0 %v4940
        %4994 = vmatprep.subr.mxu0 0.0
        %4995 = vmatpush1.msra.mxu0 %v4941
        %4996 = vmatprep.subr.mxu0 0.0
        %4997 = vmatpush1.msra.mxu0 %v4942
        %4998 = vmatprep.subr.mxu0 0.0
        %4999 = vmatpush1.msra.mxu0 %v4943
        %5000 = vmatprep.subr.mxu0 0.0
        %5001 = vmatpush1.msra.mxu0 0.0
        %5002 = vmatprep.subr.mxu0 0.0
        %5003 = vmatpush1.msra.mxu0 0.0
        %5004 = vmatprep.subr.mxu0 0.0
        %5005 = vmatpush1.msra.mxu0 0.0
        %5006 = vmatprep.subr.mxu0 0.0
        %5007 = vmatpush1.msra.mxu0 0.0
        %5008 = vmatprep.subr.mxu0 0.0
        %5009 = vmatpush1.msra.mxu0 0.0
        %5010 = vmatprep.subr.mxu0 0.0
        %5011 = vmatpush1.msra.mxu0 0.0
        %5012 = vmatprep.subr.mxu0 0.0
        %5013 = vmatpush1.msra.mxu0 0.0
        %5014 = vmatprep.subr.mxu0 0.0
        %5015 = vmatpush1.msra.mxu0 0.0
        %5016 = vmatprep.subr.mxu0 0.0
        %5017 = vmatpush1.msra.mxu0 0.0
        %5018 = vmatprep.subr.mxu0 0.0
        %5019 = vmatpush1.msra.mxu0 0.0
        %5020 = vmatprep.subr.mxu0 0.0
        %5021 = vmatpush1.msra.mxu0 0.0
        %5022 = vmatprep.subr.mxu0 0.0
        %5023 = vmatpush1.msra.mxu0 0.0
        %5024 = vmatprep.subr.mxu0 0.0
        %5025 = vmatpush1.msra.mxu0 0.0
        %5026 = vmatprep.subr.mxu0 0.0
        %5027 = vmatpush1.msra.mxu0 0.0
        %5028 = vmatprep.subr.mxu0 0.0
        %5029 = vmatpush1.msra.mxu0 0.0
        %5030 = vmatprep.subr.mxu0 0.0
        %5031 = vmatpush1.msra.mxu0 0.0
        %5032 = vmatprep.subr.mxu0 0.0
        %5033 = vmatpush1.msra.mxu0 0.0
        %5034 = vmatprep.subr.mxu0 0.0
        %5035 = vmatpush1.msra.mxu0 0.0
        %5036 = vmatprep.subr.mxu0 0.0
        %5037 = vmatpush1.msra.mxu0 0.0
        %5038 = vmatprep.subr.mxu0 0.0
        %5039 = vmatpush1.msra.mxu0 0.0
        %5040 = vmatprep.subr.mxu0 0.0
        %5041 = vmatpush1.msra.mxu0 0.0
        %5042 = vmatprep.subr.mxu0 0.0
        %5043 = vmatpush1.msra.mxu0 0.0
        %5044 = vmatprep.subr.mxu0 0.0
        %5045 = vmatpush1.msra.mxu0 0.0
        %5046 = vmatprep.subr.mxu0 0.0
        %5047 = vmatpush1.msra.mxu0 0.0
        %5048 = vmatprep.subr.mxu0 0.0
        %5049 = vmatpush1.msra.mxu0 0.0
        %5050 = vmatprep.subr.mxu0 0.0
        %5051 = vmatpush1.msra.mxu0 0.0
        %5052 = vmatprep.subr.mxu0 0.0
        %5053 = vmatpush1.msra.mxu0 0.0
        %5054 = vmatprep.subr.mxu0 0.0
        %5055 = vmatpush1.msra.mxu0 0.0
        %5056 = vmatprep.mubr.f32.mxu0 0.0
        %5057 = vmatmul.mubr.f32.gmra.mrb[0].mxu0 %v4945
        %v5058 = vpop.f32.mrb[0].mxu0
        %v5059 = vadd.f32 0.0, %v5058
        %v5060 = vpop.f32.mrb[0].mxu0
        %5061 = vmatprep.mubr.f32.mxu0 0.0
        %5062 = vmatmul.mubr.f32.gmra.mrb[0].mxu0 %v4948
        %v5063 = vpop.f32.mrb[0].mxu0
        %v5064 = vadd.f32 0.0, %v5063
        %v5065 = vpop.f32.mrb[0].mxu0
        %5066 = vmatprep.mubr.f32.mxu0 0.0
        %5067 = vmatmul.mubr.f32.gmra.mrb[0].mxu0 %v4951
        %v5068 = vpop.f32.mrb[0].mxu0
        %v5069 = vadd.f32 0.0, %v5068
        %v5070 = vpop.f32.mrb[0].mxu0
        %5071 = vmatprep.mubr.f32.mxu0 0.0
        %5072 = vmatmul.mubr.f32.gmra.mrb[0].mxu0 %v4954
        %v5073 = vpop.f32.mrb[0].mxu0
        %v5074 = vadd.f32 0.0, %v5073
        %v5075 = vpop.f32.mrb[0].mxu0
        %5076 = vmatprep.mubr.f32.mxu0 0.0
        %5077 = vmatmul.mubr.f32.gmra.mrb[0].mxu0 %v4957
        %v5078 = vpop.f32.mrb[0].mxu0
        %v5079 = vadd.f32 0.0, %v5078
        %v5080 = vpop.f32.mrb[0].mxu0
        %5081 = vmatprep.mubr.f32.mxu0 0.0
        %5082 = vmatmul.mubr.f32.gmra.mrb[0].mxu0 %v4960
        %v5083 = vpop.f32.mrb[0].mxu0
        %v5084 = vadd.f32 0.0, %v5083
        %v5085 = vpop.f32.mrb[0].mxu0
        %5086 = vmatprep.mubr.f32.mxu0 0.0
        %5087 = vmatmul.mubr.f32.gmra.mrb[0].mxu0 %v4963
        %v5088 = vpop.f32.mrb[0].mxu0
        %v5089 = vadd.f32 0.0, %v5088
        %v5090 = vpop.f32.mrb[0].mxu0
        %5091 = vmatprep.mubr.f32.mxu0 0.0
        %5092 = vmatmul.mubr.f32.gmra.mrb[0].mxu0 %v4966
        %v5093 = vpop.f32.mrb[0].mxu0
        %v5094 = vadd.f32 0.0, %v5093
        %v5095 = vpop.f32.mrb[0].mxu0
        %5096 = vmatprep.mubr.f32.mxu0 0.0
        %5097 = vmatmul.mubr.f32.gmra.mrb[0].mxu0 %v4969
        %v5098 = vpop.f32.mrb[0].mxu0
        %v5099 = vadd.f32 0.0, %v5098
        %v5100 = vpop.f32.mrb[0].mxu0
        %5101 = vmatprep.mubr.f32.mxu0 0.0
        %5102 = vmatmul.mubr.f32.gmra.mrb[0].mxu0 %v4972
        %v5103 = vpop.f32.mrb[0].mxu0
        %v5104 = vadd.f32 0.0, %v5103
        %v5105 = vpop.f32.mrb[0].mxu0
        %5106 = vmatprep.mubr.f32.mxu0 0.0
        %5107 = vmatmul.mubr.f32.gmra.mrb[0].mxu0 %v4975
        %v5108 = vpop.f32.mrb[0].mxu0
        %v5109 = vadd.f32 0.0, %v5108
        %v5110 = vpop.f32.mrb[0].mxu0
        %5111 = vmatprep.mubr.f32.mxu0 0.0
        %5112 = vmatmul.mubr.f32.gmra.mrb[0].mxu0 %v4978
        %v5113 = vpop.f32.mrb[0].mxu0
        %v5114 = vadd.f32 0.0, %v5113
        %v5115 = vpop.f32.mrb[0].mxu0
        %5116 = vmatprep.mubr.f32.mxu0 0.0
        %5117 = vmatmul.mubr.f32.gmra.mrb[0].mxu0 %v4981
        %v5118 = vpop.f32.mrb[0].mxu0
        %v5119 = vadd.f32 0.0, %v5118
        %v5120 = vpop.f32.mrb[0].mxu0
        %5121 = vmatprep.mubr.f32.mxu0 0.0
        %5122 = vmatmul.mubr.f32.gmra.mrb[0].mxu0 %v4984
        %v5123 = vpop.f32.mrb[0].mxu0
        %v5124 = vadd.f32 0.0, %v5123
        %v5125 = vpop.f32.mrb[0].mxu0
        %5126 = vmatprep.mubr.f32.mxu0 0.0
        %5127 = vmatmul.mubr.f32.gmra.mrb[0].mxu0 %v4987
        %v5128 = vpop.f32.mrb[0].mxu0
        %v5129 = vadd.f32 0.0, %v5128
        %v5130 = vpop.f32.mrb[0].mxu0
        %5131 = vmatprep.mubr.f32.mxu0 0.0
        %5132 = vmatmul.mubr.f32.gmra.mrb[0].mxu0 %v4990
        %v5133 = vpop.f32.mrb[0].mxu0
        %v5134 = vadd.f32 0.0, %v5133
        %v5135 = vpop.f32.mrb[0].mxu0
        %5136 = vdwg.mxu0
        %5137 = vmax.xlane.f32.xlu0 %v5059
        %v5138 = vpop.xlane.xlu0 %5137
        %5139 = vmax.xlane.f32.xlu0 %v5064
        %v5140 = vpop.xlane.xlu0 %5139
        %5141 = vmax.xlane.f32.xlu0 %v5069
        %v5142 = vpop.xlane.xlu0 %5141
        %5143 = vmax.xlane.f32.xlu0 %v5074
        %v5144 = vpop.xlane.xlu0 %5143
        %5145 = vmax.xlane.f32.xlu0 %v5079
        %v5146 = vpop.xlane.xlu0 %5145
        %5147 = vmax.xlane.f32.xlu0 %v5084
        %v5148 = vpop.xlane.xlu0 %5147
        %5149 = vmax.xlane.f32.xlu0 %v5089
        %v5150 = vpop.xlane.xlu0 %5149
        %5151 = vmax.xlane.f32.xlu0 %v5094
        %v5152 = vpop.xlane.xlu0 %5151
        %5153 = vmax.xlane.f32.xlu0 %v5099
        %v5154 = vpop.xlane.xlu0 %5153
        %5155 = vmax.xlane.f32.xlu0 %v5104
        %v5156 = vpop.xlane.xlu0 %5155
        %5157 = vmax.xlane.f32.xlu0 %v5109
        %v5158 = vpop.xlane.xlu0 %5157
        %5159 = vmax.xlane.f32.xlu0 %v5114
        %v5160 = vpop.xlane.xlu0 %5159
        %5161 = vmax.xlane.f32.xlu0 %v5119
        %v5162 = vpop.xlane.xlu0 %5161
        %5163 = vmax.xlane.f32.xlu0 %v5124
        %v5164 = vpop.xlane.xlu0 %5163
        %5165 = vmax.xlane.f32.xlu0 %v5129
        %v5166 = vpop.xlane.xlu0 %5165
        %5167 = vmax.xlane.f32.xlu0 %v5134
        %v5168 = vpop.xlane.xlu0 %5167
        %v5169 = vsub.f32 %v5059, %v5138
        %v5170 = vsub.f32 %v5064, %v5140
        %v5171 = vsub.f32 %v5069, %v5142
        %v5172 = vsub.f32 %v5074, %v5144
        %v5173 = vsub.f32 %v5079, %v5146
        %v5174 = vsub.f32 %v5084, %v5148
        %v5175 = vsub.f32 %v5089, %v5150
        %v5176 = vsub.f32 %v5094, %v5152
        %v5177 = vsub.f32 %v5099, %v5154
        %v5178 = vsub.f32 %v5104, %v5156
        %v5179 = vsub.f32 %v5109, %v5158
        %v5180 = vsub.f32 %v5114, %v5160
        %v5181 = vsub.f32 %v5119, %v5162
        %v5182 = vsub.f32 %v5124, %v5164
        %v5183 = vsub.f32 %v5129, %v5166
        %v5184 = vsub.f32 %v5134, %v5168
        %v5185 = vmul.f32 %v5169, 1.442695
        %v5186 = vpow.pop %v5185
        %v5187 = vmul.f32 %v5170, 1.442695
        %v5188 = vpow.pop %v5187
        %v5189 = vmul.f32 %v5171, 1.442695
        %v5190 = vpow.pop %v5189
        %v5191 = vmul.f32 %v5172, 1.442695
        %v5192 = vpow.pop %v5191
        %v5193 = vmul.f32 %v5173, 1.442695
        %v5194 = vpow.pop %v5193
        %v5195 = vmul.f32 %v5174, 1.442695
        %v5196 = vpow.pop %v5195
        %v5197 = vmul.f32 %v5175, 1.442695
        %v5198 = vpow.pop %v5197
        %v5199 = vmul.f32 %v5176, 1.442695
        %v5200 = vpow.pop %v5199
        %v5201 = vmul.f32 %v5177, 1.442695
        %v5202 = vpow.pop %v5201
        %v5203 = vmul.f32 %v5178, 1.442695
        %v5204 = vpow.pop %v5203
        %v5205 = vmul.f32 %v5179, 1.442695
        %v5206 = vpow.pop %v5205
        %v5207 = vmul.f32 %v5180, 1.442695
        %v5208 = vpow.pop %v5207
        %v5209 = vmul.f32 %v5181, 1.442695
        %v5210 = vpow.pop %v5209
        %v5211 = vmul.f32 %v5182, 1.442695
        %v5212 = vpow.pop %v5211
        %v5213 = vmul.f32 %v5183, 1.442695
        %v5214 = vpow.pop %v5213
        %v5215 = vmul.f32 %v5184, 1.442695
        %v5216 = vpow.pop %v5215
        %5217 = vadd.xlane.f32.xlu0 %v5186
        %v5218 = vpop.xlane.xlu0 %5217
        %5219 = vadd.xlane.f32.xlu0 %v5188
        %v5220 = vpop.xlane.xlu0 %5219
        %5221 = vadd.xlane.f32.xlu0 %v5190
        %v5222 = vpop.xlane.xlu0 %5221
        %5223 = vadd.xlane.f32.xlu0 %v5192
        %v5224 = vpop.xlane.xlu0 %5223
        %5225 = vadd.xlane.f32.xlu0 %v5194
        %v5226 = vpop.xlane.xlu0 %5225
        %5227 = vadd.xlane.f32.xlu0 %v5196
        %v5228 = vpop.xlane.xlu0 %5227
        %5229 = vadd.xlane.f32.xlu0 %v5198
        %v5230 = vpop.xlane.xlu0 %5229
        %5231 = vadd.xlane.f32.xlu0 %v5200
        %v5232 = vpop.xlane.xlu0 %5231
        %5233 = vadd.xlane.f32.xlu0 %v5202
        %v5234 = vpop.xlane.xlu0 %5233
        %5235 = vadd.xlane.f32.xlu0 %v5204
        %v5236 = vpop.xlane.xlu0 %5235
        %5237 = vadd.xlane.f32.xlu0 %v5206
        %v5238 = vpop.xlane.xlu0 %5237
        %5239 = vadd.xlane.f32.xlu0 %v5208
        %v5240 = vpop.xlane.xlu0 %5239
        %5241 = vadd.xlane.f32.xlu0 %v5210
        %v5242 = vpop.xlane.xlu0 %5241
        %5243 = vadd.xlane.f32.xlu0 %v5212
        %v5244 = vpop.xlane.xlu0 %5243
        %5245 = vadd.xlane.f32.xlu0 %v5214
        %v5246 = vpop.xlane.xlu0 %5245
        %5247 = vadd.xlane.f32.xlu0 %v5216
        %v5248 = vpop.xlane.xlu0 %5247
        %v5249 = vrcp.pop %v5218
        %v5250 = vrcp.pop %v5220
        %v5251 = vrcp.pop %v5222
        %v5252 = vrcp.pop %v5224
        %v5253 = vrcp.pop %v5226
        %v5254 = vrcp.pop %v5228
        %v5255 = vrcp.pop %v5230
        %v5256 = vrcp.pop %v5232
        %v5257 = vrcp.pop %v5234
        %v5258 = vrcp.pop %v5236
        %v5259 = vrcp.pop %v5238
        %v5260 = vrcp.pop %v5240
        %v5261 = vrcp.pop %v5242
        %v5262 = vrcp.pop %v5244
        %v5263 = vrcp.pop %v5246
        %v5264 = vrcp.pop %v5248
        %v5265 = vmul.f32 %v5186, %v5249
        %v5266 = vmul.f32 %v5188, %v5250
        %v5267 = vmul.f32 %v5190, %v5251
        %v5268 = vmul.f32 %v5192, %v5252
        %v5269 = vmul.f32 %v5194, %v5253
        %v5270 = vmul.f32 %v5196, %v5254
        %v5271 = vmul.f32 %v5198, %v5255
        %v5272 = vmul.f32 %v5200, %v5256
        %v5273 = vmul.f32 %v5202, %v5257
        %v5274 = vmul.f32 %v5204, %v5258
        %v5275 = vmul.f32 %v5206, %v5259
        %v5276 = vmul.f32 %v5208, %v5260
        %v5277 = vmul.f32 %v5210, %v5261
        %v5278 = vmul.f32 %v5212, %v5262
        %v5279 = vmul.f32 %v5214, %v5263
        %v5280 = vmul.f32 %v5216, %v5264
        %v5281 = vsel %vm784, %v4890, 0.0
        %v5282 = vsel %vm785, %v4895, 0.0
        %v5283 = vsel %vm786, %v4900, 0.0
        %v5284 = vsel %vm787, %v4905, 0.0
        %v5285 = vsel %vm1149, %v4870, 0.0
        %v5286 = vsel %vm1150, %v4875, 0.0
        %v5287 = vsel %vm1151, %v4880, 0.0
        %v5288 = vsel %vm1152, %v4885, 0.0
        %5289 = vmatprep.subr.mxu0 0.0
        %5290 = vmatpush1.msra.mxu0 %v5285
        %5291 = vmatprep.subr.mxu0 0.0
        %5292 = vmatpush1.msra.mxu0 %v5286
        %5293 = vmatprep.subr.mxu0 0.0
        %5294 = vmatpush1.msra.mxu0 %v5287
        %5295 = vmatprep.subr.mxu0 0.0
        %5296 = vmatpush1.msra.mxu0 %v5288
        %5297 = vmatprep.subr.mxu0 0.0
        %5298 = vmatpush1.msra.mxu0 0.0
        %5299 = vmatprep.subr.mxu0 0.0
        %5300 = vmatpush1.msra.mxu0 0.0
        %5301 = vmatprep.subr.mxu0 0.0
        %5302 = vmatpush1.msra.mxu0 0.0
        %5303 = vmatprep.subr.mxu0 0.0
        %5304 = vmatpush1.msra.mxu0 0.0
        %5305 = vmatprep.subr.mxu0 0.0
        %5306 = vmatpush1.msra.mxu0 0.0
        %5307 = vmatprep.subr.mxu0 0.0
        %5308 = vmatpush1.msra.mxu0 0.0
        %5309 = vmatprep.subr.mxu0 0.0
        %5310 = vmatpush1.msra.mxu0 0.0
        %5311 = vmatprep.subr.mxu0 0.0
        %5312 = vmatpush1.msra.mxu0 0.0
        %5313 = vmatprep.subr.mxu0 0.0
        %5314 = vmatpush1.msra.mxu0 0.0
        %5315 = vmatprep.subr.mxu0 0.0
        %5316 = vmatpush1.msra.mxu0 0.0
        %5317 = vmatprep.subr.mxu0 0.0
        %5318 = vmatpush1.msra.mxu0 0.0
        %5319 = vmatprep.subr.mxu0 0.0
        %5320 = vmatpush1.msra.mxu0 0.0
        %5321 = vmatprep.subr.mxu0 0.0
        %5322 = vmatpush1.msra.mxu0 0.0
        %5323 = vmatprep.subr.mxu0 0.0
        %5324 = vmatpush1.msra.mxu0 0.0
        %5325 = vmatprep.subr.mxu0 0.0
        %5326 = vmatpush1.msra.mxu0 0.0
        %5327 = vmatprep.subr.mxu0 0.0
        %5328 = vmatpush1.msra.mxu0 0.0
        %5329 = vmatprep.subr.mxu0 0.0
        %5330 = vmatpush1.msra.mxu0 0.0
        %5331 = vmatprep.subr.mxu0 0.0
        %5332 = vmatpush1.msra.mxu0 0.0
        %5333 = vmatprep.subr.mxu0 0.0
        %5334 = vmatpush1.msra.mxu0 0.0
        %5335 = vmatprep.subr.mxu0 0.0
        %5336 = vmatpush1.msra.mxu0 0.0
        %5337 = vmatprep.subr.mxu0 0.0
        %5338 = vmatpush1.msra.mxu0 0.0
        %5339 = vmatprep.subr.mxu0 0.0
        %5340 = vmatpush1.msra.mxu0 0.0
        %5341 = vmatprep.subr.mxu0 0.0
        %5342 = vmatpush1.msra.mxu0 0.0
        %5343 = vmatprep.subr.mxu0 0.0
        %5344 = vmatpush1.msra.mxu0 0.0
        %5345 = vmatprep.subr.mxu0 0.0
        %5346 = vmatpush1.msra.mxu0 0.0
        %5347 = vmatprep.subr.mxu0 0.0
        %5348 = vmatpush1.msra.mxu0 0.0
        %5349 = vmatprep.subr.mxu0 0.0
        %5350 = vmatpush1.msra.mxu0 0.0
        %5351 = vmatprep.subr.mxu0 0.0
        %5352 = vmatpush1.msra.mxu0 0.0
        %5353 = vmatprep.mubr.f32.mxu0 0.0
        %5354 = vmatmul.mubr.f32.gmra.mrb[0].mxu0 %v4945
        %v5355 = vpop.f32.mrb[0].mxu0
        %v5356 = vadd.f32 0.0, %v5355
        %v5357 = vpop.f32.mrb[0].mxu0
        %5358 = vmatprep.mubr.f32.mxu0 0.0
        %5359 = vmatmul.mubr.f32.gmra.mrb[0].mxu0 %v4948
        %v5360 = vpop.f32.mrb[0].mxu0
        %v5361 = vadd.f32 0.0, %v5360
        %v5362 = vpop.f32.mrb[0].mxu0
        %5363 = vmatprep.mubr.f32.mxu0 0.0
        %5364 = vmatmul.mubr.f32.gmra.mrb[0].mxu0 %v4951
        %v5365 = vpop.f32.mrb[0].mxu0
        %v5366 = vadd.f32 0.0, %v5365
        %v5367 = vpop.f32.mrb[0].mxu0
        %5368 = vmatprep.mubr.f32.mxu0 0.0
        %5369 = vmatmul.mubr.f32.gmra.mrb[0].mxu0 %v4954
        %v5370 = vpop.f32.mrb[0].mxu0
        %v5371 = vadd.f32 0.0, %v5370
        %v5372 = vpop.f32.mrb[0].mxu0
        %5373 = vmatprep.mubr.f32.mxu0 0.0
        %5374 = vmatmul.mubr.f32.gmra.mrb[0].mxu0 %v4957
        %v5375 = vpop.f32.mrb[0].mxu0
        %v5376 = vadd.f32 0.0, %v5375
        %v5377 = vpop.f32.mrb[0].mxu0
        %5378 = vmatprep.mubr.f32.mxu0 0.0
        %5379 = vmatmul.mubr.f32.gmra.mrb[0].mxu0 %v4960
        %v5380 = vpop.f32.mrb[0].mxu0
        %v5381 = vadd.f32 0.0, %v5380
        %v5382 = vpop.f32.mrb[0].mxu0
        %5383 = vmatprep.mubr.f32.mxu0 0.0
        %5384 = vmatmul.mubr.f32.gmra.mrb[0].mxu0 %v4963
        %v5385 = vpop.f32.mrb[0].mxu0
        %v5386 = vadd.f32 0.0, %v5385
        %v5387 = vpop.f32.mrb[0].mxu0
        %5388 = vmatprep.mubr.f32.mxu0 0.0
        %5389 = vmatmul.mubr.f32.gmra.mrb[0].mxu0 %v4966
        %v5390 = vpop.f32.mrb[0].mxu0
        %v5391 = vadd.f32 0.0, %v5390
        %v5392 = vpop.f32.mrb[0].mxu0
        %5393 = vmatprep.mubr.f32.mxu0 0.0
        %5394 = vmatmul.mubr.f32.gmra.mrb[0].mxu0 %v4969
        %v5395 = vpop.f32.mrb[0].mxu0
        %v5396 = vadd.f32 0.0, %v5395
        %v5397 = vpop.f32.mrb[0].mxu0
        %5398 = vmatprep.mubr.f32.mxu0 0.0
        %5399 = vmatmul.mubr.f32.gmra.mrb[0].mxu0 %v4972
        %v5400 = vpop.f32.mrb[0].mxu0
        %v5401 = vadd.f32 0.0, %v5400
        %v5402 = vpop.f32.mrb[0].mxu0
        %5403 = vmatprep.mubr.f32.mxu0 0.0
        %5404 = vmatmul.mubr.f32.gmra.mrb[0].mxu0 %v4975
        %v5405 = vpop.f32.mrb[0].mxu0
        %v5406 = vadd.f32 0.0, %v5405
        %v5407 = vpop.f32.mrb[0].mxu0
        %5408 = vmatprep.mubr.f32.mxu0 0.0
        %5409 = vmatmul.mubr.f32.gmra.mrb[0].mxu0 %v4978
        %v5410 = vpop.f32.mrb[0].mxu0
        %v5411 = vadd.f32 0.0, %v5410
        %v5412 = vpop.f32.mrb[0].mxu0
        %5413 = vmatprep.mubr.f32.mxu0 0.0
        %5414 = vmatmul.mubr.f32.gmra.mrb[0].mxu0 %v4981
        %v5415 = vpop.f32.mrb[0].mxu0
        %v5416 = vadd.f32 0.0, %v5415
        %v5417 = vpop.f32.mrb[0].mxu0
        %5418 = vmatprep.mubr.f32.mxu0 0.0
        %5419 = vmatmul.mubr.f32.gmra.mrb[0].mxu0 %v4984
        %v5420 = vpop.f32.mrb[0].mxu0
        %v5421 = vadd.f32 0.0, %v5420
        %v5422 = vpop.f32.mrb[0].mxu0
        %5423 = vmatprep.mubr.f32.mxu0 0.0
        %5424 = vmatmul.mubr.f32.gmra.mrb[0].mxu0 %v4987
        %v5425 = vpop.f32.mrb[0].mxu0
        %v5426 = vadd.f32 0.0, %v5425
        %v5427 = vpop.f32.mrb[0].mxu0
        %5428 = vmatprep.mubr.f32.mxu0 0.0
        %5429 = vmatmul.mubr.f32.gmra.mrb[0].mxu0 %v4990
        %v5430 = vpop.f32.mrb[0].mxu0
        %v5431 = vadd.f32 0.0, %v5430
        %v5432 = vpop.f32.mrb[0].mxu0
        %5433 = vdwg.mxu0
        %5434 = vmax.xlane.f32.xlu0 %v5356
        %v5435 = vpop.xlane.xlu0 %5434
        %5436 = vmax.xlane.f32.xlu0 %v5361
        %v5437 = vpop.xlane.xlu0 %5436
        %5438 = vmax.xlane.f32.xlu0 %v5366
        %v5439 = vpop.xlane.xlu0 %5438
        %5440 = vmax.xlane.f32.xlu0 %v5371
        %v5441 = vpop.xlane.xlu0 %5440
        %5442 = vmax.xlane.f32.xlu0 %v5376
        %v5443 = vpop.xlane.xlu0 %5442
        %5444 = vmax.xlane.f32.xlu0 %v5381
        %v5445 = vpop.xlane.xlu0 %5444
        %5446 = vmax.xlane.f32.xlu0 %v5386
        %v5447 = vpop.xlane.xlu0 %5446
        %5448 = vmax.xlane.f32.xlu0 %v5391
        %v5449 = vpop.xlane.xlu0 %5448
        %5450 = vmax.xlane.f32.xlu0 %v5396
        %v5451 = vpop.xlane.xlu0 %5450
        %5452 = vmax.xlane.f32.xlu0 %v5401
        %v5453 = vpop.xlane.xlu0 %5452
        %5454 = vmax.xlane.f32.xlu0 %v5406
        %v5455 = vpop.xlane.xlu0 %5454
        %5456 = vmax.xlane.f32.xlu0 %v5411
        %v5457 = vpop.xlane.xlu0 %5456
        %5458 = vmax.xlane.f32.xlu0 %v5416
        %v5459 = vpop.xlane.xlu0 %5458
        %5460 = vmax.xlane.f32.xlu0 %v5421
        %v5461 = vpop.xlane.xlu0 %5460
        %5462 = vmax.xlane.f32.xlu0 %v5426
        %v5463 = vpop.xlane.xlu0 %5462
        %5464 = vmax.xlane.f32.xlu0 %v5431
        %v5465 = vpop.xlane.xlu0 %5464
        %v5466 = vsub.f32 %v5356, %v5435
        %v5467 = vsub.f32 %v5361, %v5437
        %v5468 = vsub.f32 %v5366, %v5439
        %v5469 = vsub.f32 %v5371, %v5441
        %v5470 = vsub.f32 %v5376, %v5443
        %v5471 = vsub.f32 %v5381, %v5445
        %v5472 = vsub.f32 %v5386, %v5447
        %v5473 = vsub.f32 %v5391, %v5449
        %v5474 = vsub.f32 %v5396, %v5451
        %v5475 = vsub.f32 %v5401, %v5453
        %v5476 = vsub.f32 %v5406, %v5455
        %v5477 = vsub.f32 %v5411, %v5457
        %v5478 = vsub.f32 %v5416, %v5459
        %v5479 = vsub.f32 %v5421, %v5461
        %v5480 = vsub.f32 %v5426, %v5463
        %v5481 = vsub.f32 %v5431, %v5465
        %v5482 = vmul.f32 %v5466, 1.442695
        %v5483 = vpow.pop %v5482
        %v5484 = vmul.f32 %v5467, 1.442695
        %v5485 = vpow.pop %v5484
        %v5486 = vmul.f32 %v5468, 1.442695
        %v5487 = vpow.pop %v5486
        %v5488 = vmul.f32 %v5469, 1.442695
        %v5489 = vpow.pop %v5488
        %v5490 = vmul.f32 %v5470, 1.442695
        %v5491 = vpow.pop %v5490
        %v5492 = vmul.f32 %v5471, 1.442695
        %v5493 = vpow.pop %v5492
        %v5494 = vmul.f32 %v5472, 1.442695
        %v5495 = vpow.pop %v5494
        %v5496 = vmul.f32 %v5473, 1.442695
        %v5497 = vpow.pop %v5496
        %v5498 = vmul.f32 %v5474, 1.442695
        %v5499 = vpow.pop %v5498
        %v5500 = vmul.f32 %v5475, 1.442695
        %v5501 = vpow.pop %v5500
        %v5502 = vmul.f32 %v5476, 1.442695
        %v5503 = vpow.pop %v5502
        %v5504 = vmul.f32 %v5477, 1.442695
        %v5505 = vpow.pop %v5504
        %v5506 = vmul.f32 %v5478, 1.442695
        %v5507 = vpow.pop %v5506
        %v5508 = vmul.f32 %v5479, 1.442695
        %v5509 = vpow.pop %v5508
        %v5510 = vmul.f32 %v5480, 1.442695
        %v5511 = vpow.pop %v5510
        %v5512 = vmul.f32 %v5481, 1.442695
        %v5513 = vpow.pop %v5512
        %5514 = vadd.xlane.f32.xlu0 %v5483
        %v5515 = vpop.xlane.xlu0 %5514
        %5516 = vadd.xlane.f32.xlu0 %v5485
        %v5517 = vpop.xlane.xlu0 %5516
        %5518 = vadd.xlane.f32.xlu0 %v5487
        %v5519 = vpop.xlane.xlu0 %5518
        %5520 = vadd.xlane.f32.xlu0 %v5489
        %v5521 = vpop.xlane.xlu0 %5520
        %5522 = vadd.xlane.f32.xlu0 %v5491
        %v5523 = vpop.xlane.xlu0 %5522
        %5524 = vadd.xlane.f32.xlu0 %v5493
        %v5525 = vpop.xlane.xlu0 %5524
        %5526 = vadd.xlane.f32.xlu0 %v5495
        %v5527 = vpop.xlane.xlu0 %5526
        %5528 = vadd.xlane.f32.xlu0 %v5497
        %v5529 = vpop.xlane.xlu0 %5528
        %5530 = vadd.xlane.f32.xlu0 %v5499
        %v5531 = vpop.xlane.xlu0 %5530
        %5532 = vadd.xlane.f32.xlu0 %v5501
        %v5533 = vpop.xlane.xlu0 %5532
        %5534 = vadd.xlane.f32.xlu0 %v5503
        %v5535 = vpop.xlane.xlu0 %5534
        %5536 = vadd.xlane.f32.xlu0 %v5505
        %v5537 = vpop.xlane.xlu0 %5536
        %5538 = vadd.xlane.f32.xlu0 %v5507
        %v5539 = vpop.xlane.xlu0 %5538
        %5540 = vadd.xlane.f32.xlu0 %v5509
        %v5541 = vpop.xlane.xlu0 %5540
        %5542 = vadd.xlane.f32.xlu0 %v5511
        %v5543 = vpop.xlane.xlu0 %5542
        %5544 = vadd.xlane.f32.xlu0 %v5513
        %v5545 = vpop.xlane.xlu0 %5544
        %v5546 = vrcp.pop %v5515
        %v5547 = vrcp.pop %v5517
        %v5548 = vrcp.pop %v5519
        %v5549 = vrcp.pop %v5521
        %v5550 = vrcp.pop %v5523
        %v5551 = vrcp.pop %v5525
        %v5552 = vrcp.pop %v5527
        %v5553 = vrcp.pop %v5529
        %v5554 = vrcp.pop %v5531
        %v5555 = vrcp.pop %v5533
        %v5556 = vrcp.pop %v5535
        %v5557 = vrcp.pop %v5537
        %v5558 = vrcp.pop %v5539
        %v5559 = vrcp.pop %v5541
        %v5560 = vrcp.pop %v5543
        %v5561 = vrcp.pop %v5545
        %v5562 = vmul.f32 %v5483, %v5546
        %v5563 = vmul.f32 %v5485, %v5547
        %v5564 = vmul.f32 %v5487, %v5548
        %v5565 = vmul.f32 %v5489, %v5549
        %v5566 = vmul.f32 %v5491, %v5550
        %v5567 = vmul.f32 %v5493, %v5551
        %v5568 = vmul.f32 %v5495, %v5552
        %v5569 = vmul.f32 %v5497, %v5553
        %v5570 = vmul.f32 %v5499, %v5554
        %v5571 = vmul.f32 %v5501, %v5555
        %v5572 = vmul.f32 %v5503, %v5556
        %v5573 = vmul.f32 %v5505, %v5557
        %v5574 = vmul.f32 %v5507, %v5558
        %v5575 = vmul.f32 %v5509, %v5559
        %v5576 = vmul.f32 %v5511, %v5560
        %v5577 = vmul.f32 %v5513, %v5561
        %v5578 = vsel %vm1149, %v4890, 0.0
        %v5579 = vsel %vm1150, %v4895, 0.0
        %v5580 = vsel %vm1151, %v4900, 0.0
        %v5581 = vsel %vm1152, %v4905, 0.0
        %5582 = vmatprep.subr.mxu0 0.0
        %5583 = vmatpush1.xpose.msra.mxu0 %v5562
        %5584 = vmatprep.subr.mxu0 0.0
        %5585 = vmatpush1.xpose.msra.mxu0 %v5563
        %5586 = vmatprep.subr.mxu0 0.0
        %5587 = vmatpush1.xpose.msra.mxu0 %v5564
        %5588 = vmatprep.subr.mxu0 0.0
        %5589 = vmatpush1.xpose.msra.mxu0 %v5565
        %5590 = vmatprep.subr.mxu0 0.0
        %5591 = vmatpush1.xpose.msra.mxu0 %v5566
        %5592 = vmatprep.subr.mxu0 0.0
        %5593 = vmatpush1.xpose.msra.mxu0 %v5567
        %5594 = vmatprep.subr.mxu0 0.0
        %5595 = vmatpush1.xpose.msra.mxu0 %v5568
        %5596 = vmatprep.subr.mxu0 0.0
        %5597 = vmatpush1.xpose.msra.mxu0 %v5569
        %5598 = vmatprep.subr.mxu0 0.0
        %5599 = vmatpush1.xpose.msra.mxu0 %v5570
        %5600 = vmatprep.subr.mxu0 0.0
        %5601 = vmatpush1.xpose.msra.mxu0 %v5571
        %5602 = vmatprep.subr.mxu0 0.0
        %5603 = vmatpush1.xpose.msra.mxu0 %v5572
        %5604 = vmatprep.subr.mxu0 0.0
        %5605 = vmatpush1.xpose.msra.mxu0 %v5573
        %5606 = vmatprep.subr.mxu0 0.0
        %5607 = vmatpush1.xpose.msra.mxu0 %v5574
        %5608 = vmatprep.subr.mxu0 0.0
        %5609 = vmatpush1.xpose.msra.mxu0 %v5575
        %5610 = vmatprep.subr.mxu0 0.0
        %5611 = vmatpush1.xpose.msra.mxu0 %v5576
        %5612 = vmatprep.subr.mxu0 0.0
        %5613 = vmatpush1.xpose.msra.mxu0 %v5577
        %5614 = vmatprep.subr.mxu0 0.0
        %5615 = vmatpush1.xpose.msra.mxu0 0.0
        %5616 = vmatprep.subr.mxu0 0.0
        %5617 = vmatpush1.xpose.msra.mxu0 0.0
        %5618 = vmatprep.subr.mxu0 0.0
        %5619 = vmatpush1.xpose.msra.mxu0 0.0
        %5620 = vmatprep.subr.mxu0 0.0
        %5621 = vmatpush1.xpose.msra.mxu0 0.0
        %5622 = vmatprep.subr.mxu0 0.0
        %5623 = vmatpush1.xpose.msra.mxu0 0.0
        %5624 = vmatprep.subr.mxu0 0.0
        %5625 = vmatpush1.xpose.msra.mxu0 0.0
        %5626 = vmatprep.subr.mxu0 0.0
        %5627 = vmatpush1.xpose.msra.mxu0 0.0
        %5628 = vmatprep.subr.mxu0 0.0
        %5629 = vmatpush1.xpose.msra.mxu0 0.0
        %5630 = vmatprep.subr.mxu0 0.0
        %5631 = vmatpush1.xpose.msra.mxu0 0.0
        %5632 = vmatprep.subr.mxu0 0.0
        %5633 = vmatpush1.xpose.msra.mxu0 0.0
        %5634 = vmatprep.subr.mxu0 0.0
        %5635 = vmatpush1.xpose.msra.mxu0 0.0
        %5636 = vmatprep.subr.mxu0 0.0
        %5637 = vmatpush1.xpose.msra.mxu0 0.0
        %5638 = vmatprep.subr.mxu0 0.0
        %5639 = vmatpush1.xpose.msra.mxu0 0.0
        %5640 = vmatprep.subr.mxu0 0.0
        %5641 = vmatpush1.xpose.msra.mxu0 0.0
        %5642 = vmatprep.subr.mxu0 0.0
        %5643 = vmatpush1.xpose.msra.mxu0 0.0
        %5644 = vmatprep.subr.mxu0 0.0
        %5645 = vmatpush1.xpose.msra.mxu0 0.0
        %5646 = vmatprep.mubr.f32.mxu0 0.0
        %5647 = vmatmul.mubr.f32.gmra.mrb[0].mxu0 %v5578
        %v5648 = vpop.f32.mrb[0].mxu0
        %v5649 = vadd.f32 0.0, %v5648
        %v5650 = vpop.f32.mrb[0].mxu0
        %5651 = vmatprep.mubr.f32.mxu0 0.0
        %5652 = vmatmul.mubr.f32.gmra.mrb[0].mxu0 %v5579
        %v5653 = vpop.f32.mrb[0].mxu0
        %v5654 = vadd.f32 0.0, %v5653
        %v5655 = vpop.f32.mrb[0].mxu0
        %5656 = vmatprep.mubr.f32.mxu0 0.0
        %5657 = vmatmul.mubr.f32.gmra.mrb[0].mxu0 %v5580
        %v5658 = vpop.f32.mrb[0].mxu0
        %v5659 = vadd.f32 0.0, %v5658
        %v5660 = vpop.f32.mrb[0].mxu0
        %5661 = vmatprep.mubr.f32.mxu0 0.0
        %5662 = vmatmul.mubr.f32.gmra.mrb[0].mxu0 %v5581
        %v5663 = vpop.f32.mrb[0].mxu0
        %v5664 = vadd.f32 0.0, %v5663
        %v5665 = vpop.f32.mrb[0].mxu0
        %5666 = vdwg.mxu0
        %5667 = vmatprep.subr.mxu0 0.0
        %5668 = vmatpush1.xpose.msra.mxu0 %v5265
        %5669 = vmatprep.subr.mxu0 0.0
        %5670 = vmatpush1.xpose.msra.mxu0 %v5266
        %5671 = vmatprep.subr.mxu0 0.0
        %5672 = vmatpush1.xpose.msra.mxu0 %v5267
        %5673 = vmatprep.subr.mxu0 0.0
        %5674 = vmatpush1.xpose.msra.mxu0 %v5268
        %5675 = vmatprep.subr.mxu0 0.0
        %5676 = vmatpush1.xpose.msra.mxu0 %v5269
        %5677 = vmatprep.subr.mxu0 0.0
        %5678 = vmatpush1.xpose.msra.mxu0 %v5270
        %5679 = vmatprep.subr.mxu0 0.0
        %5680 = vmatpush1.xpose.msra.mxu0 %v5271
        %5681 = vmatprep.subr.mxu0 0.0
        %5682 = vmatpush1.xpose.msra.mxu0 %v5272
        %5683 = vmatprep.subr.mxu0 0.0
        %5684 = vmatpush1.xpose.msra.mxu0 %v5273
        %5685 = vmatprep.subr.mxu0 0.0
        %5686 = vmatpush1.xpose.msra.mxu0 %v5274
        %5687 = vmatprep.subr.mxu0 0.0
        %5688 = vmatpush1.xpose.msra.mxu0 %v5275
        %5689 = vmatprep.subr.mxu0 0.0
        %5690 = vmatpush1.xpose.msra.mxu0 %v5276
        %5691 = vmatprep.subr.mxu0 0.0
        %5692 = vmatpush1.xpose.msra.mxu0 %v5277
        %5693 = vmatprep.subr.mxu0 0.0
        %5694 = vmatpush1.xpose.msra.mxu0 %v5278
        %5695 = vmatprep.subr.mxu0 0.0
        %5696 = vmatpush1.xpose.msra.mxu0 %v5279
        %5697 = vmatprep.subr.mxu0 0.0
        %5698 = vmatpush1.xpose.msra.mxu0 %v5280
        %5699 = vmatprep.subr.mxu0 0.0
        %5700 = vmatpush1.xpose.msra.mxu0 0.0
        %5701 = vmatprep.subr.mxu0 0.0
        %5702 = vmatpush1.xpose.msra.mxu0 0.0
        %5703 = vmatprep.subr.mxu0 0.0
        %5704 = vmatpush1.xpose.msra.mxu0 0.0
        %5705 = vmatprep.subr.mxu0 0.0
        %5706 = vmatpush1.xpose.msra.mxu0 0.0
        %5707 = vmatprep.subr.mxu0 0.0
        %5708 = vmatpush1.xpose.msra.mxu0 0.0
        %5709 = vmatprep.subr.mxu0 0.0
        %5710 = vmatpush1.xpose.msra.mxu0 0.0
        %5711 = vmatprep.subr.mxu0 0.0
        %5712 = vmatpush1.xpose.msra.mxu0 0.0
        %5713 = vmatprep.subr.mxu0 0.0
        %5714 = vmatpush1.xpose.msra.mxu0 0.0
        %5715 = vmatprep.subr.mxu0 0.0
        %5716 = vmatpush1.xpose.msra.mxu0 0.0
        %5717 = vmatprep.subr.mxu0 0.0
        %5718 = vmatpush1.xpose.msra.mxu0 0.0
        %5719 = vmatprep.subr.mxu0 0.0
        %5720 = vmatpush1.xpose.msra.mxu0 0.0
        %5721 = vmatprep.subr.mxu0 0.0
        %5722 = vmatpush1.xpose.msra.mxu0 0.0
        %5723 = vmatprep.subr.mxu0 0.0
        %5724 = vmatpush1.xpose.msra.mxu0 0.0
        %5725 = vmatprep.subr.mxu0 0.0
        %5726 = vmatpush1.xpose.msra.mxu0 0.0
        %5727 = vmatprep.subr.mxu0 0.0
        %5728 = vmatpush1.xpose.msra.mxu0 0.0
        %5729 = vmatprep.subr.mxu0 0.0
        %5730 = vmatpush1.xpose.msra.mxu0 0.0
        %5731 = vmatprep.mubr.f32.mxu0 0.0
        %5732 = vmatmul.mubr.f32.gmra.mrb[0].mxu0 %v5281
        %v5733 = vpop.f32.mrb[0].mxu0
        %v5734 = vadd.f32 %v5649, %v5733
        %v5735 = vpop.f32.mrb[0].mxu0
        %5736 = vmatprep.mubr.f32.mxu0 0.0
        %5737 = vmatmul.mubr.f32.gmra.mrb[0].mxu0 %v5282
        %v5738 = vpop.f32.mrb[0].mxu0
        %v5739 = vadd.f32 %v5654, %v5738
        %v5740 = vpop.f32.mrb[0].mxu0
        %5741 = vmatprep.mubr.f32.mxu0 0.0
        %5742 = vmatmul.mubr.f32.gmra.mrb[0].mxu0 %v5283
        %v5743 = vpop.f32.mrb[0].mxu0
        %v5744 = vadd.f32 %v5659, %v5743
        %v5745 = vpop.f32.mrb[0].mxu0
        %5746 = vmatprep.mubr.f32.mxu0 0.0
        %5747 = vmatmul.mubr.f32.gmra.mrb[0].mxu0 %v5284
        %v5748 = vpop.f32.mrb[0].mxu0
        %v5749 = vadd.f32 %v5664, %v5748
        %v5750 = vpop.f32.mrb[0].mxu0
        %5751 = vdwg.mxu0
        %v5752 = vsel %vm1636, %v4870, 0.0
        %v5753 = vsel %vm1637, %v4875, 0.0
        %v5754 = vsel %vm1638, %v4880, 0.0
        %v5755 = vsel %vm1639, %v4885, 0.0
        %5756 = vmatprep.subr.mxu0 0.0
        %5757 = vmatpush1.msra.mxu0 %v5752
        %5758 = vmatprep.subr.mxu0 0.0
        %5759 = vmatpush1.msra.mxu0 %v5753
        %5760 = vmatprep.subr.mxu0 0.0
        %5761 = vmatpush1.msra.mxu0 %v5754
        %5762 = vmatprep.subr.mxu0 0.0
        %5763 = vmatpush1.msra.mxu0 %v5755
        %5764 = vmatprep.subr.mxu0 0.0
        %5765 = vmatpush1.msra.mxu0 0.0
        %5766 = vmatprep.subr.mxu0 0.0
        %5767 = vmatpush1.msra.mxu0 0.0
        %5768 = vmatprep.subr.mxu0 0.0
        %5769 = vmatpush1.msra.mxu0 0.0
        %5770 = vmatprep.subr.mxu0 0.0
        %5771 = vmatpush1.msra.mxu0 0.0
        %5772 = vmatprep.subr.mxu0 0.0
        %5773 = vmatpush1.msra.mxu0 0.0
        %5774 = vmatprep.subr.mxu0 0.0
        %5775 = vmatpush1.msra.mxu0 0.0
        %5776 = vmatprep.subr.mxu0 0.0
        %5777 = vmatpush1.msra.mxu0 0.0
        %5778 = vmatprep.subr.mxu0 0.0
        %5779 = vmatpush1.msra.mxu0 0.0
        %5780 = vmatprep.subr.mxu0 0.0
        %5781 = vmatpush1.msra.mxu0 0.0
        %5782 = vmatprep.subr.mxu0 0.0
        %5783 = vmatpush1.msra.mxu0 0.0
        %5784 = vmatprep.subr.mxu0 0.0
        %5785 = vmatpush1.msra.mxu0 0.0
        %5786 = vmatprep.subr.mxu0 0.0
        %5787 = vmatpush1.msra.mxu0 0.0
        %5788 = vmatprep.subr.mxu0 0.0
        %5789 = vmatpush1.msra.mxu0 0.0
        %5790 = vmatprep.subr.mxu0 0.0
        %5791 = vmatpush1.msra.mxu0 0.0
        %5792 = vmatprep.subr.mxu0 0.0
        %5793 = vmatpush1.msra.mxu0 0.0
        %5794 = vmatprep.subr.mxu0 0.0
        %5795 = vmatpush1.msra.mxu0 0.0
        %5796 = vmatprep.subr.mxu0 0.0
        %5797 = vmatpush1.msra.mxu0 0.0
        %5798 = vmatprep.subr.mxu0 0.0
        %5799 = vmatpush1.msra.mxu0 0.0
        %5800 = vmatprep.subr.mxu0 0.0
        %5801 = vmatpush1.msra.mxu0 0.0
        %5802 = vmatprep.subr.mxu0 0.0
        %5803 = vmatpush1.msra.mxu0 0.0
        %5804 = vmatprep.subr.mxu0 0.0
        %5805 = vmatpush1.msra.mxu0 0.0
        %5806 = vmatprep.subr.mxu0 0.0
        %5807 = vmatpush1.msra.mxu0 0.0
        %5808 = vmatprep.subr.mxu0 0.0
        %5809 = vmatpush1.msra.mxu0 0.0
        %5810 = vmatprep.subr.mxu0 0.0
        %5811 = vmatpush1.msra.mxu0 0.0
        %5812 = vmatprep.subr.mxu0 0.0
        %5813 = vmatpush1.msra.mxu0 0.0
        %5814 = vmatprep.subr.mxu0 0.0
        %5815 = vmatpush1.msra.mxu0 0.0
        %5816 = vmatprep.subr.mxu0 0.0
        %5817 = vmatpush1.msra.mxu0 0.0
        %5818 = vmatprep.subr.mxu0 0.0
        %5819 = vmatpush1.msra.mxu0 0.0
        %5820 = vmatprep.mubr.f32.mxu0 0.0
        %5821 = vmatmul.mubr.f32.gmra.mrb[0].mxu0 %v4945
        %v5822 = vpop.f32.mrb[0].mxu0
        %v5823 = vadd.f32 0.0, %v5822
        %v5824 = vpop.f32.mrb[0].mxu0
        %5825 = vmatprep.mubr.f32.mxu0 0.0
        %5826 = vmatmul.mubr.f32.gmra.mrb[0].mxu0 %v4948
        %v5827 = vpop.f32.mrb[0].mxu0
        %v5828 = vadd.f32 0.0, %v5827
        %v5829 = vpop.f32.mrb[0].mxu0
        %5830 = vmatprep.mubr.f32.mxu0 0.0
        %5831 = vmatmul.mubr.f32.gmra.mrb[0].mxu0 %v4951
        %v5832 = vpop.f32.mrb[0].mxu0
        %v5833 = vadd.f32 0.0, %v5832
        %v5834 = vpop.f32.mrb[0].mxu0
        %5835 = vmatprep.mubr.f32.mxu0 0.0
        %5836 = vmatmul.mubr.f32.gmra.mrb[0].mxu0 %v4954
        %v5837 = vpop.f32.mrb[0].mxu0
        %v5838 = vadd.f32 0.0, %v5837
        %v5839 = vpop.f32.mrb[0].mxu0
        %5840 = vmatprep.mubr.f32.mxu0 0.0
        %5841 = vmatmul.mubr.f32.gmra.mrb[0].mxu0 %v4957
        %v5842 = vpop.f32.mrb[0].mxu0
        %v5843 = vadd.f32 0.0, %v5842
        %v5844 = vpop.f32.mrb[0].mxu0
        %5845 = vmatprep.mubr.f32.mxu0 0.0
        %5846 = vmatmul.mubr.f32.gmra.mrb[0].mxu0 %v4960
        %v5847 = vpop.f32.mrb[0].mxu0
        %v5848 = vadd.f32 0.0, %v5847
        %v5849 = vpop.f32.mrb[0].mxu0
        %5850 = vmatprep.mubr.f32.mxu0 0.0
        %5851 = vmatmul.mubr.f32.gmra.mrb[0].mxu0 %v4963
        %v5852 = vpop.f32.mrb[0].mxu0
        %v5853 = vadd.f32 0.0, %v5852
        %v5854 = vpop.f32.mrb[0].mxu0
        %5855 = vmatprep.mubr.f32.mxu0 0.0
        %5856 = vmatmul.mubr.f32.gmra.mrb[0].mxu0 %v4966
        %v5857 = vpop.f32.mrb[0].mxu0
        %v5858 = vadd.f32 0.0, %v5857
        %v5859 = vpop.f32.mrb[0].mxu0
        %5860 = vmatprep.mubr.f32.mxu0 0.0
        %5861 = vmatmul.mubr.f32.gmra.mrb[0].mxu0 %v4969
        %v5862 = vpop.f32.mrb[0].mxu0
        %v5863 = vadd.f32 0.0, %v5862
        %v5864 = vpop.f32.mrb[0].mxu0
        %5865 = vmatprep.mubr.f32.mxu0 0.0
        %5866 = vmatmul.mubr.f32.gmra.mrb[0].mxu0 %v4972
        %v5867 = vpop.f32.mrb[0].mxu0
        %v5868 = vadd.f32 0.0, %v5867
        %v5869 = vpop.f32.mrb[0].mxu0
        %5870 = vmatprep.mubr.f32.mxu0 0.0
        %5871 = vmatmul.mubr.f32.gmra.mrb[0].mxu0 %v4975
        %v5872 = vpop.f32.mrb[0].mxu0
        %v5873 = vadd.f32 0.0, %v5872
        %v5874 = vpop.f32.mrb[0].mxu0
        %5875 = vmatprep.mubr.f32.mxu0 0.0
        %5876 = vmatmul.mubr.f32.gmra.mrb[0].mxu0 %v4978
        %v5877 = vpop.f32.mrb[0].mxu0
        %v5878 = vadd.f32 0.0, %v5877
        %v5879 = vpop.f32.mrb[0].mxu0
        %5880 = vmatprep.mubr.f32.mxu0 0.0
        %5881 = vmatmul.mubr.f32.gmra.mrb[0].mxu0 %v4981
        %v5882 = vpop.f32.mrb[0].mxu0
        %v5883 = vadd.f32 0.0, %v5882
        %v5884 = vpop.f32.mrb[0].mxu0
        %5885 = vmatprep.mubr.f32.mxu0 0.0
        %5886 = vmatmul.mubr.f32.gmra.mrb[0].mxu0 %v4984
        %v5887 = vpop.f32.mrb[0].mxu0
        %v5888 = vadd.f32 0.0, %v5887
        %v5889 = vpop.f32.mrb[0].mxu0
        %5890 = vmatprep.mubr.f32.mxu0 0.0
        %5891 = vmatmul.mubr.f32.gmra.mrb[0].mxu0 %v4987
        %v5892 = vpop.f32.mrb[0].mxu0
        %v5893 = vadd.f32 0.0, %v5892
        %v5894 = vpop.f32.mrb[0].mxu0
        %5895 = vmatprep.mubr.f32.mxu0 0.0
        %5896 = vmatmul.mubr.f32.gmra.mrb[0].mxu0 %v4990
        %v5897 = vpop.f32.mrb[0].mxu0
        %v5898 = vadd.f32 0.0, %v5897
        %v5899 = vpop.f32.mrb[0].mxu0
        %5900 = vdwg.mxu0
        %5901 = vmax.xlane.f32.xlu0 %v5823
        %v5902 = vpop.xlane.xlu0 %5901
        %5903 = vmax.xlane.f32.xlu0 %v5828
        %v5904 = vpop.xlane.xlu0 %5903
        %5905 = vmax.xlane.f32.xlu0 %v5833
        %v5906 = vpop.xlane.xlu0 %5905
        %5907 = vmax.xlane.f32.xlu0 %v5838
        %v5908 = vpop.xlane.xlu0 %5907
        %5909 = vmax.xlane.f32.xlu0 %v5843
        %v5910 = vpop.xlane.xlu0 %5909
        %5911 = vmax.xlane.f32.xlu0 %v5848
        %v5912 = vpop.xlane.xlu0 %5911
        %5913 = vmax.xlane.f32.xlu0 %v5853
        %v5914 = vpop.xlane.xlu0 %5913
        %5915 = vmax.xlane.f32.xlu0 %v5858
        %v5916 = vpop.xlane.xlu0 %5915
        %5917 = vmax.xlane.f32.xlu0 %v5863
        %v5918 = vpop.xlane.xlu0 %5917
        %5919 = vmax.xlane.f32.xlu0 %v5868
        %v5920 = vpop.xlane.xlu0 %5919
        %5921 = vmax.xlane.f32.xlu0 %v5873
        %v5922 = vpop.xlane.xlu0 %5921
        %5923 = vmax.xlane.f32.xlu0 %v5878
        %v5924 = vpop.xlane.xlu0 %5923
        %5925 = vmax.xlane.f32.xlu0 %v5883
        %v5926 = vpop.xlane.xlu0 %5925
        %5927 = vmax.xlane.f32.xlu0 %v5888
        %v5928 = vpop.xlane.xlu0 %5927
        %5929 = vmax.xlane.f32.xlu0 %v5893
        %v5930 = vpop.xlane.xlu0 %5929
        %5931 = vmax.xlane.f32.xlu0 %v5898
        %v5932 = vpop.xlane.xlu0 %5931
        %v5933 = vsub.f32 %v5823, %v5902
        %v5934 = vsub.f32 %v5828, %v5904
        %v5935 = vsub.f32 %v5833, %v5906
        %v5936 = vsub.f32 %v5838, %v5908
        %v5937 = vsub.f32 %v5843, %v5910
        %v5938 = vsub.f32 %v5848, %v5912
        %v5939 = vsub.f32 %v5853, %v5914
        %v5940 = vsub.f32 %v5858, %v5916
        %v5941 = vsub.f32 %v5863, %v5918
        %v5942 = vsub.f32 %v5868, %v5920
        %v5943 = vsub.f32 %v5873, %v5922
        %v5944 = vsub.f32 %v5878, %v5924
        %v5945 = vsub.f32 %v5883, %v5926
        %v5946 = vsub.f32 %v5888, %v5928
        %v5947 = vsub.f32 %v5893, %v5930
        %v5948 = vsub.f32 %v5898, %v5932
        %v5949 = vmul.f32 %v5933, 1.442695
        %v5950 = vpow.pop %v5949
        %v5951 = vmul.f32 %v5934, 1.442695
        %v5952 = vpow.pop %v5951
        %v5953 = vmul.f32 %v5935, 1.442695
        %v5954 = vpow.pop %v5953
        %v5955 = vmul.f32 %v5936, 1.442695
        %v5956 = vpow.pop %v5955
        %v5957 = vmul.f32 %v5937, 1.442695
        %v5958 = vpow.pop %v5957
        %v5959 = vmul.f32 %v5938, 1.442695
        %v5960 = vpow.pop %v5959
        %v5961 = vmul.f32 %v5939, 1.442695
        %v5962 = vpow.pop %v5961
        %v5963 = vmul.f32 %v5940, 1.442695
        %v5964 = vpow.pop %v5963
        %v5965 = vmul.f32 %v5941, 1.442695
        %v5966 = vpow.pop %v5965
        %v5967 = vmul.f32 %v5942, 1.442695
        %v5968 = vpow.pop %v5967
        %v5969 = vmul.f32 %v5943, 1.442695
        %v5970 = vpow.pop %v5969
        %v5971 = vmul.f32 %v5944, 1.442695
        %v5972 = vpow.pop %v5971
        %v5973 = vmul.f32 %v5945, 1.442695
        %v5974 = vpow.pop %v5973
        %v5975 = vmul.f32 %v5946, 1.442695
        %v5976 = vpow.pop %v5975
        %v5977 = vmul.f32 %v5947, 1.442695
        %v5978 = vpow.pop %v5977
        %v5979 = vmul.f32 %v5948, 1.442695
        %v5980 = vpow.pop %v5979
        %5981 = vadd.xlane.f32.xlu0 %v5950
        %v5982 = vpop.xlane.xlu0 %5981
        %5983 = vadd.xlane.f32.xlu0 %v5952
        %v5984 = vpop.xlane.xlu0 %5983
        %5985 = vadd.xlane.f32.xlu0 %v5954
        %v5986 = vpop.xlane.xlu0 %5985
        %5987 = vadd.xlane.f32.xlu0 %v5956
        %v5988 = vpop.xlane.xlu0 %5987
        %5989 = vadd.xlane.f32.xlu0 %v5958
        %v5990 = vpop.xlane.xlu0 %5989
        %5991 = vadd.xlane.f32.xlu0 %v5960
        %v5992 = vpop.xlane.xlu0 %5991
        %5993 = vadd.xlane.f32.xlu0 %v5962
        %v5994 = vpop.xlane.xlu0 %5993
        %5995 = vadd.xlane.f32.xlu0 %v5964
        %v5996 = vpop.xlane.xlu0 %5995
        %5997 = vadd.xlane.f32.xlu0 %v5966
        %v5998 = vpop.xlane.xlu0 %5997
        %5999 = vadd.xlane.f32.xlu0 %v5968
        %v6000 = vpop.xlane.xlu0 %5999
        %6001 = vadd.xlane.f32.xlu0 %v5970
        %v6002 = vpop.xlane.xlu0 %6001
        %6003 = vadd.xlane.f32.xlu0 %v5972
        %v6004 = vpop.xlane.xlu0 %6003
        %6005 = vadd.xlane.f32.xlu0 %v5974
        %v6006 = vpop.xlane.xlu0 %6005
        %6007 = vadd.xlane.f32.xlu0 %v5976
        %v6008 = vpop.xlane.xlu0 %6007
        %6009 = vadd.xlane.f32.xlu0 %v5978
        %v6010 = vpop.xlane.xlu0 %6009
        %6011 = vadd.xlane.f32.xlu0 %v5980
        %v6012 = vpop.xlane.xlu0 %6011
        %v6013 = vrcp.pop %v5982
        %v6014 = vrcp.pop %v5984
        %v6015 = vrcp.pop %v5986
        %v6016 = vrcp.pop %v5988
        %v6017 = vrcp.pop %v5990
        %v6018 = vrcp.pop %v5992
        %v6019 = vrcp.pop %v5994
        %v6020 = vrcp.pop %v5996
        %v6021 = vrcp.pop %v5998
        %v6022 = vrcp.pop %v6000
        %v6023 = vrcp.pop %v6002
        %v6024 = vrcp.pop %v6004
        %v6025 = vrcp.pop %v6006
        %v6026 = vrcp.pop %v6008
        %v6027 = vrcp.pop %v6010
        %v6028 = vrcp.pop %v6012
        %v6029 = vmul.f32 %v5950, %v6013
        %v6030 = vmul.f32 %v5952, %v6014
        %v6031 = vmul.f32 %v5954, %v6015
        %v6032 = vmul.f32 %v5956, %v6016
        %v6033 = vmul.f32 %v5958, %v6017
        %v6034 = vmul.f32 %v5960, %v6018
        %v6035 = vmul.f32 %v5962, %v6019
        %v6036 = vmul.f32 %v5964, %v6020
        %v6037 = vmul.f32 %v5966, %v6021
        %v6038 = vmul.f32 %v5968, %v6022
        %v6039 = vmul.f32 %v5970, %v6023
        %v6040 = vmul.f32 %v5972, %v6024
        %v6041 = vmul.f32 %v5974, %v6025
        %v6042 = vmul.f32 %v5976, %v6026
        %v6043 = vmul.f32 %v5978, %v6027
        %v6044 = vmul.f32 %v5980, %v6028
        %v6045 = vsel %vm1636, %v4890, 0.0
        %v6046 = vsel %vm1637, %v4895, 0.0
        %v6047 = vsel %vm1638, %v4900, 0.0
        %v6048 = vsel %vm1639, %v4905, 0.0
        %6049 = vmatprep.subr.mxu0 0.0
        %6050 = vmatpush1.xpose.msra.mxu0 %v6029
        %6051 = vmatprep.subr.mxu0 0.0
        %6052 = vmatpush1.xpose.msra.mxu0 %v6030
        %6053 = vmatprep.subr.mxu0 0.0
        %6054 = vmatpush1.xpose.msra.mxu0 %v6031
        %6055 = vmatprep.subr.mxu0 0.0
        %6056 = vmatpush1.xpose.msra.mxu0 %v6032
        %6057 = vmatprep.subr.mxu0 0.0
        %6058 = vmatpush1.xpose.msra.mxu0 %v6033
        %6059 = vmatprep.subr.mxu0 0.0
        %6060 = vmatpush1.xpose.msra.mxu0 %v6034
        %6061 = vmatprep.subr.mxu0 0.0
        %6062 = vmatpush1.xpose.msra.mxu0 %v6035
        %6063 = vmatprep.subr.mxu0 0.0
        %6064 = vmatpush1.xpose.msra.mxu0 %v6036
        %6065 = vmatprep.subr.mxu0 0.0
        %6066 = vmatpush1.xpose.msra.mxu0 %v6037
        %6067 = vmatprep.subr.mxu0 0.0
        %6068 = vmatpush1.xpose.msra.mxu0 %v6038
        %6069 = vmatprep.subr.mxu0 0.0
        %6070 = vmatpush1.xpose.msra.mxu0 %v6039
        %6071 = vmatprep.subr.mxu0 0.0
        %6072 = vmatpush1.xpose.msra.mxu0 %v6040
        %6073 = vmatprep.subr.mxu0 0.0
        %6074 = vmatpush1.xpose.msra.mxu0 %v6041
        %6075 = vmatprep.subr.mxu0 0.0
        %6076 = vmatpush1.xpose.msra.mxu0 %v6042
        %6077 = vmatprep.subr.mxu0 0.0
        %6078 = vmatpush1.xpose.msra.mxu0 %v6043
        %6079 = vmatprep.subr.mxu0 0.0
        %6080 = vmatpush1.xpose.msra.mxu0 %v6044
        %6081 = vmatprep.subr.mxu0 0.0
        %6082 = vmatpush1.xpose.msra.mxu0 0.0
        %6083 = vmatprep.subr.mxu0 0.0
        %6084 = vmatpush1.xpose.msra.mxu0 0.0
        %6085 = vmatprep.subr.mxu0 0.0
        %6086 = vmatpush1.xpose.msra.mxu0 0.0
        %6087 = vmatprep.subr.mxu0 0.0
        %6088 = vmatpush1.xpose.msra.mxu0 0.0
        %6089 = vmatprep.subr.mxu0 0.0
        %6090 = vmatpush1.xpose.msra.mxu0 0.0
        %6091 = vmatprep.subr.mxu0 0.0
        %6092 = vmatpush1.xpose.msra.mxu0 0.0
        %6093 = vmatprep.subr.mxu0 0.0
        %6094 = vmatpush1.xpose.msra.mxu0 0.0
        %6095 = vmatprep.subr.mxu0 0.0
        %6096 = vmatpush1.xpose.msra.mxu0 0.0
        %6097 = vmatprep.subr.mxu0 0.0
        %6098 = vmatpush1.xpose.msra.mxu0 0.0
        %6099 = vmatprep.subr.mxu0 0.0
        %6100 = vmatpush1.xpose.msra.mxu0 0.0
        %6101 = vmatprep.subr.mxu0 0.0
        %6102 = vmatpush1.xpose.msra.mxu0 0.0
        %6103 = vmatprep.subr.mxu0 0.0
        %6104 = vmatpush1.xpose.msra.mxu0 0.0
        %6105 = vmatprep.subr.mxu0 0.0
        %6106 = vmatpush1.xpose.msra.mxu0 0.0
        %6107 = vmatprep.subr.mxu0 0.0
        %6108 = vmatpush1.xpose.msra.mxu0 0.0
        %6109 = vmatprep.subr.mxu0 0.0
        %6110 = vmatpush1.xpose.msra.mxu0 0.0
        %6111 = vmatprep.subr.mxu0 0.0
        %6112 = vmatpush1.xpose.msra.mxu0 0.0
        %6113 = vmatprep.mubr.f32.mxu0 0.0
        %6114 = vmatmul.mubr.f32.gmra.mrb[0].mxu0 %v6045
        %v6115 = vpop.f32.mrb[0].mxu0
        %v6116 = vadd.f32 0.0, %v6115
        %v6117 = vpop.f32.mrb[0].mxu0
        %6118 = vmatprep.mubr.f32.mxu0 0.0
        %6119 = vmatmul.mubr.f32.gmra.mrb[0].mxu0 %v6046
        %v6120 = vpop.f32.mrb[0].mxu0
        %v6121 = vadd.f32 0.0, %v6120
        %v6122 = vpop.f32.mrb[0].mxu0
        %6123 = vmatprep.mubr.f32.mxu0 0.0
        %6124 = vmatmul.mubr.f32.gmra.mrb[0].mxu0 %v6047
        %v6125 = vpop.f32.mrb[0].mxu0
        %v6126 = vadd.f32 0.0, %v6125
        %v6127 = vpop.f32.mrb[0].mxu0
        %6128 = vmatprep.mubr.f32.mxu0 0.0
        %6129 = vmatmul.mubr.f32.gmra.mrb[0].mxu0 %v6048
        %v6130 = vpop.f32.mrb[0].mxu0
        %v6131 = vadd.f32 0.0, %v6130
        %v6132 = vpop.f32.mrb[0].mxu0
        %6133 = vdwg.mxu0
        %v6134 = vadd.f32 %v5734, %v6116
        %v6135 = vadd.f32 %v5739, %v6121
        %v6136 = vadd.f32 %v5744, %v6126
        %v6137 = vadd.f32 %v5749, %v6131
        %v6138 = vsel %vm2042, %v4870, 0.0
        %v6139 = vsel %vm2043, %v4875, 0.0
        %v6140 = vsel %vm2044, %v4880, 0.0
        %v6141 = vsel %vm2045, %v4885, 0.0
        %6142 = vmatprep.subr.mxu0 0.0
        %6143 = vmatpush1.msra.mxu0 %v6138
        %6144 = vmatprep.subr.mxu0 0.0
        %6145 = vmatpush1.msra.mxu0 %v6139
        %6146 = vmatprep.subr.mxu0 0.0
        %6147 = vmatpush1.msra.mxu0 %v6140
        %6148 = vmatprep.subr.mxu0 0.0
        %6149 = vmatpush1.msra.mxu0 %v6141
        %6150 = vmatprep.subr.mxu0 0.0
        %6151 = vmatpush1.msra.mxu0 0.0
        %6152 = vmatprep.subr.mxu0 0.0
        %6153 = vmatpush1.msra.mxu0 0.0
        %6154 = vmatprep.subr.mxu0 0.0
        %6155 = vmatpush1.msra.mxu0 0.0
        %6156 = vmatprep.subr.mxu0 0.0
        %6157 = vmatpush1.msra.mxu0 0.0
        %6158 = vmatprep.subr.mxu0 0.0
        %6159 = vmatpush1.msra.mxu0 0.0
        %6160 = vmatprep.subr.mxu0 0.0
        %6161 = vmatpush1.msra.mxu0 0.0
        %6162 = vmatprep.subr.mxu0 0.0
        %6163 = vmatpush1.msra.mxu0 0.0
        %6164 = vmatprep.subr.mxu0 0.0
        %6165 = vmatpush1.msra.mxu0 0.0
        %6166 = vmatprep.subr.mxu0 0.0
        %6167 = vmatpush1.msra.mxu0 0.0
        %6168 = vmatprep.subr.mxu0 0.0
        %6169 = vmatpush1.msra.mxu0 0.0
        %6170 = vmatprep.subr.mxu0 0.0
        %6171 = vmatpush1.msra.mxu0 0.0
        %6172 = vmatprep.subr.mxu0 0.0
        %6173 = vmatpush1.msra.mxu0 0.0
        %6174 = vmatprep.subr.mxu0 0.0
        %6175 = vmatpush1.msra.mxu0 0.0
        %6176 = vmatprep.subr.mxu0 0.0
        %6177 = vmatpush1.msra.mxu0 0.0
        %6178 = vmatprep.subr.mxu0 0.0
        %6179 = vmatpush1.msra.mxu0 0.0
        %6180 = vmatprep.subr.mxu0 0.0
        %6181 = vmatpush1.msra.mxu0 0.0
        %6182 = vmatprep.subr.mxu0 0.0
        %6183 = vmatpush1.msra.mxu0 0.0
        %6184 = vmatprep.subr.mxu0 0.0
        %6185 = vmatpush1.msra.mxu0 0.0
        %6186 = vmatprep.subr.mxu0 0.0
        %6187 = vmatpush1.msra.mxu0 0.0
        %6188 = vmatprep.subr.mxu0 0.0
        %6189 = vmatpush1.msra.mxu0 0.0
        %6190 = vmatprep.subr.mxu0 0.0
        %6191 = vmatpush1.msra.mxu0 0.0
        %6192 = vmatprep.subr.mxu0 0.0
        %6193 = vmatpush1.msra.mxu0 0.0
        %6194 = vmatprep.subr.mxu0 0.0
        %6195 = vmatpush1.msra.mxu0 0.0
        %6196 = vmatprep.subr.mxu0 0.0
        %6197 = vmatpush1.msra.mxu0 0.0
        %6198 = vmatprep.subr.mxu0 0.0
        %6199 = vmatpush1.msra.mxu0 0.0
        %6200 = vmatprep.subr.mxu0 0.0
        %6201 = vmatpush1.msra.mxu0 0.0
        %6202 = vmatprep.subr.mxu0 0.0
        %6203 = vmatpush1.msra.mxu0 0.0
        %6204 = vmatprep.subr.mxu0 0.0
        %6205 = vmatpush1.msra.mxu0 0.0
        %6206 = vmatprep.mubr.f32.mxu0 0.0
        %6207 = vmatmul.mubr.f32.gmra.mrb[0].mxu0 %v4945
        %v6208 = vpop.f32.mrb[0].mxu0
        %v6209 = vadd.f32 0.0, %v6208
        %v6210 = vpop.f32.mrb[0].mxu0
        %6211 = vmatprep.mubr.f32.mxu0 0.0
        %6212 = vmatmul.mubr.f32.gmra.mrb[0].mxu0 %v4948
        %v6213 = vpop.f32.mrb[0].mxu0
        %v6214 = vadd.f32 0.0, %v6213
        %v6215 = vpop.f32.mrb[0].mxu0
        %6216 = vmatprep.mubr.f32.mxu0 0.0
        %6217 = vmatmul.mubr.f32.gmra.mrb[0].mxu0 %v4951
        %v6218 = vpop.f32.mrb[0].mxu0
        %v6219 = vadd.f32 0.0, %v6218
        %v6220 = vpop.f32.mrb[0].mxu0
        %6221 = vmatprep.mubr.f32.mxu0 0.0
        %6222 = vmatmul.mubr.f32.gmra.mrb[0].mxu0 %v4954
        %v6223 = vpop.f32.mrb[0].mxu0
        %v6224 = vadd.f32 0.0, %v6223
        %v6225 = vpop.f32.mrb[0].mxu0
        %6226 = vmatprep.mubr.f32.mxu0 0.0
        %6227 = vmatmul.mubr.f32.gmra.mrb[0].mxu0 %v4957
        %v6228 = vpop.f32.mrb[0].mxu0
        %v6229 = vadd.f32 0.0, %v6228
        %v6230 = vpop.f32.mrb[0].mxu0
        %6231 = vmatprep.mubr.f32.mxu0 0.0
        %6232 = vmatmul.mubr.f32.gmra.mrb[0].mxu0 %v4960
        %v6233 = vpop.f32.mrb[0].mxu0
        %v6234 = vadd.f32 0.0, %v6233
        %v6235 = vpop.f32.mrb[0].mxu0
        %6236 = vmatprep.mubr.f32.mxu0 0.0
        %6237 = vmatmul.mubr.f32.gmra.mrb[0].mxu0 %v4963
        %v6238 = vpop.f32.mrb[0].mxu0
        %v6239 = vadd.f32 0.0, %v6238
        %v6240 = vpop.f32.mrb[0].mxu0
        %6241 = vmatprep.mubr.f32.mxu0 0.0
        %6242 = vmatmul.mubr.f32.gmra.mrb[0].mxu0 %v4966
        %v6243 = vpop.f32.mrb[0].mxu0
        %v6244 = vadd.f32 0.0, %v6243
        %v6245 = vpop.f32.mrb[0].mxu0
        %6246 = vmatprep.mubr.f32.mxu0 0.0
        %6247 = vmatmul.mubr.f32.gmra.mrb[0].mxu0 %v4969
        %v6248 = vpop.f32.mrb[0].mxu0
        %v6249 = vadd.f32 0.0, %v6248
        %v6250 = vpop.f32.mrb[0].mxu0
        %6251 = vmatprep.mubr.f32.mxu0 0.0
        %6252 = vmatmul.mubr.f32.gmra.mrb[0].mxu0 %v4972
        %v6253 = vpop.f32.mrb[0].mxu0
        %v6254 = vadd.f32 0.0, %v6253
        %v6255 = vpop.f32.mrb[0].mxu0
        %6256 = vmatprep.mubr.f32.mxu0 0.0
        %6257 = vmatmul.mubr.f32.gmra.mrb[0].mxu0 %v4975
        %v6258 = vpop.f32.mrb[0].mxu0
        %v6259 = vadd.f32 0.0, %v6258
        %v6260 = vpop.f32.mrb[0].mxu0
        %6261 = vmatprep.mubr.f32.mxu0 0.0
        %6262 = vmatmul.mubr.f32.gmra.mrb[0].mxu0 %v4978
        %v6263 = vpop.f32.mrb[0].mxu0
        %v6264 = vadd.f32 0.0, %v6263
        %v6265 = vpop.f32.mrb[0].mxu0
        %6266 = vmatprep.mubr.f32.mxu0 0.0
        %6267 = vmatmul.mubr.f32.gmra.mrb[0].mxu0 %v4981
        %v6268 = vpop.f32.mrb[0].mxu0
        %v6269 = vadd.f32 0.0, %v6268
        %v6270 = vpop.f32.mrb[0].mxu0
        %6271 = vmatprep.mubr.f32.mxu0 0.0
        %6272 = vmatmul.mubr.f32.gmra.mrb[0].mxu0 %v4984
        %v6273 = vpop.f32.mrb[0].mxu0
        %v6274 = vadd.f32 0.0, %v6273
        %v6275 = vpop.f32.mrb[0].mxu0
        %6276 = vmatprep.mubr.f32.mxu0 0.0
        %6277 = vmatmul.mubr.f32.gmra.mrb[0].mxu0 %v4987
        %v6278 = vpop.f32.mrb[0].mxu0
        %v6279 = vadd.f32 0.0, %v6278
        %v6280 = vpop.f32.mrb[0].mxu0
        %6281 = vmatprep.mubr.f32.mxu0 0.0
        %6282 = vmatmul.mubr.f32.gmra.mrb[0].mxu0 %v4990
        %v6283 = vpop.f32.mrb[0].mxu0
        %v6284 = vadd.f32 0.0, %v6283
        %v6285 = vpop.f32.mrb[0].mxu0
        %6286 = vdwg.mxu0
        %6287 = vmax.xlane.f32.xlu0 %v6209
        %v6288 = vpop.xlane.xlu0 %6287
        %6289 = vmax.xlane.f32.xlu0 %v6214
        %v6290 = vpop.xlane.xlu0 %6289
        %6291 = vmax.xlane.f32.xlu0 %v6219
        %v6292 = vpop.xlane.xlu0 %6291
        %6293 = vmax.xlane.f32.xlu0 %v6224
        %v6294 = vpop.xlane.xlu0 %6293
        %6295 = vmax.xlane.f32.xlu0 %v6229
        %v6296 = vpop.xlane.xlu0 %6295
        %6297 = vmax.xlane.f32.xlu0 %v6234
        %v6298 = vpop.xlane.xlu0 %6297
        %6299 = vmax.xlane.f32.xlu0 %v6239
        %v6300 = vpop.xlane.xlu0 %6299
        %6301 = vmax.xlane.f32.xlu0 %v6244
        %v6302 = vpop.xlane.xlu0 %6301
        %6303 = vmax.xlane.f32.xlu0 %v6249
        %v6304 = vpop.xlane.xlu0 %6303
        %6305 = vmax.xlane.f32.xlu0 %v6254
        %v6306 = vpop.xlane.xlu0 %6305
        %6307 = vmax.xlane.f32.xlu0 %v6259
        %v6308 = vpop.xlane.xlu0 %6307
        %6309 = vmax.xlane.f32.xlu0 %v6264
        %v6310 = vpop.xlane.xlu0 %6309
        %6311 = vmax.xlane.f32.xlu0 %v6269
        %v6312 = vpop.xlane.xlu0 %6311
        %6313 = vmax.xlane.f32.xlu0 %v6274
        %v6314 = vpop.xlane.xlu0 %6313
        %6315 = vmax.xlane.f32.xlu0 %v6279
        %v6316 = vpop.xlane.xlu0 %6315
        %6317 = vmax.xlane.f32.xlu0 %v6284
        %v6318 = vpop.xlane.xlu0 %6317
        %v6319 = vsub.f32 %v6209, %v6288
        %v6320 = vsub.f32 %v6214, %v6290
        %v6321 = vsub.f32 %v6219, %v6292
        %v6322 = vsub.f32 %v6224, %v6294
        %v6323 = vsub.f32 %v6229, %v6296
        %v6324 = vsub.f32 %v6234, %v6298
        %v6325 = vsub.f32 %v6239, %v6300
        %v6326 = vsub.f32 %v6244, %v6302
        %v6327 = vsub.f32 %v6249, %v6304
        %v6328 = vsub.f32 %v6254, %v6306
        %v6329 = vsub.f32 %v6259, %v6308
        %v6330 = vsub.f32 %v6264, %v6310
        %v6331 = vsub.f32 %v6269, %v6312
        %v6332 = vsub.f32 %v6274, %v6314
        %v6333 = vsub.f32 %v6279, %v6316
        %v6334 = vsub.f32 %v6284, %v6318
        %v6335 = vmul.f32 %v6319, 1.442695
        %v6336 = vpow.pop %v6335
        %v6337 = vmul.f32 %v6320, 1.442695
        %v6338 = vpow.pop %v6337
        %v6339 = vmul.f32 %v6321, 1.442695
        %v6340 = vpow.pop %v6339
        %v6341 = vmul.f32 %v6322, 1.442695
        %v6342 = vpow.pop %v6341
        %v6343 = vmul.f32 %v6323, 1.442695
        %v6344 = vpow.pop %v6343
        %v6345 = vmul.f32 %v6324, 1.442695
        %v6346 = vpow.pop %v6345
        %v6347 = vmul.f32 %v6325, 1.442695
        %v6348 = vpow.pop %v6347
        %v6349 = vmul.f32 %v6326, 1.442695
        %v6350 = vpow.pop %v6349
        %v6351 = vmul.f32 %v6327, 1.442695
        %v6352 = vpow.pop %v6351
        %v6353 = vmul.f32 %v6328, 1.442695
        %v6354 = vpow.pop %v6353
        %v6355 = vmul.f32 %v6329, 1.442695
        %v6356 = vpow.pop %v6355
        %v6357 = vmul.f32 %v6330, 1.442695
        %v6358 = vpow.pop %v6357
        %v6359 = vmul.f32 %v6331, 1.442695
        %v6360 = vpow.pop %v6359
        %v6361 = vmul.f32 %v6332, 1.442695
        %v6362 = vpow.pop %v6361
        %v6363 = vmul.f32 %v6333, 1.442695
        %v6364 = vpow.pop %v6363
        %v6365 = vmul.f32 %v6334, 1.442695
        %v6366 = vpow.pop %v6365
        %6367 = vadd.xlane.f32.xlu0 %v6336
        %v6368 = vpop.xlane.xlu0 %6367
        %6369 = vadd.xlane.f32.xlu0 %v6338
        %v6370 = vpop.xlane.xlu0 %6369
        %6371 = vadd.xlane.f32.xlu0 %v6340
        %v6372 = vpop.xlane.xlu0 %6371
        %6373 = vadd.xlane.f32.xlu0 %v6342
        %v6374 = vpop.xlane.xlu0 %6373
        %6375 = vadd.xlane.f32.xlu0 %v6344
        %v6376 = vpop.xlane.xlu0 %6375
        %6377 = vadd.xlane.f32.xlu0 %v6346
        %v6378 = vpop.xlane.xlu0 %6377
        %6379 = vadd.xlane.f32.xlu0 %v6348
        %v6380 = vpop.xlane.xlu0 %6379
        %6381 = vadd.xlane.f32.xlu0 %v6350
        %v6382 = vpop.xlane.xlu0 %6381
        %6383 = vadd.xlane.f32.xlu0 %v6352
        %v6384 = vpop.xlane.xlu0 %6383
        %6385 = vadd.xlane.f32.xlu0 %v6354
        %v6386 = vpop.xlane.xlu0 %6385
        %6387 = vadd.xlane.f32.xlu0 %v6356
        %v6388 = vpop.xlane.xlu0 %6387
        %6389 = vadd.xlane.f32.xlu0 %v6358
        %v6390 = vpop.xlane.xlu0 %6389
        %6391 = vadd.xlane.f32.xlu0 %v6360
        %v6392 = vpop.xlane.xlu0 %6391
        %6393 = vadd.xlane.f32.xlu0 %v6362
        %v6394 = vpop.xlane.xlu0 %6393
        %6395 = vadd.xlane.f32.xlu0 %v6364
        %v6396 = vpop.xlane.xlu0 %6395
        %6397 = vadd.xlane.f32.xlu0 %v6366
        %v6398 = vpop.xlane.xlu0 %6397
        %v6399 = vrcp.pop %v6368
        %v6400 = vrcp.pop %v6370
        %v6401 = vrcp.pop %v6372
        %v6402 = vrcp.pop %v6374
        %v6403 = vrcp.pop %v6376
        %v6404 = vrcp.pop %v6378
        %v6405 = vrcp.pop %v6380
        %v6406 = vrcp.pop %v6382
        %v6407 = vrcp.pop %v6384
        %v6408 = vrcp.pop %v6386
        %v6409 = vrcp.pop %v6388
        %v6410 = vrcp.pop %v6390
        %v6411 = vrcp.pop %v6392
        %v6412 = vrcp.pop %v6394
        %v6413 = vrcp.pop %v6396
        %v6414 = vrcp.pop %v6398
        %v6415 = vmul.f32 %v6336, %v6399
        %v6416 = vmul.f32 %v6338, %v6400
        %v6417 = vmul.f32 %v6340, %v6401
        %v6418 = vmul.f32 %v6342, %v6402
        %v6419 = vmul.f32 %v6344, %v6403
        %v6420 = vmul.f32 %v6346, %v6404
        %v6421 = vmul.f32 %v6348, %v6405
        %v6422 = vmul.f32 %v6350, %v6406
        %v6423 = vmul.f32 %v6352, %v6407
        %v6424 = vmul.f32 %v6354, %v6408
        %v6425 = vmul.f32 %v6356, %v6409
        %v6426 = vmul.f32 %v6358, %v6410
        %v6427 = vmul.f32 %v6360, %v6411
        %v6428 = vmul.f32 %v6362, %v6412
        %v6429 = vmul.f32 %v6364, %v6413
        %v6430 = vmul.f32 %v6366, %v6414
        %v6431 = vsel %vm2042, %v4890, 0.0
        %v6432 = vsel %vm2043, %v4895, 0.0
        %v6433 = vsel %vm2044, %v4900, 0.0
        %v6434 = vsel %vm2045, %v4905, 0.0
        %6435 = vmatprep.subr.mxu0 0.0
        %6436 = vmatpush1.xpose.msra.mxu0 %v6415
        %6437 = vmatprep.subr.mxu0 0.0
        %6438 = vmatpush1.xpose.msra.mxu0 %v6416
        %6439 = vmatprep.subr.mxu0 0.0
        %6440 = vmatpush1.xpose.msra.mxu0 %v6417
        %6441 = vmatprep.subr.mxu0 0.0
        %6442 = vmatpush1.xpose.msra.mxu0 %v6418
        %6443 = vmatprep.subr.mxu0 0.0
        %6444 = vmatpush1.xpose.msra.mxu0 %v6419
        %6445 = vmatprep.subr.mxu0 0.0
        %6446 = vmatpush1.xpose.msra.mxu0 %v6420
        %6447 = vmatprep.subr.mxu0 0.0
        %6448 = vmatpush1.xpose.msra.mxu0 %v6421
        %6449 = vmatprep.subr.mxu0 0.0
        %6450 = vmatpush1.xpose.msra.mxu0 %v6422
        %6451 = vmatprep.subr.mxu0 0.0
        %6452 = vmatpush1.xpose.msra.mxu0 %v6423
        %6453 = vmatprep.subr.mxu0 0.0
        %6454 = vmatpush1.xpose.msra.mxu0 %v6424
        %6455 = vmatprep.subr.mxu0 0.0
        %6456 = vmatpush1.xpose.msra.mxu0 %v6425
        %6457 = vmatprep.subr.mxu0 0.0
        %6458 = vmatpush1.xpose.msra.mxu0 %v6426
        %6459 = vmatprep.subr.mxu0 0.0
        %6460 = vmatpush1.xpose.msra.mxu0 %v6427
        %6461 = vmatprep.subr.mxu0 0.0
        %6462 = vmatpush1.xpose.msra.mxu0 %v6428
        %6463 = vmatprep.subr.mxu0 0.0
        %6464 = vmatpush1.xpose.msra.mxu0 %v6429
        %6465 = vmatprep.subr.mxu0 0.0
        %6466 = vmatpush1.xpose.msra.mxu0 %v6430
        %6467 = vmatprep.subr.mxu0 0.0
        %6468 = vmatpush1.xpose.msra.mxu0 0.0
        %6469 = vmatprep.subr.mxu0 0.0
        %6470 = vmatpush1.xpose.msra.mxu0 0.0
        %6471 = vmatprep.subr.mxu0 0.0
        %6472 = vmatpush1.xpose.msra.mxu0 0.0
        %6473 = vmatprep.subr.mxu0 0.0
        %6474 = vmatpush1.xpose.msra.mxu0 0.0
        %6475 = vmatprep.subr.mxu0 0.0
        %6476 = vmatpush1.xpose.msra.mxu0 0.0
        %6477 = vmatprep.subr.mxu0 0.0
        %6478 = vmatpush1.xpose.msra.mxu0 0.0
        %6479 = vmatprep.subr.mxu0 0.0
        %6480 = vmatpush1.xpose.msra.mxu0 0.0
        %6481 = vmatprep.subr.mxu0 0.0
        %6482 = vmatpush1.xpose.msra.mxu0 0.0
        %6483 = vmatprep.subr.mxu0 0.0
        %6484 = vmatpush1.xpose.msra.mxu0 0.0
        %6485 = vmatprep.subr.mxu0 0.0
        %6486 = vmatpush1.xpose.msra.mxu0 0.0
        %6487 = vmatprep.subr.mxu0 0.0
        %6488 = vmatpush1.xpose.msra.mxu0 0.0
        %6489 = vmatprep.subr.mxu0 0.0
        %6490 = vmatpush1.xpose.msra.mxu0 0.0
        %6491 = vmatprep.subr.mxu0 0.0
        %6492 = vmatpush1.xpose.msra.mxu0 0.0
        %6493 = vmatprep.subr.mxu0 0.0
        %6494 = vmatpush1.xpose.msra.mxu0 0.0
        %6495 = vmatprep.subr.mxu0 0.0
        %6496 = vmatpush1.xpose.msra.mxu0 0.0
        %6497 = vmatprep.subr.mxu0 0.0
        %6498 = vmatpush1.xpose.msra.mxu0 0.0
        %6499 = vmatprep.mubr.f32.mxu0 0.0
        %6500 = vmatmul.mubr.f32.gmra.mrb[0].mxu0 %v6431
        %v6501 = vpop.f32.mrb[0].mxu0
        %v6502 = vadd.f32 0.0, %v6501
        %v6503 = vpop.f32.mrb[0].mxu0
        %6504 = vmatprep.mubr.f32.mxu0 0.0
        %6505 = vmatmul.mubr.f32.gmra.mrb[0].mxu0 %v6432
        %v6506 = vpop.f32.mrb[0].mxu0
        %v6507 = vadd.f32 0.0, %v6506
        %v6508 = vpop.f32.mrb[0].mxu0
        %6509 = vmatprep.mubr.f32.mxu0 0.0
        %6510 = vmatmul.mubr.f32.gmra.mrb[0].mxu0 %v6433
        %v6511 = vpop.f32.mrb[0].mxu0
        %v6512 = vadd.f32 0.0, %v6511
        %v6513 = vpop.f32.mrb[0].mxu0
        %6514 = vmatprep.mubr.f32.mxu0 0.0
        %6515 = vmatmul.mubr.f32.gmra.mrb[0].mxu0 %v6434
        %v6516 = vpop.f32.mrb[0].mxu0
        %v6517 = vadd.f32 0.0, %v6516
        %v6518 = vpop.f32.mrb[0].mxu0
        %6519 = vdwg.mxu0
        %v6520 = vadd.f32 %v6134, %v6502
        %v6521 = vadd.f32 %v6135, %v6507
        %v6522 = vadd.f32 %v6136, %v6512
        %v6523 = vadd.f32 %v6137, %v6517
        %v6524 = vsel %vm2448, %v4870, 0.0
        %v6525 = vsel %vm2449, %v4875, 0.0
        %v6526 = vsel %vm2450, %v4880, 0.0
        %v6527 = vsel %vm2451, %v4885, 0.0
        %6528 = vmatprep.subr.mxu0 0.0
        %6529 = vmatpush1.msra.mxu0 %v6524
        %6530 = vmatprep.subr.mxu0 0.0
        %6531 = vmatpush1.msra.mxu0 %v6525
        %6532 = vmatprep.subr.mxu0 0.0
        %6533 = vmatpush1.msra.mxu0 %v6526
        %6534 = vmatprep.subr.mxu0 0.0
        %6535 = vmatpush1.msra.mxu0 %v6527
        %6536 = vmatprep.subr.mxu0 0.0
        %6537 = vmatpush1.msra.mxu0 0.0
        %6538 = vmatprep.subr.mxu0 0.0
        %6539 = vmatpush1.msra.mxu0 0.0
        %6540 = vmatprep.subr.mxu0 0.0
        %6541 = vmatpush1.msra.mxu0 0.0
        %6542 = vmatprep.subr.mxu0 0.0
        %6543 = vmatpush1.msra.mxu0 0.0
        %6544 = vmatprep.subr.mxu0 0.0
        %6545 = vmatpush1.msra.mxu0 0.0
        %6546 = vmatprep.subr.mxu0 0.0
        %6547 = vmatpush1.msra.mxu0 0.0
        %6548 = vmatprep.subr.mxu0 0.0
        %6549 = vmatpush1.msra.mxu0 0.0
        %6550 = vmatprep.subr.mxu0 0.0
        %6551 = vmatpush1.msra.mxu0 0.0
        %6552 = vmatprep.subr.mxu0 0.0
        %6553 = vmatpush1.msra.mxu0 0.0
        %6554 = vmatprep.subr.mxu0 0.0
        %6555 = vmatpush1.msra.mxu0 0.0
        %6556 = vmatprep.subr.mxu0 0.0
        %6557 = vmatpush1.msra.mxu0 0.0
        %6558 = vmatprep.subr.mxu0 0.0
        %6559 = vmatpush1.msra.mxu0 0.0
        %6560 = vmatprep.subr.mxu0 0.0
        %6561 = vmatpush1.msra.mxu0 0.0
        %6562 = vmatprep.subr.mxu0 0.0
        %6563 = vmatpush1.msra.mxu0 0.0
        %6564 = vmatprep.subr.mxu0 0.0
        %6565 = vmatpush1.msra.mxu0 0.0
        %6566 = vmatprep.subr.mxu0 0.0
        %6567 = vmatpush1.msra.mxu0 0.0
        %6568 = vmatprep.subr.mxu0 0.0
        %6569 = vmatpush1.msra.mxu0 0.0
        %6570 = vmatprep.subr.mxu0 0.0
        %6571 = vmatpush1.msra.mxu0 0.0
        %6572 = vmatprep.subr.mxu0 0.0
        %6573 = vmatpush1.msra.mxu0 0.0
        %6574 = vmatprep.subr.mxu0 0.0
        %6575 = vmatpush1.msra.mxu0 0.0
        %6576 = vmatprep.subr.mxu0 0.0
        %6577 = vmatpush1.msra.mxu0 0.0
        %6578 = vmatprep.subr.mxu0 0.0
        %6579 = vmatpush1.msra.mxu0 0.0
        %6580 = vmatprep.subr.mxu0 0.0
        %6581 = vmatpush1.msra.mxu0 0.0
        %6582 = vmatprep.subr.mxu0 0.0
        %6583 = vmatpush1.msra.mxu0 0.0
        %6584 = vmatprep.subr.mxu0 0.0
        %6585 = vmatpush1.msra.mxu0 0.0
        %6586 = vmatprep.subr.mxu0 0.0
        %6587 = vmatpush1.msra.mxu0 0.0
        %6588 = vmatprep.subr.mxu0 0.0
        %6589 = vmatpush1.msra.mxu0 0.0
        %6590 = vmatprep.subr.mxu0 0.0
        %6591 = vmatpush1.msra.mxu0 0.0
        %6592 = vmatprep.mubr.f32.mxu0 0.0
        %6593 = vmatmul.mubr.f32.gmra.mrb[0].mxu0 %v4945
        %v6594 = vpop.f32.mrb[0].mxu0
        %v6595 = vadd.f32 0.0, %v6594
        %v6596 = vpop.f32.mrb[0].mxu0
        %6597 = vmatprep.mubr.f32.mxu0 0.0
        %6598 = vmatmul.mubr.f32.gmra.mrb[0].mxu0 %v4948
        %v6599 = vpop.f32.mrb[0].mxu0
        %v6600 = vadd.f32 0.0, %v6599
        %v6601 = vpop.f32.mrb[0].mxu0
        %6602 = vmatprep.mubr.f32.mxu0 0.0
        %6603 = vmatmul.mubr.f32.gmra.mrb[0].mxu0 %v4951
        %v6604 = vpop.f32.mrb[0].mxu0
        %v6605 = vadd.f32 0.0, %v6604
        %v6606 = vpop.f32.mrb[0].mxu0
        %6607 = vmatprep.mubr.f32.mxu0 0.0
        %6608 = vmatmul.mubr.f32.gmra.mrb[0].mxu0 %v4954
        %v6609 = vpop.f32.mrb[0].mxu0
        %v6610 = vadd.f32 0.0, %v6609
        %v6611 = vpop.f32.mrb[0].mxu0
        %6612 = vmatprep.mubr.f32.mxu0 0.0
        %6613 = vmatmul.mubr.f32.gmra.mrb[0].mxu0 %v4957
        %v6614 = vpop.f32.mrb[0].mxu0
        %v6615 = vadd.f32 0.0, %v6614
        %v6616 = vpop.f32.mrb[0].mxu0
        %6617 = vmatprep.mubr.f32.mxu0 0.0
        %6618 = vmatmul.mubr.f32.gmra.mrb[0].mxu0 %v4960
        %v6619 = vpop.f32.mrb[0].mxu0
        %v6620 = vadd.f32 0.0, %v6619
        %v6621 = vpop.f32.mrb[0].mxu0
        %6622 = vmatprep.mubr.f32.mxu0 0.0
        %6623 = vmatmul.mubr.f32.gmra.mrb[0].mxu0 %v4963
        %v6624 = vpop.f32.mrb[0].mxu0
        %v6625 = vadd.f32 0.0, %v6624
        %v6626 = vpop.f32.mrb[0].mxu0
        %6627 = vmatprep.mubr.f32.mxu0 0.0
        %6628 = vmatmul.mubr.f32.gmra.mrb[0].mxu0 %v4966
        %v6629 = vpop.f32.mrb[0].mxu0
        %v6630 = vadd.f32 0.0, %v6629
        %v6631 = vpop.f32.mrb[0].mxu0
        %6632 = vmatprep.mubr.f32.mxu0 0.0
        %6633 = vmatmul.mubr.f32.gmra.mrb[0].mxu0 %v4969
        %v6634 = vpop.f32.mrb[0].mxu0
        %v6635 = vadd.f32 0.0, %v6634
        %v6636 = vpop.f32.mrb[0].mxu0
        %6637 = vmatprep.mubr.f32.mxu0 0.0
        %6638 = vmatmul.mubr.f32.gmra.mrb[0].mxu0 %v4972
        %v6639 = vpop.f32.mrb[0].mxu0
        %v6640 = vadd.f32 0.0, %v6639
        %v6641 = vpop.f32.mrb[0].mxu0
        %6642 = vmatprep.mubr.f32.mxu0 0.0
        %6643 = vmatmul.mubr.f32.gmra.mrb[0].mxu0 %v4975
        %v6644 = vpop.f32.mrb[0].mxu0
        %v6645 = vadd.f32 0.0, %v6644
        %v6646 = vpop.f32.mrb[0].mxu0
        %6647 = vmatprep.mubr.f32.mxu0 0.0
        %6648 = vmatmul.mubr.f32.gmra.mrb[0].mxu0 %v4978
        %v6649 = vpop.f32.mrb[0].mxu0
        %v6650 = vadd.f32 0.0, %v6649
        %v6651 = vpop.f32.mrb[0].mxu0
        %6652 = vmatprep.mubr.f32.mxu0 0.0
        %6653 = vmatmul.mubr.f32.gmra.mrb[0].mxu0 %v4981
        %v6654 = vpop.f32.mrb[0].mxu0
        %v6655 = vadd.f32 0.0, %v6654
        %v6656 = vpop.f32.mrb[0].mxu0
        %6657 = vmatprep.mubr.f32.mxu0 0.0
        %6658 = vmatmul.mubr.f32.gmra.mrb[0].mxu0 %v4984
        %v6659 = vpop.f32.mrb[0].mxu0
        %v6660 = vadd.f32 0.0, %v6659
        %v6661 = vpop.f32.mrb[0].mxu0
        %6662 = vmatprep.mubr.f32.mxu0 0.0
        %6663 = vmatmul.mubr.f32.gmra.mrb[0].mxu0 %v4987
        %v6664 = vpop.f32.mrb[0].mxu0
        %v6665 = vadd.f32 0.0, %v6664
        %v6666 = vpop.f32.mrb[0].mxu0
        %6667 = vmatprep.mubr.f32.mxu0 0.0
        %6668 = vmatmul.mubr.f32.gmra.mrb[0].mxu0 %v4990
        %v6669 = vpop.f32.mrb[0].mxu0
        %v6670 = vadd.f32 0.0, %v6669
        %v6671 = vpop.f32.mrb[0].mxu0
        %6672 = vdwg.mxu0
        %6673 = vmax.xlane.f32.xlu0 %v6595
        %v6674 = vpop.xlane.xlu0 %6673
        %6675 = vmax.xlane.f32.xlu0 %v6600
        %v6676 = vpop.xlane.xlu0 %6675
        %6677 = vmax.xlane.f32.xlu0 %v6605
        %v6678 = vpop.xlane.xlu0 %6677
        %6679 = vmax.xlane.f32.xlu0 %v6610
        %v6680 = vpop.xlane.xlu0 %6679
        %6681 = vmax.xlane.f32.xlu0 %v6615
        %v6682 = vpop.xlane.xlu0 %6681
        %6683 = vmax.xlane.f32.xlu0 %v6620
        %v6684 = vpop.xlane.xlu0 %6683
        %6685 = vmax.xlane.f32.xlu0 %v6625
        %v6686 = vpop.xlane.xlu0 %6685
        %6687 = vmax.xlane.f32.xlu0 %v6630
        %v6688 = vpop.xlane.xlu0 %6687
        %6689 = vmax.xlane.f32.xlu0 %v6635
        %v6690 = vpop.xlane.xlu0 %6689
        %6691 = vmax.xlane.f32.xlu0 %v6640
        %v6692 = vpop.xlane.xlu0 %6691
        %6693 = vmax.xlane.f32.xlu0 %v6645
        %v6694 = vpop.xlane.xlu0 %6693
        %6695 = vmax.xlane.f32.xlu0 %v6650
        %v6696 = vpop.xlane.xlu0 %6695
        %6697 = vmax.xlane.f32.xlu0 %v6655
        %v6698 = vpop.xlane.xlu0 %6697
        %6699 = vmax.xlane.f32.xlu0 %v6660
        %v6700 = vpop.xlane.xlu0 %6699
        %6701 = vmax.xlane.f32.xlu0 %v6665
        %v6702 = vpop.xlane.xlu0 %6701
        %6703 = vmax.xlane.f32.xlu0 %v6670
        %v6704 = vpop.xlane.xlu0 %6703
        %v6705 = vsub.f32 %v6595, %v6674
        %v6706 = vsub.f32 %v6600, %v6676
        %v6707 = vsub.f32 %v6605, %v6678
        %v6708 = vsub.f32 %v6610, %v6680
        %v6709 = vsub.f32 %v6615, %v6682
        %v6710 = vsub.f32 %v6620, %v6684
        %v6711 = vsub.f32 %v6625, %v6686
        %v6712 = vsub.f32 %v6630, %v6688
        %v6713 = vsub.f32 %v6635, %v6690
        %v6714 = vsub.f32 %v6640, %v6692
        %v6715 = vsub.f32 %v6645, %v6694
        %v6716 = vsub.f32 %v6650, %v6696
        %v6717 = vsub.f32 %v6655, %v6698
        %v6718 = vsub.f32 %v6660, %v6700
        %v6719 = vsub.f32 %v6665, %v6702
        %v6720 = vsub.f32 %v6670, %v6704
        %v6721 = vmul.f32 %v6705, 1.442695
        %v6722 = vpow.pop %v6721
        %v6723 = vmul.f32 %v6706, 1.442695
        %v6724 = vpow.pop %v6723
        %v6725 = vmul.f32 %v6707, 1.442695
        %v6726 = vpow.pop %v6725
        %v6727 = vmul.f32 %v6708, 1.442695
        %v6728 = vpow.pop %v6727
        %v6729 = vmul.f32 %v6709, 1.442695
        %v6730 = vpow.pop %v6729
        %v6731 = vmul.f32 %v6710, 1.442695
        %v6732 = vpow.pop %v6731
        %v6733 = vmul.f32 %v6711, 1.442695
        %v6734 = vpow.pop %v6733
        %v6735 = vmul.f32 %v6712, 1.442695
        %v6736 = vpow.pop %v6735
        %v6737 = vmul.f32 %v6713, 1.442695
        %v6738 = vpow.pop %v6737
        %v6739 = vmul.f32 %v6714, 1.442695
        %v6740 = vpow.pop %v6739
        %v6741 = vmul.f32 %v6715, 1.442695
        %v6742 = vpow.pop %v6741
        %v6743 = vmul.f32 %v6716, 1.442695
        %v6744 = vpow.pop %v6743
        %v6745 = vmul.f32 %v6717, 1.442695
        %v6746 = vpow.pop %v6745
        %v6747 = vmul.f32 %v6718, 1.442695
        %v6748 = vpow.pop %v6747
        %v6749 = vmul.f32 %v6719, 1.442695
        %v6750 = vpow.pop %v6749
        %v6751 = vmul.f32 %v6720, 1.442695
        %v6752 = vpow.pop %v6751
        %6753 = vadd.xlane.f32.xlu0 %v6722
        %v6754 = vpop.xlane.xlu0 %6753
        %6755 = vadd.xlane.f32.xlu0 %v6724
        %v6756 = vpop.xlane.xlu0 %6755
        %6757 = vadd.xlane.f32.xlu0 %v6726
        %v6758 = vpop.xlane.xlu0 %6757
        %6759 = vadd.xlane.f32.xlu0 %v6728
        %v6760 = vpop.xlane.xlu0 %6759
        %6761 = vadd.xlane.f32.xlu0 %v6730
        %v6762 = vpop.xlane.xlu0 %6761
        %6763 = vadd.xlane.f32.xlu0 %v6732
        %v6764 = vpop.xlane.xlu0 %6763
        %6765 = vadd.xlane.f32.xlu0 %v6734
        %v6766 = vpop.xlane.xlu0 %6765
        %6767 = vadd.xlane.f32.xlu0 %v6736
        %v6768 = vpop.xlane.xlu0 %6767
        %6769 = vadd.xlane.f32.xlu0 %v6738
        %v6770 = vpop.xlane.xlu0 %6769
        %6771 = vadd.xlane.f32.xlu0 %v6740
        %v6772 = vpop.xlane.xlu0 %6771
        %6773 = vadd.xlane.f32.xlu0 %v6742
        %v6774 = vpop.xlane.xlu0 %6773
        %6775 = vadd.xlane.f32.xlu0 %v6744
        %v6776 = vpop.xlane.xlu0 %6775
        %6777 = vadd.xlane.f32.xlu0 %v6746
        %v6778 = vpop.xlane.xlu0 %6777
        %6779 = vadd.xlane.f32.xlu0 %v6748
        %v6780 = vpop.xlane.xlu0 %6779
        %6781 = vadd.xlane.f32.xlu0 %v6750
        %v6782 = vpop.xlane.xlu0 %6781
        %6783 = vadd.xlane.f32.xlu0 %v6752
        %v6784 = vpop.xlane.xlu0 %6783
        %v6785 = vrcp.pop %v6754
        %v6786 = vrcp.pop %v6756
        %v6787 = vrcp.pop %v6758
        %v6788 = vrcp.pop %v6760
        %v6789 = vrcp.pop %v6762
        %v6790 = vrcp.pop %v6764
        %v6791 = vrcp.pop %v6766
        %v6792 = vrcp.pop %v6768
        %v6793 = vrcp.pop %v6770
        %v6794 = vrcp.pop %v6772
        %v6795 = vrcp.pop %v6774
        %v6796 = vrcp.pop %v6776
        %v6797 = vrcp.pop %v6778
        %v6798 = vrcp.pop %v6780
        %v6799 = vrcp.pop %v6782
        %v6800 = vrcp.pop %v6784
        %v6801 = vmul.f32 %v6722, %v6785
        %v6802 = vmul.f32 %v6724, %v6786
        %v6803 = vmul.f32 %v6726, %v6787
        %v6804 = vmul.f32 %v6728, %v6788
        %v6805 = vmul.f32 %v6730, %v6789
        %v6806 = vmul.f32 %v6732, %v6790
        %v6807 = vmul.f32 %v6734, %v6791
        %v6808 = vmul.f32 %v6736, %v6792
        %v6809 = vmul.f32 %v6738, %v6793
        %v6810 = vmul.f32 %v6740, %v6794
        %v6811 = vmul.f32 %v6742, %v6795
        %v6812 = vmul.f32 %v6744, %v6796
        %v6813 = vmul.f32 %v6746, %v6797
        %v6814 = vmul.f32 %v6748, %v6798
        %v6815 = vmul.f32 %v6750, %v6799
        %v6816 = vmul.f32 %v6752, %v6800
        %v6817 = vsel %vm2448, %v4890, 0.0
        %v6818 = vsel %vm2449, %v4895, 0.0
        %v6819 = vsel %vm2450, %v4900, 0.0
        %v6820 = vsel %vm2451, %v4905, 0.0
        %6821 = vmatprep.subr.mxu0 0.0
        %6822 = vmatpush1.xpose.msra.mxu0 %v6801
        %6823 = vmatprep.subr.mxu0 0.0
        %6824 = vmatpush1.xpose.msra.mxu0 %v6802
        %6825 = vmatprep.subr.mxu0 0.0
        %6826 = vmatpush1.xpose.msra.mxu0 %v6803
        %6827 = vmatprep.subr.mxu0 0.0
        %6828 = vmatpush1.xpose.msra.mxu0 %v6804
        %6829 = vmatprep.subr.mxu0 0.0
        %6830 = vmatpush1.xpose.msra.mxu0 %v6805
        %6831 = vmatprep.subr.mxu0 0.0
        %6832 = vmatpush1.xpose.msra.mxu0 %v6806
        %6833 = vmatprep.subr.mxu0 0.0
        %6834 = vmatpush1.xpose.msra.mxu0 %v6807
        %6835 = vmatprep.subr.mxu0 0.0
        %6836 = vmatpush1.xpose.msra.mxu0 %v6808
        %6837 = vmatprep.subr.mxu0 0.0
        %6838 = vmatpush1.xpose.msra.mxu0 %v6809
        %6839 = vmatprep.subr.mxu0 0.0
        %6840 = vmatpush1.xpose.msra.mxu0 %v6810
        %6841 = vmatprep.subr.mxu0 0.0
        %6842 = vmatpush1.xpose.msra.mxu0 %v6811
        %6843 = vmatprep.subr.mxu0 0.0
        %6844 = vmatpush1.xpose.msra.mxu0 %v6812
        %6845 = vmatprep.subr.mxu0 0.0
        %6846 = vmatpush1.xpose.msra.mxu0 %v6813
        %6847 = vmatprep.subr.mxu0 0.0
        %6848 = vmatpush1.xpose.msra.mxu0 %v6814
        %6849 = vmatprep.subr.mxu0 0.0
        %6850 = vmatpush1.xpose.msra.mxu0 %v6815
        %6851 = vmatprep.subr.mxu0 0.0
        %6852 = vmatpush1.xpose.msra.mxu0 %v6816
        %6853 = vmatprep.subr.mxu0 0.0
        %6854 = vmatpush1.xpose.msra.mxu0 0.0
        %6855 = vmatprep.subr.mxu0 0.0
        %6856 = vmatpush1.xpose.msra.mxu0 0.0
        %6857 = vmatprep.subr.mxu0 0.0
        %6858 = vmatpush1.xpose.msra.mxu0 0.0
        %6859 = vmatprep.subr.mxu0 0.0
        %6860 = vmatpush1.xpose.msra.mxu0 0.0
        %6861 = vmatprep.subr.mxu0 0.0
        %6862 = vmatpush1.xpose.msra.mxu0 0.0
        %6863 = vmatprep.subr.mxu0 0.0
        %6864 = vmatpush1.xpose.msra.mxu0 0.0
        %6865 = vmatprep.subr.mxu0 0.0
        %6866 = vmatpush1.xpose.msra.mxu0 0.0
        %6867 = vmatprep.subr.mxu0 0.0
        %6868 = vmatpush1.xpose.msra.mxu0 0.0
        %6869 = vmatprep.subr.mxu0 0.0
        %6870 = vmatpush1.xpose.msra.mxu0 0.0
        %6871 = vmatprep.subr.mxu0 0.0
        %6872 = vmatpush1.xpose.msra.mxu0 0.0
        %6873 = vmatprep.subr.mxu0 0.0
        %6874 = vmatpush1.xpose.msra.mxu0 0.0
        %6875 = vmatprep.subr.mxu0 0.0
        %6876 = vmatpush1.xpose.msra.mxu0 0.0
        %6877 = vmatprep.subr.mxu0 0.0
        %6878 = vmatpush1.xpose.msra.mxu0 0.0
        %6879 = vmatprep.subr.mxu0 0.0
        %6880 = vmatpush1.xpose.msra.mxu0 0.0
        %6881 = vmatprep.subr.mxu0 0.0
        %6882 = vmatpush1.xpose.msra.mxu0 0.0
        %6883 = vmatprep.subr.mxu0 0.0
        %6884 = vmatpush1.xpose.msra.mxu0 0.0
        %6885 = vmatprep.mubr.f32.mxu0 0.0
        %6886 = vmatmul.mubr.f32.gmra.mrb[0].mxu0 %v6817
        %v6887 = vpop.f32.mrb[0].mxu0
        %v6888 = vadd.f32 0.0, %v6887
        %v6889 = vpop.f32.mrb[0].mxu0
        %6890 = vmatprep.mubr.f32.mxu0 0.0
        %6891 = vmatmul.mubr.f32.gmra.mrb[0].mxu0 %v6818
        %v6892 = vpop.f32.mrb[0].mxu0
        %v6893 = vadd.f32 0.0, %v6892
        %v6894 = vpop.f32.mrb[0].mxu0
        %6895 = vmatprep.mubr.f32.mxu0 0.0
        %6896 = vmatmul.mubr.f32.gmra.mrb[0].mxu0 %v6819
        %v6897 = vpop.f32.mrb[0].mxu0
        %v6898 = vadd.f32 0.0, %v6897
        %v6899 = vpop.f32.mrb[0].mxu0
        %6900 = vmatprep.mubr.f32.mxu0 0.0
        %6901 = vmatmul.mubr.f32.gmra.mrb[0].mxu0 %v6820
        %v6902 = vpop.f32.mrb[0].mxu0
        %v6903 = vadd.f32 0.0, %v6902
        %v6904 = vpop.f32.mrb[0].mxu0
        %6905 = vdwg.mxu0
        %v6906 = vadd.f32 %v6520, %v6888
        %v6907 = vadd.f32 %v6521, %v6893
        %v6908 = vadd.f32 %v6522, %v6898
        %v6909 = vadd.f32 %v6523, %v6903
        %v6910 = vsel %vm2854, %v4870, 0.0
        %v6911 = vsel %vm2855, %v4875, 0.0
        %v6912 = vsel %vm2856, %v4880, 0.0
        %v6913 = vsel %vm2857, %v4885, 0.0
        %6914 = vmatprep.subr.mxu0 0.0
        %6915 = vmatpush1.msra.mxu0 %v6910
        %6916 = vmatprep.subr.mxu0 0.0
        %6917 = vmatpush1.msra.mxu0 %v6911
        %6918 = vmatprep.subr.mxu0 0.0
        %6919 = vmatpush1.msra.mxu0 %v6912
        %6920 = vmatprep.subr.mxu0 0.0
        %6921 = vmatpush1.msra.mxu0 %v6913
        %6922 = vmatprep.subr.mxu0 0.0
        %6923 = vmatpush1.msra.mxu0 0.0
        %6924 = vmatprep.subr.mxu0 0.0
        %6925 = vmatpush1.msra.mxu0 0.0
        %6926 = vmatprep.subr.mxu0 0.0
        %6927 = vmatpush1.msra.mxu0 0.0
        %6928 = vmatprep.subr.mxu0 0.0
        %6929 = vmatpush1.msra.mxu0 0.0
        %6930 = vmatprep.subr.mxu0 0.0
        %6931 = vmatpush1.msra.mxu0 0.0
        %6932 = vmatprep.subr.mxu0 0.0
        %6933 = vmatpush1.msra.mxu0 0.0
        %6934 = vmatprep.subr.mxu0 0.0
        %6935 = vmatpush1.msra.mxu0 0.0
        %6936 = vmatprep.subr.mxu0 0.0
        %6937 = vmatpush1.msra.mxu0 0.0
        %6938 = vmatprep.subr.mxu0 0.0
        %6939 = vmatpush1.msra.mxu0 0.0
        %6940 = vmatprep.subr.mxu0 0.0
        %6941 = vmatpush1.msra.mxu0 0.0
        %6942 = vmatprep.subr.mxu0 0.0
        %6943 = vmatpush1.msra.mxu0 0.0
        %6944 = vmatprep.subr.mxu0 0.0
        %6945 = vmatpush1.msra.mxu0 0.0
        %6946 = vmatprep.subr.mxu0 0.0
        %6947 = vmatpush1.msra.mxu0 0.0
        %6948 = vmatprep.subr.mxu0 0.0
        %6949 = vmatpush1.msra.mxu0 0.0
        %6950 = vmatprep.subr.mxu0 0.0
        %6951 = vmatpush1.msra.mxu0 0.0
        %6952 = vmatprep.subr.mxu0 0.0
        %6953 = vmatpush1.msra.mxu0 0.0
        %6954 = vmatprep.subr.mxu0 0.0
        %6955 = vmatpush1.msra.mxu0 0.0
        %6956 = vmatprep.subr.mxu0 0.0
        %6957 = vmatpush1.msra.mxu0 0.0
        %6958 = vmatprep.subr.mxu0 0.0
        %6959 = vmatpush1.msra.mxu0 0.0
        %6960 = vmatprep.subr.mxu0 0.0
        %6961 = vmatpush1.msra.mxu0 0.0
        %6962 = vmatprep.subr.mxu0 0.0
        %6963 = vmatpush1.msra.mxu0 0.0
        %6964 = vmatprep.subr.mxu0 0.0
        %6965 = vmatpush1.msra.mxu0 0.0
        %6966 = vmatprep.subr.mxu0 0.0
        %6967 = vmatpush1.msra.mxu0 0.0
        %6968 = vmatprep.subr.mxu0 0.0
        %6969 = vmatpush1.msra.mxu0 0.0
        %6970 = vmatprep.subr.mxu0 0.0
        %6971 = vmatpush1.msra.mxu0 0.0
        %6972 = vmatprep.subr.mxu0 0.0
        %6973 = vmatpush1.msra.mxu0 0.0
        %6974 = vmatprep.subr.mxu0 0.0
        %6975 = vmatpush1.msra.mxu0 0.0
        %6976 = vmatprep.subr.mxu0 0.0
        %6977 = vmatpush1.msra.mxu0 0.0
        %6978 = vmatprep.mubr.f32.mxu0 0.0
        %6979 = vmatmul.mubr.f32.gmra.mrb[0].mxu0 %v4945
        %v6980 = vpop.f32.mrb[0].mxu0
        %v6981 = vadd.f32 0.0, %v6980
        %v6982 = vpop.f32.mrb[0].mxu0
        %6983 = vmatprep.mubr.f32.mxu0 0.0
        %6984 = vmatmul.mubr.f32.gmra.mrb[0].mxu0 %v4948
        %v6985 = vpop.f32.mrb[0].mxu0
        %v6986 = vadd.f32 0.0, %v6985
        %v6987 = vpop.f32.mrb[0].mxu0
        %6988 = vmatprep.mubr.f32.mxu0 0.0
        %6989 = vmatmul.mubr.f32.gmra.mrb[0].mxu0 %v4951
        %v6990 = vpop.f32.mrb[0].mxu0
        %v6991 = vadd.f32 0.0, %v6990
        %v6992 = vpop.f32.mrb[0].mxu0
        %6993 = vmatprep.mubr.f32.mxu0 0.0
        %6994 = vmatmul.mubr.f32.gmra.mrb[0].mxu0 %v4954
        %v6995 = vpop.f32.mrb[0].mxu0
        %v6996 = vadd.f32 0.0, %v6995
        %v6997 = vpop.f32.mrb[0].mxu0
        %6998 = vmatprep.mubr.f32.mxu0 0.0
        %6999 = vmatmul.mubr.f32.gmra.mrb[0].mxu0 %v4957
        %v7000 = vpop.f32.mrb[0].mxu0
        %v7001 = vadd.f32 0.0, %v7000
        %v7002 = vpop.f32.mrb[0].mxu0
        %7003 = vmatprep.mubr.f32.mxu0 0.0
        %7004 = vmatmul.mubr.f32.gmra.mrb[0].mxu0 %v4960
        %v7005 = vpop.f32.mrb[0].mxu0
        %v7006 = vadd.f32 0.0, %v7005
        %v7007 = vpop.f32.mrb[0].mxu0
        %7008 = vmatprep.mubr.f32.mxu0 0.0
        %7009 = vmatmul.mubr.f32.gmra.mrb[0].mxu0 %v4963
        %v7010 = vpop.f32.mrb[0].mxu0
        %v7011 = vadd.f32 0.0, %v7010
        %v7012 = vpop.f32.mrb[0].mxu0
        %7013 = vmatprep.mubr.f32.mxu0 0.0
        %7014 = vmatmul.mubr.f32.gmra.mrb[0].mxu0 %v4966
        %v7015 = vpop.f32.mrb[0].mxu0
        %v7016 = vadd.f32 0.0, %v7015
        %v7017 = vpop.f32.mrb[0].mxu0
        %7018 = vmatprep.mubr.f32.mxu0 0.0
        %7019 = vmatmul.mubr.f32.gmra.mrb[0].mxu0 %v4969
        %v7020 = vpop.f32.mrb[0].mxu0
        %v7021 = vadd.f32 0.0, %v7020
        %v7022 = vpop.f32.mrb[0].mxu0
        %7023 = vmatprep.mubr.f32.mxu0 0.0
        %7024 = vmatmul.mubr.f32.gmra.mrb[0].mxu0 %v4972
        %v7025 = vpop.f32.mrb[0].mxu0
        %v7026 = vadd.f32 0.0, %v7025
        %v7027 = vpop.f32.mrb[0].mxu0
        %7028 = vmatprep.mubr.f32.mxu0 0.0
        %7029 = vmatmul.mubr.f32.gmra.mrb[0].mxu0 %v4975
        %v7030 = vpop.f32.mrb[0].mxu0
        %v7031 = vadd.f32 0.0, %v7030
        %v7032 = vpop.f32.mrb[0].mxu0
        %7033 = vmatprep.mubr.f32.mxu0 0.0
        %7034 = vmatmul.mubr.f32.gmra.mrb[0].mxu0 %v4978
        %v7035 = vpop.f32.mrb[0].mxu0
        %v7036 = vadd.f32 0.0, %v7035
        %v7037 = vpop.f32.mrb[0].mxu0
        %7038 = vmatprep.mubr.f32.mxu0 0.0
        %7039 = vmatmul.mubr.f32.gmra.mrb[0].mxu0 %v4981
        %v7040 = vpop.f32.mrb[0].mxu0
        %v7041 = vadd.f32 0.0, %v7040
        %v7042 = vpop.f32.mrb[0].mxu0
        %7043 = vmatprep.mubr.f32.mxu0 0.0
        %7044 = vmatmul.mubr.f32.gmra.mrb[0].mxu0 %v4984
        %v7045 = vpop.f32.mrb[0].mxu0
        %v7046 = vadd.f32 0.0, %v7045
        %v7047 = vpop.f32.mrb[0].mxu0
        %7048 = vmatprep.mubr.f32.mxu0 0.0
        %7049 = vmatmul.mubr.f32.gmra.mrb[0].mxu0 %v4987
        %v7050 = vpop.f32.mrb[0].mxu0
        %v7051 = vadd.f32 0.0, %v7050
        %v7052 = vpop.f32.mrb[0].mxu0
        %7053 = vmatprep.mubr.f32.mxu0 0.0
        %7054 = vmatmul.mubr.f32.gmra.mrb[0].mxu0 %v4990
        %v7055 = vpop.f32.mrb[0].mxu0
        %v7056 = vadd.f32 0.0, %v7055
        %v7057 = vpop.f32.mrb[0].mxu0
        %7058 = vdwg.mxu0
        %7059 = vmax.xlane.f32.xlu0 %v6981
        %v7060 = vpop.xlane.xlu0 %7059
        %7061 = vmax.xlane.f32.xlu0 %v6986
        %v7062 = vpop.xlane.xlu0 %7061
        %7063 = vmax.xlane.f32.xlu0 %v6991
        %v7064 = vpop.xlane.xlu0 %7063
        %7065 = vmax.xlane.f32.xlu0 %v6996
        %v7066 = vpop.xlane.xlu0 %7065
        %7067 = vmax.xlane.f32.xlu0 %v7001
        %v7068 = vpop.xlane.xlu0 %7067
        %7069 = vmax.xlane.f32.xlu0 %v7006
        %v7070 = vpop.xlane.xlu0 %7069
        %7071 = vmax.xlane.f32.xlu0 %v7011
        %v7072 = vpop.xlane.xlu0 %7071
        %7073 = vmax.xlane.f32.xlu0 %v7016
        %v7074 = vpop.xlane.xlu0 %7073
        %7075 = vmax.xlane.f32.xlu0 %v7021
        %v7076 = vpop.xlane.xlu0 %7075
        %7077 = vmax.xlane.f32.xlu0 %v7026
        %v7078 = vpop.xlane.xlu0 %7077
        %7079 = vmax.xlane.f32.xlu0 %v7031
        %v7080 = vpop.xlane.xlu0 %7079
        %7081 = vmax.xlane.f32.xlu0 %v7036
        %v7082 = vpop.xlane.xlu0 %7081
        %7083 = vmax.xlane.f32.xlu0 %v7041
        %v7084 = vpop.xlane.xlu0 %7083
        %7085 = vmax.xlane.f32.xlu0 %v7046
        %v7086 = vpop.xlane.xlu0 %7085
        %7087 = vmax.xlane.f32.xlu0 %v7051
        %v7088 = vpop.xlane.xlu0 %7087
        %7089 = vmax.xlane.f32.xlu0 %v7056
        %v7090 = vpop.xlane.xlu0 %7089
        %v7091 = vsub.f32 %v6981, %v7060
        %v7092 = vsub.f32 %v6986, %v7062
        %v7093 = vsub.f32 %v6991, %v7064
        %v7094 = vsub.f32 %v6996, %v7066
        %v7095 = vsub.f32 %v7001, %v7068
        %v7096 = vsub.f32 %v7006, %v7070
        %v7097 = vsub.f32 %v7011, %v7072
        %v7098 = vsub.f32 %v7016, %v7074
        %v7099 = vsub.f32 %v7021, %v7076
        %v7100 = vsub.f32 %v7026, %v7078
        %v7101 = vsub.f32 %v7031, %v7080
        %v7102 = vsub.f32 %v7036, %v7082
        %v7103 = vsub.f32 %v7041, %v7084
        %v7104 = vsub.f32 %v7046, %v7086
        %v7105 = vsub.f32 %v7051, %v7088
        %v7106 = vsub.f32 %v7056, %v7090
        %v7107 = vmul.f32 %v7091, 1.442695
        %v7108 = vpow.pop %v7107
        %v7109 = vmul.f32 %v7092, 1.442695
        %v7110 = vpow.pop %v7109
        %v7111 = vmul.f32 %v7093, 1.442695
        %v7112 = vpow.pop %v7111
        %v7113 = vmul.f32 %v7094, 1.442695
        %v7114 = vpow.pop %v7113
        %v7115 = vmul.f32 %v7095, 1.442695
        %v7116 = vpow.pop %v7115
        %v7117 = vmul.f32 %v7096, 1.442695
        %v7118 = vpow.pop %v7117
        %v7119 = vmul.f32 %v7097, 1.442695
        %v7120 = vpow.pop %v7119
        %v7121 = vmul.f32 %v7098, 1.442695
        %v7122 = vpow.pop %v7121
        %v7123 = vmul.f32 %v7099, 1.442695
        %v7124 = vpow.pop %v7123
        %v7125 = vmul.f32 %v7100, 1.442695
        %v7126 = vpow.pop %v7125
        %v7127 = vmul.f32 %v7101, 1.442695
        %v7128 = vpow.pop %v7127
        %v7129 = vmul.f32 %v7102, 1.442695
        %v7130 = vpow.pop %v7129
        %v7131 = vmul.f32 %v7103, 1.442695
        %v7132 = vpow.pop %v7131
        %v7133 = vmul.f32 %v7104, 1.442695
        %v7134 = vpow.pop %v7133
        %v7135 = vmul.f32 %v7105, 1.442695
        %v7136 = vpow.pop %v7135
        %v7137 = vmul.f32 %v7106, 1.442695
        %v7138 = vpow.pop %v7137
        %7139 = vadd.xlane.f32.xlu0 %v7108
        %v7140 = vpop.xlane.xlu0 %7139
        %7141 = vadd.xlane.f32.xlu0 %v7110
        %v7142 = vpop.xlane.xlu0 %7141
        %7143 = vadd.xlane.f32.xlu0 %v7112
        %v7144 = vpop.xlane.xlu0 %7143
        %7145 = vadd.xlane.f32.xlu0 %v7114
        %v7146 = vpop.xlane.xlu0 %7145
        %7147 = vadd.xlane.f32.xlu0 %v7116
        %v7148 = vpop.xlane.xlu0 %7147
        %7149 = vadd.xlane.f32.xlu0 %v7118
        %v7150 = vpop.xlane.xlu0 %7149
        %7151 = vadd.xlane.f32.xlu0 %v7120
        %v7152 = vpop.xlane.xlu0 %7151
        %7153 = vadd.xlane.f32.xlu0 %v7122
        %v7154 = vpop.xlane.xlu0 %7153
        %7155 = vadd.xlane.f32.xlu0 %v7124
        %v7156 = vpop.xlane.xlu0 %7155
        %7157 = vadd.xlane.f32.xlu0 %v7126
        %v7158 = vpop.xlane.xlu0 %7157
        %7159 = vadd.xlane.f32.xlu0 %v7128
        %v7160 = vpop.xlane.xlu0 %7159
        %7161 = vadd.xlane.f32.xlu0 %v7130
        %v7162 = vpop.xlane.xlu0 %7161
        %7163 = vadd.xlane.f32.xlu0 %v7132
        %v7164 = vpop.xlane.xlu0 %7163
        %7165 = vadd.xlane.f32.xlu0 %v7134
        %v7166 = vpop.xlane.xlu0 %7165
        %7167 = vadd.xlane.f32.xlu0 %v7136
        %v7168 = vpop.xlane.xlu0 %7167
        %7169 = vadd.xlane.f32.xlu0 %v7138
        %v7170 = vpop.xlane.xlu0 %7169
        %v7171 = vrcp.pop %v7140
        %v7172 = vrcp.pop %v7142
        %v7173 = vrcp.pop %v7144
        %v7174 = vrcp.pop %v7146
        %v7175 = vrcp.pop %v7148
        %v7176 = vrcp.pop %v7150
        %v7177 = vrcp.pop %v7152
        %v7178 = vrcp.pop %v7154
        %v7179 = vrcp.pop %v7156
        %v7180 = vrcp.pop %v7158
        %v7181 = vrcp.pop %v7160
        %v7182 = vrcp.pop %v7162
        %v7183 = vrcp.pop %v7164
        %v7184 = vrcp.pop %v7166
        %v7185 = vrcp.pop %v7168
        %v7186 = vrcp.pop %v7170
        %v7187 = vmul.f32 %v7108, %v7171
        %v7188 = vmul.f32 %v7110, %v7172
        %v7189 = vmul.f32 %v7112, %v7173
        %v7190 = vmul.f32 %v7114, %v7174
        %v7191 = vmul.f32 %v7116, %v7175
        %v7192 = vmul.f32 %v7118, %v7176
        %v7193 = vmul.f32 %v7120, %v7177
        %v7194 = vmul.f32 %v7122, %v7178
        %v7195 = vmul.f32 %v7124, %v7179
        %v7196 = vmul.f32 %v7126, %v7180
        %v7197 = vmul.f32 %v7128, %v7181
        %v7198 = vmul.f32 %v7130, %v7182
        %v7199 = vmul.f32 %v7132, %v7183
        %v7200 = vmul.f32 %v7134, %v7184
        %v7201 = vmul.f32 %v7136, %v7185
        %v7202 = vmul.f32 %v7138, %v7186
        %v7203 = vsel %vm2854, %v4890, 0.0
        %v7204 = vsel %vm2855, %v4895, 0.0
        %v7205 = vsel %vm2856, %v4900, 0.0
        %v7206 = vsel %vm2857, %v4905, 0.0
        %7207 = vmatprep.subr.mxu0 0.0
        %7208 = vmatpush1.xpose.msra.mxu0 %v7187
        %7209 = vmatprep.subr.mxu0 0.0
        %7210 = vmatpush1.xpose.msra.mxu0 %v7188
        %7211 = vmatprep.subr.mxu0 0.0
        %7212 = vmatpush1.xpose.msra.mxu0 %v7189
        %7213 = vmatprep.subr.mxu0 0.0
        %7214 = vmatpush1.xpose.msra.mxu0 %v7190
        %7215 = vmatprep.subr.mxu0 0.0
        %7216 = vmatpush1.xpose.msra.mxu0 %v7191
        %7217 = vmatprep.subr.mxu0 0.0
        %7218 = vmatpush1.xpose.msra.mxu0 %v7192
        %7219 = vmatprep.subr.mxu0 0.0
        %7220 = vmatpush1.xpose.msra.mxu0 %v7193
        %7221 = vmatprep.subr.mxu0 0.0
        %7222 = vmatpush1.xpose.msra.mxu0 %v7194
        %7223 = vmatprep.subr.mxu0 0.0
        %7224 = vmatpush1.xpose.msra.mxu0 %v7195
        %7225 = vmatprep.subr.mxu0 0.0
        %7226 = vmatpush1.xpose.msra.mxu0 %v7196
        %7227 = vmatprep.subr.mxu0 0.0
        %7228 = vmatpush1.xpose.msra.mxu0 %v7197
        %7229 = vmatprep.subr.mxu0 0.0
        %7230 = vmatpush1.xpose.msra.mxu0 %v7198
        %7231 = vmatprep.subr.mxu0 0.0
        %7232 = vmatpush1.xpose.msra.mxu0 %v7199
        %7233 = vmatprep.subr.mxu0 0.0
        %7234 = vmatpush1.xpose.msra.mxu0 %v7200
        %7235 = vmatprep.subr.mxu0 0.0
        %7236 = vmatpush1.xpose.msra.mxu0 %v7201
        %7237 = vmatprep.subr.mxu0 0.0
        %7238 = vmatpush1.xpose.msra.mxu0 %v7202
        %7239 = vmatprep.subr.mxu0 0.0
        %7240 = vmatpush1.xpose.msra.mxu0 0.0
        %7241 = vmatprep.subr.mxu0 0.0
        %7242 = vmatpush1.xpose.msra.mxu0 0.0
        %7243 = vmatprep.subr.mxu0 0.0
        %7244 = vmatpush1.xpose.msra.mxu0 0.0
        %7245 = vmatprep.subr.mxu0 0.0
        %7246 = vmatpush1.xpose.msra.mxu0 0.0
        %7247 = vmatprep.subr.mxu0 0.0
        %7248 = vmatpush1.xpose.msra.mxu0 0.0
        %7249 = vmatprep.subr.mxu0 0.0
        %7250 = vmatpush1.xpose.msra.mxu0 0.0
        %7251 = vmatprep.subr.mxu0 0.0
        %7252 = vmatpush1.xpose.msra.mxu0 0.0
        %7253 = vmatprep.subr.mxu0 0.0
        %7254 = vmatpush1.xpose.msra.mxu0 0.0
        %7255 = vmatprep.subr.mxu0 0.0
        %7256 = vmatpush1.xpose.msra.mxu0 0.0
        %7257 = vmatprep.subr.mxu0 0.0
        %7258 = vmatpush1.xpose.msra.mxu0 0.0
        %7259 = vmatprep.subr.mxu0 0.0
        %7260 = vmatpush1.xpose.msra.mxu0 0.0
        %7261 = vmatprep.subr.mxu0 0.0
        %7262 = vmatpush1.xpose.msra.mxu0 0.0
        %7263 = vmatprep.subr.mxu0 0.0
        %7264 = vmatpush1.xpose.msra.mxu0 0.0
        %7265 = vmatprep.subr.mxu0 0.0
        %7266 = vmatpush1.xpose.msra.mxu0 0.0
        %7267 = vmatprep.subr.mxu0 0.0
        %7268 = vmatpush1.xpose.msra.mxu0 0.0
        %7269 = vmatprep.subr.mxu0 0.0
        %7270 = vmatpush1.xpose.msra.mxu0 0.0
        %7271 = vmatprep.mubr.f32.mxu0 0.0
        %7272 = vmatmul.mubr.f32.gmra.mrb[0].mxu0 %v7203
        %v7273 = vpop.f32.mrb[0].mxu0
        %v7274 = vadd.f32 0.0, %v7273
        %v7275 = vpop.f32.mrb[0].mxu0
        %7276 = vmatprep.mubr.f32.mxu0 0.0
        %7277 = vmatmul.mubr.f32.gmra.mrb[0].mxu0 %v7204
        %v7278 = vpop.f32.mrb[0].mxu0
        %v7279 = vadd.f32 0.0, %v7278
        %v7280 = vpop.f32.mrb[0].mxu0
        %7281 = vmatprep.mubr.f32.mxu0 0.0
        %7282 = vmatmul.mubr.f32.gmra.mrb[0].mxu0 %v7205
        %v7283 = vpop.f32.mrb[0].mxu0
        %v7284 = vadd.f32 0.0, %v7283
        %v7285 = vpop.f32.mrb[0].mxu0
        %7286 = vmatprep.mubr.f32.mxu0 0.0
        %7287 = vmatmul.mubr.f32.gmra.mrb[0].mxu0 %v7206
        %v7288 = vpop.f32.mrb[0].mxu0
        %v7289 = vadd.f32 0.0, %v7288
        %v7290 = vpop.f32.mrb[0].mxu0
        %7291 = vdwg.mxu0
        %v7292 = vadd.f32 %v6906, %v7274
        %v7293 = vadd.f32 %v6907, %v7279
        %v7294 = vadd.f32 %v6908, %v7284
        %v7295 = vadd.f32 %v6909, %v7289
        %v7296 = vsel %vm3260, %v4870, 0.0
        %v7297 = vsel %vm3261, %v4875, 0.0
        %v7298 = vsel %vm3262, %v4880, 0.0
        %v7299 = vsel %vm3263, %v4885, 0.0
        %7300 = vmatprep.subr.mxu0 0.0
        %7301 = vmatpush1.msra.mxu0 %v7296
        %7302 = vmatprep.subr.mxu0 0.0
        %7303 = vmatpush1.msra.mxu0 %v7297
        %7304 = vmatprep.subr.mxu0 0.0
        %7305 = vmatpush1.msra.mxu0 %v7298
        %7306 = vmatprep.subr.mxu0 0.0
        %7307 = vmatpush1.msra.mxu0 %v7299
        %7308 = vmatprep.subr.mxu0 0.0
        %7309 = vmatpush1.msra.mxu0 0.0
        %7310 = vmatprep.subr.mxu0 0.0
        %7311 = vmatpush1.msra.mxu0 0.0
        %7312 = vmatprep.subr.mxu0 0.0
        %7313 = vmatpush1.msra.mxu0 0.0
        %7314 = vmatprep.subr.mxu0 0.0
        %7315 = vmatpush1.msra.mxu0 0.0
        %7316 = vmatprep.subr.mxu0 0.0
        %7317 = vmatpush1.msra.mxu0 0.0
        %7318 = vmatprep.subr.mxu0 0.0
        %7319 = vmatpush1.msra.mxu0 0.0
        %7320 = vmatprep.subr.mxu0 0.0
        %7321 = vmatpush1.msra.mxu0 0.0
        %7322 = vmatprep.subr.mxu0 0.0
        %7323 = vmatpush1.msra.mxu0 0.0
        %7324 = vmatprep.subr.mxu0 0.0
        %7325 = vmatpush1.msra.mxu0 0.0
        %7326 = vmatprep.subr.mxu0 0.0
        %7327 = vmatpush1.msra.mxu0 0.0
        %7328 = vmatprep.subr.mxu0 0.0
        %7329 = vmatpush1.msra.mxu0 0.0
        %7330 = vmatprep.subr.mxu0 0.0
        %7331 = vmatpush1.msra.mxu0 0.0
        %7332 = vmatprep.subr.mxu0 0.0
        %7333 = vmatpush1.msra.mxu0 0.0
        %7334 = vmatprep.subr.mxu0 0.0
        %7335 = vmatpush1.msra.mxu0 0.0
        %7336 = vmatprep.subr.mxu0 0.0
        %7337 = vmatpush1.msra.mxu0 0.0
        %7338 = vmatprep.subr.mxu0 0.0
        %7339 = vmatpush1.msra.mxu0 0.0
        %7340 = vmatprep.subr.mxu0 0.0
        %7341 = vmatpush1.msra.mxu0 0.0
        %7342 = vmatprep.subr.mxu0 0.0
        %7343 = vmatpush1.msra.mxu0 0.0
        %7344 = vmatprep.subr.mxu0 0.0
        %7345 = vmatpush1.msra.mxu0 0.0
        %7346 = vmatprep.subr.mxu0 0.0
        %7347 = vmatpush1.msra.mxu0 0.0
        %7348 = vmatprep.subr.mxu0 0.0
        %7349 = vmatpush1.msra.mxu0 0.0
        %7350 = vmatprep.subr.mxu0 0.0
        %7351 = vmatpush1.msra.mxu0 0.0
        %7352 = vmatprep.subr.mxu0 0.0
        %7353 = vmatpush1.msra.mxu0 0.0
        %7354 = vmatprep.subr.mxu0 0.0
        %7355 = vmatpush1.msra.mxu0 0.0
        %7356 = vmatprep.subr.mxu0 0.0
        %7357 = vmatpush1.msra.mxu0 0.0
        %7358 = vmatprep.subr.mxu0 0.0
        %7359 = vmatpush1.msra.mxu0 0.0
        %7360 = vmatprep.subr.mxu0 0.0
        %7361 = vmatpush1.msra.mxu0 0.0
        %7362 = vmatprep.subr.mxu0 0.0
        %7363 = vmatpush1.msra.mxu0 0.0
        %7364 = vmatprep.mubr.f32.mxu0 0.0
        %7365 = vmatmul.mubr.f32.gmra.mrb[0].mxu0 %v4945
        %v7366 = vpop.f32.mrb[0].mxu0
        %v7367 = vadd.f32 0.0, %v7366
        %v7368 = vpop.f32.mrb[0].mxu0
        %7369 = vmatprep.mubr.f32.mxu0 0.0
        %7370 = vmatmul.mubr.f32.gmra.mrb[0].mxu0 %v4948
        %v7371 = vpop.f32.mrb[0].mxu0
        %v7372 = vadd.f32 0.0, %v7371
        %v7373 = vpop.f32.mrb[0].mxu0
        %7374 = vmatprep.mubr.f32.mxu0 0.0
        %7375 = vmatmul.mubr.f32.gmra.mrb[0].mxu0 %v4951
        %v7376 = vpop.f32.mrb[0].mxu0
        %v7377 = vadd.f32 0.0, %v7376
        %v7378 = vpop.f32.mrb[0].mxu0
        %7379 = vmatprep.mubr.f32.mxu0 0.0
        %7380 = vmatmul.mubr.f32.gmra.mrb[0].mxu0 %v4954
        %v7381 = vpop.f32.mrb[0].mxu0
        %v7382 = vadd.f32 0.0, %v7381
        %v7383 = vpop.f32.mrb[0].mxu0
        %7384 = vmatprep.mubr.f32.mxu0 0.0
        %7385 = vmatmul.mubr.f32.gmra.mrb[0].mxu0 %v4957
        %v7386 = vpop.f32.mrb[0].mxu0
        %v7387 = vadd.f32 0.0, %v7386
        %v7388 = vpop.f32.mrb[0].mxu0
        %7389 = vmatprep.mubr.f32.mxu0 0.0
        %7390 = vmatmul.mubr.f32.gmra.mrb[0].mxu0 %v4960
        %v7391 = vpop.f32.mrb[0].mxu0
        %v7392 = vadd.f32 0.0, %v7391
        %v7393 = vpop.f32.mrb[0].mxu0
        %7394 = vmatprep.mubr.f32.mxu0 0.0
        %7395 = vmatmul.mubr.f32.gmra.mrb[0].mxu0 %v4963
        %v7396 = vpop.f32.mrb[0].mxu0
        %v7397 = vadd.f32 0.0, %v7396
        %v7398 = vpop.f32.mrb[0].mxu0
        %7399 = vmatprep.mubr.f32.mxu0 0.0
        %7400 = vmatmul.mubr.f32.gmra.mrb[0].mxu0 %v4966
        %v7401 = vpop.f32.mrb[0].mxu0
        %v7402 = vadd.f32 0.0, %v7401
        %v7403 = vpop.f32.mrb[0].mxu0
        %7404 = vmatprep.mubr.f32.mxu0 0.0
        %7405 = vmatmul.mubr.f32.gmra.mrb[0].mxu0 %v4969
        %v7406 = vpop.f32.mrb[0].mxu0
        %v7407 = vadd.f32 0.0, %v7406
        %v7408 = vpop.f32.mrb[0].mxu0
        %7409 = vmatprep.mubr.f32.mxu0 0.0
        %7410 = vmatmul.mubr.f32.gmra.mrb[0].mxu0 %v4972
        %v7411 = vpop.f32.mrb[0].mxu0
        %v7412 = vadd.f32 0.0, %v7411
        %v7413 = vpop.f32.mrb[0].mxu0
        %7414 = vmatprep.mubr.f32.mxu0 0.0
        %7415 = vmatmul.mubr.f32.gmra.mrb[0].mxu0 %v4975
        %v7416 = vpop.f32.mrb[0].mxu0
        %v7417 = vadd.f32 0.0, %v7416
        %v7418 = vpop.f32.mrb[0].mxu0
        %7419 = vmatprep.mubr.f32.mxu0 0.0
        %7420 = vmatmul.mubr.f32.gmra.mrb[0].mxu0 %v4978
        %v7421 = vpop.f32.mrb[0].mxu0
        %v7422 = vadd.f32 0.0, %v7421
        %v7423 = vpop.f32.mrb[0].mxu0
        %7424 = vmatprep.mubr.f32.mxu0 0.0
        %7425 = vmatmul.mubr.f32.gmra.mrb[0].mxu0 %v4981
        %v7426 = vpop.f32.mrb[0].mxu0
        %v7427 = vadd.f32 0.0, %v7426
        %v7428 = vpop.f32.mrb[0].mxu0
        %7429 = vmatprep.mubr.f32.mxu0 0.0
        %7430 = vmatmul.mubr.f32.gmra.mrb[0].mxu0 %v4984
        %v7431 = vpop.f32.mrb[0].mxu0
        %v7432 = vadd.f32 0.0, %v7431
        %v7433 = vpop.f32.mrb[0].mxu0
        %7434 = vmatprep.mubr.f32.mxu0 0.0
        %7435 = vmatmul.mubr.f32.gmra.mrb[0].mxu0 %v4987
        %v7436 = vpop.f32.mrb[0].mxu0
        %v7437 = vadd.f32 0.0, %v7436
        %v7438 = vpop.f32.mrb[0].mxu0
        %7439 = vmatprep.mubr.f32.mxu0 0.0
        %7440 = vmatmul.mubr.f32.gmra.mrb[0].mxu0 %v4990
        %v7441 = vpop.f32.mrb[0].mxu0
        %v7442 = vadd.f32 0.0, %v7441
        %v7443 = vpop.f32.mrb[0].mxu0
        %7444 = vdwg.mxu0
        %7445 = vmax.xlane.f32.xlu0 %v7367
        %v7446 = vpop.xlane.xlu0 %7445
        %7447 = vmax.xlane.f32.xlu0 %v7372
        %v7448 = vpop.xlane.xlu0 %7447
        %7449 = vmax.xlane.f32.xlu0 %v7377
        %v7450 = vpop.xlane.xlu0 %7449
        %7451 = vmax.xlane.f32.xlu0 %v7382
        %v7452 = vpop.xlane.xlu0 %7451
        %7453 = vmax.xlane.f32.xlu0 %v7387
        %v7454 = vpop.xlane.xlu0 %7453
        %7455 = vmax.xlane.f32.xlu0 %v7392
        %v7456 = vpop.xlane.xlu0 %7455
        %7457 = vmax.xlane.f32.xlu0 %v7397
        %v7458 = vpop.xlane.xlu0 %7457
        %7459 = vmax.xlane.f32.xlu0 %v7402
        %v7460 = vpop.xlane.xlu0 %7459
        %7461 = vmax.xlane.f32.xlu0 %v7407
        %v7462 = vpop.xlane.xlu0 %7461
        %7463 = vmax.xlane.f32.xlu0 %v7412
        %v7464 = vpop.xlane.xlu0 %7463
        %7465 = vmax.xlane.f32.xlu0 %v7417
        %v7466 = vpop.xlane.xlu0 %7465
        %7467 = vmax.xlane.f32.xlu0 %v7422
        %v7468 = vpop.xlane.xlu0 %7467
        %7469 = vmax.xlane.f32.xlu0 %v7427
        %v7470 = vpop.xlane.xlu0 %7469
        %7471 = vmax.xlane.f32.xlu0 %v7432
        %v7472 = vpop.xlane.xlu0 %7471
        %7473 = vmax.xlane.f32.xlu0 %v7437
        %v7474 = vpop.xlane.xlu0 %7473
        %7475 = vmax.xlane.f32.xlu0 %v7442
        %v7476 = vpop.xlane.xlu0 %7475
        %v7477 = vsub.f32 %v7367, %v7446
        %v7478 = vsub.f32 %v7372, %v7448
        %v7479 = vsub.f32 %v7377, %v7450
        %v7480 = vsub.f32 %v7382, %v7452
        %v7481 = vsub.f32 %v7387, %v7454
        %v7482 = vsub.f32 %v7392, %v7456
        %v7483 = vsub.f32 %v7397, %v7458
        %v7484 = vsub.f32 %v7402, %v7460
        %v7485 = vsub.f32 %v7407, %v7462
        %v7486 = vsub.f32 %v7412, %v7464
        %v7487 = vsub.f32 %v7417, %v7466
        %v7488 = vsub.f32 %v7422, %v7468
        %v7489 = vsub.f32 %v7427, %v7470
        %v7490 = vsub.f32 %v7432, %v7472
        %v7491 = vsub.f32 %v7437, %v7474
        %v7492 = vsub.f32 %v7442, %v7476
        %v7493 = vmul.f32 %v7477, 1.442695
        %v7494 = vpow.pop %v7493
        %v7495 = vmul.f32 %v7478, 1.442695
        %v7496 = vpow.pop %v7495
        %v7497 = vmul.f32 %v7479, 1.442695
        %v7498 = vpow.pop %v7497
        %v7499 = vmul.f32 %v7480, 1.442695
        %v7500 = vpow.pop %v7499
        %v7501 = vmul.f32 %v7481, 1.442695
        %v7502 = vpow.pop %v7501
        %v7503 = vmul.f32 %v7482, 1.442695
        %v7504 = vpow.pop %v7503
        %v7505 = vmul.f32 %v7483, 1.442695
        %v7506 = vpow.pop %v7505
        %v7507 = vmul.f32 %v7484, 1.442695
        %v7508 = vpow.pop %v7507
        %v7509 = vmul.f32 %v7485, 1.442695
        %v7510 = vpow.pop %v7509
        %v7511 = vmul.f32 %v7486, 1.442695
        %v7512 = vpow.pop %v7511
        %v7513 = vmul.f32 %v7487, 1.442695
        %v7514 = vpow.pop %v7513
        %v7515 = vmul.f32 %v7488, 1.442695
        %v7516 = vpow.pop %v7515
        %v7517 = vmul.f32 %v7489, 1.442695
        %v7518 = vpow.pop %v7517
        %v7519 = vmul.f32 %v7490, 1.442695
        %v7520 = vpow.pop %v7519
        %v7521 = vmul.f32 %v7491, 1.442695
        %v7522 = vpow.pop %v7521
        %v7523 = vmul.f32 %v7492, 1.442695
        %v7524 = vpow.pop %v7523
        %7525 = vadd.xlane.f32.xlu0 %v7494
        %v7526 = vpop.xlane.xlu0 %7525
        %7527 = vadd.xlane.f32.xlu0 %v7496
        %v7528 = vpop.xlane.xlu0 %7527
        %7529 = vadd.xlane.f32.xlu0 %v7498
        %v7530 = vpop.xlane.xlu0 %7529
        %7531 = vadd.xlane.f32.xlu0 %v7500
        %v7532 = vpop.xlane.xlu0 %7531
        %7533 = vadd.xlane.f32.xlu0 %v7502
        %v7534 = vpop.xlane.xlu0 %7533
        %7535 = vadd.xlane.f32.xlu0 %v7504
        %v7536 = vpop.xlane.xlu0 %7535
        %7537 = vadd.xlane.f32.xlu0 %v7506
        %v7538 = vpop.xlane.xlu0 %7537
        %7539 = vadd.xlane.f32.xlu0 %v7508
        %v7540 = vpop.xlane.xlu0 %7539
        %7541 = vadd.xlane.f32.xlu0 %v7510
        %v7542 = vpop.xlane.xlu0 %7541
        %7543 = vadd.xlane.f32.xlu0 %v7512
        %v7544 = vpop.xlane.xlu0 %7543
        %7545 = vadd.xlane.f32.xlu0 %v7514
        %v7546 = vpop.xlane.xlu0 %7545
        %7547 = vadd.xlane.f32.xlu0 %v7516
        %v7548 = vpop.xlane.xlu0 %7547
        %7549 = vadd.xlane.f32.xlu0 %v7518
        %v7550 = vpop.xlane.xlu0 %7549
        %7551 = vadd.xlane.f32.xlu0 %v7520
        %v7552 = vpop.xlane.xlu0 %7551
        %7553 = vadd.xlane.f32.xlu0 %v7522
        %v7554 = vpop.xlane.xlu0 %7553
        %7555 = vadd.xlane.f32.xlu0 %v7524
        %v7556 = vpop.xlane.xlu0 %7555
        %v7557 = vrcp.pop %v7526
        %v7558 = vrcp.pop %v7528
        %v7559 = vrcp.pop %v7530
        %v7560 = vrcp.pop %v7532
        %v7561 = vrcp.pop %v7534
        %v7562 = vrcp.pop %v7536
        %v7563 = vrcp.pop %v7538
        %v7564 = vrcp.pop %v7540
        %v7565 = vrcp.pop %v7542
        %v7566 = vrcp.pop %v7544
        %v7567 = vrcp.pop %v7546
        %v7568 = vrcp.pop %v7548
        %v7569 = vrcp.pop %v7550
        %v7570 = vrcp.pop %v7552
        %v7571 = vrcp.pop %v7554
        %v7572 = vrcp.pop %v7556
        %v7573 = vmul.f32 %v7494, %v7557
        %v7574 = vmul.f32 %v7496, %v7558
        %v7575 = vmul.f32 %v7498, %v7559
        %v7576 = vmul.f32 %v7500, %v7560
        %v7577 = vmul.f32 %v7502, %v7561
        %v7578 = vmul.f32 %v7504, %v7562
        %v7579 = vmul.f32 %v7506, %v7563
        %v7580 = vmul.f32 %v7508, %v7564
        %v7581 = vmul.f32 %v7510, %v7565
        %v7582 = vmul.f32 %v7512, %v7566
        %v7583 = vmul.f32 %v7514, %v7567
        %v7584 = vmul.f32 %v7516, %v7568
        %v7585 = vmul.f32 %v7518, %v7569
        %v7586 = vmul.f32 %v7520, %v7570
        %v7587 = vmul.f32 %v7522, %v7571
        %v7588 = vmul.f32 %v7524, %v7572
        %v7589 = vsel %vm3260, %v4890, 0.0
        %v7590 = vsel %vm3261, %v4895, 0.0
        %v7591 = vsel %vm3262, %v4900, 0.0
        %v7592 = vsel %vm3263, %v4905, 0.0
        %7593 = vmatprep.subr.mxu0 0.0
        %7594 = vmatpush1.xpose.msra.mxu0 %v7573
        %7595 = vmatprep.subr.mxu0 0.0
        %7596 = vmatpush1.xpose.msra.mxu0 %v7574
        %7597 = vmatprep.subr.mxu0 0.0
        %7598 = vmatpush1.xpose.msra.mxu0 %v7575
        %7599 = vmatprep.subr.mxu0 0.0
        %7600 = vmatpush1.xpose.msra.mxu0 %v7576
        %7601 = vmatprep.subr.mxu0 0.0
        %7602 = vmatpush1.xpose.msra.mxu0 %v7577
        %7603 = vmatprep.subr.mxu0 0.0
        %7604 = vmatpush1.xpose.msra.mxu0 %v7578
        %7605 = vmatprep.subr.mxu0 0.0
        %7606 = vmatpush1.xpose.msra.mxu0 %v7579
        %7607 = vmatprep.subr.mxu0 0.0
        %7608 = vmatpush1.xpose.msra.mxu0 %v7580
        %7609 = vmatprep.subr.mxu0 0.0
        %7610 = vmatpush1.xpose.msra.mxu0 %v7581
        %7611 = vmatprep.subr.mxu0 0.0
        %7612 = vmatpush1.xpose.msra.mxu0 %v7582
        %7613 = vmatprep.subr.mxu0 0.0
        %7614 = vmatpush1.xpose.msra.mxu0 %v7583
        %7615 = vmatprep.subr.mxu0 0.0
        %7616 = vmatpush1.xpose.msra.mxu0 %v7584
        %7617 = vmatprep.subr.mxu0 0.0
        %7618 = vmatpush1.xpose.msra.mxu0 %v7585
        %7619 = vmatprep.subr.mxu0 0.0
        %7620 = vmatpush1.xpose.msra.mxu0 %v7586
        %7621 = vmatprep.subr.mxu0 0.0
        %7622 = vmatpush1.xpose.msra.mxu0 %v7587
        %7623 = vmatprep.subr.mxu0 0.0
        %7624 = vmatpush1.xpose.msra.mxu0 %v7588
        %7625 = vmatprep.subr.mxu0 0.0
        %7626 = vmatpush1.xpose.msra.mxu0 0.0
        %7627 = vmatprep.subr.mxu0 0.0
        %7628 = vmatpush1.xpose.msra.mxu0 0.0
        %7629 = vmatprep.subr.mxu0 0.0
        %7630 = vmatpush1.xpose.msra.mxu0 0.0
        %7631 = vmatprep.subr.mxu0 0.0
        %7632 = vmatpush1.xpose.msra.mxu0 0.0
        %7633 = vmatprep.subr.mxu0 0.0
        %7634 = vmatpush1.xpose.msra.mxu0 0.0
        %7635 = vmatprep.subr.mxu0 0.0
        %7636 = vmatpush1.xpose.msra.mxu0 0.0
        %7637 = vmatprep.subr.mxu0 0.0
        %7638 = vmatpush1.xpose.msra.mxu0 0.0
        %7639 = vmatprep.subr.mxu0 0.0
        %7640 = vmatpush1.xpose.msra.mxu0 0.0
        %7641 = vmatprep.subr.mxu0 0.0
        %7642 = vmatpush1.xpose.msra.mxu0 0.0
        %7643 = vmatprep.subr.mxu0 0.0
        %7644 = vmatpush1.xpose.msra.mxu0 0.0
        %7645 = vmatprep.subr.mxu0 0.0
        %7646 = vmatpush1.xpose.msra.mxu0 0.0
        %7647 = vmatprep.subr.mxu0 0.0
        %7648 = vmatpush1.xpose.msra.mxu0 0.0
        %7649 = vmatprep.subr.mxu0 0.0
        %7650 = vmatpush1.xpose.msra.mxu0 0.0
        %7651 = vmatprep.subr.mxu0 0.0
        %7652 = vmatpush1.xpose.msra.mxu0 0.0
        %7653 = vmatprep.subr.mxu0 0.0
        %7654 = vmatpush1.xpose.msra.mxu0 0.0
        %7655 = vmatprep.subr.mxu0 0.0
        %7656 = vmatpush1.xpose.msra.mxu0 0.0
        %7657 = vmatprep.mubr.f32.mxu0 0.0
        %7658 = vmatmul.mubr.f32.gmra.mrb[0].mxu0 %v7589
        %v7659 = vpop.f32.mrb[0].mxu0
        %v7660 = vadd.f32 0.0, %v7659
        %v7661 = vpop.f32.mrb[0].mxu0
        %7662 = vmatprep.mubr.f32.mxu0 0.0
        %7663 = vmatmul.mubr.f32.gmra.mrb[0].mxu0 %v7590
        %v7664 = vpop.f32.mrb[0].mxu0
        %v7665 = vadd.f32 0.0, %v7664
        %v7666 = vpop.f32.mrb[0].mxu0
        %7667 = vmatprep.mubr.f32.mxu0 0.0
        %7668 = vmatmul.mubr.f32.gmra.mrb[0].mxu0 %v7591
        %v7669 = vpop.f32.mrb[0].mxu0
        %v7670 = vadd.f32 0.0, %v7669
        %v7671 = vpop.f32.mrb[0].mxu0
        %7672 = vmatprep.mubr.f32.mxu0 0.0
        %7673 = vmatmul.mubr.f32.gmra.mrb[0].mxu0 %v7592
        %v7674 = vpop.f32.mrb[0].mxu0
        %v7675 = vadd.f32 0.0, %v7674
        %v7676 = vpop.f32.mrb[0].mxu0
        %7677 = vdwg.mxu0
        %v7678 = vadd.f32 %v7292, %v7660
        %v7679 = vadd.f32 %v7293, %v7665
        %v7680 = vadd.f32 %v7294, %v7670
        %v7681 = vadd.f32 %v7295, %v7675
        %v7682 = vsel %vm3666, %v4870, 0.0
        %v7683 = vsel %vm3667, %v4875, 0.0
        %v7684 = vsel %vm3668, %v4880, 0.0
        %v7685 = vsel %vm3669, %v4885, 0.0
        %7686 = vmatprep.subr.mxu0 0.0
        %7687 = vmatpush1.msra.mxu0 %v7682
        %7688 = vmatprep.subr.mxu0 0.0
        %7689 = vmatpush1.msra.mxu0 %v7683
        %7690 = vmatprep.subr.mxu0 0.0
        %7691 = vmatpush1.msra.mxu0 %v7684
        %7692 = vmatprep.subr.mxu0 0.0
        %7693 = vmatpush1.msra.mxu0 %v7685
        %7694 = vmatprep.subr.mxu0 0.0
        %7695 = vmatpush1.msra.mxu0 0.0
        %7696 = vmatprep.subr.mxu0 0.0
        %7697 = vmatpush1.msra.mxu0 0.0
        %7698 = vmatprep.subr.mxu0 0.0
        %7699 = vmatpush1.msra.mxu0 0.0
        %7700 = vmatprep.subr.mxu0 0.0
        %7701 = vmatpush1.msra.mxu0 0.0
        %7702 = vmatprep.subr.mxu0 0.0
        %7703 = vmatpush1.msra.mxu0 0.0
        %7704 = vmatprep.subr.mxu0 0.0
        %7705 = vmatpush1.msra.mxu0 0.0
        %7706 = vmatprep.subr.mxu0 0.0
        %7707 = vmatpush1.msra.mxu0 0.0
        %7708 = vmatprep.subr.mxu0 0.0
        %7709 = vmatpush1.msra.mxu0 0.0
        %7710 = vmatprep.subr.mxu0 0.0
        %7711 = vmatpush1.msra.mxu0 0.0
        %7712 = vmatprep.subr.mxu0 0.0
        %7713 = vmatpush1.msra.mxu0 0.0
        %7714 = vmatprep.subr.mxu0 0.0
        %7715 = vmatpush1.msra.mxu0 0.0
        %7716 = vmatprep.subr.mxu0 0.0
        %7717 = vmatpush1.msra.mxu0 0.0
        %7718 = vmatprep.subr.mxu0 0.0
        %7719 = vmatpush1.msra.mxu0 0.0
        %7720 = vmatprep.subr.mxu0 0.0
        %7721 = vmatpush1.msra.mxu0 0.0
        %7722 = vmatprep.subr.mxu0 0.0
        %7723 = vmatpush1.msra.mxu0 0.0
        %7724 = vmatprep.subr.mxu0 0.0
        %7725 = vmatpush1.msra.mxu0 0.0
        %7726 = vmatprep.subr.mxu0 0.0
        %7727 = vmatpush1.msra.mxu0 0.0
        %7728 = vmatprep.subr.mxu0 0.0
        %7729 = vmatpush1.msra.mxu0 0.0
        %7730 = vmatprep.subr.mxu0 0.0
        %7731 = vmatpush1.msra.mxu0 0.0
        %7732 = vmatprep.subr.mxu0 0.0
        %7733 = vmatpush1.msra.mxu0 0.0
        %7734 = vmatprep.subr.mxu0 0.0
        %7735 = vmatpush1.msra.mxu0 0.0
        %7736 = vmatprep.subr.mxu0 0.0
        %7737 = vmatpush1.msra.mxu0 0.0
        %7738 = vmatprep.subr.mxu0 0.0
        %7739 = vmatpush1.msra.mxu0 0.0
        %7740 = vmatprep.subr.mxu0 0.0
        %7741 = vmatpush1.msra.mxu0 0.0
        %7742 = vmatprep.subr.mxu0 0.0
        %7743 = vmatpush1.msra.mxu0 0.0
        %7744 = vmatprep.subr.mxu0 0.0
        %7745 = vmatpush1.msra.mxu0 0.0
        %7746 = vmatprep.subr.mxu0 0.0
        %7747 = vmatpush1.msra.mxu0 0.0
        %7748 = vmatprep.subr.mxu0 0.0
        %7749 = vmatpush1.msra.mxu0 0.0
        %7750 = vmatprep.mubr.f32.mxu0 0.0
        %7751 = vmatmul.mubr.f32.gmra.mrb[0].mxu0 %v4945
        %v7752 = vpop.f32.mrb[0].mxu0
        %v7753 = vadd.f32 0.0, %v7752
        %v7754 = vpop.f32.mrb[0].mxu0
        %7755 = vmatprep.mubr.f32.mxu0 0.0
        %7756 = vmatmul.mubr.f32.gmra.mrb[0].mxu0 %v4948
        %v7757 = vpop.f32.mrb[0].mxu0
        %v7758 = vadd.f32 0.0, %v7757
        %v7759 = vpop.f32.mrb[0].mxu0
        %7760 = vmatprep.mubr.f32.mxu0 0.0
        %7761 = vmatmul.mubr.f32.gmra.mrb[0].mxu0 %v4951
        %v7762 = vpop.f32.mrb[0].mxu0
        %v7763 = vadd.f32 0.0, %v7762
        %v7764 = vpop.f32.mrb[0].mxu0
        %7765 = vmatprep.mubr.f32.mxu0 0.0
        %7766 = vmatmul.mubr.f32.gmra.mrb[0].mxu0 %v4954
        %v7767 = vpop.f32.mrb[0].mxu0
        %v7768 = vadd.f32 0.0, %v7767
        %v7769 = vpop.f32.mrb[0].mxu0
        %7770 = vmatprep.mubr.f32.mxu0 0.0
        %7771 = vmatmul.mubr.f32.gmra.mrb[0].mxu0 %v4957
        %v7772 = vpop.f32.mrb[0].mxu0
        %v7773 = vadd.f32 0.0, %v7772
        %v7774 = vpop.f32.mrb[0].mxu0
        %7775 = vmatprep.mubr.f32.mxu0 0.0
        %7776 = vmatmul.mubr.f32.gmra.mrb[0].mxu0 %v4960
        %v7777 = vpop.f32.mrb[0].mxu0
        %v7778 = vadd.f32 0.0, %v7777
        %v7779 = vpop.f32.mrb[0].mxu0
        %7780 = vmatprep.mubr.f32.mxu0 0.0
        %7781 = vmatmul.mubr.f32.gmra.mrb[0].mxu0 %v4963
        %v7782 = vpop.f32.mrb[0].mxu0
        %v7783 = vadd.f32 0.0, %v7782
        %v7784 = vpop.f32.mrb[0].mxu0
        %7785 = vmatprep.mubr.f32.mxu0 0.0
        %7786 = vmatmul.mubr.f32.gmra.mrb[0].mxu0 %v4966
        %v7787 = vpop.f32.mrb[0].mxu0
        %v7788 = vadd.f32 0.0, %v7787
        %v7789 = vpop.f32.mrb[0].mxu0
        %7790 = vmatprep.mubr.f32.mxu0 0.0
        %7791 = vmatmul.mubr.f32.gmra.mrb[0].mxu0 %v4969
        %v7792 = vpop.f32.mrb[0].mxu0
        %v7793 = vadd.f32 0.0, %v7792
        %v7794 = vpop.f32.mrb[0].mxu0
        %7795 = vmatprep.mubr.f32.mxu0 0.0
        %7796 = vmatmul.mubr.f32.gmra.mrb[0].mxu0 %v4972
        %v7797 = vpop.f32.mrb[0].mxu0
        %v7798 = vadd.f32 0.0, %v7797
        %v7799 = vpop.f32.mrb[0].mxu0
        %7800 = vmatprep.mubr.f32.mxu0 0.0
        %7801 = vmatmul.mubr.f32.gmra.mrb[0].mxu0 %v4975
        %v7802 = vpop.f32.mrb[0].mxu0
        %v7803 = vadd.f32 0.0, %v7802
        %v7804 = vpop.f32.mrb[0].mxu0
        %7805 = vmatprep.mubr.f32.mxu0 0.0
        %7806 = vmatmul.mubr.f32.gmra.mrb[0].mxu0 %v4978
        %v7807 = vpop.f32.mrb[0].mxu0
        %v7808 = vadd.f32 0.0, %v7807
        %v7809 = vpop.f32.mrb[0].mxu0
        %7810 = vmatprep.mubr.f32.mxu0 0.0
        %7811 = vmatmul.mubr.f32.gmra.mrb[0].mxu0 %v4981
        %v7812 = vpop.f32.mrb[0].mxu0
        %v7813 = vadd.f32 0.0, %v7812
        %v7814 = vpop.f32.mrb[0].mxu0
        %7815 = vmatprep.mubr.f32.mxu0 0.0
        %7816 = vmatmul.mubr.f32.gmra.mrb[0].mxu0 %v4984
        %v7817 = vpop.f32.mrb[0].mxu0
        %v7818 = vadd.f32 0.0, %v7817
        %v7819 = vpop.f32.mrb[0].mxu0
        %7820 = vmatprep.mubr.f32.mxu0 0.0
        %7821 = vmatmul.mubr.f32.gmra.mrb[0].mxu0 %v4987
        %v7822 = vpop.f32.mrb[0].mxu0
        %v7823 = vadd.f32 0.0, %v7822
        %v7824 = vpop.f32.mrb[0].mxu0
        %7825 = vmatprep.mubr.f32.mxu0 0.0
        %7826 = vmatmul.mubr.f32.gmra.mrb[0].mxu0 %v4990
        %v7827 = vpop.f32.mrb[0].mxu0
        %v7828 = vadd.f32 0.0, %v7827
        %v7829 = vpop.f32.mrb[0].mxu0
        %7830 = vdwg.mxu0
        %7831 = vmax.xlane.f32.xlu0 %v7753
        %v7832 = vpop.xlane.xlu0 %7831
        %7833 = vmax.xlane.f32.xlu0 %v7758
        %v7834 = vpop.xlane.xlu0 %7833
        %7835 = vmax.xlane.f32.xlu0 %v7763
        %v7836 = vpop.xlane.xlu0 %7835
        %7837 = vmax.xlane.f32.xlu0 %v7768
        %v7838 = vpop.xlane.xlu0 %7837
        %7839 = vmax.xlane.f32.xlu0 %v7773
        %v7840 = vpop.xlane.xlu0 %7839
        %7841 = vmax.xlane.f32.xlu0 %v7778
        %v7842 = vpop.xlane.xlu0 %7841
        %7843 = vmax.xlane.f32.xlu0 %v7783
        %v7844 = vpop.xlane.xlu0 %7843
        %7845 = vmax.xlane.f32.xlu0 %v7788
        %v7846 = vpop.xlane.xlu0 %7845
        %7847 = vmax.xlane.f32.xlu0 %v7793
        %v7848 = vpop.xlane.xlu0 %7847
        %7849 = vmax.xlane.f32.xlu0 %v7798
        %v7850 = vpop.xlane.xlu0 %7849
        %7851 = vmax.xlane.f32.xlu0 %v7803
        %v7852 = vpop.xlane.xlu0 %7851
        %7853 = vmax.xlane.f32.xlu0 %v7808
        %v7854 = vpop.xlane.xlu0 %7853
        %7855 = vmax.xlane.f32.xlu0 %v7813
        %v7856 = vpop.xlane.xlu0 %7855
        %7857 = vmax.xlane.f32.xlu0 %v7818
        %v7858 = vpop.xlane.xlu0 %7857
        %7859 = vmax.xlane.f32.xlu0 %v7823
        %v7860 = vpop.xlane.xlu0 %7859
        %7861 = vmax.xlane.f32.xlu0 %v7828
        %v7862 = vpop.xlane.xlu0 %7861
        %v7863 = vsub.f32 %v7753, %v7832
        %v7864 = vsub.f32 %v7758, %v7834
        %v7865 = vsub.f32 %v7763, %v7836
        %v7866 = vsub.f32 %v7768, %v7838
        %v7867 = vsub.f32 %v7773, %v7840
        %v7868 = vsub.f32 %v7778, %v7842
        %v7869 = vsub.f32 %v7783, %v7844
        %v7870 = vsub.f32 %v7788, %v7846
        %v7871 = vsub.f32 %v7793, %v7848
        %v7872 = vsub.f32 %v7798, %v7850
        %v7873 = vsub.f32 %v7803, %v7852
        %v7874 = vsub.f32 %v7808, %v7854
        %v7875 = vsub.f32 %v7813, %v7856
        %v7876 = vsub.f32 %v7818, %v7858
        %v7877 = vsub.f32 %v7823, %v7860
        %v7878 = vsub.f32 %v7828, %v7862
        %v7879 = vmul.f32 %v7863, 1.442695
        %v7880 = vpow.pop %v7879
        %v7881 = vmul.f32 %v7864, 1.442695
        %v7882 = vpow.pop %v7881
        %v7883 = vmul.f32 %v7865, 1.442695
        %v7884 = vpow.pop %v7883
        %v7885 = vmul.f32 %v7866, 1.442695
        %v7886 = vpow.pop %v7885
        %v7887 = vmul.f32 %v7867, 1.442695
        %v7888 = vpow.pop %v7887
        %v7889 = vmul.f32 %v7868, 1.442695
        %v7890 = vpow.pop %v7889
        %v7891 = vmul.f32 %v7869, 1.442695
        %v7892 = vpow.pop %v7891
        %v7893 = vmul.f32 %v7870, 1.442695
        %v7894 = vpow.pop %v7893
        %v7895 = vmul.f32 %v7871, 1.442695
        %v7896 = vpow.pop %v7895
        %v7897 = vmul.f32 %v7872, 1.442695
        %v7898 = vpow.pop %v7897
        %v7899 = vmul.f32 %v7873, 1.442695
        %v7900 = vpow.pop %v7899
        %v7901 = vmul.f32 %v7874, 1.442695
        %v7902 = vpow.pop %v7901
        %v7903 = vmul.f32 %v7875, 1.442695
        %v7904 = vpow.pop %v7903
        %v7905 = vmul.f32 %v7876, 1.442695
        %v7906 = vpow.pop %v7905
        %v7907 = vmul.f32 %v7877, 1.442695
        %v7908 = vpow.pop %v7907
        %v7909 = vmul.f32 %v7878, 1.442695
        %v7910 = vpow.pop %v7909
        %7911 = vadd.xlane.f32.xlu0 %v7880
        %v7912 = vpop.xlane.xlu0 %7911
        %7913 = vadd.xlane.f32.xlu0 %v7882
        %v7914 = vpop.xlane.xlu0 %7913
        %7915 = vadd.xlane.f32.xlu0 %v7884
        %v7916 = vpop.xlane.xlu0 %7915
        %7917 = vadd.xlane.f32.xlu0 %v7886
        %v7918 = vpop.xlane.xlu0 %7917
        %7919 = vadd.xlane.f32.xlu0 %v7888
        %v7920 = vpop.xlane.xlu0 %7919
        %7921 = vadd.xlane.f32.xlu0 %v7890
        %v7922 = vpop.xlane.xlu0 %7921
        %7923 = vadd.xlane.f32.xlu0 %v7892
        %v7924 = vpop.xlane.xlu0 %7923
        %7925 = vadd.xlane.f32.xlu0 %v7894
        %v7926 = vpop.xlane.xlu0 %7925
        %7927 = vadd.xlane.f32.xlu0 %v7896
        %v7928 = vpop.xlane.xlu0 %7927
        %7929 = vadd.xlane.f32.xlu0 %v7898
        %v7930 = vpop.xlane.xlu0 %7929
        %7931 = vadd.xlane.f32.xlu0 %v7900
        %v7932 = vpop.xlane.xlu0 %7931
        %7933 = vadd.xlane.f32.xlu0 %v7902
        %v7934 = vpop.xlane.xlu0 %7933
        %7935 = vadd.xlane.f32.xlu0 %v7904
        %v7936 = vpop.xlane.xlu0 %7935
        %7937 = vadd.xlane.f32.xlu0 %v7906
        %v7938 = vpop.xlane.xlu0 %7937
        %7939 = vadd.xlane.f32.xlu0 %v7908
        %v7940 = vpop.xlane.xlu0 %7939
        %7941 = vadd.xlane.f32.xlu0 %v7910
        %v7942 = vpop.xlane.xlu0 %7941
        %v7943 = vrcp.pop %v7912
        %v7944 = vrcp.pop %v7914
        %v7945 = vrcp.pop %v7916
        %v7946 = vrcp.pop %v7918
        %v7947 = vrcp.pop %v7920
        %v7948 = vrcp.pop %v7922
        %v7949 = vrcp.pop %v7924
        %v7950 = vrcp.pop %v7926
        %v7951 = vrcp.pop %v7928
        %v7952 = vrcp.pop %v7930
        %v7953 = vrcp.pop %v7932
        %v7954 = vrcp.pop %v7934
        %v7955 = vrcp.pop %v7936
        %v7956 = vrcp.pop %v7938
        %v7957 = vrcp.pop %v7940
        %v7958 = vrcp.pop %v7942
        %v7959 = vmul.f32 %v7880, %v7943
        %v7960 = vmul.f32 %v7882, %v7944
        %v7961 = vmul.f32 %v7884, %v7945
        %v7962 = vmul.f32 %v7886, %v7946
        %v7963 = vmul.f32 %v7888, %v7947
        %v7964 = vmul.f32 %v7890, %v7948
        %v7965 = vmul.f32 %v7892, %v7949
        %v7966 = vmul.f32 %v7894, %v7950
        %v7967 = vmul.f32 %v7896, %v7951
        %v7968 = vmul.f32 %v7898, %v7952
        %v7969 = vmul.f32 %v7900, %v7953
        %v7970 = vmul.f32 %v7902, %v7954
        %v7971 = vmul.f32 %v7904, %v7955
        %v7972 = vmul.f32 %v7906, %v7956
        %v7973 = vmul.f32 %v7908, %v7957
        %v7974 = vmul.f32 %v7910, %v7958
        %v7975 = vsel %vm3666, %v4890, 0.0
        %v7976 = vsel %vm3667, %v4895, 0.0
        %v7977 = vsel %vm3668, %v4900, 0.0
        %v7978 = vsel %vm3669, %v4905, 0.0
        %7979 = vmatprep.subr.mxu0 0.0
        %7980 = vmatpush1.xpose.msra.mxu0 %v7959
        %7981 = vmatprep.subr.mxu0 0.0
        %7982 = vmatpush1.xpose.msra.mxu0 %v7960
        %7983 = vmatprep.subr.mxu0 0.0
        %7984 = vmatpush1.xpose.msra.mxu0 %v7961
        %7985 = vmatprep.subr.mxu0 0.0
        %7986 = vmatpush1.xpose.msra.mxu0 %v7962
        %7987 = vmatprep.subr.mxu0 0.0
        %7988 = vmatpush1.xpose.msra.mxu0 %v7963
        %7989 = vmatprep.subr.mxu0 0.0
        %7990 = vmatpush1.xpose.msra.mxu0 %v7964
        %7991 = vmatprep.subr.mxu0 0.0
        %7992 = vmatpush1.xpose.msra.mxu0 %v7965
        %7993 = vmatprep.subr.mxu0 0.0
        %7994 = vmatpush1.xpose.msra.mxu0 %v7966
        %7995 = vmatprep.subr.mxu0 0.0
        %7996 = vmatpush1.xpose.msra.mxu0 %v7967
        %7997 = vmatprep.subr.mxu0 0.0
        %7998 = vmatpush1.xpose.msra.mxu0 %v7968
        %7999 = vmatprep.subr.mxu0 0.0
        %8000 = vmatpush1.xpose.msra.mxu0 %v7969
        %8001 = vmatprep.subr.mxu0 0.0
        %8002 = vmatpush1.xpose.msra.mxu0 %v7970
        %8003 = vmatprep.subr.mxu0 0.0
        %8004 = vmatpush1.xpose.msra.mxu0 %v7971
        %8005 = vmatprep.subr.mxu0 0.0
        %8006 = vmatpush1.xpose.msra.mxu0 %v7972
        %8007 = vmatprep.subr.mxu0 0.0
        %8008 = vmatpush1.xpose.msra.mxu0 %v7973
        %8009 = vmatprep.subr.mxu0 0.0
        %8010 = vmatpush1.xpose.msra.mxu0 %v7974
        %8011 = vmatprep.subr.mxu0 0.0
        %8012 = vmatpush1.xpose.msra.mxu0 0.0
        %8013 = vmatprep.subr.mxu0 0.0
        %8014 = vmatpush1.xpose.msra.mxu0 0.0
        %8015 = vmatprep.subr.mxu0 0.0
        %8016 = vmatpush1.xpose.msra.mxu0 0.0
        %8017 = vmatprep.subr.mxu0 0.0
        %8018 = vmatpush1.xpose.msra.mxu0 0.0
        %8019 = vmatprep.subr.mxu0 0.0
        %8020 = vmatpush1.xpose.msra.mxu0 0.0
        %8021 = vmatprep.subr.mxu0 0.0
        %8022 = vmatpush1.xpose.msra.mxu0 0.0
        %8023 = vmatprep.subr.mxu0 0.0
        %8024 = vmatpush1.xpose.msra.mxu0 0.0
        %8025 = vmatprep.subr.mxu0 0.0
        %8026 = vmatpush1.xpose.msra.mxu0 0.0
        %8027 = vmatprep.subr.mxu0 0.0
        %8028 = vmatpush1.xpose.msra.mxu0 0.0
        %8029 = vmatprep.subr.mxu0 0.0
        %8030 = vmatpush1.xpose.msra.mxu0 0.0
        %8031 = vmatprep.subr.mxu0 0.0
        %8032 = vmatpush1.xpose.msra.mxu0 0.0
        %8033 = vmatprep.subr.mxu0 0.0
        %8034 = vmatpush1.xpose.msra.mxu0 0.0
        %8035 = vmatprep.subr.mxu0 0.0
        %8036 = vmatpush1.xpose.msra.mxu0 0.0
        %8037 = vmatprep.subr.mxu0 0.0
        %8038 = vmatpush1.xpose.msra.mxu0 0.0
        %8039 = vmatprep.subr.mxu0 0.0
        %8040 = vmatpush1.xpose.msra.mxu0 0.0
        %8041 = vmatprep.subr.mxu0 0.0
        %8042 = vmatpush1.xpose.msra.mxu0 0.0
        %8043 = vmatprep.mubr.f32.mxu0 0.0
        %8044 = vmatmul.mubr.f32.gmra.mrb[0].mxu0 %v7975
        %v8045 = vpop.f32.mrb[0].mxu0
        %v8046 = vadd.f32 0.0, %v8045
        %v8047 = vpop.f32.mrb[0].mxu0
        %8048 = vmatprep.mubr.f32.mxu0 0.0
        %8049 = vmatmul.mubr.f32.gmra.mrb[0].mxu0 %v7976
        %v8050 = vpop.f32.mrb[0].mxu0
        %v8051 = vadd.f32 0.0, %v8050
        %v8052 = vpop.f32.mrb[0].mxu0
        %8053 = vmatprep.mubr.f32.mxu0 0.0
        %8054 = vmatmul.mubr.f32.gmra.mrb[0].mxu0 %v7977
        %v8055 = vpop.f32.mrb[0].mxu0
        %v8056 = vadd.f32 0.0, %v8055
        %v8057 = vpop.f32.mrb[0].mxu0
        %8058 = vmatprep.mubr.f32.mxu0 0.0
        %8059 = vmatmul.mubr.f32.gmra.mrb[0].mxu0 %v7978
        %v8060 = vpop.f32.mrb[0].mxu0
        %v8061 = vadd.f32 0.0, %v8060
        %v8062 = vpop.f32.mrb[0].mxu0
        %8063 = vdwg.mxu0
        %v8064 = vadd.f32 %v7678, %v8046
        %v8065 = vadd.f32 %v7679, %v8051
        %v8066 = vadd.f32 %v7680, %v8056
        %v8067 = vadd.f32 %v7681, %v8061
        %8068 = vmatprep.subr.mxu0 0.0
        %8069 = vmatpush1.msra.mxu0 %v8064
        %8070 = vmatprep.subr.mxu0 0.0
        %8071 = vmatpush1.msra.mxu0 %v8065
        %8072 = vmatprep.subr.mxu0 0.0
        %8073 = vmatpush1.msra.mxu0 %v8066
        %8074 = vmatprep.subr.mxu0 0.0
        %8075 = vmatpush1.msra.mxu0 %v8067
        %8076 = vmatprep.subr.mxu0 0.0
        %8077 = vmatpush1.msra.mxu0 0.0
        %8078 = vmatprep.subr.mxu0 0.0
        %8079 = vmatpush1.msra.mxu0 0.0
        %8080 = vmatprep.subr.mxu0 0.0
        %8081 = vmatpush1.msra.mxu0 0.0
        %8082 = vmatprep.subr.mxu0 0.0
        %8083 = vmatpush1.msra.mxu0 0.0
        %8084 = vmatprep.subr.mxu0 0.0
        %8085 = vmatpush1.msra.mxu0 0.0
        %8086 = vmatprep.subr.mxu0 0.0
        %8087 = vmatpush1.msra.mxu0 0.0
        %8088 = vmatprep.subr.mxu0 0.0
        %8089 = vmatpush1.msra.mxu0 0.0
        %8090 = vmatprep.subr.mxu0 0.0
        %8091 = vmatpush1.msra.mxu0 0.0
        %8092 = vmatprep.subr.mxu0 0.0
        %8093 = vmatpush1.msra.mxu0 0.0
        %8094 = vmatprep.subr.mxu0 0.0
        %8095 = vmatpush1.msra.mxu0 0.0
        %8096 = vmatprep.subr.mxu0 0.0
        %8097 = vmatpush1.msra.mxu0 0.0
        %8098 = vmatprep.subr.mxu0 0.0
        %8099 = vmatpush1.msra.mxu0 0.0
        %8100 = vmatprep.subr.mxu0 0.0
        %8101 = vmatpush1.msra.mxu0 0.0
        %8102 = vmatprep.subr.mxu0 0.0
        %8103 = vmatpush1.msra.mxu0 0.0
        %8104 = vmatprep.subr.mxu0 0.0
        %8105 = vmatpush1.msra.mxu0 0.0
        %8106 = vmatprep.subr.mxu0 0.0
        %8107 = vmatpush1.msra.mxu0 0.0
        %8108 = vmatprep.subr.mxu0 0.0
        %8109 = vmatpush1.msra.mxu0 0.0
        %8110 = vmatprep.subr.mxu0 0.0
        %8111 = vmatpush1.msra.mxu0 0.0
        %8112 = vmatprep.subr.mxu0 0.0
        %8113 = vmatpush1.msra.mxu0 0.0
        %8114 = vmatprep.subr.mxu0 0.0
        %8115 = vmatpush1.msra.mxu0 0.0
        %8116 = vmatprep.subr.mxu0 0.0
        %8117 = vmatpush1.msra.mxu0 0.0
        %8118 = vmatprep.subr.mxu0 0.0
        %8119 = vmatpush1.msra.mxu0 0.0
        %8120 = vmatprep.subr.mxu0 0.0
        %8121 = vmatpush1.msra.mxu0 0.0
        %8122 = vmatprep.subr.mxu0 0.0
        %8123 = vmatpush1.msra.mxu0 0.0
        %8124 = vmatprep.subr.mxu0 0.0
        %8125 = vmatpush1.msra.mxu0 0.0
        %8126 = vmatprep.subr.mxu0 0.0
        %8127 = vmatpush1.msra.mxu0 0.0
        %8128 = vmatprep.subr.mxu0 0.0
        %8129 = vmatpush1.msra.mxu0 0.0
        %8130 = vmatprep.subr.mxu0 0.0
        %8131 = vmatpush1.msra.mxu0 0.0
        %8132 = vmatprep.mubr.f32.mxu0 0.0
        %8133 = vmatmul.mubr.f32.gmra.mrb[0].mxu0 %v4073
        %v8134 = vpop.f32.mrb[0].mxu0
        %v8135 = vadd.f32 %v4058, %v8134
        %v8136 = vpop.f32.mrb[0].mxu0
        %8137 = vmatprep.mubr.f32.mxu0 0.0
        %8138 = vmatmul.mubr.f32.gmra.mrb[0].mxu0 %v4076
        %v8139 = vpop.f32.mrb[0].mxu0
        %v8140 = vadd.f32 %v4062, %v8139
        %v8141 = vpop.f32.mrb[0].mxu0
        %8142 = vmatprep.mubr.f32.mxu0 0.0
        %8143 = vmatmul.mubr.f32.gmra.mrb[0].mxu0 %v4079
        %v8144 = vpop.f32.mrb[0].mxu0
        %v8145 = vadd.f32 %v4066, %v8144
        %v8146 = vpop.f32.mrb[0].mxu0
        %8147 = vmatprep.mubr.f32.mxu0 0.0
        %8148 = vmatmul.mubr.f32.gmra.mrb[0].mxu0 %v4082
        %v8149 = vpop.f32.mrb[0].mxu0
        %v8150 = vadd.f32 %v4070, %v8149
        %v8151 = vpop.f32.mrb[0].mxu0
        %8152 = vdwg.mxu0
        %v8153 = vadd.f32 %v8135, %v8140
        %v8154 = vadd.f32 %v8153, %v8145
        %v8155 = vadd.f32 %v8154, %v8150
        %v8156 = vrot.slane %v8155, 4
        %v8157 = vadd.f32 %v8155, %v8156
        %v8158 = vrot.slane %v8157, 2
        %v8159 = vadd.f32 %v8157, %v8158
        %v8160 = vrot.slane %v8159, 1
        %v8161 = vadd.f32 %v8159, %v8160
        %v8162 = vmul.f32 %v8161, %v440
        %v8163 = vsub.f32 %v8135, %v8162
        %v8164 = vsub.f32 %v8140, %v8162
        %v8165 = vsub.f32 %v8145, %v8162
        %v8166 = vsub.f32 %v8150, %v8162
        %v8167 = vmul.f32 %v8163, %v8163
        %v8168 = vmul.f32 %v8164, %v8164
        %v8169 = vmul.f32 %v8165, %v8165
        %v8170 = vmul.f32 %v8166, %v8166
        %v8171 = vadd.f32 %v8167, %v8168
        %v8172 = vadd.f32 %v8171, %v8169
        %v8173 = vadd.f32 %v8172, %v8170
        %v8174 = vrot.slane %v8173, 4
        %v8175 = vadd.f32 %v8173, %v8174
        %v8176 = vrot.slane %v8175, 2
        %v8177 = vadd.f32 %v8175, %v8176
        %v8178 = vrot.slane %v8177, 1
        %v8179 = vadd.f32 %v8177, %v8178
        %v8180 = vmul.f32 %v8179, %v440
        %v8181 = vadd.f32 %v8180, 1e-05
        %v8182 = vrsqrt.pop %v8181
        %v8183 = vmul.f32 %v8163, %v8182
        %v8184 = vmul.f32 %v8164, %v8182
        %v8185 = vmul.f32 %v8165, %v8182
        %v8186 = vmul.f32 %v8166, %v8182
        %v8187 = vmul.f32 %v8183, %v4205
        %v8188 = vmul.f32 %v8184, %v4209
        %v8189 = vmul.f32 %v8185, %v4213
        %v8190 = vmul.f32 %v8186, %v4217
        %v8191 = vadd.f32 %v8187, %v4225
        %v8192 = vadd.f32 %v8188, %v4229
        %v8193 = vadd.f32 %v8189, %v4233
        %v8194 = vadd.f32 %v8190, %v4237
        %v8195 = vadd.f32 %v8191, %v4733
        %v8196 = vadd.f32 %v8192, %v4734
        %v8197 = vadd.f32 %v8193, %v4735
        %v8198 = vadd.f32 %v8194, %v4736
        %v8199 = vadd.f32 %v8195, %v8196
        %v8200 = vadd.f32 %v8199, %v8197
        %v8201 = vadd.f32 %v8200, %v8198
        %8202 = vadd.xlane.f32.xlu0 %v8201
        %v8203 = vpop.xlane.xlu0 %8202
        %v8204 = vrot.slane %v8203, 4
        %v8205 = vadd.f32 %v8203, %v8204
        %v8206 = vrot.slane %v8205, 2
        %v8207 = vadd.f32 %v8205, %v8206
        %v8208 = vrot.slane %v8207, 1
        %v8209 = vadd.f32 %v8207, %v8208
        %s8210 = vtos %v8209
        %v8211 = vstv %s8210
        %v8212 = vmul.f32 %v8211, %v4260
        %v8213 = vsub.f32 %v8195, %v8212
        %v8214 = vsub.f32 %v8196, %v8212
        %v8215 = vsub.f32 %v8197, %v8212
        %v8216 = vsub.f32 %v8198, %v8212
        %v8217 = vmul.f32 %v8213, %v8213
        %v8218 = vmul.f32 %v8214, %v8214
        %v8219 = vmul.f32 %v8215, %v8215
        %v8220 = vmul.f32 %v8216, %v8216
        %v8221 = vadd.f32 %v8217, %v8218
        %v8222 = vadd.f32 %v8221, %v8219
        %v8223 = vadd.f32 %v8222, %v8220
        %8224 = vadd.xlane.f32.xlu0 %v8223
        %v8225 = vpop.xlane.xlu0 %8224
        %v8226 = vrot.slane %v8225, 4
        %v8227 = vadd.f32 %v8225, %v8226
        %v8228 = vrot.slane %v8227, 2
        %v8229 = vadd.f32 %v8227, %v8228
        %v8230 = vrot.slane %v8229, 1
        %v8231 = vadd.f32 %v8229, %v8230
        %s8232 = vtos %v8231
        %v8233 = vstv %s8232
        %v8234 = vmul.f32 %v8233, %v4260
        %v8235 = vadd.f32 %v8234, 1e-05
        %v8236 = vrsqrt.pop %v8235
        %v8237 = vmul.f32 %v8213, %v8236
        %v8238 = vmul.f32 %v8214, %v8236
        %v8239 = vmul.f32 %v8215, %v8236
        %v8240 = vmul.f32 %v8216, %v8236
        %v8241 = vmul.f32 %v8237, %v4292
        %v8242 = vmul.f32 %v8238, %v4296
        %v8243 = vmul.f32 %v8239, %v4300
        %v8244 = vmul.f32 %v8240, %v4304
        %v8245 = vadd.f32 %v8241, %v4312
        %v8246 = vadd.f32 %v8242, %v4316
        %v8247 = vadd.f32 %v8243, %v4320
        %v8248 = vadd.f32 %v8244, %v4324
        %8249 = vmatprep.subr.mxu0 0.0
        %8250 = vmatpush1.msra.mxu0 %v8245
        %8251 = vmatprep.subr.mxu0 0.0
        %8252 = vmatpush1.msra.mxu0 %v8246
        %8253 = vmatprep.subr.mxu0 0.0
        %8254 = vmatpush1.msra.mxu0 %v8247
        %8255 = vmatprep.subr.mxu0 0.0
        %8256 = vmatpush1.msra.mxu0 %v8248
        %8257 = vmatprep.subr.mxu0 0.0
        %8258 = vmatpush1.msra.mxu0 0.0
        %8259 = vmatprep.subr.mxu0 0.0
        %8260 = vmatpush1.msra.mxu0 0.0
        %8261 = vmatprep.subr.mxu0 0.0
        %8262 = vmatpush1.msra.mxu0 0.0
        %8263 = vmatprep.subr.mxu0 0.0
        %8264 = vmatpush1.msra.mxu0 0.0
        %8265 = vmatprep.subr.mxu0 0.0
        %8266 = vmatpush1.msra.mxu0 0.0
        %8267 = vmatprep.subr.mxu0 0.0
        %8268 = vmatpush1.msra.mxu0 0.0
        %8269 = vmatprep.subr.mxu0 0.0
        %8270 = vmatpush1.msra.mxu0 0.0
        %8271 = vmatprep.subr.mxu0 0.0
        %8272 = vmatpush1.msra.mxu0 0.0
        %8273 = vmatprep.subr.mxu0 0.0
        %8274 = vmatpush1.msra.mxu0 0.0
        %8275 = vmatprep.subr.mxu0 0.0
        %8276 = vmatpush1.msra.mxu0 0.0
        %8277 = vmatprep.subr.mxu0 0.0
        %8278 = vmatpush1.msra.mxu0 0.0
        %8279 = vmatprep.subr.mxu0 0.0
        %8280 = vmatpush1.msra.mxu0 0.0
        %8281 = vmatprep.subr.mxu0 0.0
        %8282 = vmatpush1.msra.mxu0 0.0
        %8283 = vmatprep.subr.mxu0 0.0
        %8284 = vmatpush1.msra.mxu0 0.0
        %8285 = vmatprep.subr.mxu0 0.0
        %8286 = vmatpush1.msra.mxu0 0.0
        %8287 = vmatprep.subr.mxu0 0.0
        %8288 = vmatpush1.msra.mxu0 0.0
        %8289 = vmatprep.subr.mxu0 0.0
        %8290 = vmatpush1.msra.mxu0 0.0
        %8291 = vmatprep.subr.mxu0 0.0
        %8292 = vmatpush1.msra.mxu0 0.0
        %8293 = vmatprep.subr.mxu0 0.0
        %8294 = vmatpush1.msra.mxu0 0.0
        %8295 = vmatprep.subr.mxu0 0.0
        %8296 = vmatpush1.msra.mxu0 0.0
        %8297 = vmatprep.subr.mxu0 0.0
        %8298 = vmatpush1.msra.mxu0 0.0
        %8299 = vmatprep.subr.mxu0 0.0
        %8300 = vmatpush1.msra.mxu0 0.0
        %8301 = vmatprep.subr.mxu0 0.0
        %8302 = vmatpush1.msra.mxu0 0.0
        %8303 = vmatprep.subr.mxu0 0.0
        %8304 = vmatpush1.msra.mxu0 0.0
        %8305 = vmatprep.subr.mxu0 0.0
        %8306 = vmatpush1.msra.mxu0 0.0
        %8307 = vmatprep.subr.mxu0 0.0
        %8308 = vmatpush1.msra.mxu0 0.0
        %8309 = vmatprep.subr.mxu0 0.0
        %8310 = vmatpush1.msra.mxu0 0.0
        %8311 = vmatprep.subr.mxu0 0.0
        %8312 = vmatpush1.msra.mxu0 0.0
        %8313 = vmatprep.mubr.f32.mxu0 0.0
        %8314 = vmatmul.mubr.f32.gmra.mrb[0].mxu0 %v4371
        %v8315 = vpop.f32.mrb[0].mxu0
        %v8316 = vadd.f32 %v4333, %v8315
        %v8317 = vpop.f32.mrb[0].mxu0
        %8318 = vmatprep.mubr.f32.mxu0 0.0
        %8319 = vmatmul.mubr.f32.gmra.mrb[0].mxu0 %v4374
        %v8320 = vpop.f32.mrb[0].mxu0
        %v8321 = vadd.f32 %v4338, %v8320
        %v8322 = vpop.f32.mrb[0].mxu0
        %8323 = vmatprep.mubr.f32.mxu0 0.0
        %8324 = vmatmul.mubr.f32.gmra.mrb[0].mxu0 %v4377
        %v8325 = vpop.f32.mrb[0].mxu0
        %v8326 = vadd.f32 %v4343, %v8325
        %v8327 = vpop.f32.mrb[0].mxu0
        %8328 = vmatprep.mubr.f32.mxu0 0.0
        %8329 = vmatmul.mubr.f32.gmra.mrb[0].mxu0 %v4380
        %v8330 = vpop.f32.mrb[0].mxu0
        %v8331 = vadd.f32 %v4348, %v8330
        %v8332 = vpop.f32.mrb[0].mxu0
        %8333 = vmatprep.mubr.f32.mxu0 0.0
        %8334 = vmatmul.mubr.f32.gmra.mrb[0].mxu0 %v4383
        %v8335 = vpop.f32.mrb[0].mxu0
        %v8336 = vadd.f32 %v4353, %v8335
        %v8337 = vpop.f32.mrb[0].mxu0
        %8338 = vmatprep.mubr.f32.mxu0 0.0
        %8339 = vmatmul.mubr.f32.gmra.mrb[0].mxu0 %v4386
        %v8340 = vpop.f32.mrb[0].mxu0
        %v8341 = vadd.f32 %v4358, %v8340
        %v8342 = vpop.f32.mrb[0].mxu0
        %8343 = vmatprep.mubr.f32.mxu0 0.0
        %8344 = vmatmul.mubr.f32.gmra.mrb[0].mxu0 %v4389
        %v8345 = vpop.f32.mrb[0].mxu0
        %v8346 = vadd.f32 %v4363, %v8345
        %v8347 = vpop.f32.mrb[0].mxu0
        %8348 = vmatprep.mubr.f32.mxu0 0.0
        %8349 = vmatmul.mubr.f32.gmra.mrb[0].mxu0 %v4392
        %v8350 = vpop.f32.mrb[0].mxu0
        %v8351 = vadd.f32 %v4368, %v8350
        %v8352 = vpop.f32.mrb[0].mxu0
        %8353 = vdwg.mxu0
        %vm8354 = vcmp.ge.f32.partialorder %v8316, 0.0
        %vm8355 = vcmp.ge.f32.partialorder %v8321, 0.0
        %vm8356 = vcmp.ge.f32.partialorder %v8326, 0.0
        %vm8357 = vcmp.ge.f32.partialorder %v8331, 0.0
        %vm8358 = vcmp.ge.f32.partialorder %v8336, 0.0
        %vm8359 = vcmp.ge.f32.partialorder %v8341, 0.0
        %vm8360 = vcmp.ge.f32.partialorder %v8346, 0.0
        %vm8361 = vcmp.ge.f32.partialorder %v8351, 0.0
        %v8362 = vmul.f32 %v4507, %v8316
        %v8363 = vmul.f32 %v4507, %v8321
        %v8364 = vmul.f32 %v4507, %v8326
        %v8365 = vmul.f32 %v4507, %v8331
        %v8366 = vmul.f32 %v4507, %v8336
        %v8367 = vmul.f32 %v4507, %v8341
        %v8368 = vmul.f32 %v4507, %v8346
        %v8369 = vmul.f32 %v4507, %v8351
        %v8370 = vsel %vm8354, %v8316, %v8362
        %v8371 = vsel %vm8355, %v8321, %v8363
        %v8372 = vsel %vm8356, %v8326, %v8364
        %v8373 = vsel %vm8357, %v8331, %v8365
        %v8374 = vsel %vm8358, %v8336, %v8366
        %v8375 = vsel %vm8359, %v8341, %v8367
        %v8376 = vsel %vm8360, %v8346, %v8368
        %v8377 = vsel %vm8361, %v8351, %v8369
        %8378 = vmatprep.subr.mxu0 0.0
        %8379 = vmatpush1.msra.mxu0 %v8370
        %8380 = vmatprep.subr.mxu0 0.0
        %8381 = vmatpush1.msra.mxu0 %v8371
        %8382 = vmatprep.subr.mxu0 0.0
        %8383 = vmatpush1.msra.mxu0 %v8372
        %8384 = vmatprep.subr.mxu0 0.0
        %8385 = vmatpush1.msra.mxu0 %v8373
        %8386 = vmatprep.subr.mxu0 0.0
        %8387 = vmatpush1.msra.mxu0 %v8374
        %8388 = vmatprep.subr.mxu0 0.0
        %8389 = vmatpush1.msra.mxu0 %v8375
        %8390 = vmatprep.subr.mxu0 0.0
        %8391 = vmatpush1.msra.mxu0 %v8376
        %8392 = vmatprep.subr.mxu0 0.0
        %8393 = vmatpush1.msra.mxu0 %v8377
        %8394 = vmatprep.subr.mxu0 0.0
        %8395 = vmatpush1.msra.mxu0 0.0
        %8396 = vmatprep.subr.mxu0 0.0
        %8397 = vmatpush1.msra.mxu0 0.0
        %8398 = vmatprep.subr.mxu0 0.0
        %8399 = vmatpush1.msra.mxu0 0.0
        %8400 = vmatprep.subr.mxu0 0.0
        %8401 = vmatpush1.msra.mxu0 0.0
        %8402 = vmatprep.subr.mxu0 0.0
        %8403 = vmatpush1.msra.mxu0 0.0
        %8404 = vmatprep.subr.mxu0 0.0
        %8405 = vmatpush1.msra.mxu0 0.0
        %8406 = vmatprep.subr.mxu0 0.0
        %8407 = vmatpush1.msra.mxu0 0.0
        %8408 = vmatprep.subr.mxu0 0.0
        %8409 = vmatpush1.msra.mxu0 0.0
        %8410 = vmatprep.subr.mxu0 0.0
        %8411 = vmatpush1.msra.mxu0 0.0
        %8412 = vmatprep.subr.mxu0 0.0
        %8413 = vmatpush1.msra.mxu0 0.0
        %8414 = vmatprep.subr.mxu0 0.0
        %8415 = vmatpush1.msra.mxu0 0.0
        %8416 = vmatprep.subr.mxu0 0.0
        %8417 = vmatpush1.msra.mxu0 0.0
        %8418 = vmatprep.subr.mxu0 0.0
        %8419 = vmatpush1.msra.mxu0 0.0
        %8420 = vmatprep.subr.mxu0 0.0
        %8421 = vmatpush1.msra.mxu0 0.0
        %8422 = vmatprep.subr.mxu0 0.0
        %8423 = vmatpush1.msra.mxu0 0.0
        %8424 = vmatprep.subr.mxu0 0.0
        %8425 = vmatpush1.msra.mxu0 0.0
        %8426 = vmatprep.subr.mxu0 0.0
        %8427 = vmatpush1.msra.mxu0 0.0
        %8428 = vmatprep.subr.mxu0 0.0
        %8429 = vmatpush1.msra.mxu0 0.0
        %8430 = vmatprep.subr.mxu0 0.0
        %8431 = vmatpush1.msra.mxu0 0.0
        %8432 = vmatprep.subr.mxu0 0.0
        %8433 = vmatpush1.msra.mxu0 0.0
        %8434 = vmatprep.subr.mxu0 0.0
        %8435 = vmatpush1.msra.mxu0 0.0
        %8436 = vmatprep.subr.mxu0 0.0
        %8437 = vmatpush1.msra.mxu0 0.0
        %8438 = vmatprep.subr.mxu0 0.0
        %8439 = vmatpush1.msra.mxu0 0.0
        %8440 = vmatprep.subr.mxu0 0.0
        %8441 = vmatpush1.msra.mxu0 0.0
        %8442 = vmatprep.mubr.f32.mxu0 0.0
        %8443 = vmatmul.mubr.f32.gmra.mrb[0].mxu0 %v4542
        %v8444 = vpop.f32.mrb[0].mxu0
        %v8445 = vadd.f32 %v4526, %v8444
        %v8446 = vpop.f32.mrb[0].mxu0
        %8447 = vmatprep.mubr.f32.mxu0 0.0
        %8448 = vmatmul.mubr.f32.gmra.mrb[0].mxu0 %v4545
        %v8449 = vpop.f32.mrb[0].mxu0
        %v8450 = vadd.f32 %v4530, %v8449
        %v8451 = vpop.f32.mrb[0].mxu0
        %8452 = vmatprep.mubr.f32.mxu0 0.0
        %8453 = vmatmul.mubr.f32.gmra.mrb[0].mxu0 %v4548
        %v8454 = vpop.f32.mrb[0].mxu0
        %v8455 = vadd.f32 %v4534, %v8454
        %v8456 = vpop.f32.mrb[0].mxu0
        %8457 = vmatprep.mubr.f32.mxu0 0.0
        %8458 = vmatmul.mubr.f32.gmra.mrb[0].mxu0 %v4551
        %v8459 = vpop.f32.mrb[0].mxu0
        %v8460 = vadd.f32 %v4538, %v8459
        %v8461 = vpop.f32.mrb[0].mxu0
        %8462 = vdwg.mxu0
        %v8463 = vadd.f32 %v8445, %v8450
        %v8464 = vadd.f32 %v8463, %v8455
        %v8465 = vadd.f32 %v8464, %v8460
        %8466 = vadd.xlane.f32.xlu0 %v8465
        %v8467 = vpop.xlane.xlu0 %8466
        %v8468 = vrot.slane %v8467, 4
        %v8469 = vadd.f32 %v8467, %v8468
        %v8470 = vrot.slane %v8469, 2
        %v8471 = vadd.f32 %v8469, %v8470
        %v8472 = vrot.slane %v8471, 1
        %v8473 = vadd.f32 %v8471, %v8472
        %s8474 = vtos %v8473
        %v8475 = vstv %s8474
        %v8476 = vmul.f32 %v8475, %v4260
        %v8477 = vsub.f32 %v8445, %v8476
        %v8478 = vsub.f32 %v8450, %v8476
        %v8479 = vsub.f32 %v8455, %v8476
        %v8480 = vsub.f32 %v8460, %v8476
        %v8481 = vmul.f32 %v8477, %v8477
        %v8482 = vmul.f32 %v8478, %v8478
        %v8483 = vmul.f32 %v8479, %v8479
        %v8484 = vmul.f32 %v8480, %v8480
        %v8485 = vadd.f32 %v8481, %v8482
        %v8486 = vadd.f32 %v8485, %v8483
        %v8487 = vadd.f32 %v8486, %v8484
        %8488 = vadd.xlane.f32.xlu0 %v8487
        %v8489 = vpop.xlane.xlu0 %8488
        %v8490 = vrot.slane %v8489, 4
        %v8491 = vadd.f32 %v8489, %v8490
        %v8492 = vrot.slane %v8491, 2
        %v8493 = vadd.f32 %v8491, %v8492
        %v8494 = vrot.slane %v8493, 1
        %v8495 = vadd.f32 %v8493, %v8494
        %s8496 = vtos %v8495
        %v8497 = vstv %s8496
        %v8498 = vmul.f32 %v8497, %v4260
        %v8499 = vadd.f32 %v8498, 1e-05
        %v8500 = vrsqrt.pop %v8499
        %v8501 = vmul.f32 %v8477, %v8500
        %v8502 = vmul.f32 %v8478, %v8500
        %v8503 = vmul.f32 %v8479, %v8500
        %v8504 = vmul.f32 %v8480, %v8500
        %v8505 = vmul.f32 %v8501, %v4682
        %v8506 = vmul.f32 %v8502, %v4686
        %v8507 = vmul.f32 %v8503, %v4690
        %v8508 = vmul.f32 %v8504, %v4694
        %v8509 = vadd.f32 %v8505, %v4702
        %v8510 = vadd.f32 %v8506, %v4706
        %v8511 = vadd.f32 %v8507, %v4710
        %v8512 = vadd.f32 %v8508, %v4714
        %v8513 = vadd.f32 %v8509, %v8195
        %v8514 = vadd.f32 %v8510, %v8196
        %v8515 = vadd.f32 %v8511, %v8197
        %v8516 = vadd.f32 %v8512, %v8198
        %v8517 = vadd.f32 %v8513, %v4733
        %v8518 = vadd.f32 %v8514, %v4734
        %v8519 = vadd.f32 %v8515, %v4735
        %v8520 = vadd.f32 %v8516, %v4736
        %s8521 = scalar_lea.vmem %s356, 32 [#allocation3]
        %8522 = vst [vmem:[%s8521] sm:$0xff] %v8517
        %8523 = vst [vmem:[%s8521 + $0x8] sm:$0xff] %v8518
        %8524 = vst [vmem:[%s8521 + $0x10] sm:$0xff] %v8519
        %8525 = vst [vmem:[%s8521 + $0x18] sm:$0xff] %v8520
        %s8526 = sand.u32 %s248, 1
        %s8527 = scalar_lea.sflag [#allocation4], %s8526
        %s8528 = sand.u32 %s248, 1
        %s8529 = smul.addr %s8528, 64
        %s8530 = scalar_lea.vmem [#allocation3], %s8529
        // Predicated region
        $region61: #{tpu_custom_call.1} parent=59 // pred_check
          %p8531 = pneg %p258
        $region62: #{tpu_custom_call.1} parent=59 // pred_check_branch
          %8533 = sbr.rel (%p8531) target = $region64
        $region63: #{tpu_custom_call.1} parent=59 // pred_region
          %s8534 = smul.u32 2, %s25
          %s8536 = ssub.s32 1024, 1024
          %8537 = vsyncadd %s8527, %s8536
          %s8538 = smul.addr %s8534, 4
          %s8539 = smul.addr %s8538, 128
          %s8540 = scalar_lea.hbm %s10, %s8539
          %s8541 = sshll.u32 %s8530, 4
          %s8542 = int_to_ptr.vmem [resolvable:$true] %s8541
          %8547 = dma.vmem_to_hbm [thread:$0]  %s8542, 1024, %s8540, %s8527, 128, 128, 8
        $region64: #{tpu_custom_call.1} parent=59 // pred_fallthru
          _
      $region60: #{tpu_custom_call.1} parent=5 // pred_fallthru
        _
      %p8548 = scmp.le.s32.totalorder 2, %s20
      // Predicated region
      $region65: #{tpu_custom_call.1} parent=5 // pred_check
        %p8549 = pneg %p8548
      $region66: #{tpu_custom_call.1} parent=5 // pred_check_branch
        %8551 = sbr.rel (%p8549) target = $region68
      $region67: #{tpu_custom_call.1} parent=5 // pred_region
        %s8552 = ssub.s32 %s20, 2
        // Predicated region
        $region69: #{tpu_custom_call.1} parent=67 // pred_check
          %p8553 = pneg %p264
        $region70: #{tpu_custom_call.1} parent=67 // pred_check_branch
          %8555 = sbr.rel (%p8553) target = $region72
        $region71: #{tpu_custom_call.1} parent=67 // pred_region
          %s8556 = sand.u32 %s249, 1
          %s8557 = scalar_lea.sflag [#allocation4], %s8556
          %s8558 = sand.u32 %s249, 1
          %s8559 = smul.addr %s8558, 64
          %s8560 = scalar_lea.vmem [#allocation3], %s8559
          %8561 = dma.done %s8557, 1024
        $region72: #{tpu_custom_call.1} parent=67 // pred_fallthru
          _
      $region68: #{tpu_custom_call.1} parent=5 // pred_fallthru
        _
    $region6: #{tpu_custom_call.1} parent=1 // loop_footer
      %s24 = sadd.s32 1, %s20
    $region7: #{tpu_custom_call.1} parent=1 // loop_footer_branch
      %19 = sbr.rel target = $region3
    $region8: #{tpu_custom_call.1} parent=1 // loop_exit
      _
    %8562 = vsyncpa [#allocation4], 1
    %s8563 = scalar_lea.sflag [#allocation4], 1
    %8564 = vsyncpa %s8563, 1

</llo_original>
